<compile_context>
chip_gen: v5e
topology: v5e:2x2
jax: 0.10.0
libtpu: 0.0.40
codegen_flags: <defaults>
</compile_context>

<pallas_src>
import math

import numpy as np
import jax
import jax.numpy as jnp
from jax.experimental import pallas as pl
from jax.experimental.pallas import tpu as pltpu


_LN_EPS = 1e-5                      # nn.LayerNorm default eps (used by the reference)
_SQRT_HALF = 0.7071067811865476


# ----------------------------------------------------------------------------
# In-kernel helpers
# ----------------------------------------------------------------------------

def _gelu_exact(x):
    # Exact (erf-based) GELU; erf via Abramowitz-Stegun 7.1.26 (|err| < 1.5e-7)
    # using only exp / abs / where / mul / add (guaranteed Mosaic lowering).
    # TODO(synk): switch to jax.lax.erf once its Mosaic lowering is guaranteed.
    z = x * _SQRT_HALF
    az = jnp.abs(z)
    t = 1.0 / (1.0 + 0.3275911 * az)
    poly = ((((1.061405429 * t - 1.453152027) * t + 1.421413741) * t
             - 0.284496736) * t + 0.254829592) * t
    erf_abs = 1.0 - poly * jnp.exp(-az * az)
    erf = jnp.where(z < 0.0, -erf_abs, erf_abs)
    return 0.5 * x * (1.0 + erf)


def _mm(a, b):
    return jnp.dot(a, b, preferred_element_type=jnp.float32)


def _ln_mm(v, g, b, m_avg):
    # LayerNorm whose mean / E[x^2] reductions run on the MXU.  m_avg is either
    # a full 1/D averaging matrix (norm1/norm2) or a per-head block-diagonal
    # 1/head_dim matrix (pooled q/k/v norms with heads stacked along lanes).
    mu = _mm(v, m_avg)
    var = jnp.maximum(_mm(v * v, m_avg) - mu * mu, 0.0)
    return (v - mu) * jax.lax.rsqrt(var + _LN_EPS) * g + b


# ----------------------------------------------------------------------------
# Fused stage kernel (single grid step; both blocks traced back-to-back)
# ----------------------------------------------------------------------------

def _block_forward(x, g, g_rows, m):
    pre = m["prefix"]

    def G(n):
        return g(pre + n)

    def GR(n, r0, nr):
        return g_rows(pre + n, r0, nr)

    nh, dh, att, dim = m["num_heads"], m["head_dim"], m["att_dim"], m["dim"]
    nq, nkv = m["nq_bd"], m["nkv_bd"]

    # --- norm1 ---------------------------------------------------------------
    xn = _ln_mm(x, G("n1_g"), G("n1_b"), G("mavg_d"))

    # --- pooled q/k/v: depthwise pooling conv folded into the qkv projection --
    # taps[t] = S_t @ xn (shared by q/k/v and all heads); pooled = b' + sum_t taps[t] @ W'_t
    if m["shared_pool"]:
        qkv = G("bp_qkv")                                       # (nq, 3*att)
        for t in range(m["kk_q"]):
            tap = _mm(GR("sp", t * nq, nq), xn)                 # (nq, dim)
            qkv = qkv + _mm(tap, GR("wp_qkv", t * dim, dim))
        qp = qkv[:, 0:att]
        kp = qkv[:, att:2 * att]
        vp = qkv[:, 2 * att:3 * att]
    else:
        qp = G("bp_q")
        for t in range(m["kk_q"]):
            tap = _mm(GR("sq", t * nq, nq), xn)
            qp = qp + _mm(tap, GR("wp_q", t * dim, dim))
        kv = G("bp_kv")
        for t in range(m["kk_kv"]):
            tap = _mm(GR("skv", t * nkv, nkv), xn)
            kv = kv + _mm(tap, GR("wp_kv", t * dim, dim))
        kp = kv[:, 0:att]
        vp = kv[:, att:2 * att]

    # --- per-head LayerNorms (heads along lanes, reductions on MXU) ----------
    mavg_h = G("mavg_h")
    qp = _ln_mm(qp, G("gq_g"), G("gq_b"), mavg_h)
    kp = _ln_mm(kp, G("gk_g"), G("gk_b"), mavg_h)   # attn scale folded into gk host-side
    vp = _ln_mm(vp, G("gv_g"), G("gv_b"), mavg_h)

    # --- attention (per head; rel-pos bias fully on the MXU) ------------------
    tile_h, rh, ghe = G("tile_h"), G("rh"), G("ghe")
    tile_w, rw, gwe = G("tile_w"), G("rw"), G("gwe")
    mask = G("mask")                                 # block-diag over batch: 0 / -1e30

    x_att = G("proj_b")                              # heads accumulated straight into proj
    for h in range(nh):
        lo = h * dh
        qh = qp[:, lo:lo + dh]
        kh = kp[:, lo:lo + dh]
        vh = vp[:, lo:lo + dh]
        # decomposed cal_rel_pos_spatial bias (uses UNscaled post-LN q)
        bias = (_mm(_mm(qh, tile_h) * rh, ghe)
                + _mm(_mm(qh, tile_w) * rw, gwe))    # (nq, nkv)
        s = jax.lax.dot_general(qh, kh, (((1,), (1,)), ((), ())),
                                preferred_element_type=jnp.float32)
        s = s + bias + mask
        s = s - jnp.max(s, axis=-1, keepdims=True)
        e = jnp.exp(s)
        p = e * pl.reciprocal(jnp.sum(e, axis=-1, keepdims=True), approx=True)
        out_h = _mm(p, vh) + qh                      # pooled-q residual
        x_att = x_att + _mm(out_h, GR("proj_w", lo, dh))

    # --- residual shortcut (MaxPool2d on the un-normed input) -----------------
    if m["has_pool_skip"]:
        negs = G("negsk")                            # (nq, kks): 0 / -1e30 padding mask
        r = _mm(GR("ssk", 0, nq), x) + negs[:, 0:1]
        for t in range(1, m["kk_skip"]):
            r = jnp.maximum(r, _mm(GR("ssk", t * nq, nq), x) + negs[:, t:t + 1])
        x_res = r
    else:
        x_res = x
    x1 = x_res + x_att                               # drop_path p=0 -> identity

    # --- MLP -------------------------------------------------------------------
    xn2 = _ln_mm(x1, G("n2_g"), G("n2_b"), G("mavg_a"))
    hid = _gelu_exact(_mm(xn2, G("w1")) + G("b1"))
    x_mlp = _mm(hid, G("w2")) + G("b2")
    if m["has_proj_mlp"]:
        x1 = _mm(xn2, G("wpm")) + G("bpm")
    return x1 + x_mlp


def _make_stage_kernel(kmetas, layout):
    def kernel(x_ref, slab_ref, o_ref):
        def g(name):
            off, r, c = layout[name]
            return slab_ref[off:off + r, 0:c]

        def g_rows(name, r0, nr):
            off, _, c = layout[name]
            return slab_ref[off + r0:off + r0 + nr, 0:c]

        x = x_ref[...].astype(jnp.float32)
        for m in kmetas:
            x = _block_forward(x, g, g_rows, m)
        o_ref[...] = x.astype(o_ref.dtype)

    return kernel


# ----------------------------------------------------------------------------
# Host-side precomputation: parameter slab, gather matrices, rel-pos matrices
# ----------------------------------------------------------------------------

class _SlabBuilder:
    """Packs all small constants into one lane-dense (rows, 128) f32 slab.

    Every entry starts on an 8-row (sublane-tile) boundary and its columns are
    zero-padded to 128, so in-kernel slices are cheap aligned loads."""

    def __init__(self, lanes=128):
        self.lanes = lanes
        self.layout = {}
        self.parts = []
        self.rows = 0

    def add(self, name, arr):
        arr = np.asarray(arr, np.float32)
        if arr.ndim == 1:
            arr = arr.reshape(1, -1)
        assert arr.ndim == 2 and arr.shape[1] <= self.lanes, (name, arr.shape)
        r, c = arr.shape
        buf = np.zeros((r, self.lanes), np.float32)
        buf[:, :c] = arr
        self.layout[name] = (self.rows, r, c)
        self.parts.append(buf)
        self.rows += r
        pad = (-self.rows) % 8
        if pad:
            self.parts.append(np.zeros((pad, self.lanes), np.float32))
            self.rows += pad

    def finalize(self):
        slab = np.concatenate(self.parts, axis=0)
        return jnp.asarray(slab), self.layout


def _build_gather(hw, ksize, stride):
    """0/1 gather matrices S[t, n_out, n_in] (pad = k//2) and the per-output
    validity mask (n_out, kk) marking in-bounds taps."""
    h, w = hw
    kh, kw = ksize
    sh, sw = stride
    ph, pw = kh // 2, kw // 2
    ho = (h + 2 * ph - kh) // sh + 1
    wo = (w + 2 * pw - kw) // sw + 1
    kk = kh * kw
    s = np.zeros((kk, ho * wo, h * w), np.float32)
    valid = np.zeros((ho * wo, kk), np.float32)
    for ih in range(kh):
        for iw in range(kw):
            t = ih * kw + iw
            for oh in range(ho):
                for ow in range(wo):
                    r = oh * sh + ih - ph
                    c = ow * sw + iw - pw
                    if 0 <= r < h and 0 <= c < w:
                        s[t, oh * wo + ow, r * w + c] = 1.0
                        valid[oh * wo + ow, t] = 1.0
    return s, valid, (ho, wo)


def _block_diag_taps(s, batch):
    # (kk, no, ni) -> (kk, batch*no, batch*ni), block-diagonal over batch.
    kk, no, ni = s.shape
    out = np.zeros((kk, batch * no, batch * ni), np.float32)
    for b in range(batch):
        out[:, b * no:(b + 1) * no, b * ni:(b + 1) * ni] = s
    return out


def _build_rel_params(rel_pos_h, rel_pos_w, q_shape, k_shape, batch):
    """Matrices for the decomposed (MXU) relative-position bias, batch-tiled."""
    qh_, qw_ = q_shape
    kh_, kw_ = k_shape
    rel_pos_h = np.asarray(rel_pos_h, np.float32)
    rel_pos_w = np.asarray(rel_pos_w, np.float32)
    dh = rel_pos_h.shape[-1]

    def dist(qs, ks):
        q_ratio = max(ks / qs, 1.0)
        k_ratio = max(qs / ks, 1.0)
        d = (np.arange(qs)[:, None] * q_ratio
             - np.arange(ks)[None, :] * k_ratio
             + (ks - 1) * k_ratio)
        return d.astype(np.int64)                    # matches torch .long() truncation

    rel_h = rel_pos_h[dist(qh_, kh_)]                # (qh, kh, Dh)
    rel_w = rel_pos_w[dist(qw_, kw_)]                # (qw, kw, Dh)

    nq, nk = qh_ * qw_, kh_ * kw_
    rh_flat = np.zeros((nq, kh_ * dh), np.float32)
    rw_flat = np.zeros((nq, kw_ * dh), np.float32)
    for ih in range(qh_):
        for iw in range(qw_):
            n = ih * qw_ + iw
            rh_flat[n] = rel_h[ih].reshape(-1)       # col = kh_idx * Dh + c
            rw_flat[n] = rel_w[iw].reshape(-1)

    tile_h = np.tile(np.eye(dh, dtype=np.float32), (1, kh_))    # (Dh, kh*Dh)
    tile_w = np.tile(np.eye(dh, dtype=np.float32), (1, kw_))
    ghe = np.zeros((kh_ * dh, nk), np.float32)
    gwe = np.zeros((kw_ * dh, nk), np.float32)
    for mh in range(kh_):
        for mw in range(kw_):
            mcol = mh * kw_ + mw
            ghe[mh * dh:(mh + 1) * dh, mcol] = 1.0
            gwe[mw * dh:(mw + 1) * dh, mcol] = 1.0

    return (tile_h, np.tile(rh_flat, (batch, 1)), np.tile(ghe, (1, batch)),
            tile_w, np.tile(rw_flat, (batch, 1)), np.tile(gwe, (1, batch)))


def _fold_pool_w(w_sec, w_pool, nh, dim):
    # w_sec: (dim, nh*dh), w_pool: (kk, dh) -> W' of shape (kk*dim, nh*dh)
    kk, dh = w_pool.shape
    scale = np.tile(w_pool, (1, nh))                 # (kk, nh*dh)
    out = np.zeros((kk * dim, nh * dh), np.float32)
    for t in range(kk):
        out[t * dim:(t + 1) * dim] = w_sec * scale[t][None, :]
    return out


def _fold_pool_b(b_sec, w_pool, valid_bd, nh):
    # position-dependent pooled bias (zero-padded conv drops bias at borders)
    bias_scale = valid_bd @ w_pool                   # (nq_bd, dh)
    return np.tile(bias_scale, (1, nh)) * np.asarray(b_sec, np.float32)[None, :]


# ----------------------------------------------------------------------------
# Parameter init (deterministic synthetic, torch-module-shaped)
# ----------------------------------------------------------------------------

def _trunc_normal(key, shape, std=0.02):
    return std * jax.random.truncated_normal(key, -2.0, 2.0, shape, jnp.float32)


def _init_block_params(key, meta):
    dim, att, dout = meta["dim"], meta["att_dim"], meta["dim_out"]
    dh, hidden = meta["head_dim"], meta["hidden"]
    kkq, kkkv = meta["kkq"], meta["kkkv"]
    rel_h_dim = 2 * max(meta["q_shape"][0], meta["kv_shape"][0]) - 1
    rel_w_dim = 2 * max(meta["q_shape"][1], meta["kv_shape"][1]) - 1
    keys = jax.random.split(key, 12)
    p = {
        "norm1_g": jnp.ones((dim,), jnp.float32),
        "norm1_b": jnp.zeros((dim,), jnp.float32),
        "qkv_w": _trunc_normal(keys[0], (dim, 3 * att)),
        "qkv_b": _trunc_normal(keys[1], (3 * att,)),
        "proj_w": _trunc_normal(keys[2], (att, att)),
        "proj_b": _trunc_normal(keys[3], (att,)),
        "pool_q_w": _trunc_normal(keys[4], (kkq, dh)),
        "pool_k_w": _trunc_normal(keys[5], (kkkv, dh)),
        "pool_v_w": _trunc_normal(keys[6], (kkkv, dh)),
        "norm_q_g": jnp.ones((dh,), jnp.float32), "norm_q_b": jnp.zeros((dh,), jnp.float32),
        "norm_k_g": jnp.ones((dh,), jnp.float32), "norm_k_b": jnp.zeros((dh,), jnp.float32),
        "norm_v_g": jnp.ones((dh,), jnp.float32), "norm_v_b": jnp.zeros((dh,), jnp.float32),
        "rel_pos_h": _trunc_normal(keys[7], (rel_h_dim, dh)),
        "rel_pos_w": _trunc_normal(keys[8], (rel_w_dim, dh)),
        "norm2_g": jnp.ones((att,), jnp.float32),
        "norm2_b": jnp.zeros((att,), jnp.float32),
        "fc1_w": _trunc_normal(keys[9], (att, hidden)),
        "fc1_b": jnp.zeros((hidden,), jnp.float32),
        "fc2_w": _trunc_normal(keys[10], (hidden, dout)),
        "fc2_b": jnp.zeros((dout,), jnp.float32),
    }
    if meta["has_proj_mlp"]:
        p["proj_mlp_w"] = _trunc_normal(keys[11], (att, dout))
        p["proj_mlp_b"] = jnp.zeros((dout,), jnp.float32)
    return p


def _prepare_block(builder, prefix, p, meta, batch):
    dim, att = meta["dim"], meta["att_dim"]
    nh, dh = meta["num_heads"], meta["head_dim"]
    hw = meta["hw_in"]
    nq, nkv, nin = meta["n_q"], meta["n_kv"], meta["n_in"]
    nq_bd, nkv_bd, nin_bd = batch * nq, batch * nkv, batch * nin
    scale = dh ** (-0.5)

    def add(name, arr):
        builder.add(prefix + name, arr)

    wqkv = np.asarray(p["qkv_w"], np.float32)
    bqkv = np.asarray(p["qkv_b"], np.float32)
    wq, wk, wv = wqkv[:, :att], wqkv[:, att:2 * att], wqkv[:, 2 * att:]
    bq, bk, bv = bqkv[:att], bqkv[att:2 * att], bqkv[2 * att:]
    wpq = np.asarray(p["pool_q_w"], np.float32)
    wpk = np.asarray(p["pool_k_w"], np.float32)
    wpv = np.asarray(p["pool_v_w"], np.float32)

    s_q, valid_q, q_shape = _build_gather(hw, meta["kernel_q"], meta["stride_q"])
    s_kv, valid_kv, kv_shape = _build_gather(hw, meta["kernel_kv"], meta["stride_kv"])
    assert q_shape == meta["q_shape"] and kv_shape == meta["kv_shape"]
    shared = (meta["kernel_q"] == meta["kernel_kv"]
              and meta["stride_q"] == meta["stride_kv"])

    s_q_bd = _block_diag_taps(s_q, batch).reshape(meta["kkq"] * nq_bd, nin_bd)
    valid_q_bd = np.tile(valid_q, (batch, 1))
    if shared:
        add("sp", s_q_bd)
        add("wp_qkv", np.concatenate([_fold_pool_w(wq, wpq, nh, dim),
                                      _fold_pool_w(wk, wpk, nh, dim),
                                      _fold_pool_w(wv, wpv, nh, dim)], axis=1))
        add("bp_qkv", np.concatenate([_fold_pool_b(bq, wpq, valid_q_bd, nh),
                                      _fold_pool_b(bk, wpk, valid_q_bd, nh),
                                      _fold_pool_b(bv, wpv, valid_q_bd, nh)], axis=1))
    else:
        s_kv_bd = _block_diag_taps(s_kv, batch).reshape(meta["kkkv"] * nkv_bd, nin_bd)
        valid_kv_bd = np.tile(valid_kv, (batch, 1))
        add("sq", s_q_bd)
        add("skv", s_kv_bd)
        add("wp_q", _fold_pool_w(wq, wpq, nh, dim))
        add("bp_q", _fold_pool_b(bq, wpq, valid_q_bd, nh))
        add("wp_kv", np.concatenate([_fold_pool_w(wk, wpk, nh, dim),
                                     _fold_pool_w(wv, wpv, nh, dim)], axis=1))
        add("bp_kv", np.concatenate([_fold_pool_b(bk, wpk, valid_kv_bd, nh),
                                     _fold_pool_b(bv, wpv, valid_kv_bd, nh)], axis=1))

    add("n1_g", np.asarray(p["norm1_g"]))
    add("n1_b", np.asarray(p["norm1_b"]))
    add("mavg_d", np.full((dim, dim), 1.0 / dim, np.float32))
    add("mavg_a", np.full((att, att), 1.0 / att, np.float32))
    mavg_h = np.zeros((att, att), np.float32)
    for h in range(nh):
        mavg_h[h * dh:(h + 1) * dh, h * dh:(h + 1) * dh] = 1.0 / dh
    add("mavg_h", mavg_h)

    add("gq_g", np.tile(np.asarray(p["norm_q_g"]), nh))
    add("gq_b", np.tile(np.asarray(p["norm_q_b"]), nh))
    add("gk_g", np.tile(np.asarray(p["norm_k_g"]), nh) * scale)   # attn scale folded in
    add("gk_b", np.tile(np.asarray(p["norm_k_b"]), nh) * scale)
    add("gv_g", np.tile(np.asarray(p["norm_v_g"]), nh))
    add("gv_b", np.tile(np.asarray(p["norm_v_b"]), nh))

    tile_h, rh, ghe, tile_w, rw, gwe = _build_rel_params(
        p["rel_pos_h"], p["rel_pos_w"], q_shape, kv_shape, batch)
    add("tile_h", tile_h)
    add("rh", rh)
    add("ghe", ghe)
    add("tile_w", tile_w)
    add("rw", rw)
    add("gwe", gwe)

    # cross-batch masking (0 on the per-batch diagonal blocks, -1e30 elsewhere)
    mask = np.full((nq_bd, nkv_bd), -1e30, np.float32)
    for b in range(batch):
        mask[b * nq:(b + 1) * nq, b * nkv:(b + 1) * nkv] = 0.0
    add("mask", mask)

    add("proj_w", np.asarray(p["proj_w"]))
    add("proj_b", np.asarray(p["proj_b"]))

    if meta["has_pool_skip"]:
        s_sk, valid_sk, sk_shape = _build_gather(hw, meta["kernel_skip"], meta["stride_q"])
        assert sk_shape == q_shape
        add("ssk", _block_diag_taps(s_sk, batch).reshape(meta["kks"] * nq_bd, nin_bd))
        # -1e30 sentinel == MaxPool2d's -inf padding (safe at f32 activation scales)
        add("negsk", (1.0 - np.tile(valid_sk, (batch, 1))) * (-1e30))

    add("n2_g", np.asarray(p["norm2_g"]))
    add("n2_b", np.asarray(p["norm2_b"]))
    add("w1", np.asarray(p["fc1_w"]))
    add("b1", np.asarray(p["fc1_b"]))
    add("w2", np.asarray(p["fc2_w"]))
    add("b2", np.asarray(p["fc2_b"]))
    if meta["has_proj_mlp"]:
        add("wpm", np.asarray(p["proj_mlp_w"]))
        add("bpm", np.asarray(p["proj_mlp_b"]))

    return {
        "prefix": prefix,
        "num_heads": nh, "head_dim": dh, "att_dim": att, "dim": dim,
        "nq_bd": nq_bd, "nkv_bd": nkv_bd, "n_in_bd": nin_bd,
        "kk_q": meta["kkq"], "kk_kv": meta["kkkv"], "kk_skip": meta.get("kks", 0),
        "shared_pool": shared,
        "has_pool_skip": meta["has_pool_skip"],
        "has_proj_mlp": meta["has_proj_mlp"],
        "dim_out": meta["dim_out"], "hidden": meta["hidden"],
    }


# ----------------------------------------------------------------------------
# Stage construction + pallas_call wrapper
# ----------------------------------------------------------------------------

def make_stage(key, *, batch, dim=32, dim_out=64, depth=2, num_heads=2,
               input_size=(8, 8), mlp_ratio=4.0, kernel_q=(3, 3), kernel_kv=(3, 3),
               stride_q=(2, 2), stride_kv=(2, 2), dim_mul_in_att=False):
    # TODO(synk): dim_mul_in_att=True (proj_attn branch) and cls-token handling
    #             are not implemented in this kernel.
    assert dim_mul_in_att is False
    out_dims = (dim,) * (depth - 1) + (dim_out,)
    builder = _SlabBuilder()
    kmetas = []
    cur_dim = dim
    hw = tuple(input_size)
    for i in range(depth):
        sq = tuple(stride_q) if i == 0 else (1, 1)
        att_dim = cur_dim
        q_shape = (hw[0] // sq[0], hw[1] // sq[1])
        kv_shape = (hw[0] // stride_kv[0], hw[1] // stride_kv[1])
        meta = {
            "dim": cur_dim, "dim_out": out_dims[i], "att_dim": att_dim,
            "num_heads": num_heads, "head_dim": att_dim // num_heads,
            "hidden": int(att_dim * mlp_ratio),
            "hw_in": hw, "n_in": hw[0] * hw[1],
            "q_shape": q_shape, "n_q": q_shape[0] * q_shape[1],
            "kv_shape": kv_shape, "n_kv": kv_shape[0] * kv_shape[1],
            "kernel_q": tuple(kernel_q), "kernel_kv": tuple(kernel_kv),
            "stride_q": sq, "stride_kv": tuple(stride_kv),
            "kkq": kernel_q[0] * kernel_q[1],
            "kkkv": kernel_kv[0] * kernel_kv[1],
            "has_pool_skip": math.prod(sq) > 1,
            "has_proj_mlp": cur_dim != out_dims[i],
        }
        if meta["has_pool_skip"]:
            kernel_skip = tuple(s + 1 if s > 1 else s for s in sq)
            meta["kernel_skip"] = kernel_skip
            meta["kks"] = kernel_skip[0] * kernel_skip[1]
        key, bk = jax.random.split(key)
        raw = _init_block_params(bk, meta)
        kmetas.append(_prepare_block(builder, f"b{i}_", raw, meta, batch))
        cur_dim = out_dims[i]
        hw = q_shape

    slab, layout = builder.finalize()
    return {
        "slab": slab, "layout": layout, "kmetas": kmetas, "batch": batch,
        "hw_in": tuple(input_size), "n_in": input_size[0] * input_size[1],
        "dim_in": dim, "hw_out": hw, "n_out": hw[0] * hw[1],
        "dim_out": out_dims[-1],
    }


def _estimate_cost(stage, x2):
    flops, trans = 0, 0
    for m in stage["kmetas"]:
        nq, nkv, nin = m["nq_bd"], m["nkv_bd"], m["n_in_bd"]
        dim, att = m["dim"], m["att_dim"]
        dh, nh = m["head_dim"], m["num_heads"]
        hid, dout = m["hidden"], m["dim_out"]
        f = 4 * nin * dim * dim                                     # norm1 MXU reductions
        f += m["kk_q"] * 2 * nq * (nin * dim + dim * 3 * att)       # pooled q(kv) matmuls
        if not m["shared_pool"]:
            f += m["kk_kv"] * 2 * nkv * (nin * dim + dim * 2 * att)
        f += 3 * 4 * nq * att * att                                 # pooled LayerNorms
        f += nh * 2 * nq * (4 * dh * nkv + dh * att)                # bias+scores+out+proj
        f += 2 * nq * (att * hid + hid * dout)                      # MLP
        if m["has_pool_skip"]:
            f += m["kk_skip"] * 2 * nq * nin * dim
        if m["has_proj_mlp"]:
            f += 2 * nq * att * dout
        flops += f
        trans += nq * hid + nh * nq * nkv
    nbytes = 4 * (x2.size + stage["slab"].size
                  + stage["batch"] * stage["n_out"] * stage["dim_out"])
    return int(flops), int(trans), int(nbytes)


def multiscale_vit_stage_forward(x, hw_shape, stage):
    b, n, c = x.shape
    assert b == stage["batch"] and n == stage["n_in"] and c == stage["dim_in"]
    assert tuple(hw_shape) == stage["hw_in"]
    x2 = x.reshape(b * n, c)                       # batch folded into rows (free reshape)
    slab = stage["slab"]
    nq_out, dout = stage["n_out"], stage["dim_out"]

    flops, trans, nbytes = _estimate_cost(stage, x2)
    out = pl.pallas_call(
        _make_stage_kernel(stage["kmetas"], stage["layout"]),
        out_shape=jax.ShapeDtypeStruct((b * nq_out, dout), x.dtype),
        grid=(1,),
        in_specs=[pl.BlockSpec((b * n, c), lambda i: (0, 0)),
                  pl.BlockSpec(slab.shape, lambda i: (0, 0))],
        out_specs=pl.BlockSpec((b * nq_out, dout), lambda i: (0, 0)),
        compiler_params=pltpu.CompilerParams(dimension_semantics=("arbitrary",)),
        cost_estimate=pl.CostEstimate(flops=flops, transcendentals=trans,
                                      bytes_accessed=nbytes),
    )(x2, slab)
    return out.reshape(b, nq_out, dout), stage["hw_out"]


# ----------------------------------------------------------------------------

if __name__ == "__main__":
    key = jax.random.PRNGKey(0)
    key, xk = jax.random.split(key)

    B, H, W, DIM, DIM_OUT = 2, 8, 8, 32, 64
    x = jax.random.normal(xk, (B, H * W, DIM), dtype=jnp.float32)   # (B, N, C), no cls token

    stage = make_stage(key, batch=B, dim=DIM, dim_out=DIM_OUT, depth=2,
                       num_heads=2, input_size=(H, W))
    out, hw = multiscale_vit_stage_forward(x, (H, W), stage)
    out = jax.block_until_ready(out)

    assert out.shape == (B, 16, DIM_OUT), out.shape
    assert tuple(hw) == (4, 4), hw
    assert bool(jnp.all(jnp.isfinite(out)))
    print("KERNEL_OK")
</pallas_src>

<mosaic_0001>
module attributes {stable_mosaic.version = 11 : i64} {
  func.func @kernel(%arg0: i32, %arg1: memref<128x32xf32, #tpu.memory_space<vmem>>, %arg2: memref<3176x128xf32, #tpu.memory_space<vmem>>, %arg3: memref<32x64xf32, #tpu.memory_space<vmem>>) attributes {dimension_semantics = [#tpu.dimension_semantics<arbitrary>], iteration_bounds = array<i64: 1>, scalar_prefetch = 0 : i64, scratch_operands = 0 : i64, tpu.core_type = #tpu.core_type<tc>, window_params = [{pipeline_mode = #tpu.pipeline_mode<synchronous>, transform_indices = @transform_0, window_bounds = array<i64: 128, 32>}, {pipeline_mode = #tpu.pipeline_mode<synchronous>, transform_indices = @transform_1, window_bounds = array<i64: 3176, 128>}, {pipeline_mode = #tpu.pipeline_mode<synchronous>, transform_indices = @transform_2, window_bounds = array<i64: 32, 64>}]} {
    %c0 = arith.constant 0 : index
    %c0_0 = arith.constant 0 : index
    %0 = vector.load %arg1[%c0, %c0_0] : memref<128x32xf32, #tpu.memory_space<vmem>>, vector<128x32xf32>
    %c608 = arith.constant 608 : index
    %c0_1 = arith.constant 0 : index
    %1 = vector.load %arg2[%c608, %c0_1] : memref<3176x128xf32, #tpu.memory_space<vmem>>, vector<1x32xf32>
    %c616 = arith.constant 616 : index
    %c0_2 = arith.constant 0 : index
    %2 = vector.load %arg2[%c616, %c0_2] : memref<3176x128xf32, #tpu.memory_space<vmem>>, vector<1x32xf32>
    %c624 = arith.constant 624 : index
    %c0_3 = arith.constant 0 : index
    %3 = vector.load %arg2[%c624, %c0_3] : memref<3176x128xf32, #tpu.memory_space<vmem>>, vector<32x32xf32>
    %cst = arith.constant dense<0.000000e+00> : vector<128x32xf32>
    %4 = tpu.matmul %0, %3, %cst {dimension_numbers = #tpu.dot_dimension_numbers<[1], [0], [0], [1], [0, 0, 1, 1], [], []>} : vector<128x32xf32>, vector<32x32xf32>, vector<128x32xf32> -> vector<128x32xf32>
    %5 = arith.mulf %0, %0 : vector<128x32xf32>
    %cst_4 = arith.constant dense<0.000000e+00> : vector<128x32xf32>
    %6 = tpu.matmul %5, %3, %cst_4 {dimension_numbers = #tpu.dot_dimension_numbers<[1], [0], [0], [1], [0, 0, 1, 1], [], []>} : vector<128x32xf32>, vector<32x32xf32>, vector<128x32xf32> -> vector<128x32xf32>
    %7 = arith.mulf %4, %4 : vector<128x32xf32>
    %8 = arith.subf %6, %7 : vector<128x32xf32>
    %cst_5 = arith.constant 0.000000e+00 : f32
    %9 = vector.broadcast %cst_5 : f32 to vector<128x32xf32>
    %10 = arith.maximumf %8, %9 : vector<128x32xf32>
    %11 = arith.subf %0, %4 : vector<128x32xf32>
    %cst_6 = arith.constant 9.99999974E-6 : f32
    %12 = vector.broadcast %cst_6 : f32 to vector<128x32xf32>
    %13 = arith.addf %10, %12 : vector<128x32xf32>
    %14 = math.rsqrt %13 : vector<128x32xf32>
    %15 = arith.mulf %11, %14 : vector<128x32xf32>
    %16 = vector.broadcast %1 : vector<1x32xf32> to vector<128x32xf32>
    %17 = arith.mulf %15, %16 : vector<128x32xf32>
    %18 = vector.broadcast %2 : vector<1x32xf32> to vector<128x32xf32>
    %19 = arith.addf %17, %18 : vector<128x32xf32>
    %c576 = arith.constant 576 : index
    %c0_7 = arith.constant 0 : index
    %20 = vector.load %arg2[%c576, %c0_7] : memref<3176x128xf32, #tpu.memory_space<vmem>>, vector<32x96xf32>
    %c0_8 = arith.constant 0 : index
    %c0_9 = arith.constant 0 : index
    %21 = vector.load %arg2[%c0_8, %c0_9] : memref<3176x128xf32, #tpu.memory_space<vmem>>, vector<32x128xf32>
    %cst_10 = arith.constant dense<0.000000e+00> : vector<32x32xf32>
    %22 = tpu.matmul %21, %19, %cst_10 {dimension_numbers = #tpu.dot_dimension_numbers<[1], [0], [0], [1], [0, 0, 1, 1], [], []>} : vector<32x128xf32>, vector<128x32xf32>, vector<32x32xf32> -> vector<32x32xf32>
    %c288 = arith.constant 288 : index
    %c0_11 = arith.constant 0 : index
    %23 = vector.load %arg2[%c288, %c0_11] : memref<3176x128xf32, #tpu.memory_space<vmem>>, vector<32x96xf32>
    %cst_12 = arith.constant dense<0.000000e+00> : vector<32x96xf32>
    %24 = tpu.matmul %22, %23, %cst_12 {dimension_numbers = #tpu.dot_dimension_numbers<[1], [0], [0], [1], [0, 0, 1, 1], [], []>} : vector<32x32xf32>, vector<32x96xf32>, vector<32x96xf32> -> vector<32x96xf32>
    %25 = arith.addf %20, %24 : vector<32x96xf32>
    %c32 = arith.constant 32 : index
    %c0_13 = arith.constant 0 : index
    %26 = vector.load %arg2[%c32, %c0_13] : memref<3176x128xf32, #tpu.memory_space<vmem>>, vector<32x128xf32>
    %cst_14 = arith.constant dense<0.000000e+00> : vector<32x32xf32>
    %27 = tpu.matmul %26, %19, %cst_14 {dimension_numbers = #tpu.dot_dimension_numbers<[1], [0], [0], [1], [0, 0, 1, 1], [], []>} : vector<32x128xf32>, vector<128x32xf32>, vector<32x32xf32> -> vector<32x32xf32>
    %c320 = arith.constant 320 : index
    %c0_15 = arith.constant 0 : index
    %28 = vector.load %arg2[%c320, %c0_15] : memref<3176x128xf32, #tpu.memory_space<vmem>>, vector<32x96xf32>
    %cst_16 = arith.constant dense<0.000000e+00> : vector<32x96xf32>
    %29 = tpu.matmul %27, %28, %cst_16 {dimension_numbers = #tpu.dot_dimension_numbers<[1], [0], [0], [1], [0, 0, 1, 1], [], []>} : vector<32x32xf32>, vector<32x96xf32>, vector<32x96xf32> -> vector<32x96xf32>
    %30 = arith.addf %25, %29 : vector<32x96xf32>
    %c64 = arith.constant 64 : index
    %c0_17 = arith.constant 0 : index
    %31 = vector.load %arg2[%c64, %c0_17] : memref<3176x128xf32, #tpu.memory_space<vmem>>, vector<32x128xf32>
    %cst_18 = arith.constant dense<0.000000e+00> : vector<32x32xf32>
    %32 = tpu.matmul %31, %19, %cst_18 {dimension_numbers = #tpu.dot_dimension_numbers<[1], [0], [0], [1], [0, 0, 1, 1], [], []>} : vector<32x128xf32>, vector<128x32xf32>, vector<32x32xf32> -> vector<32x32xf32>
    %c352 = arith.constant 352 : index
    %c0_19 = arith.constant 0 : index
    %33 = vector.load %arg2[%c352, %c0_19] : memref<3176x128xf32, #tpu.memory_space<vmem>>, vector<32x96xf32>
    %cst_20 = arith.constant dense<0.000000e+00> : vector<32x96xf32>
    %34 = tpu.matmul %32, %33, %cst_20 {dimension_numbers = #tpu.dot_dimension_numbers<[1], [0], [0], [1], [0, 0, 1, 1], [], []>} : vector<32x32xf32>, vector<32x96xf32>, vector<32x96xf32> -> vector<32x96xf32>
    %35 = arith.addf %30, %34 : vector<32x96xf32>
    %c96 = arith.constant 96 : index
    %c0_21 = arith.constant 0 : index
    %36 = vector.load %arg2[%c96, %c0_21] : memref<3176x128xf32, #tpu.memory_space<vmem>>, vector<32x128xf32>
    %cst_22 = arith.constant dense<0.000000e+00> : vector<32x32xf32>
    %37 = tpu.matmul %36, %19, %cst_22 {dimension_numbers = #tpu.dot_dimension_numbers<[1], [0], [0], [1], [0, 0, 1, 1], [], []>} : vector<32x128xf32>, vector<128x32xf32>, vector<32x32xf32> -> vector<32x32xf32>
    %c384 = arith.constant 384 : index
    %c0_23 = arith.constant 0 : index
    %38 = vector.load %arg2[%c384, %c0_23] : memref<3176x128xf32, #tpu.memory_space<vmem>>, vector<32x96xf32>
    %cst_24 = arith.constant dense<0.000000e+00> : vector<32x96xf32>
    %39 = tpu.matmul %37, %38, %cst_24 {dimension_numbers = #tpu.dot_dimension_numbers<[1], [0], [0], [1], [0, 0, 1, 1], [], []>} : vector<32x32xf32>, vector<32x96xf32>, vector<32x96xf32> -> vector<32x96xf32>
    %40 = arith.addf %35, %39 : vector<32x96xf32>
    %c128 = arith.constant 128 : index
    %c0_25 = arith.constant 0 : index
    %41 = vector.load %arg2[%c128, %c0_25] : memref<3176x128xf32, #tpu.memory_space<vmem>>, vector<32x128xf32>
    %cst_26 = arith.constant dense<0.000000e+00> : vector<32x32xf32>
    %42 = tpu.matmul %41, %19, %cst_26 {dimension_numbers = #tpu.dot_dimension_numbers<[1], [0], [0], [1], [0, 0, 1, 1], [], []>} : vector<32x128xf32>, vector<128x32xf32>, vector<32x32xf32> -> vector<32x32xf32>
    %c416 = arith.constant 416 : index
    %c0_27 = arith.constant 0 : index
    %43 = vector.load %arg2[%c416, %c0_27] : memref<3176x128xf32, #tpu.memory_space<vmem>>, vector<32x96xf32>
    %cst_28 = arith.constant dense<0.000000e+00> : vector<32x96xf32>
    %44 = tpu.matmul %42, %43, %cst_28 {dimension_numbers = #tpu.dot_dimension_numbers<[1], [0], [0], [1], [0, 0, 1, 1], [], []>} : vector<32x32xf32>, vector<32x96xf32>, vector<32x96xf32> -> vector<32x96xf32>
    %45 = arith.addf %40, %44 : vector<32x96xf32>
    %c160 = arith.constant 160 : index
    %c0_29 = arith.constant 0 : index
    %46 = vector.load %arg2[%c160, %c0_29] : memref<3176x128xf32, #tpu.memory_space<vmem>>, vector<32x128xf32>
    %cst_30 = arith.constant dense<0.000000e+00> : vector<32x32xf32>
    %47 = tpu.matmul %46, %19, %cst_30 {dimension_numbers = #tpu.dot_dimension_numbers<[1], [0], [0], [1], [0, 0, 1, 1], [], []>} : vector<32x128xf32>, vector<128x32xf32>, vector<32x32xf32> -> vector<32x32xf32>
    %c448 = arith.constant 448 : index
    %c0_31 = arith.constant 0 : index
    %48 = vector.load %arg2[%c448, %c0_31] : memref<3176x128xf32, #tpu.memory_space<vmem>>, vector<32x96xf32>
    %cst_32 = arith.constant dense<0.000000e+00> : vector<32x96xf32>
    %49 = tpu.matmul %47, %48, %cst_32 {dimension_numbers = #tpu.dot_dimension_numbers<[1], [0], [0], [1], [0, 0, 1, 1], [], []>} : vector<32x32xf32>, vector<32x96xf32>, vector<32x96xf32> -> vector<32x96xf32>
    %50 = arith.addf %45, %49 : vector<32x96xf32>
    %c192 = arith.constant 192 : index
    %c0_33 = arith.constant 0 : index
    %51 = vector.load %arg2[%c192, %c0_33] : memref<3176x128xf32, #tpu.memory_space<vmem>>, vector<32x128xf32>
    %cst_34 = arith.constant dense<0.000000e+00> : vector<32x32xf32>
    %52 = tpu.matmul %51, %19, %cst_34 {dimension_numbers = #tpu.dot_dimension_numbers<[1], [0], [0], [1], [0, 0, 1, 1], [], []>} : vector<32x128xf32>, vector<128x32xf32>, vector<32x32xf32> -> vector<32x32xf32>
    %c480 = arith.constant 480 : index
    %c0_35 = arith.constant 0 : index
    %53 = vector.load %arg2[%c480, %c0_35] : memref<3176x128xf32, #tpu.memory_space<vmem>>, vector<32x96xf32>
    %cst_36 = arith.constant dense<0.000000e+00> : vector<32x96xf32>
    %54 = tpu.matmul %52, %53, %cst_36 {dimension_numbers = #tpu.dot_dimension_numbers<[1], [0], [0], [1], [0, 0, 1, 1], [], []>} : vector<32x32xf32>, vector<32x96xf32>, vector<32x96xf32> -> vector<32x96xf32>
    %55 = arith.addf %50, %54 : vector<32x96xf32>
    %c224 = arith.constant 224 : index
    %c0_37 = arith.constant 0 : index
    %56 = vector.load %arg2[%c224, %c0_37] : memref<3176x128xf32, #tpu.memory_space<vmem>>, vector<32x128xf32>
    %cst_38 = arith.constant dense<0.000000e+00> : vector<32x32xf32>
    %57 = tpu.matmul %56, %19, %cst_38 {dimension_numbers = #tpu.dot_dimension_numbers<[1], [0], [0], [1], [0, 0, 1, 1], [], []>} : vector<32x128xf32>, vector<128x32xf32>, vector<32x32xf32> -> vector<32x32xf32>
    %c512 = arith.constant 512 : index
    %c0_39 = arith.constant 0 : index
    %58 = vector.load %arg2[%c512, %c0_39] : memref<3176x128xf32, #tpu.memory_space<vmem>>, vector<32x96xf32>
    %cst_40 = arith.constant dense<0.000000e+00> : vector<32x96xf32>
    %59 = tpu.matmul %57, %58, %cst_40 {dimension_numbers = #tpu.dot_dimension_numbers<[1], [0], [0], [1], [0, 0, 1, 1], [], []>} : vector<32x32xf32>, vector<32x96xf32>, vector<32x96xf32> -> vector<32x96xf32>
    %60 = arith.addf %55, %59 : vector<32x96xf32>
    %c256 = arith.constant 256 : index
    %c0_41 = arith.constant 0 : index
    %61 = vector.load %arg2[%c256, %c0_41] : memref<3176x128xf32, #tpu.memory_space<vmem>>, vector<32x128xf32>
    %cst_42 = arith.constant dense<0.000000e+00> : vector<32x32xf32>
    %62 = tpu.matmul %61, %19, %cst_42 {dimension_numbers = #tpu.dot_dimension_numbers<[1], [0], [0], [1], [0, 0, 1, 1], [], []>} : vector<32x128xf32>, vector<128x32xf32>, vector<32x32xf32> -> vector<32x32xf32>
    %c544 = arith.constant 544 : index
    %c0_43 = arith.constant 0 : index
    %63 = vector.load %arg2[%c544, %c0_43] : memref<3176x128xf32, #tpu.memory_space<vmem>>, vector<32x96xf32>
    %cst_44 = arith.constant dense<0.000000e+00> : vector<32x96xf32>
    %64 = tpu.matmul %62, %63, %cst_44 {dimension_numbers = #tpu.dot_dimension_numbers<[1], [0], [0], [1], [0, 0, 1, 1], [], []>} : vector<32x32xf32>, vector<32x96xf32>, vector<32x96xf32> -> vector<32x96xf32>
    %65 = arith.addf %60, %64 : vector<32x96xf32>
    %66 = vector.extract_strided_slice %65 {offsets = [0, 0], sizes = [32, 32], strides = [1, 1]} : vector<32x96xf32> to vector<32x32xf32>
    %67 = vector.extract_strided_slice %65 {offsets = [0, 32], sizes = [32, 32], strides = [1, 1]} : vector<32x96xf32> to vector<32x32xf32>
    %68 = vector.extract_strided_slice %65 {offsets = [0, 64], sizes = [32, 32], strides = [1, 1]} : vector<32x96xf32> to vector<32x32xf32>
    %c688 = arith.constant 688 : index
    %c0_45 = arith.constant 0 : index
    %69 = vector.load %arg2[%c688, %c0_45] : memref<3176x128xf32, #tpu.memory_space<vmem>>, vector<32x32xf32>
    %c720 = arith.constant 720 : index
    %c0_46 = arith.constant 0 : index
    %70 = vector.load %arg2[%c720, %c0_46] : memref<3176x128xf32, #tpu.memory_space<vmem>>, vector<1x32xf32>
    %c728 = arith.constant 728 : index
    %c0_47 = arith.constant 0 : index
    %71 = vector.load %arg2[%c728, %c0_47] : memref<3176x128xf32, #tpu.memory_space<vmem>>, vector<1x32xf32>
    %cst_48 = arith.constant dense<0.000000e+00> : vector<32x32xf32>
    %72 = tpu.matmul %66, %69, %cst_48 {dimension_numbers = #tpu.dot_dimension_numbers<[1], [0], [0], [1], [0, 0, 1, 1], [], []>} : vector<32x32xf32>, vector<32x32xf32>, vector<32x32xf32> -> vector<32x32xf32>
    %73 = arith.mulf %66, %66 : vector<32x32xf32>
    %cst_49 = arith.constant dense<0.000000e+00> : vector<32x32xf32>
    %74 = tpu.matmul %73, %69, %cst_49 {dimension_numbers = #tpu.dot_dimension_numbers<[1], [0], [0], [1], [0, 0, 1, 1], [], []>} : vector<32x32xf32>, vector<32x32xf32>, vector<32x32xf32> -> vector<32x32xf32>
    %75 = arith.mulf %72, %72 : vector<32x32xf32>
    %76 = arith.subf %74, %75 : vector<32x32xf32>
    %cst_50 = arith.constant 0.000000e+00 : f32
    %77 = vector.broadcast %cst_50 : f32 to vector<32x32xf32>
    %78 = arith.maximumf %76, %77 : vector<32x32xf32>
    %79 = arith.subf %66, %72 : vector<32x32xf32>
    %cst_51 = arith.constant 9.99999974E-6 : f32
    %80 = vector.broadcast %cst_51 : f32 to vector<32x32xf32>
    %81 = arith.addf %78, %80 : vector<32x32xf32>
    %82 = math.rsqrt %81 : vector<32x32xf32>
    %83 = arith.mulf %79, %82 : vector<32x32xf32>
    %84 = vector.broadcast %70 : vector<1x32xf32> to vector<32x32xf32>
    %85 = arith.mulf %83, %84 : vector<32x32xf32>
    %86 = vector.broadcast %71 : vector<1x32xf32> to vector<32x32xf32>
    %87 = arith.addf %85, %86 : vector<32x32xf32>
    %c736 = arith.constant 736 : index
    %c0_52 = arith.constant 0 : index
    %88 = vector.load %arg2[%c736, %c0_52] : memref<3176x128xf32, #tpu.memory_space<vmem>>, vector<1x32xf32>
    %c744 = arith.constant 744 : index
    %c0_53 = arith.constant 0 : index
    %89 = vector.load %arg2[%c744, %c0_53] : memref<3176x128xf32, #tpu.memory_space<vmem>>, vector<1x32xf32>
    %cst_54 = arith.constant dense<0.000000e+00> : vector<32x32xf32>
    %90 = tpu.matmul %67, %69, %cst_54 {dimension_numbers = #tpu.dot_dimension_numbers<[1], [0], [0], [1], [0, 0, 1, 1], [], []>} : vector<32x32xf32>, vector<32x32xf32>, vector<32x32xf32> -> vector<32x32xf32>
    %91 = arith.mulf %67, %67 : vector<32x32xf32>
    %cst_55 = arith.constant dense<0.000000e+00> : vector<32x32xf32>
    %92 = tpu.matmul %91, %69, %cst_55 {dimension_numbers = #tpu.dot_dimension_numbers<[1], [0], [0], [1], [0, 0, 1, 1], [], []>} : vector<32x32xf32>, vector<32x32xf32>, vector<32x32xf32> -> vector<32x32xf32>
    %93 = arith.mulf %90, %90 : vector<32x32xf32>
    %94 = arith.subf %92, %93 : vector<32x32xf32>
    %cst_56 = arith.constant 0.000000e+00 : f32
    %95 = vector.broadcast %cst_56 : f32 to vector<32x32xf32>
    %96 = arith.maximumf %94, %95 : vector<32x32xf32>
    %97 = arith.subf %67, %90 : vector<32x32xf32>
    %cst_57 = arith.constant 9.99999974E-6 : f32
    %98 = vector.broadcast %cst_57 : f32 to vector<32x32xf32>
    %99 = arith.addf %96, %98 : vector<32x32xf32>
    %100 = math.rsqrt %99 : vector<32x32xf32>
    %101 = arith.mulf %97, %100 : vector<32x32xf32>
    %102 = vector.broadcast %88 : vector<1x32xf32> to vector<32x32xf32>
    %103 = arith.mulf %101, %102 : vector<32x32xf32>
    %104 = vector.broadcast %89 : vector<1x32xf32> to vector<32x32xf32>
    %105 = arith.addf %103, %104 : vector<32x32xf32>
    %c752 = arith.constant 752 : index
    %c0_58 = arith.constant 0 : index
    %106 = vector.load %arg2[%c752, %c0_58] : memref<3176x128xf32, #tpu.memory_space<vmem>>, vector<1x32xf32>
    %c760 = arith.constant 760 : index
    %c0_59 = arith.constant 0 : index
    %107 = vector.load %arg2[%c760, %c0_59] : memref<3176x128xf32, #tpu.memory_space<vmem>>, vector<1x32xf32>
    %cst_60 = arith.constant dense<0.000000e+00> : vector<32x32xf32>
    %108 = tpu.matmul %68, %69, %cst_60 {dimension_numbers = #tpu.dot_dimension_numbers<[1], [0], [0], [1], [0, 0, 1, 1], [], []>} : vector<32x32xf32>, vector<32x32xf32>, vector<32x32xf32> -> vector<32x32xf32>
    %109 = arith.mulf %68, %68 : vector<32x32xf32>
    %cst_61 = arith.constant dense<0.000000e+00> : vector<32x32xf32>
    %110 = tpu.matmul %109, %69, %cst_61 {dimension_numbers = #tpu.dot_dimension_numbers<[1], [0], [0], [1], [0, 0, 1, 1], [], []>} : vector<32x32xf32>, vector<32x32xf32>, vector<32x32xf32> -> vector<32x32xf32>
    %111 = arith.mulf %108, %108 : vector<32x32xf32>
    %112 = arith.subf %110, %111 : vector<32x32xf32>
    %cst_62 = arith.constant 0.000000e+00 : f32
    %113 = vector.broadcast %cst_62 : f32 to vector<32x32xf32>
    %114 = arith.maximumf %112, %113 : vector<32x32xf32>
    %115 = arith.subf %68, %108 : vector<32x32xf32>
    %cst_63 = arith.constant 9.99999974E-6 : f32
    %116 = vector.broadcast %cst_63 : f32 to vector<32x32xf32>
    %117 = arith.addf %114, %116 : vector<32x32xf32>
    %118 = math.rsqrt %117 : vector<32x32xf32>
    %119 = arith.mulf %115, %118 : vector<32x32xf32>
    %120 = vector.broadcast %106 : vector<1x32xf32> to vector<32x32xf32>
    %121 = arith.mulf %119, %120 : vector<32x32xf32>
    %122 = vector.broadcast %107 : vector<1x32xf32> to vector<32x32xf32>
    %123 = arith.addf %121, %122 : vector<32x32xf32>
    %c768 = arith.constant 768 : index
    %c0_64 = arith.constant 0 : index
    %124 = vector.load %arg2[%c768, %c0_64] : memref<3176x128xf32, #tpu.memory_space<vmem>>, vector<16x64xf32>
    %c784 = arith.constant 784 : index
    %c0_65 = arith.constant 0 : index
    %125 = vector.load %arg2[%c784, %c0_65] : memref<3176x128xf32, #tpu.memory_space<vmem>>, vector<32x64xf32>
    %c816 = arith.constant 816 : index
    %c0_66 = arith.constant 0 : index
    %126 = vector.load %arg2[%c816, %c0_66] : memref<3176x128xf32, #tpu.memory_space<vmem>>, vector<64x32xf32>
    %c880 = arith.constant 880 : index
    %c0_67 = arith.constant 0 : index
    %127 = vector.load %arg2[%c880, %c0_67] : memref<3176x128xf32, #tpu.memory_space<vmem>>, vector<16x64xf32>
    %c896 = arith.constant 896 : index
    %c0_68 = arith.constant 0 : index
    %128 = vector.load %arg2[%c896, %c0_68] : memref<3176x128xf32, #tpu.memory_space<vmem>>, vector<32x64xf32>
    %c928 = arith.constant 928 : index
    %c0_69 = arith.constant 0 : index
    %129 = vector.load %arg2[%c928, %c0_69] : memref<3176x128xf32, #tpu.memory_space<vmem>>, vector<64x32xf32>
    %c992 = arith.constant 992 : index
    %c0_70 = arith.constant 0 : index
    %130 = vector.load %arg2[%c992, %c0_70] : memref<3176x128xf32, #tpu.memory_space<vmem>>, vector<32x32xf32>
    %c1056 = arith.constant 1056 : index
    %c0_71 = arith.constant 0 : index
    %131 = vector.load %arg2[%c1056, %c0_71] : memref<3176x128xf32, #tpu.memory_space<vmem>>, vector<1x32xf32>
    %132 = vector.extract_strided_slice %87 {offsets = [0, 0], sizes = [32, 16], strides = [1, 1]} : vector<32x32xf32> to vector<32x16xf32>
    %133 = vector.extract_strided_slice %105 {offsets = [0, 0], sizes = [32, 16], strides = [1, 1]} : vector<32x32xf32> to vector<32x16xf32>
    %134 = vector.extract_strided_slice %123 {offsets = [0, 0], sizes = [32, 16], strides = [1, 1]} : vector<32x32xf32> to vector<32x16xf32>
    %cst_72 = arith.constant dense<0.000000e+00> : vector<32x64xf32>
    %135 = tpu.matmul %132, %124, %cst_72 {dimension_numbers = #tpu.dot_dimension_numbers<[1], [0], [0], [1], [0, 0, 1, 1], [], []>} : vector<32x16xf32>, vector<16x64xf32>, vector<32x64xf32> -> vector<32x64xf32>
    %136 = arith.mulf %135, %125 : vector<32x64xf32>
    %cst_73 = arith.constant dense<0.000000e+00> : vector<32x32xf32>
    %137 = tpu.matmul %136, %126, %cst_73 {dimension_numbers = #tpu.dot_dimension_numbers<[1], [0], [0], [1], [0, 0, 1, 1], [], []>} : vector<32x64xf32>, vector<64x32xf32>, vector<32x32xf32> -> vector<32x32xf32>
    %cst_74 = arith.constant dense<0.000000e+00> : vector<32x64xf32>
    %138 = tpu.matmul %132, %127, %cst_74 {dimension_numbers = #tpu.dot_dimension_numbers<[1], [0], [0], [1], [0, 0, 1, 1], [], []>} : vector<32x16xf32>, vector<16x64xf32>, vector<32x64xf32> -> vector<32x64xf32>
    %139 = arith.mulf %138, %128 : vector<32x64xf32>
    %cst_75 = arith.constant dense<0.000000e+00> : vector<32x32xf32>
    %140 = tpu.matmul %139, %129, %cst_75 {dimension_numbers = #tpu.dot_dimension_numbers<[1], [0], [0], [1], [0, 0, 1, 1], [], []>} : vector<32x64xf32>, vector<64x32xf32>, vector<32x32xf32> -> vector<32x32xf32>
    %141 = arith.addf %137, %140 : vector<32x32xf32>
    %cst_76 = arith.constant dense<0.000000e+00> : vector<32x32xf32>
    %142 = tpu.matmul %132, %133, %cst_76 {dimension_numbers = #tpu.dot_dimension_numbers<[1], [1], [0], [0], [0, 0, 1, 0], [], []>} : vector<32x16xf32>, vector<32x16xf32>, vector<32x32xf32> -> vector<32x32xf32>
    %143 = arith.addf %142, %141 : vector<32x32xf32>
    %144 = arith.addf %143, %130 : vector<32x32xf32>
    %cst_77 = arith.constant dense<0xFF800000> : vector<32xf32>
    %145 = vector.multi_reduction <maximumf>, %144, %cst_77 [1] : vector<32x32xf32> to vector<32xf32>
    %146 = vector.shape_cast %145 : vector<32xf32> to vector<32x1xf32>
    %147 = vector.broadcast %146 : vector<32x1xf32> to vector<32x32xf32>
    %148 = arith.subf %144, %147 : vector<32x32xf32>
    %149 = math.exp %148 : vector<32x32xf32>
    %cst_78 = arith.constant dense<0.000000e+00> : vector<32xf32>
    %150 = vector.multi_reduction <add>, %149, %cst_78 [1] : vector<32x32xf32> to vector<32xf32>
    %151 = vector.shape_cast %150 : vector<32xf32> to vector<32x1xf32>
    %152 = tpu.reciprocal %151 {approx = true} : vector<32x1xf32> -> vector<32x1xf32>
    %153 = vector.broadcast %152 : vector<32x1xf32> to vector<32x32xf32>
    %154 = arith.mulf %149, %153 : vector<32x32xf32>
    %cst_79 = arith.constant dense<0.000000e+00> : vector<32x16xf32>
    %155 = tpu.matmul %154, %134, %cst_79 {dimension_numbers = #tpu.dot_dimension_numbers<[1], [0], [0], [1], [0, 0, 1, 1], [], []>} : vector<32x32xf32>, vector<32x16xf32>, vector<32x16xf32> -> vector<32x16xf32>
    %156 = arith.addf %155, %132 : vector<32x16xf32>
    %c1024 = arith.constant 1024 : index
    %c0_80 = arith.constant 0 : index
    %157 = vector.load %arg2[%c1024, %c0_80] : memref<3176x128xf32, #tpu.memory_space<vmem>>, vector<16x32xf32>
    %cst_81 = arith.constant dense<0.000000e+00> : vector<32x32xf32>
    %158 = tpu.matmul %156, %157, %cst_81 {dimension_numbers = #tpu.dot_dimension_numbers<[1], [0], [0], [1], [0, 0, 1, 1], [], []>} : vector<32x16xf32>, vector<16x32xf32>, vector<32x32xf32> -> vector<32x32xf32>
    %159 = vector.broadcast %131 : vector<1x32xf32> to vector<32x32xf32>
    %160 = arith.addf %159, %158 : vector<32x32xf32>
    %161 = vector.extract_strided_slice %87 {offsets = [0, 16], sizes = [32, 16], strides = [1, 1]} : vector<32x32xf32> to vector<32x16xf32>
    %162 = vector.extract_strided_slice %105 {offsets = [0, 16], sizes = [32, 16], strides = [1, 1]} : vector<32x32xf32> to vector<32x16xf32>
    %163 = vector.extract_strided_slice %123 {offsets = [0, 16], sizes = [32, 16], strides = [1, 1]} : vector<32x32xf32> to vector<32x16xf32>
    %cst_82 = arith.constant dense<0.000000e+00> : vector<32x64xf32>
    %164 = tpu.matmul %161, %124, %cst_82 {dimension_numbers = #tpu.dot_dimension_numbers<[1], [0], [0], [1], [0, 0, 1, 1], [], []>} : vector<32x16xf32>, vector<16x64xf32>, vector<32x64xf32> -> vector<32x64xf32>
    %165 = arith.mulf %164, %125 : vector<32x64xf32>
    %cst_83 = arith.constant dense<0.000000e+00> : vector<32x32xf32>
    %166 = tpu.matmul %165, %126, %cst_83 {dimension_numbers = #tpu.dot_dimension_numbers<[1], [0], [0], [1], [0, 0, 1, 1], [], []>} : vector<32x64xf32>, vector<64x32xf32>, vector<32x32xf32> -> vector<32x32xf32>
    %cst_84 = arith.constant dense<0.000000e+00> : vector<32x64xf32>
    %167 = tpu.matmul %161, %127, %cst_84 {dimension_numbers = #tpu.dot_dimension_numbers<[1], [0], [0], [1], [0, 0, 1, 1], [], []>} : vector<32x16xf32>, vector<16x64xf32>, vector<32x64xf32> -> vector<32x64xf32>
    %168 = arith.mulf %167, %128 : vector<32x64xf32>
    %cst_85 = arith.constant dense<0.000000e+00> : vector<32x32xf32>
    %169 = tpu.matmul %168, %129, %cst_85 {dimension_numbers = #tpu.dot_dimension_numbers<[1], [0], [0], [1], [0, 0, 1, 1], [], []>} : vector<32x64xf32>, vector<64x32xf32>, vector<32x32xf32> -> vector<32x32xf32>
    %170 = arith.addf %166, %169 : vector<32x32xf32>
    %cst_86 = arith.constant dense<0.000000e+00> : vector<32x32xf32>
    %171 = tpu.matmul %161, %162, %cst_86 {dimension_numbers = #tpu.dot_dimension_numbers<[1], [1], [0], [0], [0, 0, 1, 0], [], []>} : vector<32x16xf32>, vector<32x16xf32>, vector<32x32xf32> -> vector<32x32xf32>
    %172 = arith.addf %171, %170 : vector<32x32xf32>
    %173 = arith.addf %172, %130 : vector<32x32xf32>
    %cst_87 = arith.constant dense<0xFF800000> : vector<32xf32>
    %174 = vector.multi_reduction <maximumf>, %173, %cst_87 [1] : vector<32x32xf32> to vector<32xf32>
    %175 = vector.shape_cast %174 : vector<32xf32> to vector<32x1xf32>
    %176 = vector.broadcast %175 : vector<32x1xf32> to vector<32x32xf32>
    %177 = arith.subf %173, %176 : vector<32x32xf32>
    %178 = math.exp %177 : vector<32x32xf32>
    %cst_88 = arith.constant dense<0.000000e+00> : vector<32xf32>
    %179 = vector.multi_reduction <add>, %178, %cst_88 [1] : vector<32x32xf32> to vector<32xf32>
    %180 = vector.shape_cast %179 : vector<32xf32> to vector<32x1xf32>
    %181 = tpu.reciprocal %180 {approx = true} : vector<32x1xf32> -> vector<32x1xf32>
    %182 = vector.broadcast %181 : vector<32x1xf32> to vector<32x32xf32>
    %183 = arith.mulf %178, %182 : vector<32x32xf32>
    %cst_89 = arith.constant dense<0.000000e+00> : vector<32x16xf32>
    %184 = tpu.matmul %183, %163, %cst_89 {dimension_numbers = #tpu.dot_dimension_numbers<[1], [0], [0], [1], [0, 0, 1, 1], [], []>} : vector<32x32xf32>, vector<32x16xf32>, vector<32x16xf32> -> vector<32x16xf32>
    %185 = arith.addf %184, %161 : vector<32x16xf32>
    %c1040 = arith.constant 1040 : index
    %c0_90 = arith.constant 0 : index
    %186 = vector.load %arg2[%c1040, %c0_90] : memref<3176x128xf32, #tpu.memory_space<vmem>>, vector<16x32xf32>
    %cst_91 = arith.constant dense<0.000000e+00> : vector<32x32xf32>
    %187 = tpu.matmul %185, %186, %cst_91 {dimension_numbers = #tpu.dot_dimension_numbers<[1], [0], [0], [1], [0, 0, 1, 1], [], []>} : vector<32x16xf32>, vector<16x32xf32>, vector<32x32xf32> -> vector<32x32xf32>
    %188 = arith.addf %160, %187 : vector<32x32xf32>
    %c1352 = arith.constant 1352 : index
    %c0_92 = arith.constant 0 : index
    %189 = vector.load %arg2[%c1352, %c0_92] : memref<3176x128xf32, #tpu.memory_space<vmem>>, vector<32x9xf32>
    %c1064 = arith.constant 1064 : index
    %c0_93 = arith.constant 0 : index
    %190 = vector.load %arg2[%c1064, %c0_93] : memref<3176x128xf32, #tpu.memory_space<vmem>>, vector<32x128xf32>
    %cst_94 = arith.constant dense<0.000000e+00> : vector<32x32xf32>
    %191 = tpu.matmul %190, %0, %cst_94 {dimension_numbers = #tpu.dot_dimension_numbers<[1], [0], [0], [1], [0, 0, 1, 1], [], []>} : vector<32x128xf32>, vector<128x32xf32>, vector<32x32xf32> -> vector<32x32xf32>
    %192 = vector.extract_strided_slice %189 {offsets = [0, 0], sizes = [32, 1], strides = [1, 1]} : vector<32x9xf32> to vector<32x1xf32>
    %193 = vector.broadcast %192 : vector<32x1xf32> to vector<32x32xf32>
    %194 = arith.addf %191, %193 : vector<32x32xf32>
    %c1096 = arith.constant 1096 : index
    %c0_95 = arith.constant 0 : index
    %195 = vector.load %arg2[%c1096, %c0_95] : memref<3176x128xf32, #tpu.memory_space<vmem>>, vector<32x128xf32>
    %cst_96 = arith.constant dense<0.000000e+00> : vector<32x32xf32>
    %196 = tpu.matmul %195, %0, %cst_96 {dimension_numbers = #tpu.dot_dimension_numbers<[1], [0], [0], [1], [0, 0, 1, 1], [], []>} : vector<32x128xf32>, vector<128x32xf32>, vector<32x32xf32> -> vector<32x32xf32>
    %197 = vector.extract_strided_slice %189 {offsets = [0, 1], sizes = [32, 1], strides = [1, 1]} : vector<32x9xf32> to vector<32x1xf32>
    %198 = vector.broadcast %197 : vector<32x1xf32> to vector<32x32xf32>
    %199 = arith.addf %196, %198 : vector<32x32xf32>
    %200 = arith.maximumf %194, %199 : vector<32x32xf32>
    %c1128 = arith.constant 1128 : index
    %c0_97 = arith.constant 0 : index
    %201 = vector.load %arg2[%c1128, %c0_97] : memref<3176x128xf32, #tpu.memory_space<vmem>>, vector<32x128xf32>
    %cst_98 = arith.constant dense<0.000000e+00> : vector<32x32xf32>
    %202 = tpu.matmul %201, %0, %cst_98 {dimension_numbers = #tpu.dot_dimension_numbers<[1], [0], [0], [1], [0, 0, 1, 1], [], []>} : vector<32x128xf32>, vector<128x32xf32>, vector<32x32xf32> -> vector<32x32xf32>
    %203 = vector.extract_strided_slice %189 {offsets = [0, 2], sizes = [32, 1], strides = [1, 1]} : vector<32x9xf32> to vector<32x1xf32>
    %204 = vector.broadcast %203 : vector<32x1xf32> to vector<32x32xf32>
    %205 = arith.addf %202, %204 : vector<32x32xf32>
    %206 = arith.maximumf %200, %205 : vector<32x32xf32>
    %c1160 = arith.constant 1160 : index
    %c0_99 = arith.constant 0 : index
    %207 = vector.load %arg2[%c1160, %c0_99] : memref<3176x128xf32, #tpu.memory_space<vmem>>, vector<32x128xf32>
    %cst_100 = arith.constant dense<0.000000e+00> : vector<32x32xf32>
    %208 = tpu.matmul %207, %0, %cst_100 {dimension_numbers = #tpu.dot_dimension_numbers<[1], [0], [0], [1], [0, 0, 1, 1], [], []>} : vector<32x128xf32>, vector<128x32xf32>, vector<32x32xf32> -> vector<32x32xf32>
    %209 = vector.extract_strided_slice %189 {offsets = [0, 3], sizes = [32, 1], strides = [1, 1]} : vector<32x9xf32> to vector<32x1xf32>
    %210 = vector.broadcast %209 : vector<32x1xf32> to vector<32x32xf32>
    %211 = arith.addf %208, %210 : vector<32x32xf32>
    %212 = arith.maximumf %206, %211 : vector<32x32xf32>
    %c1192 = arith.constant 1192 : index
    %c0_101 = arith.constant 0 : index
    %213 = vector.load %arg2[%c1192, %c0_101] : memref<3176x128xf32, #tpu.memory_space<vmem>>, vector<32x128xf32>
    %cst_102 = arith.constant dense<0.000000e+00> : vector<32x32xf32>
    %214 = tpu.matmul %213, %0, %cst_102 {dimension_numbers = #tpu.dot_dimension_numbers<[1], [0], [0], [1], [0, 0, 1, 1], [], []>} : vector<32x128xf32>, vector<128x32xf32>, vector<32x32xf32> -> vector<32x32xf32>
    %215 = vector.extract_strided_slice %189 {offsets = [0, 4], sizes = [32, 1], strides = [1, 1]} : vector<32x9xf32> to vector<32x1xf32>
    %216 = vector.broadcast %215 : vector<32x1xf32> to vector<32x32xf32>
    %217 = arith.addf %214, %216 : vector<32x32xf32>
    %218 = arith.maximumf %212, %217 : vector<32x32xf32>
    %c1224 = arith.constant 1224 : index
    %c0_103 = arith.constant 0 : index
    %219 = vector.load %arg2[%c1224, %c0_103] : memref<3176x128xf32, #tpu.memory_space<vmem>>, vector<32x128xf32>
    %cst_104 = arith.constant dense<0.000000e+00> : vector<32x32xf32>
    %220 = tpu.matmul %219, %0, %cst_104 {dimension_numbers = #tpu.dot_dimension_numbers<[1], [0], [0], [1], [0, 0, 1, 1], [], []>} : vector<32x128xf32>, vector<128x32xf32>, vector<32x32xf32> -> vector<32x32xf32>
    %221 = vector.extract_strided_slice %189 {offsets = [0, 5], sizes = [32, 1], strides = [1, 1]} : vector<32x9xf32> to vector<32x1xf32>
    %222 = vector.broadcast %221 : vector<32x1xf32> to vector<32x32xf32>
    %223 = arith.addf %220, %222 : vector<32x32xf32>
    %224 = arith.maximumf %218, %223 : vector<32x32xf32>
    %c1256 = arith.constant 1256 : index
    %c0_105 = arith.constant 0 : index
    %225 = vector.load %arg2[%c1256, %c0_105] : memref<3176x128xf32, #tpu.memory_space<vmem>>, vector<32x128xf32>
    %cst_106 = arith.constant dense<0.000000e+00> : vector<32x32xf32>
    %226 = tpu.matmul %225, %0, %cst_106 {dimension_numbers = #tpu.dot_dimension_numbers<[1], [0], [0], [1], [0, 0, 1, 1], [], []>} : vector<32x128xf32>, vector<128x32xf32>, vector<32x32xf32> -> vector<32x32xf32>
    %227 = vector.extract_strided_slice %189 {offsets = [0, 6], sizes = [32, 1], strides = [1, 1]} : vector<32x9xf32> to vector<32x1xf32>
    %228 = vector.broadcast %227 : vector<32x1xf32> to vector<32x32xf32>
    %229 = arith.addf %226, %228 : vector<32x32xf32>
    %230 = arith.maximumf %224, %229 : vector<32x32xf32>
    %c1288 = arith.constant 1288 : index
    %c0_107 = arith.constant 0 : index
    %231 = vector.load %arg2[%c1288, %c0_107] : memref<3176x128xf32, #tpu.memory_space<vmem>>, vector<32x128xf32>
    %cst_108 = arith.constant dense<0.000000e+00> : vector<32x32xf32>
    %232 = tpu.matmul %231, %0, %cst_108 {dimension_numbers = #tpu.dot_dimension_numbers<[1], [0], [0], [1], [0, 0, 1, 1], [], []>} : vector<32x128xf32>, vector<128x32xf32>, vector<32x32xf32> -> vector<32x32xf32>
    %233 = vector.extract_strided_slice %189 {offsets = [0, 7], sizes = [32, 1], strides = [1, 1]} : vector<32x9xf32> to vector<32x1xf32>
    %234 = vector.broadcast %233 : vector<32x1xf32> to vector<32x32xf32>
    %235 = arith.addf %232, %234 : vector<32x32xf32>
    %236 = arith.maximumf %230, %235 : vector<32x32xf32>
    %c1320 = arith.constant 1320 : index
    %c0_109 = arith.constant 0 : index
    %237 = vector.load %arg2[%c1320, %c0_109] : memref<3176x128xf32, #tpu.memory_space<vmem>>, vector<32x128xf32>
    %cst_110 = arith.constant dense<0.000000e+00> : vector<32x32xf32>
    %238 = tpu.matmul %237, %0, %cst_110 {dimension_numbers = #tpu.dot_dimension_numbers<[1], [0], [0], [1], [0, 0, 1, 1], [], []>} : vector<32x128xf32>, vector<128x32xf32>, vector<32x32xf32> -> vector<32x32xf32>
    %239 = vector.extract_strided_slice %189 {offsets = [0, 8], sizes = [32, 1], strides = [1, 1]} : vector<32x9xf32> to vector<32x1xf32>
    %240 = vector.broadcast %239 : vector<32x1xf32> to vector<32x32xf32>
    %241 = arith.addf %238, %240 : vector<32x32xf32>
    %242 = arith.maximumf %236, %241 : vector<32x32xf32>
    %243 = arith.addf %242, %188 : vector<32x32xf32>
    %c1384 = arith.constant 1384 : index
    %c0_111 = arith.constant 0 : index
    %244 = vector.load %arg2[%c1384, %c0_111] : memref<3176x128xf32, #tpu.memory_space<vmem>>, vector<1x32xf32>
    %c1392 = arith.constant 1392 : index
    %c0_112 = arith.constant 0 : index
    %245 = vector.load %arg2[%c1392, %c0_112] : memref<3176x128xf32, #tpu.memory_space<vmem>>, vector<1x32xf32>
    %c656 = arith.constant 656 : index
    %c0_113 = arith.constant 0 : index
    %246 = vector.load %arg2[%c656, %c0_113] : memref<3176x128xf32, #tpu.memory_space<vmem>>, vector<32x32xf32>
    %cst_114 = arith.constant dense<0.000000e+00> : vector<32x32xf32>
    %247 = tpu.matmul %243, %246, %cst_114 {dimension_numbers = #tpu.dot_dimension_numbers<[1], [0], [0], [1], [0, 0, 1, 1], [], []>} : vector<32x32xf32>, vector<32x32xf32>, vector<32x32xf32> -> vector<32x32xf32>
    %248 = arith.mulf %243, %243 : vector<32x32xf32>
    %cst_115 = arith.constant dense<0.000000e+00> : vector<32x32xf32>
    %249 = tpu.matmul %248, %246, %cst_115 {dimension_numbers = #tpu.dot_dimension_numbers<[1], [0], [0], [1], [0, 0, 1, 1], [], []>} : vector<32x32xf32>, vector<32x32xf32>, vector<32x32xf32> -> vector<32x32xf32>
    %250 = arith.mulf %247, %247 : vector<32x32xf32>
    %251 = arith.subf %249, %250 : vector<32x32xf32>
    %cst_116 = arith.constant 0.000000e+00 : f32
    %252 = vector.broadcast %cst_116 : f32 to vector<32x32xf32>
    %253 = arith.maximumf %251, %252 : vector<32x32xf32>
    %254 = arith.subf %243, %247 : vector<32x32xf32>
    %cst_117 = arith.constant 9.99999974E-6 : f32
    %255 = vector.broadcast %cst_117 : f32 to vector<32x32xf32>
    %256 = arith.addf %253, %255 : vector<32x32xf32>
    %257 = math.rsqrt %256 : vector<32x32xf32>
    %258 = arith.mulf %254, %257 : vector<32x32xf32>
    %259 = vector.broadcast %244 : vector<1x32xf32> to vector<32x32xf32>
    %260 = arith.mulf %258, %259 : vector<32x32xf32>
    %261 = vector.broadcast %245 : vector<1x32xf32> to vector<32x32xf32>
    %262 = arith.addf %260, %261 : vector<32x32xf32>
    %c1400 = arith.constant 1400 : index
    %c0_118 = arith.constant 0 : index
    %263 = vector.load %arg2[%c1400, %c0_118] : memref<3176x128xf32, #tpu.memory_space<vmem>>, vector<32x128xf32>
    %cst_119 = arith.constant dense<0.000000e+00> : vector<32x128xf32>
    %264 = tpu.matmul %262, %263, %cst_119 {dimension_numbers = #tpu.dot_dimension_numbers<[1], [0], [0], [1], [0, 0, 1, 1], [], []>} : vector<32x32xf32>, vector<32x128xf32>, vector<32x128xf32> -> vector<32x128xf32>
    %c1432 = arith.constant 1432 : index
    %c0_120 = arith.constant 0 : index
    %265 = vector.load %arg2[%c1432, %c0_120] : memref<3176x128xf32, #tpu.memory_space<vmem>>, vector<1x128xf32>
    %266 = vector.broadcast %265 : vector<1x128xf32> to vector<32x128xf32>
    %267 = arith.addf %264, %266 : vector<32x128xf32>
    %cst_121 = arith.constant 0.707106769 : f32
    %268 = vector.broadcast %cst_121 : f32 to vector<32x128xf32>
    %269 = arith.mulf %267, %268 : vector<32x128xf32>
    %270 = math.absf %269 : vector<32x128xf32>
    %cst_122 = arith.constant 0.327591091 : f32
    %271 = vector.broadcast %cst_122 : f32 to vector<32x128xf32>
    %272 = arith.mulf %271, %270 : vector<32x128xf32>
    %cst_123 = arith.constant 1.000000e+00 : f32
    %273 = vector.broadcast %cst_123 : f32 to vector<32x128xf32>
    %274 = arith.addf %273, %272 : vector<32x128xf32>
    %cst_124 = arith.constant 1.000000e+00 : f32
    %275 = vector.broadcast %cst_124 : f32 to vector<32x128xf32>
    %276 = arith.divf %275, %274 : vector<32x128xf32>
    %cst_125 = arith.constant 1.06140542 : f32
    %277 = vector.broadcast %cst_125 : f32 to vector<32x128xf32>
    %278 = arith.mulf %277, %276 : vector<32x128xf32>
    %cst_126 = arith.constant 1.45315206 : f32
    %279 = vector.broadcast %cst_126 : f32 to vector<32x128xf32>
    %280 = arith.subf %278, %279 : vector<32x128xf32>
    %281 = arith.mulf %280, %276 : vector<32x128xf32>
    %cst_127 = arith.constant 1.42141378 : f32
    %282 = vector.broadcast %cst_127 : f32 to vector<32x128xf32>
    %283 = arith.addf %281, %282 : vector<32x128xf32>
    %284 = arith.mulf %283, %276 : vector<32x128xf32>
    %cst_128 = arith.constant 0.284496725 : f32
    %285 = vector.broadcast %cst_128 : f32 to vector<32x128xf32>
    %286 = arith.subf %284, %285 : vector<32x128xf32>
    %287 = arith.mulf %286, %276 : vector<32x128xf32>
    %cst_129 = arith.constant 0.254829586 : f32
    %288 = vector.broadcast %cst_129 : f32 to vector<32x128xf32>
    %289 = arith.addf %287, %288 : vector<32x128xf32>
    %290 = arith.mulf %289, %276 : vector<32x128xf32>
    %cst_130 = arith.constant 0.000000e+00 : f32
    %291 = vector.broadcast %cst_130 : f32 to vector<32x128xf32>
    %292 = arith.subf %291, %270 : vector<32x128xf32>
    %293 = arith.mulf %292, %270 : vector<32x128xf32>
    %294 = math.exp %293 : vector<32x128xf32>
    %295 = arith.mulf %290, %294 : vector<32x128xf32>
    %cst_131 = arith.constant 1.000000e+00 : f32
    %296 = vector.broadcast %cst_131 : f32 to vector<32x128xf32>
    %297 = arith.subf %296, %295 : vector<32x128xf32>
    %cst_132 = arith.constant 0.000000e+00 : f32
    %298 = vector.broadcast %cst_132 : f32 to vector<32x128xf32>
    %299 = arith.cmpf olt, %269, %298 : vector<32x128xf32>
    %cst_133 = arith.constant 0.000000e+00 : f32
    %300 = vector.broadcast %cst_133 : f32 to vector<32x128xf32>
    %301 = arith.subf %300, %297 : vector<32x128xf32>
    %302 = arith.select %299, %301, %297 : vector<32x128xi1>, vector<32x128xf32>
    %cst_134 = arith.constant 5.000000e-01 : f32
    %303 = vector.broadcast %cst_134 : f32 to vector<32x128xf32>
    %304 = arith.mulf %303, %267 : vector<32x128xf32>
    %cst_135 = arith.constant 1.000000e+00 : f32
    %305 = vector.broadcast %cst_135 : f32 to vector<32x128xf32>
    %306 = arith.addf %305, %302 : vector<32x128xf32>
    %307 = arith.mulf %304, %306 : vector<32x128xf32>
    %c1440 = arith.constant 1440 : index
    %c0_136 = arith.constant 0 : index
    %308 = vector.load %arg2[%c1440, %c0_136] : memref<3176x128xf32, #tpu.memory_space<vmem>>, vector<128x32xf32>
    %cst_137 = arith.constant dense<0.000000e+00> : vector<32x32xf32>
    %309 = tpu.matmul %307, %308, %cst_137 {dimension_numbers = #tpu.dot_dimension_numbers<[1], [0], [0], [1], [0, 0, 1, 1], [], []>} : vector<32x128xf32>, vector<128x32xf32>, vector<32x32xf32> -> vector<32x32xf32>
    %c1568 = arith.constant 1568 : index
    %c0_138 = arith.constant 0 : index
    %310 = vector.load %arg2[%c1568, %c0_138] : memref<3176x128xf32, #tpu.memory_space<vmem>>, vector<1x32xf32>
    %311 = vector.broadcast %310 : vector<1x32xf32> to vector<32x32xf32>
    %312 = arith.addf %309, %311 : vector<32x32xf32>
    %313 = arith.addf %243, %312 : vector<32x32xf32>
    %c2552 = arith.constant 2552 : index
    %c0_139 = arith.constant 0 : index
    %314 = vector.load %arg2[%c2552, %c0_139] : memref<3176x128xf32, #tpu.memory_space<vmem>>, vector<1x32xf32>
    %c2560 = arith.constant 2560 : index
    %c0_140 = arith.constant 0 : index
    %315 = vector.load %arg2[%c2560, %c0_140] : memref<3176x128xf32, #tpu.memory_space<vmem>>, vector<1x32xf32>
    %c2568 = arith.constant 2568 : index
    %c0_141 = arith.constant 0 : index
    %316 = vector.load %arg2[%c2568, %c0_141] : memref<3176x128xf32, #tpu.memory_space<vmem>>, vector<32x32xf32>
    %cst_142 = arith.constant dense<0.000000e+00> : vector<32x32xf32>
    %317 = tpu.matmul %313, %316, %cst_142 {dimension_numbers = #tpu.dot_dimension_numbers<[1], [0], [0], [1], [0, 0, 1, 1], [], []>} : vector<32x32xf32>, vector<32x32xf32>, vector<32x32xf32> -> vector<32x32xf32>
    %318 = arith.mulf %313, %313 : vector<32x32xf32>
    %cst_143 = arith.constant dense<0.000000e+00> : vector<32x32xf32>
    %319 = tpu.matmul %318, %316, %cst_143 {dimension_numbers = #tpu.dot_dimension_numbers<[1], [0], [0], [1], [0, 0, 1, 1], [], []>} : vector<32x32xf32>, vector<32x32xf32>, vector<32x32xf32> -> vector<32x32xf32>
    %320 = arith.mulf %317, %317 : vector<32x32xf32>
    %321 = arith.subf %319, %320 : vector<32x32xf32>
    %cst_144 = arith.constant 0.000000e+00 : f32
    %322 = vector.broadcast %cst_144 : f32 to vector<32x32xf32>
    %323 = arith.maximumf %321, %322 : vector<32x32xf32>
    %324 = arith.subf %313, %317 : vector<32x32xf32>
    %cst_145 = arith.constant 9.99999974E-6 : f32
    %325 = vector.broadcast %cst_145 : f32 to vector<32x32xf32>
    %326 = arith.addf %323, %325 : vector<32x32xf32>
    %327 = math.rsqrt %326 : vector<32x32xf32>
    %328 = arith.mulf %324, %327 : vector<32x32xf32>
    %329 = vector.broadcast %314 : vector<1x32xf32> to vector<32x32xf32>
    %330 = arith.mulf %328, %329 : vector<32x32xf32>
    %331 = vector.broadcast %315 : vector<1x32xf32> to vector<32x32xf32>
    %332 = arith.addf %330, %331 : vector<32x32xf32>
    %c2224 = arith.constant 2224 : index
    %c0_146 = arith.constant 0 : index
    %333 = vector.load %arg2[%c2224, %c0_146] : memref<3176x128xf32, #tpu.memory_space<vmem>>, vector<32x32xf32>
    %c1576 = arith.constant 1576 : index
    %c0_147 = arith.constant 0 : index
    %334 = vector.load %arg2[%c1576, %c0_147] : memref<3176x128xf32, #tpu.memory_space<vmem>>, vector<32x32xf32>
    %cst_148 = arith.constant dense<0.000000e+00> : vector<32x32xf32>
    %335 = tpu.matmul %334, %332, %cst_148 {dimension_numbers = #tpu.dot_dimension_numbers<[1], [0], [0], [1], [0, 0, 1, 1], [], []>} : vector<32x32xf32>, vector<32x32xf32>, vector<32x32xf32> -> vector<32x32xf32>
    %c1936 = arith.constant 1936 : index
    %c0_149 = arith.constant 0 : index
    %336 = vector.load %arg2[%c1936, %c0_149] : memref<3176x128xf32, #tpu.memory_space<vmem>>, vector<32x32xf32>
    %cst_150 = arith.constant dense<0.000000e+00> : vector<32x32xf32>
    %337 = tpu.matmul %335, %336, %cst_150 {dimension_numbers = #tpu.dot_dimension_numbers<[1], [0], [0], [1], [0, 0, 1, 1], [], []>} : vector<32x32xf32>, vector<32x32xf32>, vector<32x32xf32> -> vector<32x32xf32>
    %338 = arith.addf %333, %337 : vector<32x32xf32>
    %c1608 = arith.constant 1608 : index
    %c0_151 = arith.constant 0 : index
    %339 = vector.load %arg2[%c1608, %c0_151] : memref<3176x128xf32, #tpu.memory_space<vmem>>, vector<32x32xf32>
    %cst_152 = arith.constant dense<0.000000e+00> : vector<32x32xf32>
    %340 = tpu.matmul %339, %332, %cst_152 {dimension_numbers = #tpu.dot_dimension_numbers<[1], [0], [0], [1], [0, 0, 1, 1], [], []>} : vector<32x32xf32>, vector<32x32xf32>, vector<32x32xf32> -> vector<32x32xf32>
    %c1968 = arith.constant 1968 : index
    %c0_153 = arith.constant 0 : index
    %341 = vector.load %arg2[%c1968, %c0_153] : memref<3176x128xf32, #tpu.memory_space<vmem>>, vector<32x32xf32>
    %cst_154 = arith.constant dense<0.000000e+00> : vector<32x32xf32>
    %342 = tpu.matmul %340, %341, %cst_154 {dimension_numbers = #tpu.dot_dimension_numbers<[1], [0], [0], [1], [0, 0, 1, 1], [], []>} : vector<32x32xf32>, vector<32x32xf32>, vector<32x32xf32> -> vector<32x32xf32>
    %343 = arith.addf %338, %342 : vector<32x32xf32>
    %c1640 = arith.constant 1640 : index
    %c0_155 = arith.constant 0 : index
    %344 = vector.load %arg2[%c1640, %c0_155] : memref<3176x128xf32, #tpu.memory_space<vmem>>, vector<32x32xf32>
    %cst_156 = arith.constant dense<0.000000e+00> : vector<32x32xf32>
    %345 = tpu.matmul %344, %332, %cst_156 {dimension_numbers = #tpu.dot_dimension_numbers<[1], [0], [0], [1], [0, 0, 1, 1], [], []>} : vector<32x32xf32>, vector<32x32xf32>, vector<32x32xf32> -> vector<32x32xf32>
    %c2000 = arith.constant 2000 : index
    %c0_157 = arith.constant 0 : index
    %346 = vector.load %arg2[%c2000, %c0_157] : memref<3176x128xf32, #tpu.memory_space<vmem>>, vector<32x32xf32>
    %cst_158 = arith.constant dense<0.000000e+00> : vector<32x32xf32>
    %347 = tpu.matmul %345, %346, %cst_158 {dimension_numbers = #tpu.dot_dimension_numbers<[1], [0], [0], [1], [0, 0, 1, 1], [], []>} : vector<32x32xf32>, vector<32x32xf32>, vector<32x32xf32> -> vector<32x32xf32>
    %348 = arith.addf %343, %347 : vector<32x32xf32>
    %c1672 = arith.constant 1672 : index
    %c0_159 = arith.constant 0 : index
    %349 = vector.load %arg2[%c1672, %c0_159] : memref<3176x128xf32, #tpu.memory_space<vmem>>, vector<32x32xf32>
    %cst_160 = arith.constant dense<0.000000e+00> : vector<32x32xf32>
    %350 = tpu.matmul %349, %332, %cst_160 {dimension_numbers = #tpu.dot_dimension_numbers<[1], [0], [0], [1], [0, 0, 1, 1], [], []>} : vector<32x32xf32>, vector<32x32xf32>, vector<32x32xf32> -> vector<32x32xf32>
    %c2032 = arith.constant 2032 : index
    %c0_161 = arith.constant 0 : index
    %351 = vector.load %arg2[%c2032, %c0_161] : memref<3176x128xf32, #tpu.memory_space<vmem>>, vector<32x32xf32>
    %cst_162 = arith.constant dense<0.000000e+00> : vector<32x32xf32>
    %352 = tpu.matmul %350, %351, %cst_162 {dimension_numbers = #tpu.dot_dimension_numbers<[1], [0], [0], [1], [0, 0, 1, 1], [], []>} : vector<32x32xf32>, vector<32x32xf32>, vector<32x32xf32> -> vector<32x32xf32>
    %353 = arith.addf %348, %352 : vector<32x32xf32>
    %c1704 = arith.constant 1704 : index
    %c0_163 = arith.constant 0 : index
    %354 = vector.load %arg2[%c1704, %c0_163] : memref<3176x128xf32, #tpu.memory_space<vmem>>, vector<32x32xf32>
    %cst_164 = arith.constant dense<0.000000e+00> : vector<32x32xf32>
    %355 = tpu.matmul %354, %332, %cst_164 {dimension_numbers = #tpu.dot_dimension_numbers<[1], [0], [0], [1], [0, 0, 1, 1], [], []>} : vector<32x32xf32>, vector<32x32xf32>, vector<32x32xf32> -> vector<32x32xf32>
    %c2064 = arith.constant 2064 : index
    %c0_165 = arith.constant 0 : index
    %356 = vector.load %arg2[%c2064, %c0_165] : memref<3176x128xf32, #tpu.memory_space<vmem>>, vector<32x32xf32>
    %cst_166 = arith.constant dense<0.000000e+00> : vector<32x32xf32>
    %357 = tpu.matmul %355, %356, %cst_166 {dimension_numbers = #tpu.dot_dimension_numbers<[1], [0], [0], [1], [0, 0, 1, 1], [], []>} : vector<32x32xf32>, vector<32x32xf32>, vector<32x32xf32> -> vector<32x32xf32>
    %358 = arith.addf %353, %357 : vector<32x32xf32>
    %c1736 = arith.constant 1736 : index
    %c0_167 = arith.constant 0 : index
    %359 = vector.load %arg2[%c1736, %c0_167] : memref<3176x128xf32, #tpu.memory_space<vmem>>, vector<32x32xf32>
    %cst_168 = arith.constant dense<0.000000e+00> : vector<32x32xf32>
    %360 = tpu.matmul %359, %332, %cst_168 {dimension_numbers = #tpu.dot_dimension_numbers<[1], [0], [0], [1], [0, 0, 1, 1], [], []>} : vector<32x32xf32>, vector<32x32xf32>, vector<32x32xf32> -> vector<32x32xf32>
    %c2096 = arith.constant 2096 : index
    %c0_169 = arith.constant 0 : index
    %361 = vector.load %arg2[%c2096, %c0_169] : memref<3176x128xf32, #tpu.memory_space<vmem>>, vector<32x32xf32>
    %cst_170 = arith.constant dense<0.000000e+00> : vector<32x32xf32>
    %362 = tpu.matmul %360, %361, %cst_170 {dimension_numbers = #tpu.dot_dimension_numbers<[1], [0], [0], [1], [0, 0, 1, 1], [], []>} : vector<32x32xf32>, vector<32x32xf32>, vector<32x32xf32> -> vector<32x32xf32>
    %363 = arith.addf %358, %362 : vector<32x32xf32>
    %c1768 = arith.constant 1768 : index
    %c0_171 = arith.constant 0 : index
    %364 = vector.load %arg2[%c1768, %c0_171] : memref<3176x128xf32, #tpu.memory_space<vmem>>, vector<32x32xf32>
    %cst_172 = arith.constant dense<0.000000e+00> : vector<32x32xf32>
    %365 = tpu.matmul %364, %332, %cst_172 {dimension_numbers = #tpu.dot_dimension_numbers<[1], [0], [0], [1], [0, 0, 1, 1], [], []>} : vector<32x32xf32>, vector<32x32xf32>, vector<32x32xf32> -> vector<32x32xf32>
    %c2128 = arith.constant 2128 : index
    %c0_173 = arith.constant 0 : index
    %366 = vector.load %arg2[%c2128, %c0_173] : memref<3176x128xf32, #tpu.memory_space<vmem>>, vector<32x32xf32>
    %cst_174 = arith.constant dense<0.000000e+00> : vector<32x32xf32>
    %367 = tpu.matmul %365, %366, %cst_174 {dimension_numbers = #tpu.dot_dimension_numbers<[1], [0], [0], [1], [0, 0, 1, 1], [], []>} : vector<32x32xf32>, vector<32x32xf32>, vector<32x32xf32> -> vector<32x32xf32>
    %368 = arith.addf %363, %367 : vector<32x32xf32>
    %c1800 = arith.constant 1800 : index
    %c0_175 = arith.constant 0 : index
    %369 = vector.load %arg2[%c1800, %c0_175] : memref<3176x128xf32, #tpu.memory_space<vmem>>, vector<32x32xf32>
    %cst_176 = arith.constant dense<0.000000e+00> : vector<32x32xf32>
    %370 = tpu.matmul %369, %332, %cst_176 {dimension_numbers = #tpu.dot_dimension_numbers<[1], [0], [0], [1], [0, 0, 1, 1], [], []>} : vector<32x32xf32>, vector<32x32xf32>, vector<32x32xf32> -> vector<32x32xf32>
    %c2160 = arith.constant 2160 : index
    %c0_177 = arith.constant 0 : index
    %371 = vector.load %arg2[%c2160, %c0_177] : memref<3176x128xf32, #tpu.memory_space<vmem>>, vector<32x32xf32>
    %cst_178 = arith.constant dense<0.000000e+00> : vector<32x32xf32>
    %372 = tpu.matmul %370, %371, %cst_178 {dimension_numbers = #tpu.dot_dimension_numbers<[1], [0], [0], [1], [0, 0, 1, 1], [], []>} : vector<32x32xf32>, vector<32x32xf32>, vector<32x32xf32> -> vector<32x32xf32>
    %373 = arith.addf %368, %372 : vector<32x32xf32>
    %c1832 = arith.constant 1832 : index
    %c0_179 = arith.constant 0 : index
    %374 = vector.load %arg2[%c1832, %c0_179] : memref<3176x128xf32, #tpu.memory_space<vmem>>, vector<32x32xf32>
    %cst_180 = arith.constant dense<0.000000e+00> : vector<32x32xf32>
    %375 = tpu.matmul %374, %332, %cst_180 {dimension_numbers = #tpu.dot_dimension_numbers<[1], [0], [0], [1], [0, 0, 1, 1], [], []>} : vector<32x32xf32>, vector<32x32xf32>, vector<32x32xf32> -> vector<32x32xf32>
    %c2192 = arith.constant 2192 : index
    %c0_181 = arith.constant 0 : index
    %376 = vector.load %arg2[%c2192, %c0_181] : memref<3176x128xf32, #tpu.memory_space<vmem>>, vector<32x32xf32>
    %cst_182 = arith.constant dense<0.000000e+00> : vector<32x32xf32>
    %377 = tpu.matmul %375, %376, %cst_182 {dimension_numbers = #tpu.dot_dimension_numbers<[1], [0], [0], [1], [0, 0, 1, 1], [], []>} : vector<32x32xf32>, vector<32x32xf32>, vector<32x32xf32> -> vector<32x32xf32>
    %378 = arith.addf %373, %377 : vector<32x32xf32>
    %c2544 = arith.constant 2544 : index
    %c0_183 = arith.constant 0 : index
    %379 = vector.load %arg2[%c2544, %c0_183] : memref<3176x128xf32, #tpu.memory_space<vmem>>, vector<8x64xf32>
    %c1864 = arith.constant 1864 : index
    %c0_184 = arith.constant 0 : index
    %380 = vector.load %arg2[%c1864, %c0_184] : memref<3176x128xf32, #tpu.memory_space<vmem>>, vector<8x32xf32>
    %cst_185 = arith.constant dense<0.000000e+00> : vector<8x32xf32>
    %381 = tpu.matmul %380, %332, %cst_185 {dimension_numbers = #tpu.dot_dimension_numbers<[1], [0], [0], [1], [0, 0, 1, 1], [], []>} : vector<8x32xf32>, vector<32x32xf32>, vector<8x32xf32> -> vector<8x32xf32>
    %c2256 = arith.constant 2256 : index
    %c0_186 = arith.constant 0 : index
    %382 = vector.load %arg2[%c2256, %c0_186] : memref<3176x128xf32, #tpu.memory_space<vmem>>, vector<32x64xf32>
    %cst_187 = arith.constant dense<0.000000e+00> : vector<8x64xf32>
    %383 = tpu.matmul %381, %382, %cst_187 {dimension_numbers = #tpu.dot_dimension_numbers<[1], [0], [0], [1], [0, 0, 1, 1], [], []>} : vector<8x32xf32>, vector<32x64xf32>, vector<8x64xf32> -> vector<8x64xf32>
    %384 = arith.addf %379, %383 : vector<8x64xf32>
    %c1872 = arith.constant 1872 : index
    %c0_188 = arith.constant 0 : index
    %385 = vector.load %arg2[%c1872, %c0_188] : memref<3176x128xf32, #tpu.memory_space<vmem>>, vector<8x32xf32>
    %cst_189 = arith.constant dense<0.000000e+00> : vector<8x32xf32>
    %386 = tpu.matmul %385, %332, %cst_189 {dimension_numbers = #tpu.dot_dimension_numbers<[1], [0], [0], [1], [0, 0, 1, 1], [], []>} : vector<8x32xf32>, vector<32x32xf32>, vector<8x32xf32> -> vector<8x32xf32>
    %c2288 = arith.constant 2288 : index
    %c0_190 = arith.constant 0 : index
    %387 = vector.load %arg2[%c2288, %c0_190] : memref<3176x128xf32, #tpu.memory_space<vmem>>, vector<32x64xf32>
    %cst_191 = arith.constant dense<0.000000e+00> : vector<8x64xf32>
    %388 = tpu.matmul %386, %387, %cst_191 {dimension_numbers = #tpu.dot_dimension_numbers<[1], [0], [0], [1], [0, 0, 1, 1], [], []>} : vector<8x32xf32>, vector<32x64xf32>, vector<8x64xf32> -> vector<8x64xf32>
    %389 = arith.addf %384, %388 : vector<8x64xf32>
    %c1880 = arith.constant 1880 : index
    %c0_192 = arith.constant 0 : index
    %390 = vector.load %arg2[%c1880, %c0_192] : memref<3176x128xf32, #tpu.memory_space<vmem>>, vector<8x32xf32>
    %cst_193 = arith.constant dense<0.000000e+00> : vector<8x32xf32>
    %391 = tpu.matmul %390, %332, %cst_193 {dimension_numbers = #tpu.dot_dimension_numbers<[1], [0], [0], [1], [0, 0, 1, 1], [], []>} : vector<8x32xf32>, vector<32x32xf32>, vector<8x32xf32> -> vector<8x32xf32>
    %c2320 = arith.constant 2320 : index
    %c0_194 = arith.constant 0 : index
    %392 = vector.load %arg2[%c2320, %c0_194] : memref<3176x128xf32, #tpu.memory_space<vmem>>, vector<32x64xf32>
    %cst_195 = arith.constant dense<0.000000e+00> : vector<8x64xf32>
    %393 = tpu.matmul %391, %392, %cst_195 {dimension_numbers = #tpu.dot_dimension_numbers<[1], [0], [0], [1], [0, 0, 1, 1], [], []>} : vector<8x32xf32>, vector<32x64xf32>, vector<8x64xf32> -> vector<8x64xf32>
    %394 = arith.addf %389, %393 : vector<8x64xf32>
    %c1888 = arith.constant 1888 : index
    %c0_196 = arith.constant 0 : index
    %395 = vector.load %arg2[%c1888, %c0_196] : memref<3176x128xf32, #tpu.memory_space<vmem>>, vector<8x32xf32>
    %cst_197 = arith.constant dense<0.000000e+00> : vector<8x32xf32>
    %396 = tpu.matmul %395, %332, %cst_197 {dimension_numbers = #tpu.dot_dimension_numbers<[1], [0], [0], [1], [0, 0, 1, 1], [], []>} : vector<8x32xf32>, vector<32x32xf32>, vector<8x32xf32> -> vector<8x32xf32>
    %c2352 = arith.constant 2352 : index
    %c0_198 = arith.constant 0 : index
    %397 = vector.load %arg2[%c2352, %c0_198] : memref<3176x128xf32, #tpu.memory_space<vmem>>, vector<32x64xf32>
    %cst_199 = arith.constant dense<0.000000e+00> : vector<8x64xf32>
    %398 = tpu.matmul %396, %397, %cst_199 {dimension_numbers = #tpu.dot_dimension_numbers<[1], [0], [0], [1], [0, 0, 1, 1], [], []>} : vector<8x32xf32>, vector<32x64xf32>, vector<8x64xf32> -> vector<8x64xf32>
    %399 = arith.addf %394, %398 : vector<8x64xf32>
    %c1896 = arith.constant 1896 : index
    %c0_200 = arith.constant 0 : index
    %400 = vector.load %arg2[%c1896, %c0_200] : memref<3176x128xf32, #tpu.memory_space<vmem>>, vector<8x32xf32>
    %cst_201 = arith.constant dense<0.000000e+00> : vector<8x32xf32>
    %401 = tpu.matmul %400, %332, %cst_201 {dimension_numbers = #tpu.dot_dimension_numbers<[1], [0], [0], [1], [0, 0, 1, 1], [], []>} : vector<8x32xf32>, vector<32x32xf32>, vector<8x32xf32> -> vector<8x32xf32>
    %c2384 = arith.constant 2384 : index
    %c0_202 = arith.constant 0 : index
    %402 = vector.load %arg2[%c2384, %c0_202] : memref<3176x128xf32, #tpu.memory_space<vmem>>, vector<32x64xf32>
    %cst_203 = arith.constant dense<0.000000e+00> : vector<8x64xf32>
    %403 = tpu.matmul %401, %402, %cst_203 {dimension_numbers = #tpu.dot_dimension_numbers<[1], [0], [0], [1], [0, 0, 1, 1], [], []>} : vector<8x32xf32>, vector<32x64xf32>, vector<8x64xf32> -> vector<8x64xf32>
    %404 = arith.addf %399, %403 : vector<8x64xf32>
    %c1904 = arith.constant 1904 : index
    %c0_204 = arith.constant 0 : index
    %405 = vector.load %arg2[%c1904, %c0_204] : memref<3176x128xf32, #tpu.memory_space<vmem>>, vector<8x32xf32>
    %cst_205 = arith.constant dense<0.000000e+00> : vector<8x32xf32>
    %406 = tpu.matmul %405, %332, %cst_205 {dimension_numbers = #tpu.dot_dimension_numbers<[1], [0], [0], [1], [0, 0, 1, 1], [], []>} : vector<8x32xf32>, vector<32x32xf32>, vector<8x32xf32> -> vector<8x32xf32>
    %c2416 = arith.constant 2416 : index
    %c0_206 = arith.constant 0 : index
    %407 = vector.load %arg2[%c2416, %c0_206] : memref<3176x128xf32, #tpu.memory_space<vmem>>, vector<32x64xf32>
    %cst_207 = arith.constant dense<0.000000e+00> : vector<8x64xf32>
    %408 = tpu.matmul %406, %407, %cst_207 {dimension_numbers = #tpu.dot_dimension_numbers<[1], [0], [0], [1], [0, 0, 1, 1], [], []>} : vector<8x32xf32>, vector<32x64xf32>, vector<8x64xf32> -> vector<8x64xf32>
    %409 = arith.addf %404, %408 : vector<8x64xf32>
    %c1912 = arith.constant 1912 : index
    %c0_208 = arith.constant 0 : index
    %410 = vector.load %arg2[%c1912, %c0_208] : memref<3176x128xf32, #tpu.memory_space<vmem>>, vector<8x32xf32>
    %cst_209 = arith.constant dense<0.000000e+00> : vector<8x32xf32>
    %411 = tpu.matmul %410, %332, %cst_209 {dimension_numbers = #tpu.dot_dimension_numbers<[1], [0], [0], [1], [0, 0, 1, 1], [], []>} : vector<8x32xf32>, vector<32x32xf32>, vector<8x32xf32> -> vector<8x32xf32>
    %c2448 = arith.constant 2448 : index
    %c0_210 = arith.constant 0 : index
    %412 = vector.load %arg2[%c2448, %c0_210] : memref<3176x128xf32, #tpu.memory_space<vmem>>, vector<32x64xf32>
    %cst_211 = arith.constant dense<0.000000e+00> : vector<8x64xf32>
    %413 = tpu.matmul %411, %412, %cst_211 {dimension_numbers = #tpu.dot_dimension_numbers<[1], [0], [0], [1], [0, 0, 1, 1], [], []>} : vector<8x32xf32>, vector<32x64xf32>, vector<8x64xf32> -> vector<8x64xf32>
    %414 = arith.addf %409, %413 : vector<8x64xf32>
    %c1920 = arith.constant 1920 : index
    %c0_212 = arith.constant 0 : index
    %415 = vector.load %arg2[%c1920, %c0_212] : memref<3176x128xf32, #tpu.memory_space<vmem>>, vector<8x32xf32>
    %cst_213 = arith.constant dense<0.000000e+00> : vector<8x32xf32>
    %416 = tpu.matmul %415, %332, %cst_213 {dimension_numbers = #tpu.dot_dimension_numbers<[1], [0], [0], [1], [0, 0, 1, 1], [], []>} : vector<8x32xf32>, vector<32x32xf32>, vector<8x32xf32> -> vector<8x32xf32>
    %c2480 = arith.constant 2480 : index
    %c0_214 = arith.constant 0 : index
    %417 = vector.load %arg2[%c2480, %c0_214] : memref<3176x128xf32, #tpu.memory_space<vmem>>, vector<32x64xf32>
    %cst_215 = arith.constant dense<0.000000e+00> : vector<8x64xf32>
    %418 = tpu.matmul %416, %417, %cst_215 {dimension_numbers = #tpu.dot_dimension_numbers<[1], [0], [0], [1], [0, 0, 1, 1], [], []>} : vector<8x32xf32>, vector<32x64xf32>, vector<8x64xf32> -> vector<8x64xf32>
    %419 = arith.addf %414, %418 : vector<8x64xf32>
    %c1928 = arith.constant 1928 : index
    %c0_216 = arith.constant 0 : index
    %420 = vector.load %arg2[%c1928, %c0_216] : memref<3176x128xf32, #tpu.memory_space<vmem>>, vector<8x32xf32>
    %cst_217 = arith.constant dense<0.000000e+00> : vector<8x32xf32>
    %421 = tpu.matmul %420, %332, %cst_217 {dimension_numbers = #tpu.dot_dimension_numbers<[1], [0], [0], [1], [0, 0, 1, 1], [], []>} : vector<8x32xf32>, vector<32x32xf32>, vector<8x32xf32> -> vector<8x32xf32>
    %c2512 = arith.constant 2512 : index
    %c0_218 = arith.constant 0 : index
    %422 = vector.load %arg2[%c2512, %c0_218] : memref<3176x128xf32, #tpu.memory_space<vmem>>, vector<32x64xf32>
    %cst_219 = arith.constant dense<0.000000e+00> : vector<8x64xf32>
    %423 = tpu.matmul %421, %422, %cst_219 {dimension_numbers = #tpu.dot_dimension_numbers<[1], [0], [0], [1], [0, 0, 1, 1], [], []>} : vector<8x32xf32>, vector<32x64xf32>, vector<8x64xf32> -> vector<8x64xf32>
    %424 = arith.addf %419, %423 : vector<8x64xf32>
    %425 = vector.extract_strided_slice %424 {offsets = [0, 0], sizes = [8, 32], strides = [1, 1]} : vector<8x64xf32> to vector<8x32xf32>
    %426 = vector.extract_strided_slice %424 {offsets = [0, 32], sizes = [8, 32], strides = [1, 1]} : vector<8x64xf32> to vector<8x32xf32>
    %c2632 = arith.constant 2632 : index
    %c0_220 = arith.constant 0 : index
    %427 = vector.load %arg2[%c2632, %c0_220] : memref<3176x128xf32, #tpu.memory_space<vmem>>, vector<32x32xf32>
    %c2664 = arith.constant 2664 : index
    %c0_221 = arith.constant 0 : index
    %428 = vector.load %arg2[%c2664, %c0_221] : memref<3176x128xf32, #tpu.memory_space<vmem>>, vector<1x32xf32>
    %c2672 = arith.constant 2672 : index
    %c0_222 = arith.constant 0 : index
    %429 = vector.load %arg2[%c2672, %c0_222] : memref<3176x128xf32, #tpu.memory_space<vmem>>, vector<1x32xf32>
    %cst_223 = arith.constant dense<0.000000e+00> : vector<32x32xf32>
    %430 = tpu.matmul %378, %427, %cst_223 {dimension_numbers = #tpu.dot_dimension_numbers<[1], [0], [0], [1], [0, 0, 1, 1], [], []>} : vector<32x32xf32>, vector<32x32xf32>, vector<32x32xf32> -> vector<32x32xf32>
    %431 = arith.mulf %378, %378 : vector<32x32xf32>
    %cst_224 = arith.constant dense<0.000000e+00> : vector<32x32xf32>
    %432 = tpu.matmul %431, %427, %cst_224 {dimension_numbers = #tpu.dot_dimension_numbers<[1], [0], [0], [1], [0, 0, 1, 1], [], []>} : vector<32x32xf32>, vector<32x32xf32>, vector<32x32xf32> -> vector<32x32xf32>
    %433 = arith.mulf %430, %430 : vector<32x32xf32>
    %434 = arith.subf %432, %433 : vector<32x32xf32>
    %cst_225 = arith.constant 0.000000e+00 : f32
    %435 = vector.broadcast %cst_225 : f32 to vector<32x32xf32>
    %436 = arith.maximumf %434, %435 : vector<32x32xf32>
    %437 = arith.subf %378, %430 : vector<32x32xf32>
    %cst_226 = arith.constant 9.99999974E-6 : f32
    %438 = vector.broadcast %cst_226 : f32 to vector<32x32xf32>
    %439 = arith.addf %436, %438 : vector<32x32xf32>
    %440 = math.rsqrt %439 : vector<32x32xf32>
    %441 = arith.mulf %437, %440 : vector<32x32xf32>
    %442 = vector.broadcast %428 : vector<1x32xf32> to vector<32x32xf32>
    %443 = arith.mulf %441, %442 : vector<32x32xf32>
    %444 = vector.broadcast %429 : vector<1x32xf32> to vector<32x32xf32>
    %445 = arith.addf %443, %444 : vector<32x32xf32>
    %c2680 = arith.constant 2680 : index
    %c0_227 = arith.constant 0 : index
    %446 = vector.load %arg2[%c2680, %c0_227] : memref<3176x128xf32, #tpu.memory_space<vmem>>, vector<1x32xf32>
    %c2688 = arith.constant 2688 : index
    %c0_228 = arith.constant 0 : index
    %447 = vector.load %arg2[%c2688, %c0_228] : memref<3176x128xf32, #tpu.memory_space<vmem>>, vector<1x32xf32>
    %cst_229 = arith.constant dense<0.000000e+00> : vector<8x32xf32>
    %448 = tpu.matmul %425, %427, %cst_229 {dimension_numbers = #tpu.dot_dimension_numbers<[1], [0], [0], [1], [0, 0, 1, 1], [], []>} : vector<8x32xf32>, vector<32x32xf32>, vector<8x32xf32> -> vector<8x32xf32>
    %449 = arith.mulf %425, %425 : vector<8x32xf32>
    %cst_230 = arith.constant dense<0.000000e+00> : vector<8x32xf32>
    %450 = tpu.matmul %449, %427, %cst_230 {dimension_numbers = #tpu.dot_dimension_numbers<[1], [0], [0], [1], [0, 0, 1, 1], [], []>} : vector<8x32xf32>, vector<32x32xf32>, vector<8x32xf32> -> vector<8x32xf32>
    %451 = arith.mulf %448, %448 : vector<8x32xf32>
    %452 = arith.subf %450, %451 : vector<8x32xf32>
    %cst_231 = arith.constant 0.000000e+00 : f32
    %453 = vector.broadcast %cst_231 : f32 to vector<8x32xf32>
    %454 = arith.maximumf %452, %453 : vector<8x32xf32>
    %455 = arith.subf %425, %448 : vector<8x32xf32>
    %cst_232 = arith.constant 9.99999974E-6 : f32
    %456 = vector.broadcast %cst_232 : f32 to vector<8x32xf32>
    %457 = arith.addf %454, %456 : vector<8x32xf32>
    %458 = math.rsqrt %457 : vector<8x32xf32>
    %459 = arith.mulf %455, %458 : vector<8x32xf32>
    %460 = vector.broadcast %446 : vector<1x32xf32> to vector<8x32xf32>
    %461 = arith.mulf %459, %460 : vector<8x32xf32>
    %462 = vector.broadcast %447 : vector<1x32xf32> to vector<8x32xf32>
    %463 = arith.addf %461, %462 : vector<8x32xf32>
    %c2696 = arith.constant 2696 : index
    %c0_233 = arith.constant 0 : index
    %464 = vector.load %arg2[%c2696, %c0_233] : memref<3176x128xf32, #tpu.memory_space<vmem>>, vector<1x32xf32>
    %c2704 = arith.constant 2704 : index
    %c0_234 = arith.constant 0 : index
    %465 = vector.load %arg2[%c2704, %c0_234] : memref<3176x128xf32, #tpu.memory_space<vmem>>, vector<1x32xf32>
    %cst_235 = arith.constant dense<0.000000e+00> : vector<8x32xf32>
    %466 = tpu.matmul %426, %427, %cst_235 {dimension_numbers = #tpu.dot_dimension_numbers<[1], [0], [0], [1], [0, 0, 1, 1], [], []>} : vector<8x32xf32>, vector<32x32xf32>, vector<8x32xf32> -> vector<8x32xf32>
    %467 = arith.mulf %426, %426 : vector<8x32xf32>
    %cst_236 = arith.constant dense<0.000000e+00> : vector<8x32xf32>
    %468 = tpu.matmul %467, %427, %cst_236 {dimension_numbers = #tpu.dot_dimension_numbers<[1], [0], [0], [1], [0, 0, 1, 1], [], []>} : vector<8x32xf32>, vector<32x32xf32>, vector<8x32xf32> -> vector<8x32xf32>
    %469 = arith.mulf %466, %466 : vector<8x32xf32>
    %470 = arith.subf %468, %469 : vector<8x32xf32>
    %cst_237 = arith.constant 0.000000e+00 : f32
    %471 = vector.broadcast %cst_237 : f32 to vector<8x32xf32>
    %472 = arith.maximumf %470, %471 : vector<8x32xf32>
    %473 = arith.subf %426, %466 : vector<8x32xf32>
    %cst_238 = arith.constant 9.99999974E-6 : f32
    %474 = vector.broadcast %cst_238 : f32 to vector<8x32xf32>
    %475 = arith.addf %472, %474 : vector<8x32xf32>
    %476 = math.rsqrt %475 : vector<8x32xf32>
    %477 = arith.mulf %473, %476 : vector<8x32xf32>
    %478 = vector.broadcast %464 : vector<1x32xf32> to vector<8x32xf32>
    %479 = arith.mulf %477, %478 : vector<8x32xf32>
    %480 = vector.broadcast %465 : vector<1x32xf32> to vector<8x32xf32>
    %481 = arith.addf %479, %480 : vector<8x32xf32>
    %c2712 = arith.constant 2712 : index
    %c0_239 = arith.constant 0 : index
    %482 = vector.load %arg2[%c2712, %c0_239] : memref<3176x128xf32, #tpu.memory_space<vmem>>, vector<16x32xf32>
    %c2728 = arith.constant 2728 : index
    %c0_240 = arith.constant 0 : index
    %483 = vector.load %arg2[%c2728, %c0_240] : memref<3176x128xf32, #tpu.memory_space<vmem>>, vector<32x32xf32>
    %c2760 = arith.constant 2760 : index
    %c0_241 = arith.constant 0 : index
    %484 = vector.load %arg2[%c2760, %c0_241] : memref<3176x128xf32, #tpu.memory_space<vmem>>, vector<32x8xf32>
    %c2792 = arith.constant 2792 : index
    %c0_242 = arith.constant 0 : index
    %485 = vector.load %arg2[%c2792, %c0_242] : memref<3176x128xf32, #tpu.memory_space<vmem>>, vector<16x32xf32>
    %c2808 = arith.constant 2808 : index
    %c0_243 = arith.constant 0 : index
    %486 = vector.load %arg2[%c2808, %c0_243] : memref<3176x128xf32, #tpu.memory_space<vmem>>, vector<32x32xf32>
    %c2840 = arith.constant 2840 : index
    %c0_244 = arith.constant 0 : index
    %487 = vector.load %arg2[%c2840, %c0_244] : memref<3176x128xf32, #tpu.memory_space<vmem>>, vector<32x8xf32>
    %c2872 = arith.constant 2872 : index
    %c0_245 = arith.constant 0 : index
    %488 = vector.load %arg2[%c2872, %c0_245] : memref<3176x128xf32, #tpu.memory_space<vmem>>, vector<32x8xf32>
    %c2936 = arith.constant 2936 : index
    %c0_246 = arith.constant 0 : index
    %489 = vector.load %arg2[%c2936, %c0_246] : memref<3176x128xf32, #tpu.memory_space<vmem>>, vector<1x32xf32>
    %490 = vector.extract_strided_slice %445 {offsets = [0, 0], sizes = [32, 16], strides = [1, 1]} : vector<32x32xf32> to vector<32x16xf32>
    %491 = vector.extract_strided_slice %463 {offsets = [0, 0], sizes = [8, 16], strides = [1, 1]} : vector<8x32xf32> to vector<8x16xf32>
    %492 = vector.extract_strided_slice %481 {offsets = [0, 0], sizes = [8, 16], strides = [1, 1]} : vector<8x32xf32> to vector<8x16xf32>
    %cst_247 = arith.constant dense<0.000000e+00> : vector<32x32xf32>
    %493 = tpu.matmul %490, %482, %cst_247 {dimension_numbers = #tpu.dot_dimension_numbers<[1], [0], [0], [1], [0, 0, 1, 1], [], []>} : vector<32x16xf32>, vector<16x32xf32>, vector<32x32xf32> -> vector<32x32xf32>
    %494 = arith.mulf %493, %483 : vector<32x32xf32>
    %cst_248 = arith.constant dense<0.000000e+00> : vector<32x8xf32>
    %495 = tpu.matmul %494, %484, %cst_248 {dimension_numbers = #tpu.dot_dimension_numbers<[1], [0], [0], [1], [0, 0, 1, 1], [], []>} : vector<32x32xf32>, vector<32x8xf32>, vector<32x8xf32> -> vector<32x8xf32>
    %cst_249 = arith.constant dense<0.000000e+00> : vector<32x32xf32>
    %496 = tpu.matmul %490, %485, %cst_249 {dimension_numbers = #tpu.dot_dimension_numbers<[1], [0], [0], [1], [0, 0, 1, 1], [], []>} : vector<32x16xf32>, vector<16x32xf32>, vector<32x32xf32> -> vector<32x32xf32>
    %497 = arith.mulf %496, %486 : vector<32x32xf32>
    %cst_250 = arith.constant dense<0.000000e+00> : vector<32x8xf32>
    %498 = tpu.matmul %497, %487, %cst_250 {dimension_numbers = #tpu.dot_dimension_numbers<[1], [0], [0], [1], [0, 0, 1, 1], [], []>} : vector<32x32xf32>, vector<32x8xf32>, vector<32x8xf32> -> vector<32x8xf32>
    %499 = arith.addf %495, %498 : vector<32x8xf32>
    %cst_251 = arith.constant dense<0.000000e+00> : vector<32x8xf32>
    %500 = tpu.matmul %490, %491, %cst_251 {dimension_numbers = #tpu.dot_dimension_numbers<[1], [1], [0], [0], [0, 0, 1, 0], [], []>} : vector<32x16xf32>, vector<8x16xf32>, vector<32x8xf32> -> vector<32x8xf32>
    %501 = arith.addf %500, %499 : vector<32x8xf32>
    %502 = arith.addf %501, %488 : vector<32x8xf32>
    %cst_252 = arith.constant dense<0xFF800000> : vector<32xf32>
    %503 = vector.multi_reduction <maximumf>, %502, %cst_252 [1] : vector<32x8xf32> to vector<32xf32>
    %504 = vector.shape_cast %503 : vector<32xf32> to vector<32x1xf32>
    %505 = vector.broadcast %504 : vector<32x1xf32> to vector<32x8xf32>
    %506 = arith.subf %502, %505 : vector<32x8xf32>
    %507 = math.exp %506 : vector<32x8xf32>
    %cst_253 = arith.constant dense<0.000000e+00> : vector<32xf32>
    %508 = vector.multi_reduction <add>, %507, %cst_253 [1] : vector<32x8xf32> to vector<32xf32>
    %509 = vector.shape_cast %508 : vector<32xf32> to vector<32x1xf32>
    %510 = tpu.reciprocal %509 {approx = true} : vector<32x1xf32> -> vector<32x1xf32>
    %511 = vector.broadcast %510 : vector<32x1xf32> to vector<32x8xf32>
    %512 = arith.mulf %507, %511 : vector<32x8xf32>
    %cst_254 = arith.constant dense<0.000000e+00> : vector<32x16xf32>
    %513 = tpu.matmul %512, %492, %cst_254 {dimension_numbers = #tpu.dot_dimension_numbers<[1], [0], [0], [1], [0, 0, 1, 1], [], []>} : vector<32x8xf32>, vector<8x16xf32>, vector<32x16xf32> -> vector<32x16xf32>
    %514 = arith.addf %513, %490 : vector<32x16xf32>
    %c2904 = arith.constant 2904 : index
    %c0_255 = arith.constant 0 : index
    %515 = vector.load %arg2[%c2904, %c0_255] : memref<3176x128xf32, #tpu.memory_space<vmem>>, vector<16x32xf32>
    %cst_256 = arith.constant dense<0.000000e+00> : vector<32x32xf32>
    %516 = tpu.matmul %514, %515, %cst_256 {dimension_numbers = #tpu.dot_dimension_numbers<[1], [0], [0], [1], [0, 0, 1, 1], [], []>} : vector<32x16xf32>, vector<16x32xf32>, vector<32x32xf32> -> vector<32x32xf32>
    %517 = vector.broadcast %489 : vector<1x32xf32> to vector<32x32xf32>
    %518 = arith.addf %517, %516 : vector<32x32xf32>
    %519 = vector.extract_strided_slice %445 {offsets = [0, 16], sizes = [32, 16], strides = [1, 1]} : vector<32x32xf32> to vector<32x16xf32>
    %520 = vector.extract_strided_slice %463 {offsets = [0, 16], sizes = [8, 16], strides = [1, 1]} : vector<8x32xf32> to vector<8x16xf32>
    %521 = vector.extract_strided_slice %481 {offsets = [0, 16], sizes = [8, 16], strides = [1, 1]} : vector<8x32xf32> to vector<8x16xf32>
    %cst_257 = arith.constant dense<0.000000e+00> : vector<32x32xf32>
    %522 = tpu.matmul %519, %482, %cst_257 {dimension_numbers = #tpu.dot_dimension_numbers<[1], [0], [0], [1], [0, 0, 1, 1], [], []>} : vector<32x16xf32>, vector<16x32xf32>, vector<32x32xf32> -> vector<32x32xf32>
    %523 = arith.mulf %522, %483 : vector<32x32xf32>
    %cst_258 = arith.constant dense<0.000000e+00> : vector<32x8xf32>
    %524 = tpu.matmul %523, %484, %cst_258 {dimension_numbers = #tpu.dot_dimension_numbers<[1], [0], [0], [1], [0, 0, 1, 1], [], []>} : vector<32x32xf32>, vector<32x8xf32>, vector<32x8xf32> -> vector<32x8xf32>
    %cst_259 = arith.constant dense<0.000000e+00> : vector<32x32xf32>
    %525 = tpu.matmul %519, %485, %cst_259 {dimension_numbers = #tpu.dot_dimension_numbers<[1], [0], [0], [1], [0, 0, 1, 1], [], []>} : vector<32x16xf32>, vector<16x32xf32>, vector<32x32xf32> -> vector<32x32xf32>
    %526 = arith.mulf %525, %486 : vector<32x32xf32>
    %cst_260 = arith.constant dense<0.000000e+00> : vector<32x8xf32>
    %527 = tpu.matmul %526, %487, %cst_260 {dimension_numbers = #tpu.dot_dimension_numbers<[1], [0], [0], [1], [0, 0, 1, 1], [], []>} : vector<32x32xf32>, vector<32x8xf32>, vector<32x8xf32> -> vector<32x8xf32>
    %528 = arith.addf %524, %527 : vector<32x8xf32>
    %cst_261 = arith.constant dense<0.000000e+00> : vector<32x8xf32>
    %529 = tpu.matmul %519, %520, %cst_261 {dimension_numbers = #tpu.dot_dimension_numbers<[1], [1], [0], [0], [0, 0, 1, 0], [], []>} : vector<32x16xf32>, vector<8x16xf32>, vector<32x8xf32> -> vector<32x8xf32>
    %530 = arith.addf %529, %528 : vector<32x8xf32>
    %531 = arith.addf %530, %488 : vector<32x8xf32>
    %cst_262 = arith.constant dense<0xFF800000> : vector<32xf32>
    %532 = vector.multi_reduction <maximumf>, %531, %cst_262 [1] : vector<32x8xf32> to vector<32xf32>
    %533 = vector.shape_cast %532 : vector<32xf32> to vector<32x1xf32>
    %534 = vector.broadcast %533 : vector<32x1xf32> to vector<32x8xf32>
    %535 = arith.subf %531, %534 : vector<32x8xf32>
    %536 = math.exp %535 : vector<32x8xf32>
    %cst_263 = arith.constant dense<0.000000e+00> : vector<32xf32>
    %537 = vector.multi_reduction <add>, %536, %cst_263 [1] : vector<32x8xf32> to vector<32xf32>
    %538 = vector.shape_cast %537 : vector<32xf32> to vector<32x1xf32>
    %539 = tpu.reciprocal %538 {approx = true} : vector<32x1xf32> -> vector<32x1xf32>
    %540 = vector.broadcast %539 : vector<32x1xf32> to vector<32x8xf32>
    %541 = arith.mulf %536, %540 : vector<32x8xf32>
    %cst_264 = arith.constant dense<0.000000e+00> : vector<32x16xf32>
    %542 = tpu.matmul %541, %521, %cst_264 {dimension_numbers = #tpu.dot_dimension_numbers<[1], [0], [0], [1], [0, 0, 1, 1], [], []>} : vector<32x8xf32>, vector<8x16xf32>, vector<32x16xf32> -> vector<32x16xf32>
    %543 = arith.addf %542, %519 : vector<32x16xf32>
    %c2920 = arith.constant 2920 : index
    %c0_265 = arith.constant 0 : index
    %544 = vector.load %arg2[%c2920, %c0_265] : memref<3176x128xf32, #tpu.memory_space<vmem>>, vector<16x32xf32>
    %cst_266 = arith.constant dense<0.000000e+00> : vector<32x32xf32>
    %545 = tpu.matmul %543, %544, %cst_266 {dimension_numbers = #tpu.dot_dimension_numbers<[1], [0], [0], [1], [0, 0, 1, 1], [], []>} : vector<32x16xf32>, vector<16x32xf32>, vector<32x32xf32> -> vector<32x32xf32>
    %546 = arith.addf %518, %545 : vector<32x32xf32>
    %547 = arith.addf %313, %546 : vector<32x32xf32>
    %c2944 = arith.constant 2944 : index
    %c0_267 = arith.constant 0 : index
    %548 = vector.load %arg2[%c2944, %c0_267] : memref<3176x128xf32, #tpu.memory_space<vmem>>, vector<1x32xf32>
    %c2952 = arith.constant 2952 : index
    %c0_268 = arith.constant 0 : index
    %549 = vector.load %arg2[%c2952, %c0_268] : memref<3176x128xf32, #tpu.memory_space<vmem>>, vector<1x32xf32>
    %c2600 = arith.constant 2600 : index
    %c0_269 = arith.constant 0 : index
    %550 = vector.load %arg2[%c2600, %c0_269] : memref<3176x128xf32, #tpu.memory_space<vmem>>, vector<32x32xf32>
    %cst_270 = arith.constant dense<0.000000e+00> : vector<32x32xf32>
    %551 = tpu.matmul %547, %550, %cst_270 {dimension_numbers = #tpu.dot_dimension_numbers<[1], [0], [0], [1], [0, 0, 1, 1], [], []>} : vector<32x32xf32>, vector<32x32xf32>, vector<32x32xf32> -> vector<32x32xf32>
    %552 = arith.mulf %547, %547 : vector<32x32xf32>
    %cst_271 = arith.constant dense<0.000000e+00> : vector<32x32xf32>
    %553 = tpu.matmul %552, %550, %cst_271 {dimension_numbers = #tpu.dot_dimension_numbers<[1], [0], [0], [1], [0, 0, 1, 1], [], []>} : vector<32x32xf32>, vector<32x32xf32>, vector<32x32xf32> -> vector<32x32xf32>
    %554 = arith.mulf %551, %551 : vector<32x32xf32>
    %555 = arith.subf %553, %554 : vector<32x32xf32>
    %cst_272 = arith.constant 0.000000e+00 : f32
    %556 = vector.broadcast %cst_272 : f32 to vector<32x32xf32>
    %557 = arith.maximumf %555, %556 : vector<32x32xf32>
    %558 = arith.subf %547, %551 : vector<32x32xf32>
    %cst_273 = arith.constant 9.99999974E-6 : f32
    %559 = vector.broadcast %cst_273 : f32 to vector<32x32xf32>
    %560 = arith.addf %557, %559 : vector<32x32xf32>
    %561 = math.rsqrt %560 : vector<32x32xf32>
    %562 = arith.mulf %558, %561 : vector<32x32xf32>
    %563 = vector.broadcast %548 : vector<1x32xf32> to vector<32x32xf32>
    %564 = arith.mulf %562, %563 : vector<32x32xf32>
    %565 = vector.broadcast %549 : vector<1x32xf32> to vector<32x32xf32>
    %566 = arith.addf %564, %565 : vector<32x32xf32>
    %c2960 = arith.constant 2960 : index
    %c0_274 = arith.constant 0 : index
    %567 = vector.load %arg2[%c2960, %c0_274] : memref<3176x128xf32, #tpu.memory_space<vmem>>, vector<32x128xf32>
    %cst_275 = arith.constant dense<0.000000e+00> : vector<32x128xf32>
    %568 = tpu.matmul %566, %567, %cst_275 {dimension_numbers = #tpu.dot_dimension_numbers<[1], [0], [0], [1], [0, 0, 1, 1], [], []>} : vector<32x32xf32>, vector<32x128xf32>, vector<32x128xf32> -> vector<32x128xf32>
    %c2992 = arith.constant 2992 : index
    %c0_276 = arith.constant 0 : index
    %569 = vector.load %arg2[%c2992, %c0_276] : memref<3176x128xf32, #tpu.memory_space<vmem>>, vector<1x128xf32>
    %570 = vector.broadcast %569 : vector<1x128xf32> to vector<32x128xf32>
    %571 = arith.addf %568, %570 : vector<32x128xf32>
    %cst_277 = arith.constant 0.707106769 : f32
    %572 = vector.broadcast %cst_277 : f32 to vector<32x128xf32>
    %573 = arith.mulf %571, %572 : vector<32x128xf32>
    %574 = math.absf %573 : vector<32x128xf32>
    %cst_278 = arith.constant 0.327591091 : f32
    %575 = vector.broadcast %cst_278 : f32 to vector<32x128xf32>
    %576 = arith.mulf %575, %574 : vector<32x128xf32>
    %cst_279 = arith.constant 1.000000e+00 : f32
    %577 = vector.broadcast %cst_279 : f32 to vector<32x128xf32>
    %578 = arith.addf %577, %576 : vector<32x128xf32>
    %cst_280 = arith.constant 1.000000e+00 : f32
    %579 = vector.broadcast %cst_280 : f32 to vector<32x128xf32>
    %580 = arith.divf %579, %578 : vector<32x128xf32>
    %cst_281 = arith.constant 1.06140542 : f32
    %581 = vector.broadcast %cst_281 : f32 to vector<32x128xf32>
    %582 = arith.mulf %581, %580 : vector<32x128xf32>
    %cst_282 = arith.constant 1.45315206 : f32
    %583 = vector.broadcast %cst_282 : f32 to vector<32x128xf32>
    %584 = arith.subf %582, %583 : vector<32x128xf32>
    %585 = arith.mulf %584, %580 : vector<32x128xf32>
    %cst_283 = arith.constant 1.42141378 : f32
    %586 = vector.broadcast %cst_283 : f32 to vector<32x128xf32>
    %587 = arith.addf %585, %586 : vector<32x128xf32>
    %588 = arith.mulf %587, %580 : vector<32x128xf32>
    %cst_284 = arith.constant 0.284496725 : f32
    %589 = vector.broadcast %cst_284 : f32 to vector<32x128xf32>
    %590 = arith.subf %588, %589 : vector<32x128xf32>
    %591 = arith.mulf %590, %580 : vector<32x128xf32>
    %cst_285 = arith.constant 0.254829586 : f32
    %592 = vector.broadcast %cst_285 : f32 to vector<32x128xf32>
    %593 = arith.addf %591, %592 : vector<32x128xf32>
    %594 = arith.mulf %593, %580 : vector<32x128xf32>
    %cst_286 = arith.constant 0.000000e+00 : f32
    %595 = vector.broadcast %cst_286 : f32 to vector<32x128xf32>
    %596 = arith.subf %595, %574 : vector<32x128xf32>
    %597 = arith.mulf %596, %574 : vector<32x128xf32>
    %598 = math.exp %597 : vector<32x128xf32>
    %599 = arith.mulf %594, %598 : vector<32x128xf32>
    %cst_287 = arith.constant 1.000000e+00 : f32
    %600 = vector.broadcast %cst_287 : f32 to vector<32x128xf32>
    %601 = arith.subf %600, %599 : vector<32x128xf32>
    %cst_288 = arith.constant 0.000000e+00 : f32
    %602 = vector.broadcast %cst_288 : f32 to vector<32x128xf32>
    %603 = arith.cmpf olt, %573, %602 : vector<32x128xf32>
    %cst_289 = arith.constant 0.000000e+00 : f32
    %604 = vector.broadcast %cst_289 : f32 to vector<32x128xf32>
    %605 = arith.subf %604, %601 : vector<32x128xf32>
    %606 = arith.select %603, %605, %601 : vector<32x128xi1>, vector<32x128xf32>
    %cst_290 = arith.constant 5.000000e-01 : f32
    %607 = vector.broadcast %cst_290 : f32 to vector<32x128xf32>
    %608 = arith.mulf %607, %571 : vector<32x128xf32>
    %cst_291 = arith.constant 1.000000e+00 : f32
    %609 = vector.broadcast %cst_291 : f32 to vector<32x128xf32>
    %610 = arith.addf %609, %606 : vector<32x128xf32>
    %611 = arith.mulf %608, %610 : vector<32x128xf32>
    %c3000 = arith.constant 3000 : index
    %c0_292 = arith.constant 0 : index
    %612 = vector.load %arg2[%c3000, %c0_292] : memref<3176x128xf32, #tpu.memory_space<vmem>>, vector<128x64xf32>
    %cst_293 = arith.constant dense<0.000000e+00> : vector<32x64xf32>
    %613 = tpu.matmul %611, %612, %cst_293 {dimension_numbers = #tpu.dot_dimension_numbers<[1], [0], [0], [1], [0, 0, 1, 1], [], []>} : vector<32x128xf32>, vector<128x64xf32>, vector<32x64xf32> -> vector<32x64xf32>
    %c3128 = arith.constant 3128 : index
    %c0_294 = arith.constant 0 : index
    %614 = vector.load %arg2[%c3128, %c0_294] : memref<3176x128xf32, #tpu.memory_space<vmem>>, vector<1x64xf32>
    %615 = vector.broadcast %614 : vector<1x64xf32> to vector<32x64xf32>
    %616 = arith.addf %613, %615 : vector<32x64xf32>
    %c3136 = arith.constant 3136 : index
    %c0_295 = arith.constant 0 : index
    %617 = vector.load %arg2[%c3136, %c0_295] : memref<3176x128xf32, #tpu.memory_space<vmem>>, vector<32x64xf32>
    %cst_296 = arith.constant dense<0.000000e+00> : vector<32x64xf32>
    %618 = tpu.matmul %566, %617, %cst_296 {dimension_numbers = #tpu.dot_dimension_numbers<[1], [0], [0], [1], [0, 0, 1, 1], [], []>} : vector<32x32xf32>, vector<32x64xf32>, vector<32x64xf32> -> vector<32x64xf32>
    %c3168 = arith.constant 3168 : index
    %c0_297 = arith.constant 0 : index
    %619 = vector.load %arg2[%c3168, %c0_297] : memref<3176x128xf32, #tpu.memory_space<vmem>>, vector<1x64xf32>
    %620 = vector.broadcast %619 : vector<1x64xf32> to vector<32x64xf32>
    %621 = arith.addf %618, %620 : vector<32x64xf32>
    %622 = arith.addf %621, %616 : vector<32x64xf32>
    %c0_298 = arith.constant 0 : index
    %c0_299 = arith.constant 0 : index
    %623 = vector.load %arg3[%c0_298, %c0_299] : memref<32x64xf32, #tpu.memory_space<vmem>>, vector<32x64xf32>
    tpu.vector_store %arg3[%c0_298, %c0_299], %622 {strides = array<i32>} : memref<32x64xf32, #tpu.memory_space<vmem>>, vector<32x64xf32>,
    return
  }
  func.func @transform_0(%arg0: i32) -> (i32, i32) {
    %c0_i32 = arith.constant 0 : i32
    %c0_i32_0 = arith.constant 0 : i32
    %c0_i32_1 = arith.constant 0 : i32
    return %c0_i32, %c0_i32_0 : i32, i32
  }
  func.func @transform_1(%arg0: i32) -> (i32, i32) {
    %c0_i32 = arith.constant 0 : i32
    %c0_i32_0 = arith.constant 0 : i32
    %c0_i32_1 = arith.constant 0 : i32
    return %c0_i32, %c0_i32_0 : i32, i32
  }
  func.func @transform_2(%arg0: i32) -> (i32, i32) {
    %c0_i32 = arith.constant 0 : i32
    %c0_i32_0 = arith.constant 0 : i32
    %c0_i32_1 = arith.constant 0 : i32
    return %c0_i32, %c0_i32_0 : i32, i32
  }
}

</mosaic_0001>

<llo_original>
// kernel: tpu_custom_call.1
$region0: #{tpu_custom_call.1}
  #allocation0 [shape = 'u32[]', space=smem, size = 0x4, offset = 0x4, fixed_abs, tag = 'smem constant byte address 0x4 - core index']
  #allocation1 [shape = 'u32[72,128]{1,0:T(1,128)}', space=vmem, size = 0x9000, scoped, tag = 'internal scratch']
  %s0 = inlined_call_operand.vmem [shape: f32[128,32], index: 0, kind: input, shape index: {}]
  %s1 = inlined_call_operand.hbm [shape: f32[3176,128], index: 1, kind: input, shape index: {}]
  %s2 = inlined_call_operand.hbm [shape: f32[32,64], index: 2, kind: output, shape index: {}]
  %s3 = sld [smem:[#allocation0]]
  $region22: #{tpu_custom_call.1} parent=0
    _
  %s5 = ssub.s32 1, %s3
  %s6 = scalar_select 0, %s5, %s3
  $region1: #{tpu_custom_call.1} parent=0
    #allocation2 [shape = 'u8[1626112]{0}', space=vmem, size = 0x18d000, scoped, tag = 'input window, operand 1, single buffered']
    #allocation3 [shape = 's32[1]{0}', space=sflag, size = 0x4, scoped, tag = 'scoped memory for tpu_custom_call.1']
    #allocation4 [shape = 's32[1]{0}', space=sflag, size = 0x4, scoped, tag = 'scoped memory for tpu_custom_call.1']
    #allocation5 [shape = 'u8[16384]{0}', space=vmem, size = 0x4000, scoped, tag = 'output window, operand 0, single buffered']
    %7 = vsyncpa [#allocation3], 0
    %8 = vsyncpa [#allocation4], 0
    // Predicated region
    $region2: #{tpu_custom_call.1} parent=1 // pred_check
      _
    $region3: #{tpu_custom_call.1} parent=1 // pred_check_branch
      %10 = sbr.rel (0) target = $region5
    $region4: #{tpu_custom_call.1} parent=1 // pred_region
      _
    $region5: #{tpu_custom_call.1} parent=1 // pred_fallthru
      _
    // Predicated region
    $region6: #{tpu_custom_call.1} parent=1 // pred_check
      _
    $region7: #{tpu_custom_call.1} parent=1 // pred_check_branch
      %12 = sbr.rel (0) target = $region9
    $region8: #{tpu_custom_call.1} parent=1 // pred_region
      %14 = vsyncadd [#allocation3], 0
      %s15 = sshll.u32 %s1, 4
      %s16 = int_to_ptr.hbm [resolvable:$true] %s15
      %s17 = sshll.u32 [#allocation2], 4
      %s18 = int_to_ptr.vmem [resolvable:$true] %s17
      %23 = dma.hbm_to_vmem [thread:$0]  %s16, 50816, %s18, [#allocation3], 128, 128, 8
    $region9: #{tpu_custom_call.1} parent=1 // pred_fallthru
      _
    // Predicated region
    $region10: #{tpu_custom_call.1} parent=1 // pred_check
      _
    $region11: #{tpu_custom_call.1} parent=1 // pred_check_branch
      %25 = sbr.rel (0) target = $region13
    $region12: #{tpu_custom_call.1} parent=1 // pred_region
      %27 = dma.done [#allocation3], 50816
    $region13: #{tpu_custom_call.1} parent=1 // pred_fallthru
      _
    %v28 = vld [vmem:[%s0] sm:$0xff]
    %v29 = vld [vmem:[%s0 + $0x8] sm:$0xff]
    %v30 = vld [vmem:[%s0 + $0x10] sm:$0xff]
    %v31 = vld [vmem:[%s0 + $0x18] sm:$0xff]
    %v32 = vld [vmem:[%s0 + $0x20] sm:$0xff]
    %v33 = vld [vmem:[%s0 + $0x28] sm:$0xff]
    %v34 = vld [vmem:[%s0 + $0x30] sm:$0xff]
    %v35 = vld [vmem:[%s0 + $0x38] sm:$0xff]
    %v36 = vld [vmem:[%s0 + $0x40] sm:$0xff]
    %v37 = vld [vmem:[%s0 + $0x48] sm:$0xff]
    %v38 = vld [vmem:[%s0 + $0x50] sm:$0xff]
    %v39 = vld [vmem:[%s0 + $0x58] sm:$0xff]
    %v40 = vld [vmem:[%s0 + $0x60] sm:$0xff]
    %v41 = vld [vmem:[%s0 + $0x68] sm:$0xff]
    %v42 = vld [vmem:[%s0 + $0x70] sm:$0xff]
    %v43 = vld [vmem:[%s0 + $0x78] sm:$0xff]
    %v44 = vld [vmem:[#allocation2 + $0x260] sm:$0x1]
    %v45 = vld [vmem:[#allocation2 + $0x268] sm:$0x1]
    %v46 = vld [vmem:[#allocation2 + $0x270] sm:$0xff]
    %v47 = vld [vmem:[#allocation2 + $0x278] sm:$0xff]
    %v48 = vld [vmem:[#allocation2 + $0x280] sm:$0xff]
    %v49 = vld [vmem:[#allocation2 + $0x288] sm:$0xff]
    %vm50 = vcmask 261120
    %v52 = vsel %vm50, %v28, 0
    %v55 = vsel %vm50, %v29, 0
    %v58 = vsel %vm50, %v30, 0
    %v61 = vsel %vm50, %v31, 0
    %v64 = vsel %vm50, %v32, 0
    %v67 = vsel %vm50, %v33, 0
    %v70 = vsel %vm50, %v34, 0
    %v73 = vsel %vm50, %v35, 0
    %v76 = vsel %vm50, %v36, 0
    %v79 = vsel %vm50, %v37, 0
    %v82 = vsel %vm50, %v38, 0
    %v85 = vsel %vm50, %v39, 0
    %v88 = vsel %vm50, %v40, 0
    %v91 = vsel %vm50, %v41, 0
    %v94 = vsel %vm50, %v42, 0
    %v97 = vsel %vm50, %v43, 0
    %99 = vmatpush.msra.mxu0 0.0
    %100 = vmatpush.msra.mxu0 0.0
    %101 = vmatpush.msra.mxu0 0.0
    %102 = vmatpush.msra.mxu0 0.0
    %103 = vmatpush.msra.mxu0 0.0
    %104 = vmatpush.msra.mxu0 0.0
    %105 = vmatpush.msra.mxu0 0.0
    %106 = vmatpush.msra.mxu0 0.0
    %107 = vmatpush.msra.mxu0 0.0
    %108 = vmatpush.msra.mxu0 0.0
    %109 = vmatpush.msra.mxu0 0.0
    %110 = vmatpush.msra.mxu0 0.0
    %111 = vmatpush.msra.mxu0 %v49
    %112 = vmatpush.msra.mxu0 %v48
    %113 = vmatpush.msra.mxu0 %v47
    %114 = vmatpush.msra.mxu0 %v46
    %115 = vmatmul.f32.gmra.mxu0 %v52
    %v116 = vpop.f32.mrf.mxu0
    %v117 = vadd.f32 0.0, %v116
    %118 = vmatmul.f32.gmra.mxu0 %v55
    %v119 = vpop.f32.mrf.mxu0
    %v120 = vadd.f32 0.0, %v119
    %121 = vmatmul.f32.gmra.mxu0 %v58
    %v122 = vpop.f32.mrf.mxu0
    %v123 = vadd.f32 0.0, %v122
    %124 = vmatmul.f32.gmra.mxu0 %v61
    %v125 = vpop.f32.mrf.mxu0
    %v126 = vadd.f32 0.0, %v125
    %127 = vmatmul.f32.gmra.mxu0 %v64
    %v128 = vpop.f32.mrf.mxu0
    %v129 = vadd.f32 0.0, %v128
    %130 = vmatmul.f32.gmra.mxu0 %v67
    %v131 = vpop.f32.mrf.mxu0
    %v132 = vadd.f32 0.0, %v131
    %133 = vmatmul.f32.gmra.mxu0 %v70
    %v134 = vpop.f32.mrf.mxu0
    %v135 = vadd.f32 0.0, %v134
    %136 = vmatmul.f32.gmra.mxu0 %v73
    %v137 = vpop.f32.mrf.mxu0
    %v138 = vadd.f32 0.0, %v137
    %139 = vmatmul.f32.gmra.mxu0 %v76
    %v140 = vpop.f32.mrf.mxu0
    %v141 = vadd.f32 0.0, %v140
    %142 = vmatmul.f32.gmra.mxu0 %v79
    %v143 = vpop.f32.mrf.mxu0
    %v144 = vadd.f32 0.0, %v143
    %145 = vmatmul.f32.gmra.mxu0 %v82
    %v146 = vpop.f32.mrf.mxu0
    %v147 = vadd.f32 0.0, %v146
    %148 = vmatmul.f32.gmra.mxu0 %v85
    %v149 = vpop.f32.mrf.mxu0
    %v150 = vadd.f32 0.0, %v149
    %151 = vmatmul.f32.gmra.mxu0 %v88
    %v152 = vpop.f32.mrf.mxu0
    %v153 = vadd.f32 0.0, %v152
    %154 = vmatmul.f32.gmra.mxu0 %v91
    %v155 = vpop.f32.mrf.mxu0
    %v156 = vadd.f32 0.0, %v155
    %157 = vmatmul.f32.gmra.mxu0 %v94
    %v158 = vpop.f32.mrf.mxu0
    %v159 = vadd.f32 0.0, %v158
    %160 = vmatmul.f32.gmra.mxu0 %v97
    %v161 = vpop.f32.mrf.mxu0
    %v162 = vadd.f32 0.0, %v161
    %163 = vdwg.mxu0
    %v164 = vmul.f32 %v28, %v28
    %v165 = vmul.f32 %v29, %v29
    %v166 = vmul.f32 %v30, %v30
    %v167 = vmul.f32 %v31, %v31
    %v168 = vmul.f32 %v32, %v32
    %v169 = vmul.f32 %v33, %v33
    %v170 = vmul.f32 %v34, %v34
    %v171 = vmul.f32 %v35, %v35
    %v172 = vmul.f32 %v36, %v36
    %v173 = vmul.f32 %v37, %v37
    %v174 = vmul.f32 %v38, %v38
    %v175 = vmul.f32 %v39, %v39
    %v176 = vmul.f32 %v40, %v40
    %v177 = vmul.f32 %v41, %v41
    %v178 = vmul.f32 %v42, %v42
    %v179 = vmul.f32 %v43, %v43
    %v181 = vsel %vm50, %v164, 0
    %v184 = vsel %vm50, %v165, 0
    %v187 = vsel %vm50, %v166, 0
    %v190 = vsel %vm50, %v167, 0
    %v193 = vsel %vm50, %v168, 0
    %v196 = vsel %vm50, %v169, 0
    %v199 = vsel %vm50, %v170, 0
    %v202 = vsel %vm50, %v171, 0
    %v205 = vsel %vm50, %v172, 0
    %v208 = vsel %vm50, %v173, 0
    %v211 = vsel %vm50, %v174, 0
    %v214 = vsel %vm50, %v175, 0
    %v217 = vsel %vm50, %v176, 0
    %v220 = vsel %vm50, %v177, 0
    %v223 = vsel %vm50, %v178, 0
    %v226 = vsel %vm50, %v179, 0
    %228 = vmatpush.msra.mxu0 0.0
    %229 = vmatpush.msra.mxu0 0.0
    %230 = vmatpush.msra.mxu0 0.0
    %231 = vmatpush.msra.mxu0 0.0
    %232 = vmatpush.msra.mxu0 0.0
    %233 = vmatpush.msra.mxu0 0.0
    %234 = vmatpush.msra.mxu0 0.0
    %235 = vmatpush.msra.mxu0 0.0
    %236 = vmatpush.msra.mxu0 0.0
    %237 = vmatpush.msra.mxu0 0.0
    %238 = vmatpush.msra.mxu0 0.0
    %239 = vmatpush.msra.mxu0 0.0
    %240 = vmatpush.msra.mxu0 %v49
    %241 = vmatpush.msra.mxu0 %v48
    %242 = vmatpush.msra.mxu0 %v47
    %243 = vmatpush.msra.mxu0 %v46
    %244 = vmatmul.f32.gmra.mxu0 %v181
    %v245 = vpop.f32.mrf.mxu0
    %v246 = vadd.f32 0.0, %v245
    %247 = vmatmul.f32.gmra.mxu0 %v184
    %v248 = vpop.f32.mrf.mxu0
    %v249 = vadd.f32 0.0, %v248
    %250 = vmatmul.f32.gmra.mxu0 %v187
    %v251 = vpop.f32.mrf.mxu0
    %v252 = vadd.f32 0.0, %v251
    %253 = vmatmul.f32.gmra.mxu0 %v190
    %v254 = vpop.f32.mrf.mxu0
    %v255 = vadd.f32 0.0, %v254
    %256 = vmatmul.f32.gmra.mxu0 %v193
    %v257 = vpop.f32.mrf.mxu0
    %v258 = vadd.f32 0.0, %v257
    %259 = vmatmul.f32.gmra.mxu0 %v196
    %v260 = vpop.f32.mrf.mxu0
    %v261 = vadd.f32 0.0, %v260
    %262 = vmatmul.f32.gmra.mxu0 %v199
    %v263 = vpop.f32.mrf.mxu0
    %v264 = vadd.f32 0.0, %v263
    %265 = vmatmul.f32.gmra.mxu0 %v202
    %v266 = vpop.f32.mrf.mxu0
    %v267 = vadd.f32 0.0, %v266
    %268 = vmatmul.f32.gmra.mxu0 %v205
    %v269 = vpop.f32.mrf.mxu0
    %v270 = vadd.f32 0.0, %v269
    %271 = vmatmul.f32.gmra.mxu0 %v208
    %v272 = vpop.f32.mrf.mxu0
    %v273 = vadd.f32 0.0, %v272
    %274 = vmatmul.f32.gmra.mxu0 %v211
    %v275 = vpop.f32.mrf.mxu0
    %v276 = vadd.f32 0.0, %v275
    %277 = vmatmul.f32.gmra.mxu0 %v214
    %v278 = vpop.f32.mrf.mxu0
    %v279 = vadd.f32 0.0, %v278
    %280 = vmatmul.f32.gmra.mxu0 %v217
    %v281 = vpop.f32.mrf.mxu0
    %v282 = vadd.f32 0.0, %v281
    %283 = vmatmul.f32.gmra.mxu0 %v220
    %v284 = vpop.f32.mrf.mxu0
    %v285 = vadd.f32 0.0, %v284
    %286 = vmatmul.f32.gmra.mxu0 %v223
    %v287 = vpop.f32.mrf.mxu0
    %v288 = vadd.f32 0.0, %v287
    %289 = vmatmul.f32.gmra.mxu0 %v226
    %v290 = vpop.f32.mrf.mxu0
    %v291 = vadd.f32 0.0, %v290
    %292 = vdwg.mxu0
    %v293 = vmul.f32 %v117, %v117
    %v294 = vmul.f32 %v120, %v120
    %v295 = vmul.f32 %v123, %v123
    %v296 = vmul.f32 %v126, %v126
    %v297 = vmul.f32 %v129, %v129
    %v298 = vmul.f32 %v132, %v132
    %v299 = vmul.f32 %v135, %v135
    %v300 = vmul.f32 %v138, %v138
    %v301 = vmul.f32 %v141, %v141
    %v302 = vmul.f32 %v144, %v144
    %v303 = vmul.f32 %v147, %v147
    %v304 = vmul.f32 %v150, %v150
    %v305 = vmul.f32 %v153, %v153
    %v306 = vmul.f32 %v156, %v156
    %v307 = vmul.f32 %v159, %v159
    %v308 = vmul.f32 %v162, %v162
    %v309 = vsub.f32 %v246, %v293
    %v310 = vsub.f32 %v249, %v294
    %v311 = vsub.f32 %v252, %v295
    %v312 = vsub.f32 %v255, %v296
    %v313 = vsub.f32 %v258, %v297
    %v314 = vsub.f32 %v261, %v298
    %v315 = vsub.f32 %v264, %v299
    %v316 = vsub.f32 %v267, %v300
    %v317 = vsub.f32 %v270, %v301
    %v318 = vsub.f32 %v273, %v302
    %v319 = vsub.f32 %v276, %v303
    %v320 = vsub.f32 %v279, %v304
    %v321 = vsub.f32 %v282, %v305
    %v322 = vsub.f32 %v285, %v306
    %v323 = vsub.f32 %v288, %v307
    %v324 = vsub.f32 %v291, %v308
    %v325 = vmax.f32 %v309, 0.0
    %v326 = vmax.f32 %v310, 0.0
    %v327 = vmax.f32 %v311, 0.0
    %v328 = vmax.f32 %v312, 0.0
    %v329 = vmax.f32 %v313, 0.0
    %v330 = vmax.f32 %v314, 0.0
    %v331 = vmax.f32 %v315, 0.0
    %v332 = vmax.f32 %v316, 0.0
    %v333 = vmax.f32 %v317, 0.0
    %v334 = vmax.f32 %v318, 0.0
    %v335 = vmax.f32 %v319, 0.0
    %v336 = vmax.f32 %v320, 0.0
    %v337 = vmax.f32 %v321, 0.0
    %v338 = vmax.f32 %v322, 0.0
    %v339 = vmax.f32 %v323, 0.0
    %v340 = vmax.f32 %v324, 0.0
    %v341 = vsub.f32 %v28, %v117
    %v342 = vsub.f32 %v29, %v120
    %v343 = vsub.f32 %v30, %v123
    %v344 = vsub.f32 %v31, %v126
    %v345 = vsub.f32 %v32, %v129
    %v346 = vsub.f32 %v33, %v132
    %v347 = vsub.f32 %v34, %v135
    %v348 = vsub.f32 %v35, %v138
    %v349 = vsub.f32 %v36, %v141
    %v350 = vsub.f32 %v37, %v144
    %v351 = vsub.f32 %v38, %v147
    %v352 = vsub.f32 %v39, %v150
    %v353 = vsub.f32 %v40, %v153
    %v354 = vsub.f32 %v41, %v156
    %v355 = vsub.f32 %v42, %v159
    %v356 = vsub.f32 %v43, %v162
    %v357 = vadd.f32 %v325, 1e-05
    %v358 = vadd.f32 %v326, 1e-05
    %v359 = vadd.f32 %v327, 1e-05
    %v360 = vadd.f32 %v328, 1e-05
    %v361 = vadd.f32 %v329, 1e-05
    %v362 = vadd.f32 %v330, 1e-05
    %v363 = vadd.f32 %v331, 1e-05
    %v364 = vadd.f32 %v332, 1e-05
    %v365 = vadd.f32 %v333, 1e-05
    %v366 = vadd.f32 %v334, 1e-05
    %v367 = vadd.f32 %v335, 1e-05
    %v368 = vadd.f32 %v336, 1e-05
    %v369 = vadd.f32 %v337, 1e-05
    %v370 = vadd.f32 %v338, 1e-05
    %v371 = vadd.f32 %v339, 1e-05
    %v372 = vadd.f32 %v340, 1e-05
    %v373 = vrsqrt.pop %v357
    %v374 = vmul.f32 %v373, %v357
    %v375 = vmul.f32 %v374, %v373
    %v376 = vmul.f32 0.5, %v375
    %v377 = vsub.f32 1.5, %v376
    %v378 = vmul.f32 %v373, %v377
    %vm379 = vweird.f32 %v357
    %vm380 = vweird.f32 %v373
    %vm381 = vmor %vm379, %vm380
    %v382 = vsel %vm381, %v373, %v378
    %v383 = vrsqrt.pop %v358
    %v384 = vmul.f32 %v383, %v358
    %v385 = vmul.f32 %v384, %v383
    %v386 = vmul.f32 0.5, %v385
    %v387 = vsub.f32 1.5, %v386
    %v388 = vmul.f32 %v383, %v387
    %vm389 = vweird.f32 %v358
    %vm390 = vweird.f32 %v383
    %vm391 = vmor %vm389, %vm390
    %v392 = vsel %vm391, %v383, %v388
    %v393 = vrsqrt.pop %v359
    %v394 = vmul.f32 %v393, %v359
    %v395 = vmul.f32 %v394, %v393
    %v396 = vmul.f32 0.5, %v395
    %v397 = vsub.f32 1.5, %v396
    %v398 = vmul.f32 %v393, %v397
    %vm399 = vweird.f32 %v359
    %vm400 = vweird.f32 %v393
    %vm401 = vmor %vm399, %vm400
    %v402 = vsel %vm401, %v393, %v398
    %v403 = vrsqrt.pop %v360
    %v404 = vmul.f32 %v403, %v360
    %v405 = vmul.f32 %v404, %v403
    %v406 = vmul.f32 0.5, %v405
    %v407 = vsub.f32 1.5, %v406
    %v408 = vmul.f32 %v403, %v407
    %vm409 = vweird.f32 %v360
    %vm410 = vweird.f32 %v403
    %vm411 = vmor %vm409, %vm410
    %v412 = vsel %vm411, %v403, %v408
    %v413 = vrsqrt.pop %v361
    %v414 = vmul.f32 %v413, %v361
    %v415 = vmul.f32 %v414, %v413
    %v416 = vmul.f32 0.5, %v415
    %v417 = vsub.f32 1.5, %v416
    %v418 = vmul.f32 %v413, %v417
    %vm419 = vweird.f32 %v361
    %vm420 = vweird.f32 %v413
    %vm421 = vmor %vm419, %vm420
    %v422 = vsel %vm421, %v413, %v418
    %v423 = vrsqrt.pop %v362
    %v424 = vmul.f32 %v423, %v362
    %v425 = vmul.f32 %v424, %v423
    %v426 = vmul.f32 0.5, %v425
    %v427 = vsub.f32 1.5, %v426
    %v428 = vmul.f32 %v423, %v427
    %vm429 = vweird.f32 %v362
    %vm430 = vweird.f32 %v423
    %vm431 = vmor %vm429, %vm430
    %v432 = vsel %vm431, %v423, %v428
    %v433 = vrsqrt.pop %v363
    %v434 = vmul.f32 %v433, %v363
    %v435 = vmul.f32 %v434, %v433
    %v436 = vmul.f32 0.5, %v435
    %v437 = vsub.f32 1.5, %v436
    %v438 = vmul.f32 %v433, %v437
    %vm439 = vweird.f32 %v363
    %vm440 = vweird.f32 %v433
    %vm441 = vmor %vm439, %vm440
    %v442 = vsel %vm441, %v433, %v438
    %v443 = vrsqrt.pop %v364
    %v444 = vmul.f32 %v443, %v364
    %v445 = vmul.f32 %v444, %v443
    %v446 = vmul.f32 0.5, %v445
    %v447 = vsub.f32 1.5, %v446
    %v448 = vmul.f32 %v443, %v447
    %vm449 = vweird.f32 %v364
    %vm450 = vweird.f32 %v443
    %vm451 = vmor %vm449, %vm450
    %v452 = vsel %vm451, %v443, %v448
    %v453 = vrsqrt.pop %v365
    %v454 = vmul.f32 %v453, %v365
    %v455 = vmul.f32 %v454, %v453
    %v456 = vmul.f32 0.5, %v455
    %v457 = vsub.f32 1.5, %v456
    %v458 = vmul.f32 %v453, %v457
    %vm459 = vweird.f32 %v365
    %vm460 = vweird.f32 %v453
    %vm461 = vmor %vm459, %vm460
    %v462 = vsel %vm461, %v453, %v458
    %v463 = vrsqrt.pop %v366
    %v464 = vmul.f32 %v463, %v366
    %v465 = vmul.f32 %v464, %v463
    %v466 = vmul.f32 0.5, %v465
    %v467 = vsub.f32 1.5, %v466
    %v468 = vmul.f32 %v463, %v467
    %vm469 = vweird.f32 %v366
    %vm470 = vweird.f32 %v463
    %vm471 = vmor %vm469, %vm470
    %v472 = vsel %vm471, %v463, %v468
    %v473 = vrsqrt.pop %v367
    %v474 = vmul.f32 %v473, %v367
    %v475 = vmul.f32 %v474, %v473
    %v476 = vmul.f32 0.5, %v475
    %v477 = vsub.f32 1.5, %v476
    %v478 = vmul.f32 %v473, %v477
    %vm479 = vweird.f32 %v367
    %vm480 = vweird.f32 %v473
    %vm481 = vmor %vm479, %vm480
    %v482 = vsel %vm481, %v473, %v478
    %v483 = vrsqrt.pop %v368
    %v484 = vmul.f32 %v483, %v368
    %v485 = vmul.f32 %v484, %v483
    %v486 = vmul.f32 0.5, %v485
    %v487 = vsub.f32 1.5, %v486
    %v488 = vmul.f32 %v483, %v487
    %vm489 = vweird.f32 %v368
    %vm490 = vweird.f32 %v483
    %vm491 = vmor %vm489, %vm490
    %v492 = vsel %vm491, %v483, %v488
    %v493 = vrsqrt.pop %v369
    %v494 = vmul.f32 %v493, %v369
    %v495 = vmul.f32 %v494, %v493
    %v496 = vmul.f32 0.5, %v495
    %v497 = vsub.f32 1.5, %v496
    %v498 = vmul.f32 %v493, %v497
    %vm499 = vweird.f32 %v369
    %vm500 = vweird.f32 %v493
    %vm501 = vmor %vm499, %vm500
    %v502 = vsel %vm501, %v493, %v498
    %v503 = vrsqrt.pop %v370
    %v504 = vmul.f32 %v503, %v370
    %v505 = vmul.f32 %v504, %v503
    %v506 = vmul.f32 0.5, %v505
    %v507 = vsub.f32 1.5, %v506
    %v508 = vmul.f32 %v503, %v507
    %vm509 = vweird.f32 %v370
    %vm510 = vweird.f32 %v503
    %vm511 = vmor %vm509, %vm510
    %v512 = vsel %vm511, %v503, %v508
    %v513 = vrsqrt.pop %v371
    %v514 = vmul.f32 %v513, %v371
    %v515 = vmul.f32 %v514, %v513
    %v516 = vmul.f32 0.5, %v515
    %v517 = vsub.f32 1.5, %v516
    %v518 = vmul.f32 %v513, %v517
    %vm519 = vweird.f32 %v371
    %vm520 = vweird.f32 %v513
    %vm521 = vmor %vm519, %vm520
    %v522 = vsel %vm521, %v513, %v518
    %v523 = vrsqrt.pop %v372
    %v524 = vmul.f32 %v523, %v372
    %v525 = vmul.f32 %v524, %v523
    %v526 = vmul.f32 0.5, %v525
    %v527 = vsub.f32 1.5, %v526
    %v528 = vmul.f32 %v523, %v527
    %vm529 = vweird.f32 %v372
    %vm530 = vweird.f32 %v523
    %vm531 = vmor %vm529, %vm530
    %v532 = vsel %vm531, %v523, %v528
    %v533 = vmul.f32 %v341, %v382
    %v534 = vmul.f32 %v342, %v392
    %v535 = vmul.f32 %v343, %v402
    %v536 = vmul.f32 %v344, %v412
    %v537 = vmul.f32 %v345, %v422
    %v538 = vmul.f32 %v346, %v432
    %v539 = vmul.f32 %v347, %v442
    %v540 = vmul.f32 %v348, %v452
    %v541 = vmul.f32 %v349, %v462
    %v542 = vmul.f32 %v350, %v472
    %v543 = vmul.f32 %v351, %v482
    %v544 = vmul.f32 %v352, %v492
    %v545 = vmul.f32 %v353, %v502
    %v546 = vmul.f32 %v354, %v512
    %v547 = vmul.f32 %v355, %v522
    %v548 = vmul.f32 %v356, %v532
    %v549 = vperm.slane %v44, 0
    %v550 = vmul.f32 %v533, %v549
    %v551 = vmul.f32 %v534, %v549
    %v552 = vmul.f32 %v535, %v549
    %v553 = vmul.f32 %v536, %v549
    %v554 = vmul.f32 %v537, %v549
    %v555 = vmul.f32 %v538, %v549
    %v556 = vmul.f32 %v539, %v549
    %v557 = vmul.f32 %v540, %v549
    %v558 = vmul.f32 %v541, %v549
    %v559 = vmul.f32 %v542, %v549
    %v560 = vmul.f32 %v543, %v549
    %v561 = vmul.f32 %v544, %v549
    %v562 = vmul.f32 %v545, %v549
    %v563 = vmul.f32 %v546, %v549
    %v564 = vmul.f32 %v547, %v549
    %v565 = vmul.f32 %v548, %v549
    %v566 = vperm.slane %v45, 0
    %v567 = vadd.f32 %v550, %v566
    %v568 = vadd.f32 %v551, %v566
    %v569 = vadd.f32 %v552, %v566
    %v570 = vadd.f32 %v553, %v566
    %v571 = vadd.f32 %v554, %v566
    %v572 = vadd.f32 %v555, %v566
    %v573 = vadd.f32 %v556, %v566
    %v574 = vadd.f32 %v557, %v566
    %v575 = vadd.f32 %v558, %v566
    %v576 = vadd.f32 %v559, %v566
    %v577 = vadd.f32 %v560, %v566
    %v578 = vadd.f32 %v561, %v566
    %v579 = vadd.f32 %v562, %v566
    %v580 = vadd.f32 %v563, %v566
    %v581 = vadd.f32 %v564, %v566
    %v582 = vadd.f32 %v565, %v566
    %v583 = vld [vmem:[#allocation2 + $0x240] sm:$0xff]
    %v584 = vld [vmem:[#allocation2 + $0x248] sm:$0xff]
    %v585 = vld [vmem:[#allocation2 + $0x250] sm:$0xff]
    %v586 = vld [vmem:[#allocation2 + $0x258] sm:$0xff]
    %v587 = vld [vmem:[#allocation2] sm:$0xff]
    %v588 = vld [vmem:[#allocation2 + $0x8] sm:$0xff]
    %v589 = vld [vmem:[#allocation2 + $0x10] sm:$0xff]
    %v590 = vld [vmem:[#allocation2 + $0x18] sm:$0xff]
    %591 = vmatpush.msra.mxu0 %v582
    %592 = vmatpush.msra.mxu0 %v581
    %593 = vmatpush.msra.mxu0 %v580
    %594 = vmatpush.msra.mxu0 %v579
    %595 = vmatpush.msra.mxu0 %v578
    %596 = vmatpush.msra.mxu0 %v577
    %597 = vmatpush.msra.mxu0 %v576
    %598 = vmatpush.msra.mxu0 %v575
    %599 = vmatpush.msra.mxu0 %v574
    %600 = vmatpush.msra.mxu0 %v573
    %601 = vmatpush.msra.mxu0 %v572
    %602 = vmatpush.msra.mxu0 %v571
    %603 = vmatpush.msra.mxu0 %v570
    %604 = vmatpush.msra.mxu0 %v569
    %605 = vmatpush.msra.mxu0 %v568
    %606 = vmatpush.msra.mxu0 %v567
    %607 = vmatmul.f32.gmra.mxu0 %v587
    %v608 = vpop.f32.mrf.mxu0
    %v609 = vadd.f32 0.0, %v608
    %610 = vmatmul.f32.gmra.mxu0 %v588
    %v611 = vpop.f32.mrf.mxu0
    %v612 = vadd.f32 0.0, %v611
    %613 = vmatmul.f32.gmra.mxu0 %v589
    %v614 = vpop.f32.mrf.mxu0
    %v615 = vadd.f32 0.0, %v614
    %616 = vmatmul.f32.gmra.mxu0 %v590
    %v617 = vpop.f32.mrf.mxu0
    %v618 = vadd.f32 0.0, %v617
    %619 = vdwg.mxu0
    %v620 = vld [vmem:[#allocation2 + $0x120] sm:$0xff]
    %v621 = vld [vmem:[#allocation2 + $0x128] sm:$0xff]
    %v622 = vld [vmem:[#allocation2 + $0x130] sm:$0xff]
    %v623 = vld [vmem:[#allocation2 + $0x138] sm:$0xff]
    %v625 = vsel %vm50, %v609, 0
    %v628 = vsel %vm50, %v612, 0
    %v631 = vsel %vm50, %v615, 0
    %v634 = vsel %vm50, %v618, 0
    %636 = vmatpush.msra.mxu0 0.0
    %637 = vmatpush.msra.mxu0 0.0
    %638 = vmatpush.msra.mxu0 0.0
    %639 = vmatpush.msra.mxu0 0.0
    %640 = vmatpush.msra.mxu0 0.0
    %641 = vmatpush.msra.mxu0 0.0
    %642 = vmatpush.msra.mxu0 0.0
    %643 = vmatpush.msra.mxu0 0.0
    %644 = vmatpush.msra.mxu0 0.0
    %645 = vmatpush.msra.mxu0 0.0
    %646 = vmatpush.msra.mxu0 0.0
    %647 = vmatpush.msra.mxu0 0.0
    %648 = vmatpush.msra.mxu0 %v623
    %649 = vmatpush.msra.mxu0 %v622
    %650 = vmatpush.msra.mxu0 %v621
    %651 = vmatpush.msra.mxu0 %v620
    %652 = vmatmul.f32.gmra.mxu0 %v625
    %v653 = vpop.f32.mrf.mxu0
    %v654 = vadd.f32 0.0, %v653
    %655 = vmatmul.f32.gmra.mxu0 %v628
    %v656 = vpop.f32.mrf.mxu0
    %v657 = vadd.f32 0.0, %v656
    %658 = vmatmul.f32.gmra.mxu0 %v631
    %v659 = vpop.f32.mrf.mxu0
    %v660 = vadd.f32 0.0, %v659
    %661 = vmatmul.f32.gmra.mxu0 %v634
    %v662 = vpop.f32.mrf.mxu0
    %v663 = vadd.f32 0.0, %v662
    %664 = vdwg.mxu0
    %v665 = vadd.f32 %v583, %v654
    %v666 = vadd.f32 %v584, %v657
    %v667 = vadd.f32 %v585, %v660
    %v668 = vadd.f32 %v586, %v663
    %v669 = vld [vmem:[#allocation2 + $0x20] sm:$0xff]
    %v670 = vld [vmem:[#allocation2 + $0x28] sm:$0xff]
    %v671 = vld [vmem:[#allocation2 + $0x30] sm:$0xff]
    %v672 = vld [vmem:[#allocation2 + $0x38] sm:$0xff]
    %673 = vmatpush.msra.mxu0 %v582
    %674 = vmatpush.msra.mxu0 %v581
    %675 = vmatpush.msra.mxu0 %v580
    %676 = vmatpush.msra.mxu0 %v579
    %677 = vmatpush.msra.mxu0 %v578
    %678 = vmatpush.msra.mxu0 %v577
    %679 = vmatpush.msra.mxu0 %v576
    %680 = vmatpush.msra.mxu0 %v575
    %681 = vmatpush.msra.mxu0 %v574
    %682 = vmatpush.msra.mxu0 %v573
    %683 = vmatpush.msra.mxu0 %v572
    %684 = vmatpush.msra.mxu0 %v571
    %685 = vmatpush.msra.mxu0 %v570
    %686 = vmatpush.msra.mxu0 %v569
    %687 = vmatpush.msra.mxu0 %v568
    %688 = vmatpush.msra.mxu0 %v567
    %689 = vmatmul.f32.gmra.mxu0 %v669
    %v690 = vpop.f32.mrf.mxu0
    %v691 = vadd.f32 0.0, %v690
    %692 = vmatmul.f32.gmra.mxu0 %v670
    %v693 = vpop.f32.mrf.mxu0
    %v694 = vadd.f32 0.0, %v693
    %695 = vmatmul.f32.gmra.mxu0 %v671
    %v696 = vpop.f32.mrf.mxu0
    %v697 = vadd.f32 0.0, %v696
    %698 = vmatmul.f32.gmra.mxu0 %v672
    %v699 = vpop.f32.mrf.mxu0
    %v700 = vadd.f32 0.0, %v699
    %701 = vdwg.mxu0
    %v702 = vld [vmem:[#allocation2 + $0x140] sm:$0xff]
    %v703 = vld [vmem:[#allocation2 + $0x148] sm:$0xff]
    %v704 = vld [vmem:[#allocation2 + $0x150] sm:$0xff]
    %v705 = vld [vmem:[#allocation2 + $0x158] sm:$0xff]
    %v707 = vsel %vm50, %v691, 0
    %v710 = vsel %vm50, %v694, 0
    %v713 = vsel %vm50, %v697, 0
    %v716 = vsel %vm50, %v700, 0
    %718 = vmatpush.msra.mxu0 0.0
    %719 = vmatpush.msra.mxu0 0.0
    %720 = vmatpush.msra.mxu0 0.0
    %721 = vmatpush.msra.mxu0 0.0
    %722 = vmatpush.msra.mxu0 0.0
    %723 = vmatpush.msra.mxu0 0.0
    %724 = vmatpush.msra.mxu0 0.0
    %725 = vmatpush.msra.mxu0 0.0
    %726 = vmatpush.msra.mxu0 0.0
    %727 = vmatpush.msra.mxu0 0.0
    %728 = vmatpush.msra.mxu0 0.0
    %729 = vmatpush.msra.mxu0 0.0
    %730 = vmatpush.msra.mxu0 %v705
    %731 = vmatpush.msra.mxu0 %v704
    %732 = vmatpush.msra.mxu0 %v703
    %733 = vmatpush.msra.mxu0 %v702
    %734 = vmatmul.f32.gmra.mxu0 %v707
    %v735 = vpop.f32.mrf.mxu0
    %v736 = vadd.f32 0.0, %v735
    %737 = vmatmul.f32.gmra.mxu0 %v710
    %v738 = vpop.f32.mrf.mxu0
    %v739 = vadd.f32 0.0, %v738
    %740 = vmatmul.f32.gmra.mxu0 %v713
    %v741 = vpop.f32.mrf.mxu0
    %v742 = vadd.f32 0.0, %v741
    %743 = vmatmul.f32.gmra.mxu0 %v716
    %v744 = vpop.f32.mrf.mxu0
    %v745 = vadd.f32 0.0, %v744
    %746 = vdwg.mxu0
    %v747 = vadd.f32 %v665, %v736
    %v748 = vadd.f32 %v666, %v739
    %v749 = vadd.f32 %v667, %v742
    %v750 = vadd.f32 %v668, %v745
    %v751 = vld [vmem:[#allocation2 + $0x40] sm:$0xff]
    %v752 = vld [vmem:[#allocation2 + $0x48] sm:$0xff]
    %v753 = vld [vmem:[#allocation2 + $0x50] sm:$0xff]
    %v754 = vld [vmem:[#allocation2 + $0x58] sm:$0xff]
    %755 = vmatpush.msra.mxu0 %v582
    %756 = vmatpush.msra.mxu0 %v581
    %757 = vmatpush.msra.mxu0 %v580
    %758 = vmatpush.msra.mxu0 %v579
    %759 = vmatpush.msra.mxu0 %v578
    %760 = vmatpush.msra.mxu0 %v577
    %761 = vmatpush.msra.mxu0 %v576
    %762 = vmatpush.msra.mxu0 %v575
    %763 = vmatpush.msra.mxu0 %v574
    %764 = vmatpush.msra.mxu0 %v573
    %765 = vmatpush.msra.mxu0 %v572
    %766 = vmatpush.msra.mxu0 %v571
    %767 = vmatpush.msra.mxu0 %v570
    %768 = vmatpush.msra.mxu0 %v569
    %769 = vmatpush.msra.mxu0 %v568
    %770 = vmatpush.msra.mxu0 %v567
    %771 = vmatmul.f32.gmra.mxu0 %v751
    %v772 = vpop.f32.mrf.mxu0
    %v773 = vadd.f32 0.0, %v772
    %774 = vmatmul.f32.gmra.mxu0 %v752
    %v775 = vpop.f32.mrf.mxu0
    %v776 = vadd.f32 0.0, %v775
    %777 = vmatmul.f32.gmra.mxu0 %v753
    %v778 = vpop.f32.mrf.mxu0
    %v779 = vadd.f32 0.0, %v778
    %780 = vmatmul.f32.gmra.mxu0 %v754
    %v781 = vpop.f32.mrf.mxu0
    %v782 = vadd.f32 0.0, %v781
    %783 = vdwg.mxu0
    %v784 = vld [vmem:[#allocation2 + $0x160] sm:$0xff]
    %v785 = vld [vmem:[#allocation2 + $0x168] sm:$0xff]
    %v786 = vld [vmem:[#allocation2 + $0x170] sm:$0xff]
    %v787 = vld [vmem:[#allocation2 + $0x178] sm:$0xff]
    %v789 = vsel %vm50, %v773, 0
    %v792 = vsel %vm50, %v776, 0
    %v795 = vsel %vm50, %v779, 0
    %v798 = vsel %vm50, %v782, 0
    %800 = vmatpush.msra.mxu0 0.0
    %801 = vmatpush.msra.mxu0 0.0
    %802 = vmatpush.msra.mxu0 0.0
    %803 = vmatpush.msra.mxu0 0.0
    %804 = vmatpush.msra.mxu0 0.0
    %805 = vmatpush.msra.mxu0 0.0
    %806 = vmatpush.msra.mxu0 0.0
    %807 = vmatpush.msra.mxu0 0.0
    %808 = vmatpush.msra.mxu0 0.0
    %809 = vmatpush.msra.mxu0 0.0
    %810 = vmatpush.msra.mxu0 0.0
    %811 = vmatpush.msra.mxu0 0.0
    %812 = vmatpush.msra.mxu0 %v787
    %813 = vmatpush.msra.mxu0 %v786
    %814 = vmatpush.msra.mxu0 %v785
    %815 = vmatpush.msra.mxu0 %v784
    %816 = vmatmul.f32.gmra.mxu0 %v789
    %v817 = vpop.f32.mrf.mxu0
    %v818 = vadd.f32 0.0, %v817
    %819 = vmatmul.f32.gmra.mxu0 %v792
    %v820 = vpop.f32.mrf.mxu0
    %v821 = vadd.f32 0.0, %v820
    %822 = vmatmul.f32.gmra.mxu0 %v795
    %v823 = vpop.f32.mrf.mxu0
    %v824 = vadd.f32 0.0, %v823
    %825 = vmatmul.f32.gmra.mxu0 %v798
    %v826 = vpop.f32.mrf.mxu0
    %v827 = vadd.f32 0.0, %v826
    %828 = vdwg.mxu0
    %v829 = vadd.f32 %v747, %v818
    %v830 = vadd.f32 %v748, %v821
    %v831 = vadd.f32 %v749, %v824
    %v832 = vadd.f32 %v750, %v827
    %v833 = vld [vmem:[#allocation2 + $0x60] sm:$0xff]
    %v834 = vld [vmem:[#allocation2 + $0x68] sm:$0xff]
    %v835 = vld [vmem:[#allocation2 + $0x70] sm:$0xff]
    %v836 = vld [vmem:[#allocation2 + $0x78] sm:$0xff]
    %837 = vmatpush.msra.mxu0 %v582
    %838 = vmatpush.msra.mxu0 %v581
    %839 = vmatpush.msra.mxu0 %v580
    %840 = vmatpush.msra.mxu0 %v579
    %841 = vmatpush.msra.mxu0 %v578
    %842 = vmatpush.msra.mxu0 %v577
    %843 = vmatpush.msra.mxu0 %v576
    %844 = vmatpush.msra.mxu0 %v575
    %845 = vmatpush.msra.mxu0 %v574
    %846 = vmatpush.msra.mxu0 %v573
    %847 = vmatpush.msra.mxu0 %v572
    %848 = vmatpush.msra.mxu0 %v571
    %849 = vmatpush.msra.mxu0 %v570
    %850 = vmatpush.msra.mxu0 %v569
    %851 = vmatpush.msra.mxu0 %v568
    %852 = vmatpush.msra.mxu0 %v567
    %853 = vmatmul.f32.gmra.mxu0 %v833
    %v854 = vpop.f32.mrf.mxu0
    %v855 = vadd.f32 0.0, %v854
    %856 = vmatmul.f32.gmra.mxu0 %v834
    %v857 = vpop.f32.mrf.mxu0
    %v858 = vadd.f32 0.0, %v857
    %859 = vmatmul.f32.gmra.mxu0 %v835
    %v860 = vpop.f32.mrf.mxu0
    %v861 = vadd.f32 0.0, %v860
    %862 = vmatmul.f32.gmra.mxu0 %v836
    %v863 = vpop.f32.mrf.mxu0
    %v864 = vadd.f32 0.0, %v863
    %865 = vdwg.mxu0
    %v866 = vld [vmem:[#allocation2 + $0x180] sm:$0xff]
    %v867 = vld [vmem:[#allocation2 + $0x188] sm:$0xff]
    %v868 = vld [vmem:[#allocation2 + $0x190] sm:$0xff]
    %v869 = vld [vmem:[#allocation2 + $0x198] sm:$0xff]
    %v871 = vsel %vm50, %v855, 0
    %v874 = vsel %vm50, %v858, 0
    %v877 = vsel %vm50, %v861, 0
    %v880 = vsel %vm50, %v864, 0
    %882 = vmatpush.msra.mxu0 0.0
    %883 = vmatpush.msra.mxu0 0.0
    %884 = vmatpush.msra.mxu0 0.0
    %885 = vmatpush.msra.mxu0 0.0
    %886 = vmatpush.msra.mxu0 0.0
    %887 = vmatpush.msra.mxu0 0.0
    %888 = vmatpush.msra.mxu0 0.0
    %889 = vmatpush.msra.mxu0 0.0
    %890 = vmatpush.msra.mxu0 0.0
    %891 = vmatpush.msra.mxu0 0.0
    %892 = vmatpush.msra.mxu0 0.0
    %893 = vmatpush.msra.mxu0 0.0
    %894 = vmatpush.msra.mxu0 %v869
    %895 = vmatpush.msra.mxu0 %v868
    %896 = vmatpush.msra.mxu0 %v867
    %897 = vmatpush.msra.mxu0 %v866
    %898 = vmatmul.f32.gmra.mxu0 %v871
    %v899 = vpop.f32.mrf.mxu0
    %v900 = vadd.f32 0.0, %v899
    %901 = vmatmul.f32.gmra.mxu0 %v874
    %v902 = vpop.f32.mrf.mxu0
    %v903 = vadd.f32 0.0, %v902
    %904 = vmatmul.f32.gmra.mxu0 %v877
    %v905 = vpop.f32.mrf.mxu0
    %v906 = vadd.f32 0.0, %v905
    %907 = vmatmul.f32.gmra.mxu0 %v880
    %v908 = vpop.f32.mrf.mxu0
    %v909 = vadd.f32 0.0, %v908
    %910 = vdwg.mxu0
    %v911 = vadd.f32 %v829, %v900
    %v912 = vadd.f32 %v830, %v903
    %v913 = vadd.f32 %v831, %v906
    %v914 = vadd.f32 %v832, %v909
    %v915 = vld [vmem:[#allocation2 + $0x80] sm:$0xff]
    %v916 = vld [vmem:[#allocation2 + $0x88] sm:$0xff]
    %v917 = vld [vmem:[#allocation2 + $0x90] sm:$0xff]
    %v918 = vld [vmem:[#allocation2 + $0x98] sm:$0xff]
    %919 = vmatpush.msra.mxu0 %v582
    %920 = vmatpush.msra.mxu0 %v581
    %921 = vmatpush.msra.mxu0 %v580
    %922 = vmatpush.msra.mxu0 %v579
    %923 = vmatpush.msra.mxu0 %v578
    %924 = vmatpush.msra.mxu0 %v577
    %925 = vmatpush.msra.mxu0 %v576
    %926 = vmatpush.msra.mxu0 %v575
    %927 = vmatpush.msra.mxu0 %v574
    %928 = vmatpush.msra.mxu0 %v573
    %929 = vmatpush.msra.mxu0 %v572
    %930 = vmatpush.msra.mxu0 %v571
    %931 = vmatpush.msra.mxu0 %v570
    %932 = vmatpush.msra.mxu0 %v569
    %933 = vmatpush.msra.mxu0 %v568
    %934 = vmatpush.msra.mxu0 %v567
    %935 = vmatmul.f32.gmra.mxu0 %v915
    %v936 = vpop.f32.mrf.mxu0
    %v937 = vadd.f32 0.0, %v936
    %938 = vmatmul.f32.gmra.mxu0 %v916
    %v939 = vpop.f32.mrf.mxu0
    %v940 = vadd.f32 0.0, %v939
    %941 = vmatmul.f32.gmra.mxu0 %v917
    %v942 = vpop.f32.mrf.mxu0
    %v943 = vadd.f32 0.0, %v942
    %944 = vmatmul.f32.gmra.mxu0 %v918
    %v945 = vpop.f32.mrf.mxu0
    %v946 = vadd.f32 0.0, %v945
    %947 = vdwg.mxu0
    %v948 = vld [vmem:[#allocation2 + $0x1a0] sm:$0xff]
    %v949 = vld [vmem:[#allocation2 + $0x1a8] sm:$0xff]
    %v950 = vld [vmem:[#allocation2 + $0x1b0] sm:$0xff]
    %v951 = vld [vmem:[#allocation2 + $0x1b8] sm:$0xff]
    %v953 = vsel %vm50, %v937, 0
    %v956 = vsel %vm50, %v940, 0
    %v959 = vsel %vm50, %v943, 0
    %v962 = vsel %vm50, %v946, 0
    %964 = vmatpush.msra.mxu0 0.0
    %965 = vmatpush.msra.mxu0 0.0
    %966 = vmatpush.msra.mxu0 0.0
    %967 = vmatpush.msra.mxu0 0.0
    %968 = vmatpush.msra.mxu0 0.0
    %969 = vmatpush.msra.mxu0 0.0
    %970 = vmatpush.msra.mxu0 0.0
    %971 = vmatpush.msra.mxu0 0.0
    %972 = vmatpush.msra.mxu0 0.0
    %973 = vmatpush.msra.mxu0 0.0
    %974 = vmatpush.msra.mxu0 0.0
    %975 = vmatpush.msra.mxu0 0.0
    %976 = vmatpush.msra.mxu0 %v951
    %977 = vmatpush.msra.mxu0 %v950
    %978 = vmatpush.msra.mxu0 %v949
    %979 = vmatpush.msra.mxu0 %v948
    %980 = vmatmul.f32.gmra.mxu0 %v953
    %v981 = vpop.f32.mrf.mxu0
    %v982 = vadd.f32 0.0, %v981
    %983 = vmatmul.f32.gmra.mxu0 %v956
    %v984 = vpop.f32.mrf.mxu0
    %v985 = vadd.f32 0.0, %v984
    %986 = vmatmul.f32.gmra.mxu0 %v959
    %v987 = vpop.f32.mrf.mxu0
    %v988 = vadd.f32 0.0, %v987
    %989 = vmatmul.f32.gmra.mxu0 %v962
    %v990 = vpop.f32.mrf.mxu0
    %v991 = vadd.f32 0.0, %v990
    %992 = vdwg.mxu0
    %v993 = vadd.f32 %v911, %v982
    %v994 = vadd.f32 %v912, %v985
    %v995 = vadd.f32 %v913, %v988
    %v996 = vadd.f32 %v914, %v991
    %v997 = vld [vmem:[#allocation2 + $0xa0] sm:$0xff]
    %v998 = vld [vmem:[#allocation2 + $0xa8] sm:$0xff]
    %v999 = vld [vmem:[#allocation2 + $0xb0] sm:$0xff]
    %v1000 = vld [vmem:[#allocation2 + $0xb8] sm:$0xff]
    %1001 = vmatpush.msra.mxu0 %v582
    %1002 = vmatpush.msra.mxu0 %v581
    %1003 = vmatpush.msra.mxu0 %v580
    %1004 = vmatpush.msra.mxu0 %v579
    %1005 = vmatpush.msra.mxu0 %v578
    %1006 = vmatpush.msra.mxu0 %v577
    %1007 = vmatpush.msra.mxu0 %v576
    %1008 = vmatpush.msra.mxu0 %v575
    %1009 = vmatpush.msra.mxu0 %v574
    %1010 = vmatpush.msra.mxu0 %v573
    %1011 = vmatpush.msra.mxu0 %v572
    %1012 = vmatpush.msra.mxu0 %v571
    %1013 = vmatpush.msra.mxu0 %v570
    %1014 = vmatpush.msra.mxu0 %v569
    %1015 = vmatpush.msra.mxu0 %v568
    %1016 = vmatpush.msra.mxu0 %v567
    %1017 = vmatmul.f32.gmra.mxu0 %v997
    %v1018 = vpop.f32.mrf.mxu0
    %v1019 = vadd.f32 0.0, %v1018
    %1020 = vmatmul.f32.gmra.mxu0 %v998
    %v1021 = vpop.f32.mrf.mxu0
    %v1022 = vadd.f32 0.0, %v1021
    %1023 = vmatmul.f32.gmra.mxu0 %v999
    %v1024 = vpop.f32.mrf.mxu0
    %v1025 = vadd.f32 0.0, %v1024
    %1026 = vmatmul.f32.gmra.mxu0 %v1000
    %v1027 = vpop.f32.mrf.mxu0
    %v1028 = vadd.f32 0.0, %v1027
    %1029 = vdwg.mxu0
    %v1030 = vld [vmem:[#allocation2 + $0x1c0] sm:$0xff]
    %v1031 = vld [vmem:[#allocation2 + $0x1c8] sm:$0xff]
    %v1032 = vld [vmem:[#allocation2 + $0x1d0] sm:$0xff]
    %v1033 = vld [vmem:[#allocation2 + $0x1d8] sm:$0xff]
    %v1035 = vsel %vm50, %v1019, 0
    %v1038 = vsel %vm50, %v1022, 0
    %v1041 = vsel %vm50, %v1025, 0
    %v1044 = vsel %vm50, %v1028, 0
    %1046 = vmatpush.msra.mxu0 0.0
    %1047 = vmatpush.msra.mxu0 0.0
    %1048 = vmatpush.msra.mxu0 0.0
    %1049 = vmatpush.msra.mxu0 0.0
    %1050 = vmatpush.msra.mxu0 0.0
    %1051 = vmatpush.msra.mxu0 0.0
    %1052 = vmatpush.msra.mxu0 0.0
    %1053 = vmatpush.msra.mxu0 0.0
    %1054 = vmatpush.msra.mxu0 0.0
    %1055 = vmatpush.msra.mxu0 0.0
    %1056 = vmatpush.msra.mxu0 0.0
    %1057 = vmatpush.msra.mxu0 0.0
    %1058 = vmatpush.msra.mxu0 %v1033
    %1059 = vmatpush.msra.mxu0 %v1032
    %1060 = vmatpush.msra.mxu0 %v1031
    %1061 = vmatpush.msra.mxu0 %v1030
    %1062 = vmatmul.f32.gmra.mxu0 %v1035
    %v1063 = vpop.f32.mrf.mxu0
    %v1064 = vadd.f32 0.0, %v1063
    %1065 = vmatmul.f32.gmra.mxu0 %v1038
    %v1066 = vpop.f32.mrf.mxu0
    %v1067 = vadd.f32 0.0, %v1066
    %1068 = vmatmul.f32.gmra.mxu0 %v1041
    %v1069 = vpop.f32.mrf.mxu0
    %v1070 = vadd.f32 0.0, %v1069
    %1071 = vmatmul.f32.gmra.mxu0 %v1044
    %v1072 = vpop.f32.mrf.mxu0
    %v1073 = vadd.f32 0.0, %v1072
    %1074 = vdwg.mxu0
    %v1075 = vadd.f32 %v993, %v1064
    %v1076 = vadd.f32 %v994, %v1067
    %v1077 = vadd.f32 %v995, %v1070
    %v1078 = vadd.f32 %v996, %v1073
    %v1079 = vld [vmem:[#allocation2 + $0xc0] sm:$0xff]
    %v1080 = vld [vmem:[#allocation2 + $0xc8] sm:$0xff]
    %v1081 = vld [vmem:[#allocation2 + $0xd0] sm:$0xff]
    %v1082 = vld [vmem:[#allocation2 + $0xd8] sm:$0xff]
    %1083 = vmatpush.msra.mxu0 %v582
    %1084 = vmatpush.msra.mxu0 %v581
    %1085 = vmatpush.msra.mxu0 %v580
    %1086 = vmatpush.msra.mxu0 %v579
    %1087 = vmatpush.msra.mxu0 %v578
    %1088 = vmatpush.msra.mxu0 %v577
    %1089 = vmatpush.msra.mxu0 %v576
    %1090 = vmatpush.msra.mxu0 %v575
    %1091 = vmatpush.msra.mxu0 %v574
    %1092 = vmatpush.msra.mxu0 %v573
    %1093 = vmatpush.msra.mxu0 %v572
    %1094 = vmatpush.msra.mxu0 %v571
    %1095 = vmatpush.msra.mxu0 %v570
    %1096 = vmatpush.msra.mxu0 %v569
    %1097 = vmatpush.msra.mxu0 %v568
    %1098 = vmatpush.msra.mxu0 %v567
    %1099 = vmatmul.f32.gmra.mxu0 %v1079
    %v1100 = vpop.f32.mrf.mxu0
    %v1101 = vadd.f32 0.0, %v1100
    %1102 = vmatmul.f32.gmra.mxu0 %v1080
    %v1103 = vpop.f32.mrf.mxu0
    %v1104 = vadd.f32 0.0, %v1103
    %1105 = vmatmul.f32.gmra.mxu0 %v1081
    %v1106 = vpop.f32.mrf.mxu0
    %v1107 = vadd.f32 0.0, %v1106
    %1108 = vmatmul.f32.gmra.mxu0 %v1082
    %v1109 = vpop.f32.mrf.mxu0
    %v1110 = vadd.f32 0.0, %v1109
    %1111 = vdwg.mxu0
    %v1112 = vld [vmem:[#allocation2 + $0x1e0] sm:$0xff]
    %v1113 = vld [vmem:[#allocation2 + $0x1e8] sm:$0xff]
    %v1114 = vld [vmem:[#allocation2 + $0x1f0] sm:$0xff]
    %v1115 = vld [vmem:[#allocation2 + $0x1f8] sm:$0xff]
    %v1117 = vsel %vm50, %v1101, 0
    %v1120 = vsel %vm50, %v1104, 0
    %v1123 = vsel %vm50, %v1107, 0
    %v1126 = vsel %vm50, %v1110, 0
    %1128 = vmatpush.msra.mxu0 0.0
    %1129 = vmatpush.msra.mxu0 0.0
    %1130 = vmatpush.msra.mxu0 0.0
    %1131 = vmatpush.msra.mxu0 0.0
    %1132 = vmatpush.msra.mxu0 0.0
    %1133 = vmatpush.msra.mxu0 0.0
    %1134 = vmatpush.msra.mxu0 0.0
    %1135 = vmatpush.msra.mxu0 0.0
    %1136 = vmatpush.msra.mxu0 0.0
    %1137 = vmatpush.msra.mxu0 0.0
    %1138 = vmatpush.msra.mxu0 0.0
    %1139 = vmatpush.msra.mxu0 0.0
    %1140 = vmatpush.msra.mxu0 %v1115
    %1141 = vmatpush.msra.mxu0 %v1114
    %1142 = vmatpush.msra.mxu0 %v1113
    %1143 = vmatpush.msra.mxu0 %v1112
    %1144 = vmatmul.f32.gmra.mxu0 %v1117
    %v1145 = vpop.f32.mrf.mxu0
    %v1146 = vadd.f32 0.0, %v1145
    %1147 = vmatmul.f32.gmra.mxu0 %v1120
    %v1148 = vpop.f32.mrf.mxu0
    %v1149 = vadd.f32 0.0, %v1148
    %1150 = vmatmul.f32.gmra.mxu0 %v1123
    %v1151 = vpop.f32.mrf.mxu0
    %v1152 = vadd.f32 0.0, %v1151
    %1153 = vmatmul.f32.gmra.mxu0 %v1126
    %v1154 = vpop.f32.mrf.mxu0
    %v1155 = vadd.f32 0.0, %v1154
    %1156 = vdwg.mxu0
    %v1157 = vadd.f32 %v1075, %v1146
    %v1158 = vadd.f32 %v1076, %v1149
    %v1159 = vadd.f32 %v1077, %v1152
    %v1160 = vadd.f32 %v1078, %v1155
    %v1161 = vld [vmem:[#allocation2 + $0xe0] sm:$0xff]
    %v1162 = vld [vmem:[#allocation2 + $0xe8] sm:$0xff]
    %v1163 = vld [vmem:[#allocation2 + $0xf0] sm:$0xff]
    %v1164 = vld [vmem:[#allocation2 + $0xf8] sm:$0xff]
    %1165 = vmatpush.msra.mxu0 %v582
    %1166 = vmatpush.msra.mxu0 %v581
    %1167 = vmatpush.msra.mxu0 %v580
    %1168 = vmatpush.msra.mxu0 %v579
    %1169 = vmatpush.msra.mxu0 %v578
    %1170 = vmatpush.msra.mxu0 %v577
    %1171 = vmatpush.msra.mxu0 %v576
    %1172 = vmatpush.msra.mxu0 %v575
    %1173 = vmatpush.msra.mxu0 %v574
    %1174 = vmatpush.msra.mxu0 %v573
    %1175 = vmatpush.msra.mxu0 %v572
    %1176 = vmatpush.msra.mxu0 %v571
    %1177 = vmatpush.msra.mxu0 %v570
    %1178 = vmatpush.msra.mxu0 %v569
    %1179 = vmatpush.msra.mxu0 %v568
    %1180 = vmatpush.msra.mxu0 %v567
    %1181 = vmatmul.f32.gmra.mxu0 %v1161
    %v1182 = vpop.f32.mrf.mxu0
    %v1183 = vadd.f32 0.0, %v1182
    %1184 = vmatmul.f32.gmra.mxu0 %v1162
    %v1185 = vpop.f32.mrf.mxu0
    %v1186 = vadd.f32 0.0, %v1185
    %1187 = vmatmul.f32.gmra.mxu0 %v1163
    %v1188 = vpop.f32.mrf.mxu0
    %v1189 = vadd.f32 0.0, %v1188
    %1190 = vmatmul.f32.gmra.mxu0 %v1164
    %v1191 = vpop.f32.mrf.mxu0
    %v1192 = vadd.f32 0.0, %v1191
    %1193 = vdwg.mxu0
    %v1194 = vld [vmem:[#allocation2 + $0x200] sm:$0xff]
    %v1195 = vld [vmem:[#allocation2 + $0x208] sm:$0xff]
    %v1196 = vld [vmem:[#allocation2 + $0x210] sm:$0xff]
    %v1197 = vld [vmem:[#allocation2 + $0x218] sm:$0xff]
    %v1199 = vsel %vm50, %v1183, 0
    %v1202 = vsel %vm50, %v1186, 0
    %v1205 = vsel %vm50, %v1189, 0
    %v1208 = vsel %vm50, %v1192, 0
    %1210 = vmatpush.msra.mxu0 0.0
    %1211 = vmatpush.msra.mxu0 0.0
    %1212 = vmatpush.msra.mxu0 0.0
    %1213 = vmatpush.msra.mxu0 0.0
    %1214 = vmatpush.msra.mxu0 0.0
    %1215 = vmatpush.msra.mxu0 0.0
    %1216 = vmatpush.msra.mxu0 0.0
    %1217 = vmatpush.msra.mxu0 0.0
    %1218 = vmatpush.msra.mxu0 0.0
    %1219 = vmatpush.msra.mxu0 0.0
    %1220 = vmatpush.msra.mxu0 0.0
    %1221 = vmatpush.msra.mxu0 0.0
    %1222 = vmatpush.msra.mxu0 %v1197
    %1223 = vmatpush.msra.mxu0 %v1196
    %1224 = vmatpush.msra.mxu0 %v1195
    %1225 = vmatpush.msra.mxu0 %v1194
    %1226 = vmatmul.f32.gmra.mxu0 %v1199
    %v1227 = vpop.f32.mrf.mxu0
    %v1228 = vadd.f32 0.0, %v1227
    %1229 = vmatmul.f32.gmra.mxu0 %v1202
    %v1230 = vpop.f32.mrf.mxu0
    %v1231 = vadd.f32 0.0, %v1230
    %1232 = vmatmul.f32.gmra.mxu0 %v1205
    %v1233 = vpop.f32.mrf.mxu0
    %v1234 = vadd.f32 0.0, %v1233
    %1235 = vmatmul.f32.gmra.mxu0 %v1208
    %v1236 = vpop.f32.mrf.mxu0
    %v1237 = vadd.f32 0.0, %v1236
    %1238 = vdwg.mxu0
    %v1239 = vadd.f32 %v1157, %v1228
    %v1240 = vadd.f32 %v1158, %v1231
    %v1241 = vadd.f32 %v1159, %v1234
    %v1242 = vadd.f32 %v1160, %v1237
    %v1243 = vld [vmem:[#allocation2 + $0x100] sm:$0xff]
    %v1244 = vld [vmem:[#allocation2 + $0x108] sm:$0xff]
    %v1245 = vld [vmem:[#allocation2 + $0x110] sm:$0xff]
    %v1246 = vld [vmem:[#allocation2 + $0x118] sm:$0xff]
    %1247 = vmatpush.msra.mxu0 %v582
    %1248 = vmatpush.msra.mxu0 %v581
    %1249 = vmatpush.msra.mxu0 %v580
    %1250 = vmatpush.msra.mxu0 %v579
    %1251 = vmatpush.msra.mxu0 %v578
    %1252 = vmatpush.msra.mxu0 %v577
    %1253 = vmatpush.msra.mxu0 %v576
    %1254 = vmatpush.msra.mxu0 %v575
    %1255 = vmatpush.msra.mxu0 %v574
    %1256 = vmatpush.msra.mxu0 %v573
    %1257 = vmatpush.msra.mxu0 %v572
    %1258 = vmatpush.msra.mxu0 %v571
    %1259 = vmatpush.msra.mxu0 %v570
    %1260 = vmatpush.msra.mxu0 %v569
    %1261 = vmatpush.msra.mxu0 %v568
    %1262 = vmatpush.msra.mxu0 %v567
    %1263 = vmatmul.f32.gmra.mxu0 %v1243
    %v1264 = vpop.f32.mrf.mxu0
    %v1265 = vadd.f32 0.0, %v1264
    %1266 = vmatmul.f32.gmra.mxu0 %v1244
    %v1267 = vpop.f32.mrf.mxu0
    %v1268 = vadd.f32 0.0, %v1267
    %1269 = vmatmul.f32.gmra.mxu0 %v1245
    %v1270 = vpop.f32.mrf.mxu0
    %v1271 = vadd.f32 0.0, %v1270
    %1272 = vmatmul.f32.gmra.mxu0 %v1246
    %v1273 = vpop.f32.mrf.mxu0
    %v1274 = vadd.f32 0.0, %v1273
    %1275 = vdwg.mxu0
    %v1276 = vld [vmem:[#allocation2 + $0x220] sm:$0xff]
    %v1277 = vld [vmem:[#allocation2 + $0x228] sm:$0xff]
    %v1278 = vld [vmem:[#allocation2 + $0x230] sm:$0xff]
    %v1279 = vld [vmem:[#allocation2 + $0x238] sm:$0xff]
    %v1281 = vsel %vm50, %v1265, 0
    %v1284 = vsel %vm50, %v1268, 0
    %v1287 = vsel %vm50, %v1271, 0
    %v1290 = vsel %vm50, %v1274, 0
    %1292 = vmatpush.msra.mxu0 0.0
    %1293 = vmatpush.msra.mxu0 0.0
    %1294 = vmatpush.msra.mxu0 0.0
    %1295 = vmatpush.msra.mxu0 0.0
    %1296 = vmatpush.msra.mxu0 0.0
    %1297 = vmatpush.msra.mxu0 0.0
    %1298 = vmatpush.msra.mxu0 0.0
    %1299 = vmatpush.msra.mxu0 0.0
    %1300 = vmatpush.msra.mxu0 0.0
    %1301 = vmatpush.msra.mxu0 0.0
    %1302 = vmatpush.msra.mxu0 0.0
    %1303 = vmatpush.msra.mxu0 0.0
    %1304 = vmatpush.msra.mxu0 %v1279
    %1305 = vmatpush.msra.mxu0 %v1278
    %1306 = vmatpush.msra.mxu0 %v1277
    %1307 = vmatpush.msra.mxu0 %v1276
    %1308 = vmatmul.f32.gmra.mxu0 %v1281
    %v1309 = vpop.f32.mrf.mxu0
    %v1310 = vadd.f32 0.0, %v1309
    %1311 = vmatmul.f32.gmra.mxu0 %v1284
    %v1312 = vpop.f32.mrf.mxu0
    %v1313 = vadd.f32 0.0, %v1312
    %1314 = vmatmul.f32.gmra.mxu0 %v1287
    %v1315 = vpop.f32.mrf.mxu0
    %v1316 = vadd.f32 0.0, %v1315
    %1317 = vmatmul.f32.gmra.mxu0 %v1290
    %v1318 = vpop.f32.mrf.mxu0
    %v1319 = vadd.f32 0.0, %v1318
    %1320 = vdwg.mxu0
    %v1321 = vadd.f32 %v1239, %v1310
    %v1322 = vadd.f32 %v1240, %v1313
    %v1323 = vadd.f32 %v1241, %v1316
    %v1324 = vadd.f32 %v1242, %v1319
    %v1325 = vld [vmem:[#allocation2 + $0x2b0] sm:$0xff]
    %v1326 = vld [vmem:[#allocation2 + $0x2b8] sm:$0xff]
    %v1327 = vld [vmem:[#allocation2 + $0x2c0] sm:$0xff]
    %v1328 = vld [vmem:[#allocation2 + $0x2c8] sm:$0xff]
    %v1329 = vld [vmem:[#allocation2 + $0x2d0] sm:$0x1]
    %v1330 = vld [vmem:[#allocation2 + $0x2d8] sm:$0x1]
    %v1332 = vsel %vm50, %v1321, 0
    %v1335 = vsel %vm50, %v1322, 0
    %v1338 = vsel %vm50, %v1323, 0
    %v1341 = vsel %vm50, %v1324, 0
    %1343 = vmatpush.msra.mxu0 0.0
    %1344 = vmatpush.msra.mxu0 0.0
    %1345 = vmatpush.msra.mxu0 0.0
    %1346 = vmatpush.msra.mxu0 0.0
    %1347 = vmatpush.msra.mxu0 0.0
    %1348 = vmatpush.msra.mxu0 0.0
    %1349 = vmatpush.msra.mxu0 0.0
    %1350 = vmatpush.msra.mxu0 0.0
    %1351 = vmatpush.msra.mxu0 0.0
    %1352 = vmatpush.msra.mxu0 0.0
    %1353 = vmatpush.msra.mxu0 0.0
    %1354 = vmatpush.msra.mxu0 0.0
    %1355 = vmatpush.msra.mxu0 %v1328
    %1356 = vmatpush.msra.mxu0 %v1327
    %1357 = vmatpush.msra.mxu0 %v1326
    %1358 = vmatpush.msra.mxu0 %v1325
    %1359 = vmatmul.f32.gmra.mxu0 %v1332
    %v1360 = vpop.f32.mrf.mxu0
    %v1361 = vadd.f32 0.0, %v1360
    %1362 = vmatmul.f32.gmra.mxu0 %v1335
    %v1363 = vpop.f32.mrf.mxu0
    %v1364 = vadd.f32 0.0, %v1363
    %1365 = vmatmul.f32.gmra.mxu0 %v1338
    %v1366 = vpop.f32.mrf.mxu0
    %v1367 = vadd.f32 0.0, %v1366
    %1368 = vmatmul.f32.gmra.mxu0 %v1341
    %v1369 = vpop.f32.mrf.mxu0
    %v1370 = vadd.f32 0.0, %v1369
    %1371 = vdwg.mxu0
    %v1372 = vmul.f32 %v1321, %v1321
    %v1373 = vmul.f32 %v1322, %v1322
    %v1374 = vmul.f32 %v1323, %v1323
    %v1375 = vmul.f32 %v1324, %v1324
    %v1377 = vsel %vm50, %v1372, 0
    %v1380 = vsel %vm50, %v1373, 0
    %v1383 = vsel %vm50, %v1374, 0
    %v1386 = vsel %vm50, %v1375, 0
    %1388 = vmatpush.msra.mxu0 0.0
    %1389 = vmatpush.msra.mxu0 0.0
    %1390 = vmatpush.msra.mxu0 0.0
    %1391 = vmatpush.msra.mxu0 0.0
    %1392 = vmatpush.msra.mxu0 0.0
    %1393 = vmatpush.msra.mxu0 0.0
    %1394 = vmatpush.msra.mxu0 0.0
    %1395 = vmatpush.msra.mxu0 0.0
    %1396 = vmatpush.msra.mxu0 0.0
    %1397 = vmatpush.msra.mxu0 0.0
    %1398 = vmatpush.msra.mxu0 0.0
    %1399 = vmatpush.msra.mxu0 0.0
    %1400 = vmatpush.msra.mxu0 %v1328
    %1401 = vmatpush.msra.mxu0 %v1327
    %1402 = vmatpush.msra.mxu0 %v1326
    %1403 = vmatpush.msra.mxu0 %v1325
    %1404 = vmatmul.f32.gmra.mxu0 %v1377
    %v1405 = vpop.f32.mrf.mxu0
    %v1406 = vadd.f32 0.0, %v1405
    %1407 = vmatmul.f32.gmra.mxu0 %v1380
    %v1408 = vpop.f32.mrf.mxu0
    %v1409 = vadd.f32 0.0, %v1408
    %1410 = vmatmul.f32.gmra.mxu0 %v1383
    %v1411 = vpop.f32.mrf.mxu0
    %v1412 = vadd.f32 0.0, %v1411
    %1413 = vmatmul.f32.gmra.mxu0 %v1386
    %v1414 = vpop.f32.mrf.mxu0
    %v1415 = vadd.f32 0.0, %v1414
    %1416 = vdwg.mxu0
    %v1417 = vmul.f32 %v1361, %v1361
    %v1418 = vmul.f32 %v1364, %v1364
    %v1419 = vmul.f32 %v1367, %v1367
    %v1420 = vmul.f32 %v1370, %v1370
    %v1421 = vsub.f32 %v1406, %v1417
    %v1422 = vsub.f32 %v1409, %v1418
    %v1423 = vsub.f32 %v1412, %v1419
    %v1424 = vsub.f32 %v1415, %v1420
    %v1425 = vmax.f32 %v1421, 0.0
    %v1426 = vmax.f32 %v1422, 0.0
    %v1427 = vmax.f32 %v1423, 0.0
    %v1428 = vmax.f32 %v1424, 0.0
    %v1429 = vsub.f32 %v1321, %v1361
    %v1430 = vsub.f32 %v1322, %v1364
    %v1431 = vsub.f32 %v1323, %v1367
    %v1432 = vsub.f32 %v1324, %v1370
    %v1433 = vadd.f32 %v1425, 1e-05
    %v1434 = vadd.f32 %v1426, 1e-05
    %v1435 = vadd.f32 %v1427, 1e-05
    %v1436 = vadd.f32 %v1428, 1e-05
    %v1437 = vrsqrt.pop %v1433
    %v1438 = vmul.f32 %v1437, %v1433
    %v1439 = vmul.f32 %v1438, %v1437
    %v1440 = vmul.f32 0.5, %v1439
    %v1441 = vsub.f32 1.5, %v1440
    %v1442 = vmul.f32 %v1437, %v1441
    %vm1443 = vweird.f32 %v1433
    %vm1444 = vweird.f32 %v1437
    %vm1445 = vmor %vm1443, %vm1444
    %v1446 = vsel %vm1445, %v1437, %v1442
    %v1447 = vrsqrt.pop %v1434
    %v1448 = vmul.f32 %v1447, %v1434
    %v1449 = vmul.f32 %v1448, %v1447
    %v1450 = vmul.f32 0.5, %v1449
    %v1451 = vsub.f32 1.5, %v1450
    %v1452 = vmul.f32 %v1447, %v1451
    %vm1453 = vweird.f32 %v1434
    %vm1454 = vweird.f32 %v1447
    %vm1455 = vmor %vm1453, %vm1454
    %v1456 = vsel %vm1455, %v1447, %v1452
    %v1457 = vrsqrt.pop %v1435
    %v1458 = vmul.f32 %v1457, %v1435
    %v1459 = vmul.f32 %v1458, %v1457
    %v1460 = vmul.f32 0.5, %v1459
    %v1461 = vsub.f32 1.5, %v1460
    %v1462 = vmul.f32 %v1457, %v1461
    %vm1463 = vweird.f32 %v1435
    %vm1464 = vweird.f32 %v1457
    %vm1465 = vmor %vm1463, %vm1464
    %v1466 = vsel %vm1465, %v1457, %v1462
    %v1467 = vrsqrt.pop %v1436
    %v1468 = vmul.f32 %v1467, %v1436
    %v1469 = vmul.f32 %v1468, %v1467
    %v1470 = vmul.f32 0.5, %v1469
    %v1471 = vsub.f32 1.5, %v1470
    %v1472 = vmul.f32 %v1467, %v1471
    %vm1473 = vweird.f32 %v1436
    %vm1474 = vweird.f32 %v1467
    %vm1475 = vmor %vm1473, %vm1474
    %v1476 = vsel %vm1475, %v1467, %v1472
    %v1477 = vmul.f32 %v1429, %v1446
    %v1478 = vmul.f32 %v1430, %v1456
    %v1479 = vmul.f32 %v1431, %v1466
    %v1480 = vmul.f32 %v1432, %v1476
    %v1481 = vperm.slane %v1329, 0
    %v1482 = vmul.f32 %v1477, %v1481
    %v1483 = vmul.f32 %v1478, %v1481
    %v1484 = vmul.f32 %v1479, %v1481
    %v1485 = vmul.f32 %v1480, %v1481
    %v1486 = vperm.slane %v1330, 0
    %v1487 = vadd.f32 %v1482, %v1486
    %v1488 = vadd.f32 %v1483, %v1486
    %v1489 = vadd.f32 %v1484, %v1486
    %v1490 = vadd.f32 %v1485, %v1486
    %v1491 = vld [vmem:[#allocation2 + $0x2e0] sm:$0x1]
    %v1492 = vld [vmem:[#allocation2 + $0x2e8] sm:$0x1]
    %1493 = vrot.lane.b32.xlu0 %v1321, 96
    %v1494 = vpop.permute.xlu0 %1493
    %1495 = vrot.lane.b32.xlu0 %v1322, 96
    %v1496 = vpop.permute.xlu0 %1495
    %1497 = vrot.lane.b32.xlu0 %v1323, 96
    %v1498 = vpop.permute.xlu0 %1497
    %1499 = vrot.lane.b32.xlu0 %v1324, 96
    %v1500 = vpop.permute.xlu0 %1499
    %v1501 = vsel %vm50, %v1494, 0
    %v1503 = vsel %vm50, %v1496, 0
    %v1505 = vsel %vm50, %v1498, 0
    %v1507 = vsel %vm50, %v1500, 0
    %1509 = vmatpush.msra.mxu0 0.0
    %1510 = vmatpush.msra.mxu0 0.0
    %1511 = vmatpush.msra.mxu0 0.0
    %1512 = vmatpush.msra.mxu0 0.0
    %1513 = vmatpush.msra.mxu0 0.0
    %1514 = vmatpush.msra.mxu0 0.0
    %1515 = vmatpush.msra.mxu0 0.0
    %1516 = vmatpush.msra.mxu0 0.0
    %1517 = vmatpush.msra.mxu0 0.0
    %1518 = vmatpush.msra.mxu0 0.0
    %1519 = vmatpush.msra.mxu0 0.0
    %1520 = vmatpush.msra.mxu0 0.0
    %1521 = vmatpush.msra.mxu0 %v1328
    %1522 = vmatpush.msra.mxu0 %v1327
    %1523 = vmatpush.msra.mxu0 %v1326
    %1524 = vmatpush.msra.mxu0 %v1325
    %1525 = vmatmul.f32.gmra.mxu0 %v1501
    %v1526 = vpop.f32.mrf.mxu0
    %v1527 = vadd.f32 0.0, %v1526
    %1528 = vmatmul.f32.gmra.mxu0 %v1503
    %v1529 = vpop.f32.mrf.mxu0
    %v1530 = vadd.f32 0.0, %v1529
    %1531 = vmatmul.f32.gmra.mxu0 %v1505
    %v1532 = vpop.f32.mrf.mxu0
    %v1533 = vadd.f32 0.0, %v1532
    %1534 = vmatmul.f32.gmra.mxu0 %v1507
    %v1535 = vpop.f32.mrf.mxu0
    %v1536 = vadd.f32 0.0, %v1535
    %1537 = vdwg.mxu0
    %1538 = vrot.lane.b32.xlu0 %v1372, 96
    %v1539 = vpop.permute.xlu0 %1538
    %1540 = vrot.lane.b32.xlu0 %v1373, 96
    %v1541 = vpop.permute.xlu0 %1540
    %1542 = vrot.lane.b32.xlu0 %v1374, 96
    %v1543 = vpop.permute.xlu0 %1542
    %1544 = vrot.lane.b32.xlu0 %v1375, 96
    %v1545 = vpop.permute.xlu0 %1544
    %v1546 = vsel %vm50, %v1539, 0
    %v1548 = vsel %vm50, %v1541, 0
    %v1550 = vsel %vm50, %v1543, 0
    %v1552 = vsel %vm50, %v1545, 0
    %1554 = vmatpush.msra.mxu0 0.0
    %1555 = vmatpush.msra.mxu0 0.0
    %1556 = vmatpush.msra.mxu0 0.0
    %1557 = vmatpush.msra.mxu0 0.0
    %1558 = vmatpush.msra.mxu0 0.0
    %1559 = vmatpush.msra.mxu0 0.0
    %1560 = vmatpush.msra.mxu0 0.0
    %1561 = vmatpush.msra.mxu0 0.0
    %1562 = vmatpush.msra.mxu0 0.0
    %1563 = vmatpush.msra.mxu0 0.0
    %1564 = vmatpush.msra.mxu0 0.0
    %1565 = vmatpush.msra.mxu0 0.0
    %1566 = vmatpush.msra.mxu0 %v1328
    %1567 = vmatpush.msra.mxu0 %v1327
    %1568 = vmatpush.msra.mxu0 %v1326
    %1569 = vmatpush.msra.mxu0 %v1325
    %1570 = vmatmul.f32.gmra.mxu0 %v1546
    %v1571 = vpop.f32.mrf.mxu0
    %v1572 = vadd.f32 0.0, %v1571
    %1573 = vmatmul.f32.gmra.mxu0 %v1548
    %v1574 = vpop.f32.mrf.mxu0
    %v1575 = vadd.f32 0.0, %v1574
    %1576 = vmatmul.f32.gmra.mxu0 %v1550
    %v1577 = vpop.f32.mrf.mxu0
    %v1578 = vadd.f32 0.0, %v1577
    %1579 = vmatmul.f32.gmra.mxu0 %v1552
    %v1580 = vpop.f32.mrf.mxu0
    %v1581 = vadd.f32 0.0, %v1580
    %1582 = vdwg.mxu0
    %v1583 = vmul.f32 %v1527, %v1527
    %v1584 = vmul.f32 %v1530, %v1530
    %v1585 = vmul.f32 %v1533, %v1533
    %v1586 = vmul.f32 %v1536, %v1536
    %v1587 = vsub.f32 %v1572, %v1583
    %v1588 = vsub.f32 %v1575, %v1584
    %v1589 = vsub.f32 %v1578, %v1585
    %v1590 = vsub.f32 %v1581, %v1586
    %v1591 = vmax.f32 %v1587, 0.0
    %v1592 = vmax.f32 %v1588, 0.0
    %v1593 = vmax.f32 %v1589, 0.0
    %v1594 = vmax.f32 %v1590, 0.0
    %1599 = vrot.lane.b32.xlu0 %v1527, 32
    %v1600 = vpop.permute.xlu0 %1599
    %1601 = vrot.lane.b32.xlu0 %v1530, 32
    %v1602 = vpop.permute.xlu0 %1601
    %1603 = vrot.lane.b32.xlu0 %v1533, 32
    %v1604 = vpop.permute.xlu0 %1603
    %1605 = vrot.lane.b32.xlu0 %v1536, 32
    %v1606 = vpop.permute.xlu0 %1605
    %v1611 = vsub.f32 %v1321, %v1600
    %v1612 = vsub.f32 %v1322, %v1602
    %v1613 = vsub.f32 %v1323, %v1604
    %v1614 = vsub.f32 %v1324, %v1606
    %v1615 = vadd.f32 %v1591, 1e-05
    %v1616 = vadd.f32 %v1592, 1e-05
    %v1617 = vadd.f32 %v1593, 1e-05
    %v1618 = vadd.f32 %v1594, 1e-05
    %v1619 = vrsqrt.pop %v1615
    %v1620 = vmul.f32 %v1619, %v1615
    %v1621 = vmul.f32 %v1620, %v1619
    %v1622 = vmul.f32 0.5, %v1621
    %v1623 = vsub.f32 1.5, %v1622
    %v1624 = vmul.f32 %v1619, %v1623
    %vm1625 = vweird.f32 %v1615
    %vm1626 = vweird.f32 %v1619
    %vm1627 = vmor %vm1625, %vm1626
    %v1628 = vsel %vm1627, %v1619, %v1624
    %v1629 = vrsqrt.pop %v1616
    %v1630 = vmul.f32 %v1629, %v1616
    %v1631 = vmul.f32 %v1630, %v1629
    %v1632 = vmul.f32 0.5, %v1631
    %v1633 = vsub.f32 1.5, %v1632
    %v1634 = vmul.f32 %v1629, %v1633
    %vm1635 = vweird.f32 %v1616
    %vm1636 = vweird.f32 %v1629
    %vm1637 = vmor %vm1635, %vm1636
    %v1638 = vsel %vm1637, %v1629, %v1634
    %v1639 = vrsqrt.pop %v1617
    %v1640 = vmul.f32 %v1639, %v1617
    %v1641 = vmul.f32 %v1640, %v1639
    %v1642 = vmul.f32 0.5, %v1641
    %v1643 = vsub.f32 1.5, %v1642
    %v1644 = vmul.f32 %v1639, %v1643
    %vm1645 = vweird.f32 %v1617
    %vm1646 = vweird.f32 %v1639
    %vm1647 = vmor %vm1645, %vm1646
    %v1648 = vsel %vm1647, %v1639, %v1644
    %v1649 = vrsqrt.pop %v1618
    %v1650 = vmul.f32 %v1649, %v1618
    %v1651 = vmul.f32 %v1650, %v1649
    %v1652 = vmul.f32 0.5, %v1651
    %v1653 = vsub.f32 1.5, %v1652
    %v1654 = vmul.f32 %v1649, %v1653
    %vm1655 = vweird.f32 %v1618
    %vm1656 = vweird.f32 %v1649
    %vm1657 = vmor %vm1655, %vm1656
    %v1658 = vsel %vm1657, %v1649, %v1654
    %1663 = vrot.lane.b32.xlu0 %v1628, 32
    %v1664 = vpop.permute.xlu0 %1663
    %1665 = vrot.lane.b32.xlu0 %v1638, 32
    %v1666 = vpop.permute.xlu0 %1665
    %1667 = vrot.lane.b32.xlu0 %v1648, 32
    %v1668 = vpop.permute.xlu0 %1667
    %1669 = vrot.lane.b32.xlu0 %v1658, 32
    %v1670 = vpop.permute.xlu0 %1669
    %v1675 = vmul.f32 %v1611, %v1664
    %v1676 = vmul.f32 %v1612, %v1666
    %v1677 = vmul.f32 %v1613, %v1668
    %v1678 = vmul.f32 %v1614, %v1670
    %v1679 = vperm.slane %v1491, 0
    %1681 = vrot.lane.b32.xlu0 %v1679, 32
    %v1682 = vpop.permute.xlu0 %1681
    %v1684 = vmul.f32 %v1675, %v1682
    %v1685 = vmul.f32 %v1676, %v1682
    %v1686 = vmul.f32 %v1677, %v1682
    %v1687 = vmul.f32 %v1678, %v1682
    %v1688 = vperm.slane %v1492, 0
    %1690 = vrot.lane.b32.xlu0 %v1688, 32
    %v1691 = vpop.permute.xlu0 %1690
    %v1693 = vadd.f32 %v1684, %v1691
    %v1694 = vadd.f32 %v1685, %v1691
    %v1695 = vadd.f32 %v1686, %v1691
    %v1696 = vadd.f32 %v1687, %v1691
    %v1697 = vld [vmem:[#allocation2 + $0x2f0] sm:$0x1]
    %v1698 = vld [vmem:[#allocation2 + $0x2f8] sm:$0x1]
    %1699 = vrot.lane.b32.xlu0 %v1321, 64
    %v1700 = vpop.permute.xlu0 %1699
    %1701 = vrot.lane.b32.xlu0 %v1322, 64
    %v1702 = vpop.permute.xlu0 %1701
    %1703 = vrot.lane.b32.xlu0 %v1323, 64
    %v1704 = vpop.permute.xlu0 %1703
    %1705 = vrot.lane.b32.xlu0 %v1324, 64
    %v1706 = vpop.permute.xlu0 %1705
    %v1707 = vsel %vm50, %v1700, 0
    %v1709 = vsel %vm50, %v1702, 0
    %v1711 = vsel %vm50, %v1704, 0
    %v1713 = vsel %vm50, %v1706, 0
    %1715 = vmatpush.msra.mxu0 0.0
    %1716 = vmatpush.msra.mxu0 0.0
    %1717 = vmatpush.msra.mxu0 0.0
    %1718 = vmatpush.msra.mxu0 0.0
    %1719 = vmatpush.msra.mxu0 0.0
    %1720 = vmatpush.msra.mxu0 0.0
    %1721 = vmatpush.msra.mxu0 0.0
    %1722 = vmatpush.msra.mxu0 0.0
    %1723 = vmatpush.msra.mxu0 0.0
    %1724 = vmatpush.msra.mxu0 0.0
    %1725 = vmatpush.msra.mxu0 0.0
    %1726 = vmatpush.msra.mxu0 0.0
    %1727 = vmatpush.msra.mxu0 %v1328
    %1728 = vmatpush.msra.mxu0 %v1327
    %1729 = vmatpush.msra.mxu0 %v1326
    %1730 = vmatpush.msra.mxu0 %v1325
    %1731 = vmatmul.f32.gmra.mxu0 %v1707
    %v1732 = vpop.f32.mrf.mxu0
    %v1733 = vadd.f32 0.0, %v1732
    %1734 = vmatmul.f32.gmra.mxu0 %v1709
    %v1735 = vpop.f32.mrf.mxu0
    %v1736 = vadd.f32 0.0, %v1735
    %1737 = vmatmul.f32.gmra.mxu0 %v1711
    %v1738 = vpop.f32.mrf.mxu0
    %v1739 = vadd.f32 0.0, %v1738
    %1740 = vmatmul.f32.gmra.mxu0 %v1713
    %v1741 = vpop.f32.mrf.mxu0
    %v1742 = vadd.f32 0.0, %v1741
    %1743 = vdwg.mxu0
    %1744 = vrot.lane.b32.xlu0 %v1372, 64
    %v1745 = vpop.permute.xlu0 %1744
    %1746 = vrot.lane.b32.xlu0 %v1373, 64
    %v1747 = vpop.permute.xlu0 %1746
    %1748 = vrot.lane.b32.xlu0 %v1374, 64
    %v1749 = vpop.permute.xlu0 %1748
    %1750 = vrot.lane.b32.xlu0 %v1375, 64
    %v1751 = vpop.permute.xlu0 %1750
    %v1752 = vsel %vm50, %v1745, 0
    %v1754 = vsel %vm50, %v1747, 0
    %v1756 = vsel %vm50, %v1749, 0
    %v1758 = vsel %vm50, %v1751, 0
    %1760 = vmatpush.msra.mxu0 0.0
    %1761 = vmatpush.msra.mxu0 0.0
    %1762 = vmatpush.msra.mxu0 0.0
    %1763 = vmatpush.msra.mxu0 0.0
    %1764 = vmatpush.msra.mxu0 0.0
    %1765 = vmatpush.msra.mxu0 0.0
    %1766 = vmatpush.msra.mxu0 0.0
    %1767 = vmatpush.msra.mxu0 0.0
    %1768 = vmatpush.msra.mxu0 0.0
    %1769 = vmatpush.msra.mxu0 0.0
    %1770 = vmatpush.msra.mxu0 0.0
    %1771 = vmatpush.msra.mxu0 0.0
    %1772 = vmatpush.msra.mxu0 %v1328
    %1773 = vmatpush.msra.mxu0 %v1327
    %1774 = vmatpush.msra.mxu0 %v1326
    %1775 = vmatpush.msra.mxu0 %v1325
    %1776 = vmatmul.f32.gmra.mxu0 %v1752
    %v1777 = vpop.f32.mrf.mxu0
    %v1778 = vadd.f32 0.0, %v1777
    %1779 = vmatmul.f32.gmra.mxu0 %v1754
    %v1780 = vpop.f32.mrf.mxu0
    %v1781 = vadd.f32 0.0, %v1780
    %1782 = vmatmul.f32.gmra.mxu0 %v1756
    %v1783 = vpop.f32.mrf.mxu0
    %v1784 = vadd.f32 0.0, %v1783
    %1785 = vmatmul.f32.gmra.mxu0 %v1758
    %v1786 = vpop.f32.mrf.mxu0
    %v1787 = vadd.f32 0.0, %v1786
    %1788 = vdwg.mxu0
    %v1789 = vmul.f32 %v1733, %v1733
    %v1790 = vmul.f32 %v1736, %v1736
    %v1791 = vmul.f32 %v1739, %v1739
    %v1792 = vmul.f32 %v1742, %v1742
    %v1793 = vsub.f32 %v1778, %v1789
    %v1794 = vsub.f32 %v1781, %v1790
    %v1795 = vsub.f32 %v1784, %v1791
    %v1796 = vsub.f32 %v1787, %v1792
    %v1797 = vmax.f32 %v1793, 0.0
    %v1798 = vmax.f32 %v1794, 0.0
    %v1799 = vmax.f32 %v1795, 0.0
    %v1800 = vmax.f32 %v1796, 0.0
    %1805 = vrot.lane.b32.xlu0 %v1733, 64
    %v1806 = vpop.permute.xlu0 %1805
    %1807 = vrot.lane.b32.xlu0 %v1736, 64
    %v1808 = vpop.permute.xlu0 %1807
    %1809 = vrot.lane.b32.xlu0 %v1739, 64
    %v1810 = vpop.permute.xlu0 %1809
    %1811 = vrot.lane.b32.xlu0 %v1742, 64
    %v1812 = vpop.permute.xlu0 %1811
    %v1817 = vsub.f32 %v1321, %v1806
    %v1818 = vsub.f32 %v1322, %v1808
    %v1819 = vsub.f32 %v1323, %v1810
    %v1820 = vsub.f32 %v1324, %v1812
    %v1821 = vadd.f32 %v1797, 1e-05
    %v1822 = vadd.f32 %v1798, 1e-05
    %v1823 = vadd.f32 %v1799, 1e-05
    %v1824 = vadd.f32 %v1800, 1e-05
    %v1825 = vrsqrt.pop %v1821
    %v1826 = vmul.f32 %v1825, %v1821
    %v1827 = vmul.f32 %v1826, %v1825
    %v1828 = vmul.f32 0.5, %v1827
    %v1829 = vsub.f32 1.5, %v1828
    %v1830 = vmul.f32 %v1825, %v1829
    %vm1831 = vweird.f32 %v1821
    %vm1832 = vweird.f32 %v1825
    %vm1833 = vmor %vm1831, %vm1832
    %v1834 = vsel %vm1833, %v1825, %v1830
    %v1835 = vrsqrt.pop %v1822
    %v1836 = vmul.f32 %v1835, %v1822
    %v1837 = vmul.f32 %v1836, %v1835
    %v1838 = vmul.f32 0.5, %v1837
    %v1839 = vsub.f32 1.5, %v1838
    %v1840 = vmul.f32 %v1835, %v1839
    %vm1841 = vweird.f32 %v1822
    %vm1842 = vweird.f32 %v1835
    %vm1843 = vmor %vm1841, %vm1842
    %v1844 = vsel %vm1843, %v1835, %v1840
    %v1845 = vrsqrt.pop %v1823
    %v1846 = vmul.f32 %v1845, %v1823
    %v1847 = vmul.f32 %v1846, %v1845
    %v1848 = vmul.f32 0.5, %v1847
    %v1849 = vsub.f32 1.5, %v1848
    %v1850 = vmul.f32 %v1845, %v1849
    %vm1851 = vweird.f32 %v1823
    %vm1852 = vweird.f32 %v1845
    %vm1853 = vmor %vm1851, %vm1852
    %v1854 = vsel %vm1853, %v1845, %v1850
    %v1855 = vrsqrt.pop %v1824
    %v1856 = vmul.f32 %v1855, %v1824
    %v1857 = vmul.f32 %v1856, %v1855
    %v1858 = vmul.f32 0.5, %v1857
    %v1859 = vsub.f32 1.5, %v1858
    %v1860 = vmul.f32 %v1855, %v1859
    %vm1861 = vweird.f32 %v1824
    %vm1862 = vweird.f32 %v1855
    %vm1863 = vmor %vm1861, %vm1862
    %v1864 = vsel %vm1863, %v1855, %v1860
    %1869 = vrot.lane.b32.xlu0 %v1834, 64
    %v1870 = vpop.permute.xlu0 %1869
    %1871 = vrot.lane.b32.xlu0 %v1844, 64
    %v1872 = vpop.permute.xlu0 %1871
    %1873 = vrot.lane.b32.xlu0 %v1854, 64
    %v1874 = vpop.permute.xlu0 %1873
    %1875 = vrot.lane.b32.xlu0 %v1864, 64
    %v1876 = vpop.permute.xlu0 %1875
    %v1881 = vmul.f32 %v1817, %v1870
    %v1882 = vmul.f32 %v1818, %v1872
    %v1883 = vmul.f32 %v1819, %v1874
    %v1884 = vmul.f32 %v1820, %v1876
    %v1885 = vperm.slane %v1697, 0
    %1887 = vrot.lane.b32.xlu0 %v1885, 64
    %v1888 = vpop.permute.xlu0 %1887
    %v1890 = vmul.f32 %v1881, %v1888
    %v1891 = vmul.f32 %v1882, %v1888
    %v1892 = vmul.f32 %v1883, %v1888
    %v1893 = vmul.f32 %v1884, %v1888
    %v1894 = vperm.slane %v1698, 0
    %1896 = vrot.lane.b32.xlu0 %v1894, 64
    %v1897 = vpop.permute.xlu0 %1896
    %v1899 = vadd.f32 %v1890, %v1897
    %v1900 = vadd.f32 %v1891, %v1897
    %v1901 = vadd.f32 %v1892, %v1897
    %v1902 = vadd.f32 %v1893, %v1897
    %v1903 = vld [vmem:[#allocation2 + $0x300] sm:$0xff]
    %v1904 = vld [vmem:[#allocation2 + $0x308] sm:$0xff]
    %v1905 = vld [vmem:[#allocation2 + $0x310] sm:$0xff]
    %v1906 = vld [vmem:[#allocation2 + $0x318] sm:$0xff]
    %v1907 = vld [vmem:[#allocation2 + $0x320] sm:$0xff]
    %v1908 = vld [vmem:[#allocation2 + $0x328] sm:$0xff]
    %v1909 = vld [vmem:[#allocation2 + $0x330] sm:$0xff]
    %v1910 = vld [vmem:[#allocation2 + $0x338] sm:$0xff]
    %v1911 = vld [vmem:[#allocation2 + $0x340] sm:$0xff]
    %v1912 = vld [vmem:[#allocation2 + $0x348] sm:$0xff]
    %v1913 = vld [vmem:[#allocation2 + $0x350] sm:$0xff]
    %v1914 = vld [vmem:[#allocation2 + $0x358] sm:$0xff]
    %v1915 = vld [vmem:[#allocation2 + $0x360] sm:$0xff]
    %v1916 = vld [vmem:[#allocation2 + $0x368] sm:$0xff]
    %v1917 = vld [vmem:[#allocation2 + $0x370] sm:$0xff]
    %v1918 = vld [vmem:[#allocation2 + $0x378] sm:$0xff]
    %v1919 = vld [vmem:[#allocation2 + $0x380] sm:$0xff]
    %v1920 = vld [vmem:[#allocation2 + $0x388] sm:$0xff]
    %v1921 = vld [vmem:[#allocation2 + $0x390] sm:$0xff]
    %v1922 = vld [vmem:[#allocation2 + $0x398] sm:$0xff]
    %v1923 = vld [vmem:[#allocation2 + $0x3a0] sm:$0xff]
    %v1924 = vld [vmem:[#allocation2 + $0x3a8] sm:$0xff]
    %v1925 = vld [vmem:[#allocation2 + $0x3b0] sm:$0xff]
    %v1926 = vld [vmem:[#allocation2 + $0x3b8] sm:$0xff]
    %v1927 = vld [vmem:[#allocation2 + $0x3c0] sm:$0xff]
    %v1928 = vld [vmem:[#allocation2 + $0x3c8] sm:$0xff]
    %v1929 = vld [vmem:[#allocation2 + $0x3d0] sm:$0xff]
    %v1930 = vld [vmem:[#allocation2 + $0x3d8] sm:$0xff]
    %v1931 = vld [vmem:[#allocation2 + $0x3e0] sm:$0xff]
    %v1932 = vld [vmem:[#allocation2 + $0x3e8] sm:$0xff]
    %v1933 = vld [vmem:[#allocation2 + $0x3f0] sm:$0xff]
    %v1934 = vld [vmem:[#allocation2 + $0x3f8] sm:$0xff]
    %v1935 = vld [vmem:[#allocation2 + $0x420] sm:$0x1]
    %vm1936 = vcmask 130048
    %v1938 = vsel %vm1936, %v1487, 0
    %v1941 = vsel %vm1936, %v1488, 0
    %v1944 = vsel %vm1936, %v1489, 0
    %v1947 = vsel %vm1936, %v1490, 0
    %1949 = vmatpush.msra.mxu0 0.0
    %1950 = vmatpush.msra.mxu0 0.0
    %1951 = vmatpush.msra.mxu0 0.0
    %1952 = vmatpush.msra.mxu0 0.0
    %1953 = vmatpush.msra.mxu0 0.0
    %1954 = vmatpush.msra.mxu0 0.0
    %1955 = vmatpush.msra.mxu0 0.0
    %1956 = vmatpush.msra.mxu0 0.0
    %1957 = vmatpush.msra.mxu0 0.0
    %1958 = vmatpush.msra.mxu0 0.0
    %1959 = vmatpush.msra.mxu0 0.0
    %1960 = vmatpush.msra.mxu0 0.0
    %1961 = vmatpush.msra.mxu0 0.0
    %1962 = vmatpush.msra.mxu0 0.0
    %1963 = vmatpush.msra.mxu0 %v1904
    %1964 = vmatpush.msra.mxu0 %v1903
    %1965 = vmatmul.f32.gmra.mxu0 %v1938
    %v1966 = vpop.f32.mrf.mxu0
    %v1967 = vadd.f32 0.0, %v1966
    %1968 = vmatmul.f32.gmra.mxu0 %v1941
    %v1969 = vpop.f32.mrf.mxu0
    %v1970 = vadd.f32 0.0, %v1969
    %1971 = vmatmul.f32.gmra.mxu0 %v1944
    %v1972 = vpop.f32.mrf.mxu0
    %v1973 = vadd.f32 0.0, %v1972
    %1974 = vmatmul.f32.gmra.mxu0 %v1947
    %v1975 = vpop.f32.mrf.mxu0
    %v1976 = vadd.f32 0.0, %v1975
    %1977 = vdwg.mxu0
    %v1978 = vmul.f32 %v1967, %v1905
    %v1979 = vmul.f32 %v1970, %v1906
    %v1980 = vmul.f32 %v1973, %v1907
    %v1981 = vmul.f32 %v1976, %v1908
    %1982 = vmatpush.msra.mxu0 0.0
    %1983 = vmatpush.msra.mxu0 0.0
    %1984 = vmatpush.msra.mxu0 0.0
    %1985 = vmatpush.msra.mxu0 0.0
    %1986 = vmatpush.msra.mxu0 0.0
    %1987 = vmatpush.msra.mxu0 0.0
    %1988 = vmatpush.msra.mxu0 0.0
    %1989 = vmatpush.msra.mxu0 0.0
    %1990 = vmatpush.msra.mxu0 0.0
    %1991 = vmatpush.msra.mxu0 0.0
    %1992 = vmatpush.msra.mxu0 0.0
    %1993 = vmatpush.msra.mxu0 0.0
    %1994 = vmatpush.msra.mxu0 0.0
    %1995 = vmatpush.msra.mxu0 0.0
    %1996 = vmatpush.msra.mxu0 %v1918
    %1997 = vmatpush.msra.mxu0 %v1917
    %1998 = vmatmul.f32.gmra.mxu0 %v1938
    %v1999 = vpop.f32.mrf.mxu0
    %v2000 = vadd.f32 0.0, %v1999
    %2001 = vmatmul.f32.gmra.mxu0 %v1941
    %v2002 = vpop.f32.mrf.mxu0
    %v2003 = vadd.f32 0.0, %v2002
    %2004 = vmatmul.f32.gmra.mxu0 %v1944
    %v2005 = vpop.f32.mrf.mxu0
    %v2006 = vadd.f32 0.0, %v2005
    %2007 = vmatmul.f32.gmra.mxu0 %v1947
    %v2008 = vpop.f32.mrf.mxu0
    %v2009 = vadd.f32 0.0, %v2008
    %2010 = vdwg.mxu0
    %v2011 = vmul.f32 %v2000, %v1919
    %v2012 = vmul.f32 %v2003, %v1920
    %v2013 = vmul.f32 %v2006, %v1921
    %v2014 = vmul.f32 %v2009, %v1922
    %vm2015 = vcmask 523264
    %v2017 = vsel %vm2015, %v2011, 0
    %v2020 = vsel %vm2015, %v2012, 0
    %v2023 = vsel %vm2015, %v2013, 0
    %v2026 = vsel %vm2015, %v2014, 0
    %2028 = vmatpush.msra.mxu0 0.0
    %2029 = vmatpush.msra.mxu0 0.0
    %2030 = vmatpush.msra.mxu0 0.0
    %2031 = vmatpush.msra.mxu0 0.0
    %2032 = vmatpush.msra.mxu0 0.0
    %2033 = vmatpush.msra.mxu0 0.0
    %2034 = vmatpush.msra.mxu0 0.0
    %2035 = vmatpush.msra.mxu0 0.0
    %2036 = vmatpush.msra.mxu0 %v1930
    %2037 = vmatpush.msra.mxu0 %v1929
    %2038 = vmatpush.msra.mxu0 %v1928
    %2039 = vmatpush.msra.mxu0 %v1927
    %2040 = vmatpush.msra.mxu0 %v1926
    %2041 = vmatpush.msra.mxu0 %v1925
    %2042 = vmatpush.msra.mxu0 %v1924
    %2043 = vmatpush.msra.mxu0 %v1923
    %2044 = vmatmul.f32.gmra.mxu0 %v2017
    %v2045 = vpop.f32.mrf.mxu0
    %v2046 = vadd.f32 0.0, %v2045
    %2047 = vmatmul.f32.gmra.mxu0 %v2020
    %v2048 = vpop.f32.mrf.mxu0
    %v2049 = vadd.f32 0.0, %v2048
    %2050 = vmatmul.f32.gmra.mxu0 %v2023
    %v2051 = vpop.f32.mrf.mxu0
    %v2052 = vadd.f32 0.0, %v2051
    %2053 = vmatmul.f32.gmra.mxu0 %v2026
    %v2054 = vpop.f32.mrf.mxu0
    %v2055 = vadd.f32 0.0, %v2054
    %2056 = vdwg.mxu0
    %v2058 = vsel %vm2015, %v1978, 0
    %v2061 = vsel %vm2015, %v1979, 0
    %v2064 = vsel %vm2015, %v1980, 0
    %v2067 = vsel %vm2015, %v1981, 0
    %2069 = vmatpush.msra.mxu0 0.0
    %2070 = vmatpush.msra.mxu0 0.0
    %2071 = vmatpush.msra.mxu0 0.0
    %2072 = vmatpush.msra.mxu0 0.0
    %2073 = vmatpush.msra.mxu0 0.0
    %2074 = vmatpush.msra.mxu0 0.0
    %2075 = vmatpush.msra.mxu0 0.0
    %2076 = vmatpush.msra.mxu0 0.0
    %2077 = vmatpush.msra.mxu0 %v1916
    %2078 = vmatpush.msra.mxu0 %v1915
    %2079 = vmatpush.msra.mxu0 %v1914
    %2080 = vmatpush.msra.mxu0 %v1913
    %2081 = vmatpush.msra.mxu0 %v1912
    %2082 = vmatpush.msra.mxu0 %v1911
    %2083 = vmatpush.msra.mxu0 %v1910
    %2084 = vmatpush.msra.mxu0 %v1909
    %2085 = vmatmul.f32.gmra.mxu0 %v2058
    %v2086 = vpop.f32.mrf.mxu0
    %v2087 = vadd.f32 %v2046, %v2086
    %2088 = vmatmul.f32.gmra.mxu0 %v2061
    %v2089 = vpop.f32.mrf.mxu0
    %v2090 = vadd.f32 %v2049, %v2089
    %2091 = vmatmul.f32.gmra.mxu0 %v2064
    %v2092 = vpop.f32.mrf.mxu0
    %v2093 = vadd.f32 %v2052, %v2092
    %2094 = vmatmul.f32.gmra.mxu0 %v2067
    %v2095 = vpop.f32.mrf.mxu0
    %v2096 = vadd.f32 %v2055, %v2095
    %2097 = vdwg.mxu0
    %2102 = vrot.lane.b32.xlu0 %v1693, 96
    %v2103 = vpop.permute.xlu0 %2102
    %2104 = vrot.lane.b32.xlu0 %v1694, 96
    %v2105 = vpop.permute.xlu0 %2104
    %2106 = vrot.lane.b32.xlu0 %v1695, 96
    %v2107 = vpop.permute.xlu0 %2106
    %2108 = vrot.lane.b32.xlu0 %v1696, 96
    %v2109 = vpop.permute.xlu0 %2108
    %v2110 = vsel %vm1936, %v2103, 0
    %v2112 = vsel %vm1936, %v2105, 0
    %v2114 = vsel %vm1936, %v2107, 0
    %v2116 = vsel %vm1936, %v2109, 0
    %2118 = vmatpush.xpose.msra.mxu0 0.0
    %2119 = vmatpush.xpose.msra.mxu0 0.0
    %2120 = vmatpush.xpose.msra.mxu0 0.0
    %2121 = vmatpush.xpose.msra.mxu0 0.0
    %2122 = vmatpush.xpose.msra.mxu0 0.0
    %2123 = vmatpush.xpose.msra.mxu0 0.0
    %2124 = vmatpush.xpose.msra.mxu0 0.0
    %2125 = vmatpush.xpose.msra.mxu0 0.0
    %2126 = vmatpush.xpose.msra.mxu0 0.0
    %2127 = vmatpush.xpose.msra.mxu0 0.0
    %2128 = vmatpush.xpose.msra.mxu0 0.0
    %2129 = vmatpush.xpose.msra.mxu0 0.0
    %2130 = vmatpush.xpose.msra.mxu0 %v2116
    %2131 = vmatpush.xpose.msra.mxu0 %v2114
    %2132 = vmatpush.xpose.msra.mxu0 %v2112
    %2133 = vmatpush.xpose.msra.mxu0 %v2110
    %2134 = vmatmul.f32.gmra.mxu0 %v1938
    %v2135 = vpop.f32.mrf.mxu0
    %v2136 = vadd.f32 %v2087, %v2135
    %2137 = vmatmul.f32.gmra.mxu0 %v1941
    %v2138 = vpop.f32.mrf.mxu0
    %v2139 = vadd.f32 %v2090, %v2138
    %2140 = vmatmul.f32.gmra.mxu0 %v1944
    %v2141 = vpop.f32.mrf.mxu0
    %v2142 = vadd.f32 %v2093, %v2141
    %2143 = vmatmul.f32.gmra.mxu0 %v1947
    %v2144 = vpop.f32.mrf.mxu0
    %v2145 = vadd.f32 %v2096, %v2144
    %2146 = vdwg.mxu0
    %v2147 = vadd.f32 %v2136, %v1931
    %v2148 = vadd.f32 %v2139, %v1932
    %v2149 = vadd.f32 %v2142, %v1933
    %v2150 = vadd.f32 %v2145, %v1934
    %v2151 = vsel %vm50, %v2147, -inf
    %2152 = vmax.xlane.f32.xlu0 %v2151
    %v2153 = vpop.xlane.xlu0 %2152
    %v2154 = vsel %vm50, %v2148, -inf
    %2155 = vmax.xlane.f32.xlu0 %v2154
    %v2156 = vpop.xlane.xlu0 %2155
    %v2157 = vsel %vm50, %v2149, -inf
    %2158 = vmax.xlane.f32.xlu0 %v2157
    %v2159 = vpop.xlane.xlu0 %2158
    %v2160 = vsel %vm50, %v2150, -inf
    %2161 = vmax.xlane.f32.xlu0 %v2160
    %v2162 = vpop.xlane.xlu0 %2161
    %v2163 = vsub.f32 %v2147, %v2153
    %v2164 = vsub.f32 %v2148, %v2156
    %v2165 = vsub.f32 %v2149, %v2159
    %v2166 = vsub.f32 %v2150, %v2162
    %v2167 = vmul.f32 %v2163, 1.442695
    %v2168 = vpow.pop %v2167
    %v2169 = vmul.f32 %v2164, 1.442695
    %v2170 = vpow.pop %v2169
    %v2171 = vmul.f32 %v2165, 1.442695
    %v2172 = vpow.pop %v2171
    %v2173 = vmul.f32 %v2166, 1.442695
    %v2174 = vpow.pop %v2173
    %v2175 = vsel %vm50, %v2168, 0.0
    %2176 = vadd.xlane.f32.xlu0 %v2175
    %v2177 = vpop.xlane.xlu0 %2176
    %v2178 = vsel %vm50, %v2170, 0.0
    %2179 = vadd.xlane.f32.xlu0 %v2178
    %v2180 = vpop.xlane.xlu0 %2179
    %v2181 = vsel %vm50, %v2172, 0.0
    %2182 = vadd.xlane.f32.xlu0 %v2181
    %v2183 = vpop.xlane.xlu0 %2182
    %v2184 = vsel %vm50, %v2174, 0.0
    %2185 = vadd.xlane.f32.xlu0 %v2184
    %v2186 = vpop.xlane.xlu0 %2185
    %v2187 = vrcp.pop %v2177
    %v2188 = vrcp.pop %v2180
    %v2189 = vrcp.pop %v2183
    %v2190 = vrcp.pop %v2186
    %v2191 = vmul.f32 %v2168, %v2187
    %v2192 = vmul.f32 %v2170, %v2188
    %v2193 = vmul.f32 %v2172, %v2189
    %v2194 = vmul.f32 %v2174, %v2190
    %2199 = vrot.lane.b32.xlu0 %v1899, 64
    %v2200 = vpop.permute.xlu0 %2199
    %2201 = vrot.lane.b32.xlu0 %v1900, 64
    %v2202 = vpop.permute.xlu0 %2201
    %2203 = vrot.lane.b32.xlu0 %v1901, 64
    %v2204 = vpop.permute.xlu0 %2203
    %2205 = vrot.lane.b32.xlu0 %v1902, 64
    %v2206 = vpop.permute.xlu0 %2205
    %v2212 = vsel %vm50, %v2191, 0
    %v2215 = vsel %vm50, %v2192, 0
    %v2218 = vsel %vm50, %v2193, 0
    %v2221 = vsel %vm50, %v2194, 0
    %2223 = vmatpush.msra.mxu0 0.0
    %2224 = vmatpush.msra.mxu0 0.0
    %2225 = vmatpush.msra.mxu0 0.0
    %2226 = vmatpush.msra.mxu0 0.0
    %2227 = vmatpush.msra.mxu0 0.0
    %2228 = vmatpush.msra.mxu0 0.0
    %2229 = vmatpush.msra.mxu0 0.0
    %2230 = vmatpush.msra.mxu0 0.0
    %2231 = vmatpush.msra.mxu0 0.0
    %2232 = vmatpush.msra.mxu0 0.0
    %2233 = vmatpush.msra.mxu0 0.0
    %2234 = vmatpush.msra.mxu0 0.0
    %2235 = vmatpush.msra.mxu0 %v2206
    %2236 = vmatpush.msra.mxu0 %v2204
    %2237 = vmatpush.msra.mxu0 %v2202
    %2238 = vmatpush.msra.mxu0 %v2200
    %2239 = vmatmul.f32.gmra.mxu0 %v2212
    %v2240 = vpop.f32.mrf.mxu0
    %v2241 = vadd.f32 %v1487, %v2240
    %2242 = vmatmul.f32.gmra.mxu0 %v2215
    %v2243 = vpop.f32.mrf.mxu0
    %v2244 = vadd.f32 %v1488, %v2243
    %2245 = vmatmul.f32.gmra.mxu0 %v2218
    %v2246 = vpop.f32.mrf.mxu0
    %v2247 = vadd.f32 %v1489, %v2246
    %2248 = vmatmul.f32.gmra.mxu0 %v2221
    %v2249 = vpop.f32.mrf.mxu0
    %v2250 = vadd.f32 %v1490, %v2249
    %2251 = vdwg.mxu0
    %v2252 = vld [vmem:[#allocation2 + $0x400] sm:$0xff]
    %v2253 = vld [vmem:[#allocation2 + $0x408] sm:$0xff]
    %v2255 = vsel %vm1936, %v2241, 0
    %v2258 = vsel %vm1936, %v2244, 0
    %v2261 = vsel %vm1936, %v2247, 0
    %v2264 = vsel %vm1936, %v2250, 0
    %2266 = vmatpush.msra.mxu0 0.0
    %2267 = vmatpush.msra.mxu0 0.0
    %2268 = vmatpush.msra.mxu0 0.0
    %2269 = vmatpush.msra.mxu0 0.0
    %2270 = vmatpush.msra.mxu0 0.0
    %2271 = vmatpush.msra.mxu0 0.0
    %2272 = vmatpush.msra.mxu0 0.0
    %2273 = vmatpush.msra.mxu0 0.0
    %2274 = vmatpush.msra.mxu0 0.0
    %2275 = vmatpush.msra.mxu0 0.0
    %2276 = vmatpush.msra.mxu0 0.0
    %2277 = vmatpush.msra.mxu0 0.0
    %2278 = vmatpush.msra.mxu0 0.0
    %2279 = vmatpush.msra.mxu0 0.0
    %2280 = vmatpush.msra.mxu0 %v2253
    %2281 = vmatpush.msra.mxu0 %v2252
    %2282 = vmatmul.f32.gmra.mxu0 %v2255
    %v2283 = vpop.f32.mrf.mxu0
    %v2284 = vadd.f32 0.0, %v2283
    %2285 = vmatmul.f32.gmra.mxu0 %v2258
    %v2286 = vpop.f32.mrf.mxu0
    %v2287 = vadd.f32 0.0, %v2286
    %2288 = vmatmul.f32.gmra.mxu0 %v2261
    %v2289 = vpop.f32.mrf.mxu0
    %v2290 = vadd.f32 0.0, %v2289
    %2291 = vmatmul.f32.gmra.mxu0 %v2264
    %v2292 = vpop.f32.mrf.mxu0
    %v2293 = vadd.f32 0.0, %v2292
    %2294 = vdwg.mxu0
    %v2295 = vperm.slane %v1935, 0
    %v2296 = vadd.f32 %v2295, %v2284
    %v2297 = vadd.f32 %v2295, %v2287
    %v2298 = vadd.f32 %v2295, %v2290
    %v2299 = vadd.f32 %v2295, %v2293
    %2300 = vrot.lane.b32.xlu0 %v1487, 112
    %v2301 = vpop.permute.xlu0 %2300
    %2302 = vrot.lane.b32.xlu0 %v1488, 112
    %v2303 = vpop.permute.xlu0 %2302
    %2304 = vrot.lane.b32.xlu0 %v1489, 112
    %v2305 = vpop.permute.xlu0 %2304
    %2306 = vrot.lane.b32.xlu0 %v1490, 112
    %v2307 = vpop.permute.xlu0 %2306
    %v2308 = vsel %vm1936, %v2301, 0
    %v2310 = vsel %vm1936, %v2303, 0
    %v2312 = vsel %vm1936, %v2305, 0
    %v2314 = vsel %vm1936, %v2307, 0
    %2316 = vmatpush.msra.mxu0 0.0
    %2317 = vmatpush.msra.mxu0 0.0
    %2318 = vmatpush.msra.mxu0 0.0
    %2319 = vmatpush.msra.mxu0 0.0
    %2320 = vmatpush.msra.mxu0 0.0
    %2321 = vmatpush.msra.mxu0 0.0
    %2322 = vmatpush.msra.mxu0 0.0
    %2323 = vmatpush.msra.mxu0 0.0
    %2324 = vmatpush.msra.mxu0 0.0
    %2325 = vmatpush.msra.mxu0 0.0
    %2326 = vmatpush.msra.mxu0 0.0
    %2327 = vmatpush.msra.mxu0 0.0
    %2328 = vmatpush.msra.mxu0 0.0
    %2329 = vmatpush.msra.mxu0 0.0
    %2330 = vmatpush.msra.mxu0 %v1904
    %2331 = vmatpush.msra.mxu0 %v1903
    %2332 = vmatmul.f32.gmra.mxu0 %v2308
    %v2333 = vpop.f32.mrf.mxu0
    %v2334 = vadd.f32 0.0, %v2333
    %2335 = vmatmul.f32.gmra.mxu0 %v2310
    %v2336 = vpop.f32.mrf.mxu0
    %v2337 = vadd.f32 0.0, %v2336
    %2338 = vmatmul.f32.gmra.mxu0 %v2312
    %v2339 = vpop.f32.mrf.mxu0
    %v2340 = vadd.f32 0.0, %v2339
    %2341 = vmatmul.f32.gmra.mxu0 %v2314
    %v2342 = vpop.f32.mrf.mxu0
    %v2343 = vadd.f32 0.0, %v2342
    %2344 = vdwg.mxu0
    %v2345 = vmul.f32 %v2334, %v1905
    %v2346 = vmul.f32 %v2337, %v1906
    %v2347 = vmul.f32 %v2340, %v1907
    %v2348 = vmul.f32 %v2343, %v1908
    %2349 = vmatpush.msra.mxu0 0.0
    %2350 = vmatpush.msra.mxu0 0.0
    %2351 = vmatpush.msra.mxu0 0.0
    %2352 = vmatpush.msra.mxu0 0.0
    %2353 = vmatpush.msra.mxu0 0.0
    %2354 = vmatpush.msra.mxu0 0.0
    %2355 = vmatpush.msra.mxu0 0.0
    %2356 = vmatpush.msra.mxu0 0.0
    %2357 = vmatpush.msra.mxu0 0.0
    %2358 = vmatpush.msra.mxu0 0.0
    %2359 = vmatpush.msra.mxu0 0.0
    %2360 = vmatpush.msra.mxu0 0.0
    %2361 = vmatpush.msra.mxu0 0.0
    %2362 = vmatpush.msra.mxu0 0.0
    %2363 = vmatpush.msra.mxu0 %v1918
    %2364 = vmatpush.msra.mxu0 %v1917
    %2365 = vmatmul.f32.gmra.mxu0 %v2308
    %v2366 = vpop.f32.mrf.mxu0
    %v2367 = vadd.f32 0.0, %v2366
    %2368 = vmatmul.f32.gmra.mxu0 %v2310
    %v2369 = vpop.f32.mrf.mxu0
    %v2370 = vadd.f32 0.0, %v2369
    %2371 = vmatmul.f32.gmra.mxu0 %v2312
    %v2372 = vpop.f32.mrf.mxu0
    %v2373 = vadd.f32 0.0, %v2372
    %2374 = vmatmul.f32.gmra.mxu0 %v2314
    %v2375 = vpop.f32.mrf.mxu0
    %v2376 = vadd.f32 0.0, %v2375
    %2377 = vdwg.mxu0
    %v2378 = vmul.f32 %v2367, %v1919
    %v2379 = vmul.f32 %v2370, %v1920
    %v2380 = vmul.f32 %v2373, %v1921
    %v2381 = vmul.f32 %v2376, %v1922
    %v2383 = vsel %vm2015, %v2378, 0
    %v2386 = vsel %vm2015, %v2379, 0
    %v2389 = vsel %vm2015, %v2380, 0
    %v2392 = vsel %vm2015, %v2381, 0
    %2394 = vmatpush.msra.mxu0 0.0
    %2395 = vmatpush.msra.mxu0 0.0
    %2396 = vmatpush.msra.mxu0 0.0
    %2397 = vmatpush.msra.mxu0 0.0
    %2398 = vmatpush.msra.mxu0 0.0
    %2399 = vmatpush.msra.mxu0 0.0
    %2400 = vmatpush.msra.mxu0 0.0
    %2401 = vmatpush.msra.mxu0 0.0
    %2402 = vmatpush.msra.mxu0 %v1930
    %2403 = vmatpush.msra.mxu0 %v1929
    %2404 = vmatpush.msra.mxu0 %v1928
    %2405 = vmatpush.msra.mxu0 %v1927
    %2406 = vmatpush.msra.mxu0 %v1926
    %2407 = vmatpush.msra.mxu0 %v1925
    %2408 = vmatpush.msra.mxu0 %v1924
    %2409 = vmatpush.msra.mxu0 %v1923
    %2410 = vmatmul.f32.gmra.mxu0 %v2383
    %v2411 = vpop.f32.mrf.mxu0
    %v2412 = vadd.f32 0.0, %v2411
    %2413 = vmatmul.f32.gmra.mxu0 %v2386
    %v2414 = vpop.f32.mrf.mxu0
    %v2415 = vadd.f32 0.0, %v2414
    %2416 = vmatmul.f32.gmra.mxu0 %v2389
    %v2417 = vpop.f32.mrf.mxu0
    %v2418 = vadd.f32 0.0, %v2417
    %2419 = vmatmul.f32.gmra.mxu0 %v2392
    %v2420 = vpop.f32.mrf.mxu0
    %v2421 = vadd.f32 0.0, %v2420
    %2422 = vdwg.mxu0
    %v2424 = vsel %vm2015, %v2345, 0
    %v2427 = vsel %vm2015, %v2346, 0
    %v2430 = vsel %vm2015, %v2347, 0
    %v2433 = vsel %vm2015, %v2348, 0
    %2435 = vmatpush.msra.mxu0 0.0
    %2436 = vmatpush.msra.mxu0 0.0
    %2437 = vmatpush.msra.mxu0 0.0
    %2438 = vmatpush.msra.mxu0 0.0
    %2439 = vmatpush.msra.mxu0 0.0
    %2440 = vmatpush.msra.mxu0 0.0
    %2441 = vmatpush.msra.mxu0 0.0
    %2442 = vmatpush.msra.mxu0 0.0
    %2443 = vmatpush.msra.mxu0 %v1916
    %2444 = vmatpush.msra.mxu0 %v1915
    %2445 = vmatpush.msra.mxu0 %v1914
    %2446 = vmatpush.msra.mxu0 %v1913
    %2447 = vmatpush.msra.mxu0 %v1912
    %2448 = vmatpush.msra.mxu0 %v1911
    %2449 = vmatpush.msra.mxu0 %v1910
    %2450 = vmatpush.msra.mxu0 %v1909
    %2451 = vmatmul.f32.gmra.mxu0 %v2424
    %v2452 = vpop.f32.mrf.mxu0
    %v2453 = vadd.f32 %v2412, %v2452
    %2454 = vmatmul.f32.gmra.mxu0 %v2427
    %v2455 = vpop.f32.mrf.mxu0
    %v2456 = vadd.f32 %v2415, %v2455
    %2457 = vmatmul.f32.gmra.mxu0 %v2430
    %v2458 = vpop.f32.mrf.mxu0
    %v2459 = vadd.f32 %v2418, %v2458
    %2460 = vmatmul.f32.gmra.mxu0 %v2433
    %v2461 = vpop.f32.mrf.mxu0
    %v2462 = vadd.f32 %v2421, %v2461
    %2463 = vdwg.mxu0
    %2464 = vrot.lane.b32.xlu0 %v1693, 80
    %v2465 = vpop.permute.xlu0 %2464
    %2466 = vrot.lane.b32.xlu0 %v1694, 80
    %v2467 = vpop.permute.xlu0 %2466
    %2468 = vrot.lane.b32.xlu0 %v1695, 80
    %v2469 = vpop.permute.xlu0 %2468
    %2470 = vrot.lane.b32.xlu0 %v1696, 80
    %v2471 = vpop.permute.xlu0 %2470
    %v2472 = vsel %vm1936, %v2465, 0
    %v2474 = vsel %vm1936, %v2467, 0
    %v2476 = vsel %vm1936, %v2469, 0
    %v2478 = vsel %vm1936, %v2471, 0
    %2480 = vmatpush.xpose.msra.mxu0 0.0
    %2481 = vmatpush.xpose.msra.mxu0 0.0
    %2482 = vmatpush.xpose.msra.mxu0 0.0
    %2483 = vmatpush.xpose.msra.mxu0 0.0
    %2484 = vmatpush.xpose.msra.mxu0 0.0
    %2485 = vmatpush.xpose.msra.mxu0 0.0
    %2486 = vmatpush.xpose.msra.mxu0 0.0
    %2487 = vmatpush.xpose.msra.mxu0 0.0
    %2488 = vmatpush.xpose.msra.mxu0 0.0
    %2489 = vmatpush.xpose.msra.mxu0 0.0
    %2490 = vmatpush.xpose.msra.mxu0 0.0
    %2491 = vmatpush.xpose.msra.mxu0 0.0
    %2492 = vmatpush.xpose.msra.mxu0 %v2478
    %2493 = vmatpush.xpose.msra.mxu0 %v2476
    %2494 = vmatpush.xpose.msra.mxu0 %v2474
    %2495 = vmatpush.xpose.msra.mxu0 %v2472
    %2496 = vmatmul.f32.gmra.mxu0 %v2308
    %v2497 = vpop.f32.mrf.mxu0
    %v2498 = vadd.f32 %v2453, %v2497
    %2499 = vmatmul.f32.gmra.mxu0 %v2310
    %v2500 = vpop.f32.mrf.mxu0
    %v2501 = vadd.f32 %v2456, %v2500
    %2502 = vmatmul.f32.gmra.mxu0 %v2312
    %v2503 = vpop.f32.mrf.mxu0
    %v2504 = vadd.f32 %v2459, %v2503
    %2505 = vmatmul.f32.gmra.mxu0 %v2314
    %v2506 = vpop.f32.mrf.mxu0
    %v2507 = vadd.f32 %v2462, %v2506
    %2508 = vdwg.mxu0
    %v2509 = vadd.f32 %v2498, %v1931
    %v2510 = vadd.f32 %v2501, %v1932
    %v2511 = vadd.f32 %v2504, %v1933
    %v2512 = vadd.f32 %v2507, %v1934
    %v2513 = vsel %vm50, %v2509, -inf
    %2514 = vmax.xlane.f32.xlu0 %v2513
    %v2515 = vpop.xlane.xlu0 %2514
    %v2516 = vsel %vm50, %v2510, -inf
    %2517 = vmax.xlane.f32.xlu0 %v2516
    %v2518 = vpop.xlane.xlu0 %2517
    %v2519 = vsel %vm50, %v2511, -inf
    %2520 = vmax.xlane.f32.xlu0 %v2519
    %v2521 = vpop.xlane.xlu0 %2520
    %v2522 = vsel %vm50, %v2512, -inf
    %2523 = vmax.xlane.f32.xlu0 %v2522
    %v2524 = vpop.xlane.xlu0 %2523
    %v2525 = vsub.f32 %v2509, %v2515
    %v2526 = vsub.f32 %v2510, %v2518
    %v2527 = vsub.f32 %v2511, %v2521
    %v2528 = vsub.f32 %v2512, %v2524
    %v2529 = vmul.f32 %v2525, 1.442695
    %v2530 = vpow.pop %v2529
    %v2531 = vmul.f32 %v2526, 1.442695
    %v2532 = vpow.pop %v2531
    %v2533 = vmul.f32 %v2527, 1.442695
    %v2534 = vpow.pop %v2533
    %v2535 = vmul.f32 %v2528, 1.442695
    %v2536 = vpow.pop %v2535
    %v2537 = vsel %vm50, %v2530, 0.0
    %2538 = vadd.xlane.f32.xlu0 %v2537
    %v2539 = vpop.xlane.xlu0 %2538
    %v2540 = vsel %vm50, %v2532, 0.0
    %2541 = vadd.xlane.f32.xlu0 %v2540
    %v2542 = vpop.xlane.xlu0 %2541
    %v2543 = vsel %vm50, %v2534, 0.0
    %2544 = vadd.xlane.f32.xlu0 %v2543
    %v2545 = vpop.xlane.xlu0 %2544
    %v2546 = vsel %vm50, %v2536, 0.0
    %2547 = vadd.xlane.f32.xlu0 %v2546
    %v2548 = vpop.xlane.xlu0 %2547
    %v2549 = vrcp.pop %v2539
    %v2550 = vrcp.pop %v2542
    %v2551 = vrcp.pop %v2545
    %v2552 = vrcp.pop %v2548
    %v2553 = vmul.f32 %v2530, %v2549
    %v2554 = vmul.f32 %v2532, %v2550
    %v2555 = vmul.f32 %v2534, %v2551
    %v2556 = vmul.f32 %v2536, %v2552
    %2557 = vrot.lane.b32.xlu0 %v1899, 48
    %v2558 = vpop.permute.xlu0 %2557
    %2559 = vrot.lane.b32.xlu0 %v1900, 48
    %v2560 = vpop.permute.xlu0 %2559
    %2561 = vrot.lane.b32.xlu0 %v1901, 48
    %v2562 = vpop.permute.xlu0 %2561
    %2563 = vrot.lane.b32.xlu0 %v1902, 48
    %v2564 = vpop.permute.xlu0 %2563
    %v2574 = vsel %vm50, %v2553, 0
    %v2577 = vsel %vm50, %v2554, 0
    %v2580 = vsel %vm50, %v2555, 0
    %v2583 = vsel %vm50, %v2556, 0
    %2585 = vmatpush.msra.mxu0 0.0
    %2586 = vmatpush.msra.mxu0 0.0
    %2587 = vmatpush.msra.mxu0 0.0
    %2588 = vmatpush.msra.mxu0 0.0
    %2589 = vmatpush.msra.mxu0 0.0
    %2590 = vmatpush.msra.mxu0 0.0
    %2591 = vmatpush.msra.mxu0 0.0
    %2592 = vmatpush.msra.mxu0 0.0
    %2593 = vmatpush.msra.mxu0 0.0
    %2594 = vmatpush.msra.mxu0 0.0
    %2595 = vmatpush.msra.mxu0 0.0
    %2596 = vmatpush.msra.mxu0 0.0
    %2597 = vmatpush.msra.mxu0 %v2564
    %2598 = vmatpush.msra.mxu0 %v2562
    %2599 = vmatpush.msra.mxu0 %v2560
    %2600 = vmatpush.msra.mxu0 %v2558
    %2601 = vmatmul.f32.gmra.mxu0 %v2574
    %v2602 = vpop.f32.mrf.mxu0
    %v2603 = vadd.f32 %v2301, %v2602
    %2604 = vmatmul.f32.gmra.mxu0 %v2577
    %v2605 = vpop.f32.mrf.mxu0
    %v2606 = vadd.f32 %v2303, %v2605
    %2607 = vmatmul.f32.gmra.mxu0 %v2580
    %v2608 = vpop.f32.mrf.mxu0
    %v2609 = vadd.f32 %v2305, %v2608
    %2610 = vmatmul.f32.gmra.mxu0 %v2583
    %v2611 = vpop.f32.mrf.mxu0
    %v2612 = vadd.f32 %v2307, %v2611
    %2613 = vdwg.mxu0
    %v2614 = vld [vmem:[#allocation2 + $0x410] sm:$0xff]
    %v2615 = vld [vmem:[#allocation2 + $0x418] sm:$0xff]
    %v2617 = vsel %vm1936, %v2603, 0
    %v2620 = vsel %vm1936, %v2606, 0
    %v2623 = vsel %vm1936, %v2609, 0
    %v2626 = vsel %vm1936, %v2612, 0
    %2628 = vmatpush.msra.mxu0 0.0
    %2629 = vmatpush.msra.mxu0 0.0
    %2630 = vmatpush.msra.mxu0 0.0
    %2631 = vmatpush.msra.mxu0 0.0
    %2632 = vmatpush.msra.mxu0 0.0
    %2633 = vmatpush.msra.mxu0 0.0
    %2634 = vmatpush.msra.mxu0 0.0
    %2635 = vmatpush.msra.mxu0 0.0
    %2636 = vmatpush.msra.mxu0 0.0
    %2637 = vmatpush.msra.mxu0 0.0
    %2638 = vmatpush.msra.mxu0 0.0
    %2639 = vmatpush.msra.mxu0 0.0
    %2640 = vmatpush.msra.mxu0 0.0
    %2641 = vmatpush.msra.mxu0 0.0
    %2642 = vmatpush.msra.mxu0 %v2615
    %2643 = vmatpush.msra.mxu0 %v2614
    %2644 = vmatmul.f32.gmra.mxu0 %v2617
    %v2645 = vpop.f32.mrf.mxu0
    %v2646 = vadd.f32 0.0, %v2645
    %2647 = vmatmul.f32.gmra.mxu0 %v2620
    %v2648 = vpop.f32.mrf.mxu0
    %v2649 = vadd.f32 0.0, %v2648
    %2650 = vmatmul.f32.gmra.mxu0 %v2623
    %v2651 = vpop.f32.mrf.mxu0
    %v2652 = vadd.f32 0.0, %v2651
    %2653 = vmatmul.f32.gmra.mxu0 %v2626
    %v2654 = vpop.f32.mrf.mxu0
    %v2655 = vadd.f32 0.0, %v2654
    %2656 = vdwg.mxu0
    %v2657 = vadd.f32 %v2296, %v2646
    %v2658 = vadd.f32 %v2297, %v2649
    %v2659 = vadd.f32 %v2298, %v2652
    %v2660 = vadd.f32 %v2299, %v2655
    %v2661 = vld [vmem:[#allocation2 + $0x548] sm:$0xff]
    %v2662 = vld [vmem:[#allocation2 + $0x550] sm:$0xff]
    %v2663 = vld [vmem:[#allocation2 + $0x558] sm:$0xff]
    %v2664 = vld [vmem:[#allocation2 + $0x560] sm:$0xff]
    %v2665 = vld [vmem:[#allocation2 + $0x428] sm:$0xff]
    %v2666 = vld [vmem:[#allocation2 + $0x430] sm:$0xff]
    %v2667 = vld [vmem:[#allocation2 + $0x438] sm:$0xff]
    %v2668 = vld [vmem:[#allocation2 + $0x440] sm:$0xff]
    %2670 = vset.pattern.permute.xlu0 0
    %2671 = vperm.xlu0 %2670, %v2661
    %v2672 = vpop.permute.xlu0 %2671
    %2675 = vset.pattern.permute.xlu0 0
    %2676 = vperm.xlu0 %2675, %v2662
    %v2677 = vpop.permute.xlu0 %2676
    %2680 = vset.pattern.permute.xlu0 0
    %2681 = vperm.xlu0 %2680, %v2663
    %v2682 = vpop.permute.xlu0 %2681
    %2685 = vset.pattern.permute.xlu0 0
    %2686 = vperm.xlu0 %2685, %v2664
    %v2687 = vpop.permute.xlu0 %2686
    %2689 = vmatpush.msra.mxu0 %v43
    %2690 = vmatpush.msra.mxu0 %v42
    %2691 = vmatpush.msra.mxu0 %v41
    %2692 = vmatpush.msra.mxu0 %v40
    %2693 = vmatpush.msra.mxu0 %v39
    %2694 = vmatpush.msra.mxu0 %v38
    %2695 = vmatpush.msra.mxu0 %v37
    %2696 = vmatpush.msra.mxu0 %v36
    %2697 = vmatpush.msra.mxu0 %v35
    %2698 = vmatpush.msra.mxu0 %v34
    %2699 = vmatpush.msra.mxu0 %v33
    %2700 = vmatpush.msra.mxu0 %v32
    %2701 = vmatpush.msra.mxu0 %v31
    %2702 = vmatpush.msra.mxu0 %v30
    %2703 = vmatpush.msra.mxu0 %v29
    %2704 = vmatpush.msra.mxu0 %v28
    %2705 = vmatmul.f32.gmra.mxu0 %v2665
    %v2706 = vpop.f32.mrf.mxu0
    %v2707 = vadd.f32 %v2672, %v2706
    %2708 = vmatmul.f32.gmra.mxu0 %v2666
    %v2709 = vpop.f32.mrf.mxu0
    %v2710 = vadd.f32 %v2677, %v2709
    %2711 = vmatmul.f32.gmra.mxu0 %v2667
    %v2712 = vpop.f32.mrf.mxu0
    %v2713 = vadd.f32 %v2682, %v2712
    %2714 = vmatmul.f32.gmra.mxu0 %v2668
    %v2715 = vpop.f32.mrf.mxu0
    %v2716 = vadd.f32 %v2687, %v2715
    %2717 = vdwg.mxu0
    %v2718 = vld [vmem:[#allocation2 + $0x448] sm:$0xff]
    %v2719 = vld [vmem:[#allocation2 + $0x450] sm:$0xff]
    %v2720 = vld [vmem:[#allocation2 + $0x458] sm:$0xff]
    %v2721 = vld [vmem:[#allocation2 + $0x460] sm:$0xff]
    %2722 = vset.pattern.permute.xlu0 1
    %2723 = vperm.xlu0 %2722, %v2661
    %v2724 = vpop.permute.xlu0 %2723
    %2726 = vset.pattern.permute.xlu0 1
    %2727 = vperm.xlu0 %2726, %v2662
    %v2728 = vpop.permute.xlu0 %2727
    %2730 = vset.pattern.permute.xlu0 1
    %2731 = vperm.xlu0 %2730, %v2663
    %v2732 = vpop.permute.xlu0 %2731
    %2734 = vset.pattern.permute.xlu0 1
    %2735 = vperm.xlu0 %2734, %v2664
    %v2736 = vpop.permute.xlu0 %2735
    %2738 = vmatpush.msra.mxu0 %v43
    %2739 = vmatpush.msra.mxu0 %v42
    %2740 = vmatpush.msra.mxu0 %v41
    %2741 = vmatpush.msra.mxu0 %v40
    %2742 = vmatpush.msra.mxu0 %v39
    %2743 = vmatpush.msra.mxu0 %v38
    %2744 = vmatpush.msra.mxu0 %v37
    %2745 = vmatpush.msra.mxu0 %v36
    %2746 = vmatpush.msra.mxu0 %v35
    %2747 = vmatpush.msra.mxu0 %v34
    %2748 = vmatpush.msra.mxu0 %v33
    %2749 = vmatpush.msra.mxu0 %v32
    %2750 = vmatpush.msra.mxu0 %v31
    %2751 = vmatpush.msra.mxu0 %v30
    %2752 = vmatpush.msra.mxu0 %v29
    %2753 = vmatpush.msra.mxu0 %v28
    %2754 = vmatmul.f32.gmra.mxu0 %v2718
    %v2755 = vpop.f32.mrf.mxu0
    %v2756 = vadd.f32 %v2724, %v2755
    %2757 = vmatmul.f32.gmra.mxu0 %v2719
    %v2758 = vpop.f32.mrf.mxu0
    %v2759 = vadd.f32 %v2728, %v2758
    %2760 = vmatmul.f32.gmra.mxu0 %v2720
    %v2761 = vpop.f32.mrf.mxu0
    %v2762 = vadd.f32 %v2732, %v2761
    %2763 = vmatmul.f32.gmra.mxu0 %v2721
    %v2764 = vpop.f32.mrf.mxu0
    %v2765 = vadd.f32 %v2736, %v2764
    %2766 = vdwg.mxu0
    %v2767 = vmax.f32 %v2707, %v2756
    %v2768 = vmax.f32 %v2710, %v2759
    %v2769 = vmax.f32 %v2713, %v2762
    %v2770 = vmax.f32 %v2716, %v2765
    %v2771 = vld [vmem:[#allocation2 + $0x468] sm:$0xff]
    %v2772 = vld [vmem:[#allocation2 + $0x470] sm:$0xff]
    %v2773 = vld [vmem:[#allocation2 + $0x478] sm:$0xff]
    %v2774 = vld [vmem:[#allocation2 + $0x480] sm:$0xff]
    %2775 = vset.pattern.permute.xlu0 2
    %2776 = vperm.xlu0 %2775, %v2661
    %v2777 = vpop.permute.xlu0 %2776
    %2779 = vset.pattern.permute.xlu0 2
    %2780 = vperm.xlu0 %2779, %v2662
    %v2781 = vpop.permute.xlu0 %2780
    %2783 = vset.pattern.permute.xlu0 2
    %2784 = vperm.xlu0 %2783, %v2663
    %v2785 = vpop.permute.xlu0 %2784
    %2787 = vset.pattern.permute.xlu0 2
    %2788 = vperm.xlu0 %2787, %v2664
    %v2789 = vpop.permute.xlu0 %2788
    %2791 = vmatpush.msra.mxu0 %v43
    %2792 = vmatpush.msra.mxu0 %v42
    %2793 = vmatpush.msra.mxu0 %v41
    %2794 = vmatpush.msra.mxu0 %v40
    %2795 = vmatpush.msra.mxu0 %v39
    %2796 = vmatpush.msra.mxu0 %v38
    %2797 = vmatpush.msra.mxu0 %v37
    %2798 = vmatpush.msra.mxu0 %v36
    %2799 = vmatpush.msra.mxu0 %v35
    %2800 = vmatpush.msra.mxu0 %v34
    %2801 = vmatpush.msra.mxu0 %v33
    %2802 = vmatpush.msra.mxu0 %v32
    %2803 = vmatpush.msra.mxu0 %v31
    %2804 = vmatpush.msra.mxu0 %v30
    %2805 = vmatpush.msra.mxu0 %v29
    %2806 = vmatpush.msra.mxu0 %v28
    %2807 = vmatmul.f32.gmra.mxu0 %v2771
    %v2808 = vpop.f32.mrf.mxu0
    %v2809 = vadd.f32 %v2777, %v2808
    %2810 = vmatmul.f32.gmra.mxu0 %v2772
    %v2811 = vpop.f32.mrf.mxu0
    %v2812 = vadd.f32 %v2781, %v2811
    %2813 = vmatmul.f32.gmra.mxu0 %v2773
    %v2814 = vpop.f32.mrf.mxu0
    %v2815 = vadd.f32 %v2785, %v2814
    %2816 = vmatmul.f32.gmra.mxu0 %v2774
    %v2817 = vpop.f32.mrf.mxu0
    %v2818 = vadd.f32 %v2789, %v2817
    %2819 = vdwg.mxu0
    %v2820 = vmax.f32 %v2767, %v2809
    %v2821 = vmax.f32 %v2768, %v2812
    %v2822 = vmax.f32 %v2769, %v2815
    %v2823 = vmax.f32 %v2770, %v2818
    %v2824 = vld [vmem:[#allocation2 + $0x488] sm:$0xff]
    %v2825 = vld [vmem:[#allocation2 + $0x490] sm:$0xff]
    %v2826 = vld [vmem:[#allocation2 + $0x498] sm:$0xff]
    %v2827 = vld [vmem:[#allocation2 + $0x4a0] sm:$0xff]
    %2828 = vset.pattern.permute.xlu0 3
    %2829 = vperm.xlu0 %2828, %v2661
    %v2830 = vpop.permute.xlu0 %2829
    %2832 = vset.pattern.permute.xlu0 3
    %2833 = vperm.xlu0 %2832, %v2662
    %v2834 = vpop.permute.xlu0 %2833
    %2836 = vset.pattern.permute.xlu0 3
    %2837 = vperm.xlu0 %2836, %v2663
    %v2838 = vpop.permute.xlu0 %2837
    %2840 = vset.pattern.permute.xlu0 3
    %2841 = vperm.xlu0 %2840, %v2664
    %v2842 = vpop.permute.xlu0 %2841
    %2844 = vmatpush.msra.mxu0 %v43
    %2845 = vmatpush.msra.mxu0 %v42
    %2846 = vmatpush.msra.mxu0 %v41
    %2847 = vmatpush.msra.mxu0 %v40
    %2848 = vmatpush.msra.mxu0 %v39
    %2849 = vmatpush.msra.mxu0 %v38
    %2850 = vmatpush.msra.mxu0 %v37
    %2851 = vmatpush.msra.mxu0 %v36
    %2852 = vmatpush.msra.mxu0 %v35
    %2853 = vmatpush.msra.mxu0 %v34
    %2854 = vmatpush.msra.mxu0 %v33
    %2855 = vmatpush.msra.mxu0 %v32
    %2856 = vmatpush.msra.mxu0 %v31
    %2857 = vmatpush.msra.mxu0 %v30
    %2858 = vmatpush.msra.mxu0 %v29
    %2859 = vmatpush.msra.mxu0 %v28
    %2860 = vmatmul.f32.gmra.mxu0 %v2824
    %v2861 = vpop.f32.mrf.mxu0
    %v2862 = vadd.f32 %v2830, %v2861
    %2863 = vmatmul.f32.gmra.mxu0 %v2825
    %v2864 = vpop.f32.mrf.mxu0
    %v2865 = vadd.f32 %v2834, %v2864
    %2866 = vmatmul.f32.gmra.mxu0 %v2826
    %v2867 = vpop.f32.mrf.mxu0
    %v2868 = vadd.f32 %v2838, %v2867
    %2869 = vmatmul.f32.gmra.mxu0 %v2827
    %v2870 = vpop.f32.mrf.mxu0
    %v2871 = vadd.f32 %v2842, %v2870
    %2872 = vdwg.mxu0
    %v2873 = vmax.f32 %v2820, %v2862
    %v2874 = vmax.f32 %v2821, %v2865
    %v2875 = vmax.f32 %v2822, %v2868
    %v2876 = vmax.f32 %v2823, %v2871
    %v2877 = vld [vmem:[#allocation2 + $0x4a8] sm:$0xff]
    %v2878 = vld [vmem:[#allocation2 + $0x4b0] sm:$0xff]
    %v2879 = vld [vmem:[#allocation2 + $0x4b8] sm:$0xff]
    %v2880 = vld [vmem:[#allocation2 + $0x4c0] sm:$0xff]
    %2881 = vset.pattern.permute.xlu0 4
    %2882 = vperm.xlu0 %2881, %v2661
    %v2883 = vpop.permute.xlu0 %2882
    %2885 = vset.pattern.permute.xlu0 4
    %2886 = vperm.xlu0 %2885, %v2662
    %v2887 = vpop.permute.xlu0 %2886
    %2889 = vset.pattern.permute.xlu0 4
    %2890 = vperm.xlu0 %2889, %v2663
    %v2891 = vpop.permute.xlu0 %2890
    %2893 = vset.pattern.permute.xlu0 4
    %2894 = vperm.xlu0 %2893, %v2664
    %v2895 = vpop.permute.xlu0 %2894
    %2897 = vmatpush.msra.mxu0 %v43
    %2898 = vmatpush.msra.mxu0 %v42
    %2899 = vmatpush.msra.mxu0 %v41
    %2900 = vmatpush.msra.mxu0 %v40
    %2901 = vmatpush.msra.mxu0 %v39
    %2902 = vmatpush.msra.mxu0 %v38
    %2903 = vmatpush.msra.mxu0 %v37
    %2904 = vmatpush.msra.mxu0 %v36
    %2905 = vmatpush.msra.mxu0 %v35
    %2906 = vmatpush.msra.mxu0 %v34
    %2907 = vmatpush.msra.mxu0 %v33
    %2908 = vmatpush.msra.mxu0 %v32
    %2909 = vmatpush.msra.mxu0 %v31
    %2910 = vmatpush.msra.mxu0 %v30
    %2911 = vmatpush.msra.mxu0 %v29
    %2912 = vmatpush.msra.mxu0 %v28
    %2913 = vmatmul.f32.gmra.mxu0 %v2877
    %v2914 = vpop.f32.mrf.mxu0
    %v2915 = vadd.f32 %v2883, %v2914
    %2916 = vmatmul.f32.gmra.mxu0 %v2878
    %v2917 = vpop.f32.mrf.mxu0
    %v2918 = vadd.f32 %v2887, %v2917
    %2919 = vmatmul.f32.gmra.mxu0 %v2879
    %v2920 = vpop.f32.mrf.mxu0
    %v2921 = vadd.f32 %v2891, %v2920
    %2922 = vmatmul.f32.gmra.mxu0 %v2880
    %v2923 = vpop.f32.mrf.mxu0
    %v2924 = vadd.f32 %v2895, %v2923
    %2925 = vdwg.mxu0
    %v2926 = vmax.f32 %v2873, %v2915
    %v2927 = vmax.f32 %v2874, %v2918
    %v2928 = vmax.f32 %v2875, %v2921
    %v2929 = vmax.f32 %v2876, %v2924
    %v2930 = vld [vmem:[#allocation2 + $0x4c8] sm:$0xff]
    %v2931 = vld [vmem:[#allocation2 + $0x4d0] sm:$0xff]
    %v2932 = vld [vmem:[#allocation2 + $0x4d8] sm:$0xff]
    %v2933 = vld [vmem:[#allocation2 + $0x4e0] sm:$0xff]
    %2934 = vset.pattern.permute.xlu0 5
    %2935 = vperm.xlu0 %2934, %v2661
    %v2936 = vpop.permute.xlu0 %2935
    %2938 = vset.pattern.permute.xlu0 5
    %2939 = vperm.xlu0 %2938, %v2662
    %v2940 = vpop.permute.xlu0 %2939
    %2942 = vset.pattern.permute.xlu0 5
    %2943 = vperm.xlu0 %2942, %v2663
    %v2944 = vpop.permute.xlu0 %2943
    %2946 = vset.pattern.permute.xlu0 5
    %2947 = vperm.xlu0 %2946, %v2664
    %v2948 = vpop.permute.xlu0 %2947
    %2950 = vmatpush.msra.mxu0 %v43
    %2951 = vmatpush.msra.mxu0 %v42
    %2952 = vmatpush.msra.mxu0 %v41
    %2953 = vmatpush.msra.mxu0 %v40
    %2954 = vmatpush.msra.mxu0 %v39
    %2955 = vmatpush.msra.mxu0 %v38
    %2956 = vmatpush.msra.mxu0 %v37
    %2957 = vmatpush.msra.mxu0 %v36
    %2958 = vmatpush.msra.mxu0 %v35
    %2959 = vmatpush.msra.mxu0 %v34
    %2960 = vmatpush.msra.mxu0 %v33
    %2961 = vmatpush.msra.mxu0 %v32
    %2962 = vmatpush.msra.mxu0 %v31
    %2963 = vmatpush.msra.mxu0 %v30
    %2964 = vmatpush.msra.mxu0 %v29
    %2965 = vmatpush.msra.mxu0 %v28
    %2966 = vmatmul.f32.gmra.mxu0 %v2930
    %v2967 = vpop.f32.mrf.mxu0
    %v2968 = vadd.f32 %v2936, %v2967
    %2969 = vmatmul.f32.gmra.mxu0 %v2931
    %v2970 = vpop.f32.mrf.mxu0
    %v2971 = vadd.f32 %v2940, %v2970
    %2972 = vmatmul.f32.gmra.mxu0 %v2932
    %v2973 = vpop.f32.mrf.mxu0
    %v2974 = vadd.f32 %v2944, %v2973
    %2975 = vmatmul.f32.gmra.mxu0 %v2933
    %v2976 = vpop.f32.mrf.mxu0
    %v2977 = vadd.f32 %v2948, %v2976
    %2978 = vdwg.mxu0
    %v2979 = vmax.f32 %v2926, %v2968
    %v2980 = vmax.f32 %v2927, %v2971
    %v2981 = vmax.f32 %v2928, %v2974
    %v2982 = vmax.f32 %v2929, %v2977
    %v2983 = vld [vmem:[#allocation2 + $0x4e8] sm:$0xff]
    %v2984 = vld [vmem:[#allocation2 + $0x4f0] sm:$0xff]
    %v2985 = vld [vmem:[#allocation2 + $0x4f8] sm:$0xff]
    %v2986 = vld [vmem:[#allocation2 + $0x500] sm:$0xff]
    %2987 = vset.pattern.permute.xlu0 6
    %2988 = vperm.xlu0 %2987, %v2661
    %v2989 = vpop.permute.xlu0 %2988
    %2991 = vset.pattern.permute.xlu0 6
    %2992 = vperm.xlu0 %2991, %v2662
    %v2993 = vpop.permute.xlu0 %2992
    %2995 = vset.pattern.permute.xlu0 6
    %2996 = vperm.xlu0 %2995, %v2663
    %v2997 = vpop.permute.xlu0 %2996
    %2999 = vset.pattern.permute.xlu0 6
    %3000 = vperm.xlu0 %2999, %v2664
    %v3001 = vpop.permute.xlu0 %3000
    %3003 = vmatpush.msra.mxu0 %v43
    %3004 = vmatpush.msra.mxu0 %v42
    %3005 = vmatpush.msra.mxu0 %v41
    %3006 = vmatpush.msra.mxu0 %v40
    %3007 = vmatpush.msra.mxu0 %v39
    %3008 = vmatpush.msra.mxu0 %v38
    %3009 = vmatpush.msra.mxu0 %v37
    %3010 = vmatpush.msra.mxu0 %v36
    %3011 = vmatpush.msra.mxu0 %v35
    %3012 = vmatpush.msra.mxu0 %v34
    %3013 = vmatpush.msra.mxu0 %v33
    %3014 = vmatpush.msra.mxu0 %v32
    %3015 = vmatpush.msra.mxu0 %v31
    %3016 = vmatpush.msra.mxu0 %v30
    %3017 = vmatpush.msra.mxu0 %v29
    %3018 = vmatpush.msra.mxu0 %v28
    %3019 = vmatmul.f32.gmra.mxu0 %v2983
    %v3020 = vpop.f32.mrf.mxu0
    %v3021 = vadd.f32 %v2989, %v3020
    %3022 = vmatmul.f32.gmra.mxu0 %v2984
    %v3023 = vpop.f32.mrf.mxu0
    %v3024 = vadd.f32 %v2993, %v3023
    %3025 = vmatmul.f32.gmra.mxu0 %v2985
    %v3026 = vpop.f32.mrf.mxu0
    %v3027 = vadd.f32 %v2997, %v3026
    %3028 = vmatmul.f32.gmra.mxu0 %v2986
    %v3029 = vpop.f32.mrf.mxu0
    %v3030 = vadd.f32 %v3001, %v3029
    %3031 = vdwg.mxu0
    %v3032 = vmax.f32 %v2979, %v3021
    %v3033 = vmax.f32 %v2980, %v3024
    %v3034 = vmax.f32 %v2981, %v3027
    %v3035 = vmax.f32 %v2982, %v3030
    %v3036 = vld [vmem:[#allocation2 + $0x508] sm:$0xff]
    %v3037 = vld [vmem:[#allocation2 + $0x510] sm:$0xff]
    %v3038 = vld [vmem:[#allocation2 + $0x518] sm:$0xff]
    %v3039 = vld [vmem:[#allocation2 + $0x520] sm:$0xff]
    %3040 = vset.pattern.permute.xlu0 7
    %3041 = vperm.xlu0 %3040, %v2661
    %v3042 = vpop.permute.xlu0 %3041
    %3044 = vset.pattern.permute.xlu0 7
    %3045 = vperm.xlu0 %3044, %v2662
    %v3046 = vpop.permute.xlu0 %3045
    %3048 = vset.pattern.permute.xlu0 7
    %3049 = vperm.xlu0 %3048, %v2663
    %v3050 = vpop.permute.xlu0 %3049
    %3052 = vset.pattern.permute.xlu0 7
    %3053 = vperm.xlu0 %3052, %v2664
    %v3054 = vpop.permute.xlu0 %3053
    %3056 = vmatpush.msra.mxu0 %v43
    %3057 = vmatpush.msra.mxu0 %v42
    %3058 = vmatpush.msra.mxu0 %v41
    %3059 = vmatpush.msra.mxu0 %v40
    %3060 = vmatpush.msra.mxu0 %v39
    %3061 = vmatpush.msra.mxu0 %v38
    %3062 = vmatpush.msra.mxu0 %v37
    %3063 = vmatpush.msra.mxu0 %v36
    %3064 = vmatpush.msra.mxu0 %v35
    %3065 = vmatpush.msra.mxu0 %v34
    %3066 = vmatpush.msra.mxu0 %v33
    %3067 = vmatpush.msra.mxu0 %v32
    %3068 = vmatpush.msra.mxu0 %v31
    %3069 = vmatpush.msra.mxu0 %v30
    %3070 = vmatpush.msra.mxu0 %v29
    %3071 = vmatpush.msra.mxu0 %v28
    %3072 = vmatmul.f32.gmra.mxu0 %v3036
    %v3073 = vpop.f32.mrf.mxu0
    %v3074 = vadd.f32 %v3042, %v3073
    %3075 = vmatmul.f32.gmra.mxu0 %v3037
    %v3076 = vpop.f32.mrf.mxu0
    %v3077 = vadd.f32 %v3046, %v3076
    %3078 = vmatmul.f32.gmra.mxu0 %v3038
    %v3079 = vpop.f32.mrf.mxu0
    %v3080 = vadd.f32 %v3050, %v3079
    %3081 = vmatmul.f32.gmra.mxu0 %v3039
    %v3082 = vpop.f32.mrf.mxu0
    %v3083 = vadd.f32 %v3054, %v3082
    %3084 = vdwg.mxu0
    %v3085 = vmax.f32 %v3032, %v3074
    %v3086 = vmax.f32 %v3033, %v3077
    %v3087 = vmax.f32 %v3034, %v3080
    %v3088 = vmax.f32 %v3035, %v3083
    %v3089 = vld [vmem:[#allocation2 + $0x528] sm:$0xff]
    %v3090 = vld [vmem:[#allocation2 + $0x530] sm:$0xff]
    %v3091 = vld [vmem:[#allocation2 + $0x538] sm:$0xff]
    %v3092 = vld [vmem:[#allocation2 + $0x540] sm:$0xff]
    %3093 = vset.pattern.permute.xlu0 8
    %3094 = vperm.xlu0 %3093, %v2661
    %v3095 = vpop.permute.xlu0 %3094
    %3097 = vset.pattern.permute.xlu0 8
    %3098 = vperm.xlu0 %3097, %v2662
    %v3099 = vpop.permute.xlu0 %3098
    %3101 = vset.pattern.permute.xlu0 8
    %3102 = vperm.xlu0 %3101, %v2663
    %v3103 = vpop.permute.xlu0 %3102
    %3105 = vset.pattern.permute.xlu0 8
    %3106 = vperm.xlu0 %3105, %v2664
    %v3107 = vpop.permute.xlu0 %3106
    %3109 = vmatpush.msra.mxu0 %v43
    %3110 = vmatpush.msra.mxu0 %v42
    %3111 = vmatpush.msra.mxu0 %v41
    %3112 = vmatpush.msra.mxu0 %v40
    %3113 = vmatpush.msra.mxu0 %v39
    %3114 = vmatpush.msra.mxu0 %v38
    %3115 = vmatpush.msra.mxu0 %v37
    %3116 = vmatpush.msra.mxu0 %v36
    %3117 = vmatpush.msra.mxu0 %v35
    %3118 = vmatpush.msra.mxu0 %v34
    %3119 = vmatpush.msra.mxu0 %v33
    %3120 = vmatpush.msra.mxu0 %v32
    %3121 = vmatpush.msra.mxu0 %v31
    %3122 = vmatpush.msra.mxu0 %v30
    %3123 = vmatpush.msra.mxu0 %v29
    %3124 = vmatpush.msra.mxu0 %v28
    %3125 = vmatmul.f32.gmra.mxu0 %v3089
    %v3126 = vpop.f32.mrf.mxu0
    %v3127 = vadd.f32 %v3095, %v3126
    %3128 = vmatmul.f32.gmra.mxu0 %v3090
    %v3129 = vpop.f32.mrf.mxu0
    %v3130 = vadd.f32 %v3099, %v3129
    %3131 = vmatmul.f32.gmra.mxu0 %v3091
    %v3132 = vpop.f32.mrf.mxu0
    %v3133 = vadd.f32 %v3103, %v3132
    %3134 = vmatmul.f32.gmra.mxu0 %v3092
    %v3135 = vpop.f32.mrf.mxu0
    %v3136 = vadd.f32 %v3107, %v3135
    %3137 = vdwg.mxu0
    %v3138 = vmax.f32 %v3085, %v3127
    %v3139 = vmax.f32 %v3086, %v3130
    %v3140 = vmax.f32 %v3087, %v3133
    %v3141 = vmax.f32 %v3088, %v3136
    %v3142 = vadd.f32 %v3138, %v2657
    %v3143 = vadd.f32 %v3139, %v2658
    %v3144 = vadd.f32 %v3140, %v2659
    %v3145 = vadd.f32 %v3141, %v2660
    %v3146 = vld [vmem:[#allocation2 + $0x568] sm:$0x1]
    %v3147 = vld [vmem:[#allocation2 + $0x570] sm:$0x1]
    %v3148 = vld [vmem:[#allocation2 + $0x290] sm:$0xff]
    %v3149 = vld [vmem:[#allocation2 + $0x298] sm:$0xff]
    %v3150 = vld [vmem:[#allocation2 + $0x2a0] sm:$0xff]
    %v3151 = vld [vmem:[#allocation2 + $0x2a8] sm:$0xff]
    %v3153 = vsel %vm50, %v3142, 0
    %v3156 = vsel %vm50, %v3143, 0
    %v3159 = vsel %vm50, %v3144, 0
    %v3162 = vsel %vm50, %v3145, 0
    %3164 = vmatpush.msra.mxu0 0.0
    %3165 = vmatpush.msra.mxu0 0.0
    %3166 = vmatpush.msra.mxu0 0.0
    %3167 = vmatpush.msra.mxu0 0.0
    %3168 = vmatpush.msra.mxu0 0.0
    %3169 = vmatpush.msra.mxu0 0.0
    %3170 = vmatpush.msra.mxu0 0.0
    %3171 = vmatpush.msra.mxu0 0.0
    %3172 = vmatpush.msra.mxu0 0.0
    %3173 = vmatpush.msra.mxu0 0.0
    %3174 = vmatpush.msra.mxu0 0.0
    %3175 = vmatpush.msra.mxu0 0.0
    %3176 = vmatpush.msra.mxu0 %v3151
    %3177 = vmatpush.msra.mxu0 %v3150
    %3178 = vmatpush.msra.mxu0 %v3149
    %3179 = vmatpush.msra.mxu0 %v3148
    %3180 = vmatmul.f32.gmra.mxu0 %v3153
    %v3181 = vpop.f32.mrf.mxu0
    %v3182 = vadd.f32 0.0, %v3181
    %3183 = vmatmul.f32.gmra.mxu0 %v3156
    %v3184 = vpop.f32.mrf.mxu0
    %v3185 = vadd.f32 0.0, %v3184
    %3186 = vmatmul.f32.gmra.mxu0 %v3159
    %v3187 = vpop.f32.mrf.mxu0
    %v3188 = vadd.f32 0.0, %v3187
    %3189 = vmatmul.f32.gmra.mxu0 %v3162
    %v3190 = vpop.f32.mrf.mxu0
    %v3191 = vadd.f32 0.0, %v3190
    %3192 = vdwg.mxu0
    %v3193 = vmul.f32 %v3142, %v3142
    %v3194 = vmul.f32 %v3143, %v3143
    %v3195 = vmul.f32 %v3144, %v3144
    %v3196 = vmul.f32 %v3145, %v3145
    %v3198 = vsel %vm50, %v3193, 0
    %v3201 = vsel %vm50, %v3194, 0
    %v3204 = vsel %vm50, %v3195, 0
    %v3207 = vsel %vm50, %v3196, 0
    %3209 = vmatpush.msra.mxu0 0.0
    %3210 = vmatpush.msra.mxu0 0.0
    %3211 = vmatpush.msra.mxu0 0.0
    %3212 = vmatpush.msra.mxu0 0.0
    %3213 = vmatpush.msra.mxu0 0.0
    %3214 = vmatpush.msra.mxu0 0.0
    %3215 = vmatpush.msra.mxu0 0.0
    %3216 = vmatpush.msra.mxu0 0.0
    %3217 = vmatpush.msra.mxu0 0.0
    %3218 = vmatpush.msra.mxu0 0.0
    %3219 = vmatpush.msra.mxu0 0.0
    %3220 = vmatpush.msra.mxu0 0.0
    %3221 = vmatpush.msra.mxu0 %v3151
    %3222 = vmatpush.msra.mxu0 %v3150
    %3223 = vmatpush.msra.mxu0 %v3149
    %3224 = vmatpush.msra.mxu0 %v3148
    %3225 = vmatmul.f32.gmra.mxu0 %v3198
    %v3226 = vpop.f32.mrf.mxu0
    %v3227 = vadd.f32 0.0, %v3226
    %3228 = vmatmul.f32.gmra.mxu0 %v3201
    %v3229 = vpop.f32.mrf.mxu0
    %v3230 = vadd.f32 0.0, %v3229
    %3231 = vmatmul.f32.gmra.mxu0 %v3204
    %v3232 = vpop.f32.mrf.mxu0
    %v3233 = vadd.f32 0.0, %v3232
    %3234 = vmatmul.f32.gmra.mxu0 %v3207
    %v3235 = vpop.f32.mrf.mxu0
    %v3236 = vadd.f32 0.0, %v3235
    %3237 = vdwg.mxu0
    %v3238 = vmul.f32 %v3182, %v3182
    %v3239 = vmul.f32 %v3185, %v3185
    %v3240 = vmul.f32 %v3188, %v3188
    %v3241 = vmul.f32 %v3191, %v3191
    %v3242 = vsub.f32 %v3227, %v3238
    %v3243 = vsub.f32 %v3230, %v3239
    %v3244 = vsub.f32 %v3233, %v3240
    %v3245 = vsub.f32 %v3236, %v3241
    %v3246 = vmax.f32 %v3242, 0.0
    %v3247 = vmax.f32 %v3243, 0.0
    %v3248 = vmax.f32 %v3244, 0.0
    %v3249 = vmax.f32 %v3245, 0.0
    %v3250 = vsub.f32 %v3142, %v3182
    %v3251 = vsub.f32 %v3143, %v3185
    %v3252 = vsub.f32 %v3144, %v3188
    %v3253 = vsub.f32 %v3145, %v3191
    %v3254 = vadd.f32 %v3246, 1e-05
    %v3255 = vadd.f32 %v3247, 1e-05
    %v3256 = vadd.f32 %v3248, 1e-05
    %v3257 = vadd.f32 %v3249, 1e-05
    %v3258 = vrsqrt.pop %v3254
    %v3259 = vmul.f32 %v3258, %v3254
    %v3260 = vmul.f32 %v3259, %v3258
    %v3261 = vmul.f32 0.5, %v3260
    %v3262 = vsub.f32 1.5, %v3261
    %v3263 = vmul.f32 %v3258, %v3262
    %vm3264 = vweird.f32 %v3254
    %vm3265 = vweird.f32 %v3258
    %vm3266 = vmor %vm3264, %vm3265
    %v3267 = vsel %vm3266, %v3258, %v3263
    %v3268 = vrsqrt.pop %v3255
    %v3269 = vmul.f32 %v3268, %v3255
    %v3270 = vmul.f32 %v3269, %v3268
    %v3271 = vmul.f32 0.5, %v3270
    %v3272 = vsub.f32 1.5, %v3271
    %v3273 = vmul.f32 %v3268, %v3272
    %vm3274 = vweird.f32 %v3255
    %vm3275 = vweird.f32 %v3268
    %vm3276 = vmor %vm3274, %vm3275
    %v3277 = vsel %vm3276, %v3268, %v3273
    %v3278 = vrsqrt.pop %v3256
    %v3279 = vmul.f32 %v3278, %v3256
    %v3280 = vmul.f32 %v3279, %v3278
    %v3281 = vmul.f32 0.5, %v3280
    %v3282 = vsub.f32 1.5, %v3281
    %v3283 = vmul.f32 %v3278, %v3282
    %vm3284 = vweird.f32 %v3256
    %vm3285 = vweird.f32 %v3278
    %vm3286 = vmor %vm3284, %vm3285
    %v3287 = vsel %vm3286, %v3278, %v3283
    %v3288 = vrsqrt.pop %v3257
    %v3289 = vmul.f32 %v3288, %v3257
    %v3290 = vmul.f32 %v3289, %v3288
    %v3291 = vmul.f32 0.5, %v3290
    %v3292 = vsub.f32 1.5, %v3291
    %v3293 = vmul.f32 %v3288, %v3292
    %vm3294 = vweird.f32 %v3257
    %vm3295 = vweird.f32 %v3288
    %vm3296 = vmor %vm3294, %vm3295
    %v3297 = vsel %vm3296, %v3288, %v3293
    %v3298 = vmul.f32 %v3250, %v3267
    %v3299 = vmul.f32 %v3251, %v3277
    %v3300 = vmul.f32 %v3252, %v3287
    %v3301 = vmul.f32 %v3253, %v3297
    %v3302 = vperm.slane %v3146, 0
    %v3303 = vmul.f32 %v3298, %v3302
    %v3304 = vmul.f32 %v3299, %v3302
    %v3305 = vmul.f32 %v3300, %v3302
    %v3306 = vmul.f32 %v3301, %v3302
    %v3307 = vperm.slane %v3147, 0
    %v3308 = vadd.f32 %v3303, %v3307
    %v3309 = vadd.f32 %v3304, %v3307
    %v3310 = vadd.f32 %v3305, %v3307
    %v3311 = vadd.f32 %v3306, %v3307
    %v3312 = vld [vmem:[#allocation2 + $0x578] sm:$0xff]
    %v3313 = vld [vmem:[#allocation2 + $0x580] sm:$0xff]
    %v3314 = vld [vmem:[#allocation2 + $0x588] sm:$0xff]
    %v3315 = vld [vmem:[#allocation2 + $0x590] sm:$0xff]
    %v3316 = vld [vmem:[#allocation2 + $0x598] sm:$0x1]
    %v3317 = vperm.slane %v3316, 0
    %v3319 = vsel %vm50, %v3308, 0
    %v3322 = vsel %vm50, %v3309, 0
    %v3325 = vsel %vm50, %v3310, 0
    %v3328 = vsel %vm50, %v3311, 0
    %3330 = vmatpush.msra.mxu0 0.0
    %3331 = vmatpush.msra.mxu0 0.0
    %3332 = vmatpush.msra.mxu0 0.0
    %3333 = vmatpush.msra.mxu0 0.0
    %3334 = vmatpush.msra.mxu0 0.0
    %3335 = vmatpush.msra.mxu0 0.0
    %3336 = vmatpush.msra.mxu0 0.0
    %3337 = vmatpush.msra.mxu0 0.0
    %3338 = vmatpush.msra.mxu0 0.0
    %3339 = vmatpush.msra.mxu0 0.0
    %3340 = vmatpush.msra.mxu0 0.0
    %3341 = vmatpush.msra.mxu0 0.0
    %3342 = vmatpush.msra.mxu0 %v3315
    %3343 = vmatpush.msra.mxu0 %v3314
    %3344 = vmatpush.msra.mxu0 %v3313
    %3345 = vmatpush.msra.mxu0 %v3312
    %3346 = vmatmul.f32.gmra.mxu0 %v3319
    %v3347 = vpop.f32.mrf.mxu0
    %v3348 = vadd.f32 %v3317, %v3347
    %3349 = vmatmul.f32.gmra.mxu0 %v3322
    %v3350 = vpop.f32.mrf.mxu0
    %v3351 = vadd.f32 %v3317, %v3350
    %3352 = vmatmul.f32.gmra.mxu0 %v3325
    %v3353 = vpop.f32.mrf.mxu0
    %v3354 = vadd.f32 %v3317, %v3353
    %3355 = vmatmul.f32.gmra.mxu0 %v3328
    %v3356 = vpop.f32.mrf.mxu0
    %v3357 = vadd.f32 %v3317, %v3356
    %3358 = vdwg.mxu0
    %v3359 = vmul.f32 %v3348, 0.70710677
    %v3360 = vmul.f32 %v3351, 0.70710677
    %v3361 = vmul.f32 %v3354, 0.70710677
    %v3362 = vmul.f32 %v3357, 0.70710677
    %v3363 = vand.u32 2147483647, %v3359
    %v3364 = vand.u32 2147483647, %v3360
    %v3365 = vand.u32 2147483647, %v3361
    %v3366 = vand.u32 2147483647, %v3362
    %v3367 = vmul.f32 %v3363, 0.3275911
    %v3368 = vmul.f32 %v3364, 0.3275911
    %v3369 = vmul.f32 %v3365, 0.3275911
    %v3370 = vmul.f32 %v3366, 0.3275911
    %v3371 = vadd.f32 %v3367, 1.0
    %v3372 = vadd.f32 %v3368, 1.0
    %v3373 = vadd.f32 %v3369, 1.0
    %v3374 = vadd.f32 %v3370, 1.0
    %v3375 = vrcp.pop %v3371
    %v3376 = vmul.f32 %v3371, %v3375
    %v3377 = vsub.f32 1.0, %v3376
    %v3378 = vmul.f32 %v3375, %v3377
    %v3379 = vadd.f32 %v3375, %v3378
    %vm3380 = vweird.f32 %v3371
    %vm3381 = vweird.f32 %v3375
    %vm3382 = vmor %vm3380, %vm3381
    %v3383 = vsel %vm3382, %v3375, %v3379
    %v3384 = vand.u32 2147483647, %v3371
    %vm3385 = vcmp.eq.f32.partialorder %v3384, 8.507059e+37
    %v3386 = vand.u32 %v3371, 2147483648
    %v3387 = vor.u32 1.1754944e-38, %v3386
    %v3388 = vsel %vm3385, %v3387, %v3383
    %v3389 = vmul.f32 1.0, %v3388
    %v3390 = vrcp.pop %v3372
    %v3391 = vmul.f32 %v3372, %v3390
    %v3392 = vsub.f32 1.0, %v3391
    %v3393 = vmul.f32 %v3390, %v3392
    %v3394 = vadd.f32 %v3390, %v3393
    %vm3395 = vweird.f32 %v3372
    %vm3396 = vweird.f32 %v3390
    %vm3397 = vmor %vm3395, %vm3396
    %v3398 = vsel %vm3397, %v3390, %v3394
    %v3399 = vand.u32 2147483647, %v3372
    %vm3400 = vcmp.eq.f32.partialorder %v3399, 8.507059e+37
    %v3401 = vand.u32 %v3372, 2147483648
    %v3402 = vor.u32 1.1754944e-38, %v3401
    %v3403 = vsel %vm3400, %v3402, %v3398
    %v3404 = vmul.f32 1.0, %v3403
    %v3405 = vrcp.pop %v3373
    %v3406 = vmul.f32 %v3373, %v3405
    %v3407 = vsub.f32 1.0, %v3406
    %v3408 = vmul.f32 %v3405, %v3407
    %v3409 = vadd.f32 %v3405, %v3408
    %vm3410 = vweird.f32 %v3373
    %vm3411 = vweird.f32 %v3405
    %vm3412 = vmor %vm3410, %vm3411
    %v3413 = vsel %vm3412, %v3405, %v3409
    %v3414 = vand.u32 2147483647, %v3373
    %vm3415 = vcmp.eq.f32.partialorder %v3414, 8.507059e+37
    %v3416 = vand.u32 %v3373, 2147483648
    %v3417 = vor.u32 1.1754944e-38, %v3416
    %v3418 = vsel %vm3415, %v3417, %v3413
    %v3419 = vmul.f32 1.0, %v3418
    %v3420 = vrcp.pop %v3374
    %v3421 = vmul.f32 %v3374, %v3420
    %v3422 = vsub.f32 1.0, %v3421
    %v3423 = vmul.f32 %v3420, %v3422
    %v3424 = vadd.f32 %v3420, %v3423
    %vm3425 = vweird.f32 %v3374
    %vm3426 = vweird.f32 %v3420
    %vm3427 = vmor %vm3425, %vm3426
    %v3428 = vsel %vm3427, %v3420, %v3424
    %v3429 = vand.u32 2147483647, %v3374
    %vm3430 = vcmp.eq.f32.partialorder %v3429, 8.507059e+37
    %v3431 = vand.u32 %v3374, 2147483648
    %v3432 = vor.u32 1.1754944e-38, %v3431
    %v3433 = vsel %vm3430, %v3432, %v3428
    %v3434 = vmul.f32 1.0, %v3433
    %v3435 = vmul.f32 %v3389, 1.0614054
    %v3436 = vmul.f32 %v3404, 1.0614054
    %v3437 = vmul.f32 %v3419, 1.0614054
    %v3438 = vmul.f32 %v3434, 1.0614054
    %v3439 = vsub.f32 %v3435, 1.4531521
    %v3440 = vsub.f32 %v3436, 1.4531521
    %v3441 = vsub.f32 %v3437, 1.4531521
    %v3442 = vsub.f32 %v3438, 1.4531521
    %v3443 = vmul.f32 %v3439, %v3389
    %v3444 = vmul.f32 %v3440, %v3404
    %v3445 = vmul.f32 %v3441, %v3419
    %v3446 = vmul.f32 %v3442, %v3434
    %v3447 = vadd.f32 %v3443, 1.4214138
    %v3448 = vadd.f32 %v3444, 1.4214138
    %v3449 = vadd.f32 %v3445, 1.4214138
    %v3450 = vadd.f32 %v3446, 1.4214138
    %v3451 = vmul.f32 %v3447, %v3389
    %v3452 = vmul.f32 %v3448, %v3404
    %v3453 = vmul.f32 %v3449, %v3419
    %v3454 = vmul.f32 %v3450, %v3434
    %v3455 = vsub.f32 %v3451, 0.28449672
    %v3456 = vsub.f32 %v3452, 0.28449672
    %v3457 = vsub.f32 %v3453, 0.28449672
    %v3458 = vsub.f32 %v3454, 0.28449672
    %v3459 = vmul.f32 %v3455, %v3389
    %v3460 = vmul.f32 %v3456, %v3404
    %v3461 = vmul.f32 %v3457, %v3419
    %v3462 = vmul.f32 %v3458, %v3434
    %v3463 = vadd.f32 %v3459, 0.2548296
    %v3464 = vadd.f32 %v3460, 0.2548296
    %v3465 = vadd.f32 %v3461, 0.2548296
    %v3466 = vadd.f32 %v3462, 0.2548296
    %v3467 = vmul.f32 %v3463, %v3389
    %v3468 = vmul.f32 %v3464, %v3404
    %v3469 = vmul.f32 %v3465, %v3419
    %v3470 = vmul.f32 %v3466, %v3434
    %v3471 = vsub.f32 0.0, %v3363
    %v3472 = vsub.f32 0.0, %v3364
    %v3473 = vsub.f32 0.0, %v3365
    %v3474 = vsub.f32 0.0, %v3366
    %v3475 = vmul.f32 %v3471, %v3363
    %v3476 = vmul.f32 %v3472, %v3364
    %v3477 = vmul.f32 %v3473, %v3365
    %v3478 = vmul.f32 %v3474, %v3366
    %v3479 = vmul.f32 %v3475, 1.442695
    %v3480 = vpow.pop %v3479
    %v3481 = vmul.f32 %v3476, 1.442695
    %v3482 = vpow.pop %v3481
    %v3483 = vmul.f32 %v3477, 1.442695
    %v3484 = vpow.pop %v3483
    %v3485 = vmul.f32 %v3478, 1.442695
    %v3486 = vpow.pop %v3485
    %v3487 = vmul.f32 %v3467, %v3480
    %v3488 = vmul.f32 %v3468, %v3482
    %v3489 = vmul.f32 %v3469, %v3484
    %v3490 = vmul.f32 %v3470, %v3486
    %v3491 = vsub.f32 1.0, %v3487
    %v3492 = vsub.f32 1.0, %v3488
    %v3493 = vsub.f32 1.0, %v3489
    %v3494 = vsub.f32 1.0, %v3490
    %vm3495 = vcmp.lt.f32.partialorder %v3359, 0.0
    %vm3496 = vcmp.lt.f32.partialorder %v3360, 0.0
    %vm3497 = vcmp.lt.f32.partialorder %v3361, 0.0
    %vm3498 = vcmp.lt.f32.partialorder %v3362, 0.0
    %v3499 = vsub.f32 0.0, %v3491
    %v3500 = vsub.f32 0.0, %v3492
    %v3501 = vsub.f32 0.0, %v3493
    %v3502 = vsub.f32 0.0, %v3494
    %v3503 = vsel %vm3495, %v3499, %v3491
    %v3504 = vsel %vm3496, %v3500, %v3492
    %v3505 = vsel %vm3497, %v3501, %v3493
    %v3506 = vsel %vm3498, %v3502, %v3494
    %v3507 = vmul.f32 %v3348, 0.5
    %v3508 = vmul.f32 %v3351, 0.5
    %v3509 = vmul.f32 %v3354, 0.5
    %v3510 = vmul.f32 %v3357, 0.5
    %v3511 = vadd.f32 %v3503, 1.0
    %v3512 = vadd.f32 %v3504, 1.0
    %v3513 = vadd.f32 %v3505, 1.0
    %v3514 = vadd.f32 %v3506, 1.0
    %v3515 = vmul.f32 %v3507, %v3511
    %v3516 = vmul.f32 %v3508, %v3512
    %v3517 = vmul.f32 %v3509, %v3513
    %v3518 = vmul.f32 %v3510, %v3514
    %v3519 = vld [vmem:[#allocation2 + $0x5a0] sm:$0xff]
    %v3520 = vld [vmem:[#allocation2 + $0x5a8] sm:$0xff]
    %v3521 = vld [vmem:[#allocation2 + $0x5b0] sm:$0xff]
    %v3522 = vld [vmem:[#allocation2 + $0x5b8] sm:$0xff]
    %v3523 = vld [vmem:[#allocation2 + $0x5c0] sm:$0xff]
    %v3524 = vld [vmem:[#allocation2 + $0x5c8] sm:$0xff]
    %v3525 = vld [vmem:[#allocation2 + $0x5d0] sm:$0xff]
    %v3526 = vld [vmem:[#allocation2 + $0x5d8] sm:$0xff]
    %v3527 = vld [vmem:[#allocation2 + $0x5e0] sm:$0xff]
    %v3528 = vld [vmem:[#allocation2 + $0x5e8] sm:$0xff]
    %v3529 = vld [vmem:[#allocation2 + $0x5f0] sm:$0xff]
    %v3530 = vld [vmem:[#allocation2 + $0x5f8] sm:$0xff]
    %v3531 = vld [vmem:[#allocation2 + $0x600] sm:$0xff]
    %v3532 = vld [vmem:[#allocation2 + $0x608] sm:$0xff]
    %v3533 = vld [vmem:[#allocation2 + $0x610] sm:$0xff]
    %v3534 = vld [vmem:[#allocation2 + $0x618] sm:$0xff]
    %v3535 = vld [vmem:[#allocation2 + $0x620] sm:$0x1]
    %v3536 = vperm.slane %v3535, 0
    %3537 = vmatpush.msra.mxu0 %v3534
    %3538 = vmatpush.msra.mxu0 %v3533
    %3539 = vmatpush.msra.mxu0 %v3532
    %3540 = vmatpush.msra.mxu0 %v3531
    %3541 = vmatpush.msra.mxu0 %v3530
    %3542 = vmatpush.msra.mxu0 %v3529
    %3543 = vmatpush.msra.mxu0 %v3528
    %3544 = vmatpush.msra.mxu0 %v3527
    %3545 = vmatpush.msra.mxu0 %v3526
    %3546 = vmatpush.msra.mxu0 %v3525
    %3547 = vmatpush.msra.mxu0 %v3524
    %3548 = vmatpush.msra.mxu0 %v3523
    %3549 = vmatpush.msra.mxu0 %v3522
    %3550 = vmatpush.msra.mxu0 %v3521
    %3551 = vmatpush.msra.mxu0 %v3520
    %3552 = vmatpush.msra.mxu0 %v3519
    %3553 = vmatmul.f32.gmra.mxu0 %v3515
    %v3554 = vpop.f32.mrf.mxu0
    %v3555 = vadd.f32 %v3536, %v3554
    %3556 = vmatmul.f32.gmra.mxu0 %v3516
    %v3557 = vpop.f32.mrf.mxu0
    %v3558 = vadd.f32 %v3536, %v3557
    %3559 = vmatmul.f32.gmra.mxu0 %v3517
    %v3560 = vpop.f32.mrf.mxu0
    %v3561 = vadd.f32 %v3536, %v3560
    %3562 = vmatmul.f32.gmra.mxu0 %v3518
    %v3563 = vpop.f32.mrf.mxu0
    %v3564 = vadd.f32 %v3536, %v3563
    %3565 = vdwg.mxu0
    %v3566 = vadd.f32 %v3142, %v3555
    %v3567 = vadd.f32 %v3143, %v3558
    %v3568 = vadd.f32 %v3144, %v3561
    %v3569 = vadd.f32 %v3145, %v3564
    %v3570 = vld [vmem:[#allocation2 + $0x9f8] sm:$0x1]
    %v3571 = vld [vmem:[#allocation2 + $0xa00] sm:$0x1]
    %v3572 = vld [vmem:[#allocation2 + $0xa08] sm:$0xff]
    %v3573 = vld [vmem:[#allocation2 + $0xa10] sm:$0xff]
    %v3574 = vld [vmem:[#allocation2 + $0xa18] sm:$0xff]
    %v3575 = vld [vmem:[#allocation2 + $0xa20] sm:$0xff]
    %v3577 = vsel %vm50, %v3566, 0
    %v3580 = vsel %vm50, %v3567, 0
    %v3583 = vsel %vm50, %v3568, 0
    %v3586 = vsel %vm50, %v3569, 0
    %3588 = vmatpush.msra.mxu0 0.0
    %3589 = vmatpush.msra.mxu0 0.0
    %3590 = vmatpush.msra.mxu0 0.0
    %3591 = vmatpush.msra.mxu0 0.0
    %3592 = vmatpush.msra.mxu0 0.0
    %3593 = vmatpush.msra.mxu0 0.0
    %3594 = vmatpush.msra.mxu0 0.0
    %3595 = vmatpush.msra.mxu0 0.0
    %3596 = vmatpush.msra.mxu0 0.0
    %3597 = vmatpush.msra.mxu0 0.0
    %3598 = vmatpush.msra.mxu0 0.0
    %3599 = vmatpush.msra.mxu0 0.0
    %3600 = vmatpush.msra.mxu0 %v3575
    %3601 = vmatpush.msra.mxu0 %v3574
    %3602 = vmatpush.msra.mxu0 %v3573
    %3603 = vmatpush.msra.mxu0 %v3572
    %3604 = vmatmul.f32.gmra.mxu0 %v3577
    %v3605 = vpop.f32.mrf.mxu0
    %v3606 = vadd.f32 0.0, %v3605
    %3607 = vmatmul.f32.gmra.mxu0 %v3580
    %v3608 = vpop.f32.mrf.mxu0
    %v3609 = vadd.f32 0.0, %v3608
    %3610 = vmatmul.f32.gmra.mxu0 %v3583
    %v3611 = vpop.f32.mrf.mxu0
    %v3612 = vadd.f32 0.0, %v3611
    %3613 = vmatmul.f32.gmra.mxu0 %v3586
    %v3614 = vpop.f32.mrf.mxu0
    %v3615 = vadd.f32 0.0, %v3614
    %3616 = vdwg.mxu0
    %v3617 = vmul.f32 %v3566, %v3566
    %v3618 = vmul.f32 %v3567, %v3567
    %v3619 = vmul.f32 %v3568, %v3568
    %v3620 = vmul.f32 %v3569, %v3569
    %v3622 = vsel %vm50, %v3617, 0
    %v3625 = vsel %vm50, %v3618, 0
    %v3628 = vsel %vm50, %v3619, 0
    %v3631 = vsel %vm50, %v3620, 0
    %3633 = vmatpush.msra.mxu0 0.0
    %3634 = vmatpush.msra.mxu0 0.0
    %3635 = vmatpush.msra.mxu0 0.0
    %3636 = vmatpush.msra.mxu0 0.0
    %3637 = vmatpush.msra.mxu0 0.0
    %3638 = vmatpush.msra.mxu0 0.0
    %3639 = vmatpush.msra.mxu0 0.0
    %3640 = vmatpush.msra.mxu0 0.0
    %3641 = vmatpush.msra.mxu0 0.0
    %3642 = vmatpush.msra.mxu0 0.0
    %3643 = vmatpush.msra.mxu0 0.0
    %3644 = vmatpush.msra.mxu0 0.0
    %3645 = vmatpush.msra.mxu0 %v3575
    %3646 = vmatpush.msra.mxu0 %v3574
    %3647 = vmatpush.msra.mxu0 %v3573
    %3648 = vmatpush.msra.mxu0 %v3572
    %3649 = vmatmul.f32.gmra.mxu0 %v3622
    %v3650 = vpop.f32.mrf.mxu0
    %v3651 = vadd.f32 0.0, %v3650
    %3652 = vmatmul.f32.gmra.mxu0 %v3625
    %v3653 = vpop.f32.mrf.mxu0
    %v3654 = vadd.f32 0.0, %v3653
    %3655 = vmatmul.f32.gmra.mxu0 %v3628
    %v3656 = vpop.f32.mrf.mxu0
    %v3657 = vadd.f32 0.0, %v3656
    %3658 = vmatmul.f32.gmra.mxu0 %v3631
    %v3659 = vpop.f32.mrf.mxu0
    %v3660 = vadd.f32 0.0, %v3659
    %3661 = vdwg.mxu0
    %v3662 = vmul.f32 %v3606, %v3606
    %v3663 = vmul.f32 %v3609, %v3609
    %v3664 = vmul.f32 %v3612, %v3612
    %v3665 = vmul.f32 %v3615, %v3615
    %v3666 = vsub.f32 %v3651, %v3662
    %v3667 = vsub.f32 %v3654, %v3663
    %v3668 = vsub.f32 %v3657, %v3664
    %v3669 = vsub.f32 %v3660, %v3665
    %v3670 = vmax.f32 %v3666, 0.0
    %v3671 = vmax.f32 %v3667, 0.0
    %v3672 = vmax.f32 %v3668, 0.0
    %v3673 = vmax.f32 %v3669, 0.0
    %v3674 = vsub.f32 %v3566, %v3606
    %v3675 = vsub.f32 %v3567, %v3609
    %v3676 = vsub.f32 %v3568, %v3612
    %v3677 = vsub.f32 %v3569, %v3615
    %v3678 = vadd.f32 %v3670, 1e-05
    %v3679 = vadd.f32 %v3671, 1e-05
    %v3680 = vadd.f32 %v3672, 1e-05
    %v3681 = vadd.f32 %v3673, 1e-05
    %v3682 = vrsqrt.pop %v3678
    %v3683 = vmul.f32 %v3682, %v3678
    %v3684 = vmul.f32 %v3683, %v3682
    %v3685 = vmul.f32 0.5, %v3684
    %v3686 = vsub.f32 1.5, %v3685
    %v3687 = vmul.f32 %v3682, %v3686
    %vm3688 = vweird.f32 %v3678
    %vm3689 = vweird.f32 %v3682
    %vm3690 = vmor %vm3688, %vm3689
    %v3691 = vsel %vm3690, %v3682, %v3687
    %v3692 = vrsqrt.pop %v3679
    %v3693 = vmul.f32 %v3692, %v3679
    %v3694 = vmul.f32 %v3693, %v3692
    %v3695 = vmul.f32 0.5, %v3694
    %v3696 = vsub.f32 1.5, %v3695
    %v3697 = vmul.f32 %v3692, %v3696
    %vm3698 = vweird.f32 %v3679
    %vm3699 = vweird.f32 %v3692
    %vm3700 = vmor %vm3698, %vm3699
    %v3701 = vsel %vm3700, %v3692, %v3697
    %v3702 = vrsqrt.pop %v3680
    %v3703 = vmul.f32 %v3702, %v3680
    %v3704 = vmul.f32 %v3703, %v3702
    %v3705 = vmul.f32 0.5, %v3704
    %v3706 = vsub.f32 1.5, %v3705
    %v3707 = vmul.f32 %v3702, %v3706
    %vm3708 = vweird.f32 %v3680
    %vm3709 = vweird.f32 %v3702
    %vm3710 = vmor %vm3708, %vm3709
    %v3711 = vsel %vm3710, %v3702, %v3707
    %v3712 = vrsqrt.pop %v3681
    %v3713 = vmul.f32 %v3712, %v3681
    %v3714 = vmul.f32 %v3713, %v3712
    %v3715 = vmul.f32 0.5, %v3714
    %v3716 = vsub.f32 1.5, %v3715
    %v3717 = vmul.f32 %v3712, %v3716
    %vm3718 = vweird.f32 %v3681
    %vm3719 = vweird.f32 %v3712
    %vm3720 = vmor %vm3718, %vm3719
    %v3721 = vsel %vm3720, %v3712, %v3717
    %v3722 = vmul.f32 %v3674, %v3691
    %v3723 = vmul.f32 %v3675, %v3701
    %v3724 = vmul.f32 %v3676, %v3711
    %v3725 = vmul.f32 %v3677, %v3721
    %v3726 = vperm.slane %v3570, 0
    %v3727 = vmul.f32 %v3722, %v3726
    %v3728 = vmul.f32 %v3723, %v3726
    %v3729 = vmul.f32 %v3724, %v3726
    %v3730 = vmul.f32 %v3725, %v3726
    %v3731 = vperm.slane %v3571, 0
    %v3732 = vadd.f32 %v3727, %v3731
    %v3733 = vadd.f32 %v3728, %v3731
    %v3734 = vadd.f32 %v3729, %v3731
    %v3735 = vadd.f32 %v3730, %v3731
    %v3736 = vld [vmem:[#allocation2 + $0x8b0] sm:$0xff]
    %v3737 = vld [vmem:[#allocation2 + $0x8b8] sm:$0xff]
    %v3738 = vld [vmem:[#allocation2 + $0x8c0] sm:$0xff]
    %v3739 = vld [vmem:[#allocation2 + $0x8c8] sm:$0xff]
    %v3740 = vld [vmem:[#allocation2 + $0x628] sm:$0xff]
    %v3741 = vld [vmem:[#allocation2 + $0x630] sm:$0xff]
    %v3742 = vld [vmem:[#allocation2 + $0x638] sm:$0xff]
    %v3743 = vld [vmem:[#allocation2 + $0x640] sm:$0xff]
    %v3745 = vsel %vm50, %v3740, 0
    %v3748 = vsel %vm50, %v3741, 0
    %v3751 = vsel %vm50, %v3742, 0
    %v3754 = vsel %vm50, %v3743, 0
    %3756 = vmatpush.msra.mxu0 0.0
    %3757 = vmatpush.msra.mxu0 0.0
    %3758 = vmatpush.msra.mxu0 0.0
    %3759 = vmatpush.msra.mxu0 0.0
    %3760 = vmatpush.msra.mxu0 0.0
    %3761 = vmatpush.msra.mxu0 0.0
    %3762 = vmatpush.msra.mxu0 0.0
    %3763 = vmatpush.msra.mxu0 0.0
    %3764 = vmatpush.msra.mxu0 0.0
    %3765 = vmatpush.msra.mxu0 0.0
    %3766 = vmatpush.msra.mxu0 0.0
    %3767 = vmatpush.msra.mxu0 0.0
    %3768 = vmatpush.msra.mxu0 %v3735
    %3769 = vmatpush.msra.mxu0 %v3734
    %3770 = vmatpush.msra.mxu0 %v3733
    %3771 = vmatpush.msra.mxu0 %v3732
    %3772 = vmatmul.f32.gmra.mxu0 %v3745
    %v3773 = vpop.f32.mrf.mxu0
    %v3774 = vadd.f32 0.0, %v3773
    %3775 = vmatmul.f32.gmra.mxu0 %v3748
    %v3776 = vpop.f32.mrf.mxu0
    %v3777 = vadd.f32 0.0, %v3776
    %3778 = vmatmul.f32.gmra.mxu0 %v3751
    %v3779 = vpop.f32.mrf.mxu0
    %v3780 = vadd.f32 0.0, %v3779
    %3781 = vmatmul.f32.gmra.mxu0 %v3754
    %v3782 = vpop.f32.mrf.mxu0
    %v3783 = vadd.f32 0.0, %v3782
    %3784 = vdwg.mxu0
    %v3785 = vld [vmem:[#allocation2 + $0x790] sm:$0xff]
    %v3786 = vld [vmem:[#allocation2 + $0x798] sm:$0xff]
    %v3787 = vld [vmem:[#allocation2 + $0x7a0] sm:$0xff]
    %v3788 = vld [vmem:[#allocation2 + $0x7a8] sm:$0xff]
    %v3790 = vsel %vm50, %v3774, 0
    %v3793 = vsel %vm50, %v3777, 0
    %v3796 = vsel %vm50, %v3780, 0
    %v3799 = vsel %vm50, %v3783, 0
    %3801 = vmatpush.msra.mxu0 0.0
    %3802 = vmatpush.msra.mxu0 0.0
    %3803 = vmatpush.msra.mxu0 0.0
    %3804 = vmatpush.msra.mxu0 0.0
    %3805 = vmatpush.msra.mxu0 0.0
    %3806 = vmatpush.msra.mxu0 0.0
    %3807 = vmatpush.msra.mxu0 0.0
    %3808 = vmatpush.msra.mxu0 0.0
    %3809 = vmatpush.msra.mxu0 0.0
    %3810 = vmatpush.msra.mxu0 0.0
    %3811 = vmatpush.msra.mxu0 0.0
    %3812 = vmatpush.msra.mxu0 0.0
    %3813 = vmatpush.msra.mxu0 %v3788
    %3814 = vmatpush.msra.mxu0 %v3787
    %3815 = vmatpush.msra.mxu0 %v3786
    %3816 = vmatpush.msra.mxu0 %v3785
    %3817 = vmatmul.f32.gmra.mxu0 %v3790
    %v3818 = vpop.f32.mrf.mxu0
    %v3819 = vadd.f32 0.0, %v3818
    %3820 = vmatmul.f32.gmra.mxu0 %v3793
    %v3821 = vpop.f32.mrf.mxu0
    %v3822 = vadd.f32 0.0, %v3821
    %3823 = vmatmul.f32.gmra.mxu0 %v3796
    %v3824 = vpop.f32.mrf.mxu0
    %v3825 = vadd.f32 0.0, %v3824
    %3826 = vmatmul.f32.gmra.mxu0 %v3799
    %v3827 = vpop.f32.mrf.mxu0
    %v3828 = vadd.f32 0.0, %v3827
    %3829 = vdwg.mxu0
    %v3830 = vadd.f32 %v3736, %v3819
    %v3831 = vadd.f32 %v3737, %v3822
    %v3832 = vadd.f32 %v3738, %v3825
    %v3833 = vadd.f32 %v3739, %v3828
    %v3834 = vld [vmem:[#allocation2 + $0x648] sm:$0xff]
    %v3835 = vld [vmem:[#allocation2 + $0x650] sm:$0xff]
    %v3836 = vld [vmem:[#allocation2 + $0x658] sm:$0xff]
    %v3837 = vld [vmem:[#allocation2 + $0x660] sm:$0xff]
    %v3839 = vsel %vm50, %v3834, 0
    %v3842 = vsel %vm50, %v3835, 0
    %v3845 = vsel %vm50, %v3836, 0
    %v3848 = vsel %vm50, %v3837, 0
    %3850 = vmatpush.msra.mxu0 0.0
    %3851 = vmatpush.msra.mxu0 0.0
    %3852 = vmatpush.msra.mxu0 0.0
    %3853 = vmatpush.msra.mxu0 0.0
    %3854 = vmatpush.msra.mxu0 0.0
    %3855 = vmatpush.msra.mxu0 0.0
    %3856 = vmatpush.msra.mxu0 0.0
    %3857 = vmatpush.msra.mxu0 0.0
    %3858 = vmatpush.msra.mxu0 0.0
    %3859 = vmatpush.msra.mxu0 0.0
    %3860 = vmatpush.msra.mxu0 0.0
    %3861 = vmatpush.msra.mxu0 0.0
    %3862 = vmatpush.msra.mxu0 %v3735
    %3863 = vmatpush.msra.mxu0 %v3734
    %3864 = vmatpush.msra.mxu0 %v3733
    %3865 = vmatpush.msra.mxu0 %v3732
    %3866 = vmatmul.f32.gmra.mxu0 %v3839
    %v3867 = vpop.f32.mrf.mxu0
    %v3868 = vadd.f32 0.0, %v3867
    %3869 = vmatmul.f32.gmra.mxu0 %v3842
    %v3870 = vpop.f32.mrf.mxu0
    %v3871 = vadd.f32 0.0, %v3870
    %3872 = vmatmul.f32.gmra.mxu0 %v3845
    %v3873 = vpop.f32.mrf.mxu0
    %v3874 = vadd.f32 0.0, %v3873
    %3875 = vmatmul.f32.gmra.mxu0 %v3848
    %v3876 = vpop.f32.mrf.mxu0
    %v3877 = vadd.f32 0.0, %v3876
    %3878 = vdwg.mxu0
    %v3879 = vld [vmem:[#allocation2 + $0x7b0] sm:$0xff]
    %v3880 = vld [vmem:[#allocation2 + $0x7b8] sm:$0xff]
    %v3881 = vld [vmem:[#allocation2 + $0x7c0] sm:$0xff]
    %v3882 = vld [vmem:[#allocation2 + $0x7c8] sm:$0xff]
    %v3884 = vsel %vm50, %v3868, 0
    %v3887 = vsel %vm50, %v3871, 0
    %v3890 = vsel %vm50, %v3874, 0
    %v3893 = vsel %vm50, %v3877, 0
    %3895 = vmatpush.msra.mxu0 0.0
    %3896 = vmatpush.msra.mxu0 0.0
    %3897 = vmatpush.msra.mxu0 0.0
    %3898 = vmatpush.msra.mxu0 0.0
    %3899 = vmatpush.msra.mxu0 0.0
    %3900 = vmatpush.msra.mxu0 0.0
    %3901 = vmatpush.msra.mxu0 0.0
    %3902 = vmatpush.msra.mxu0 0.0
    %3903 = vmatpush.msra.mxu0 0.0
    %3904 = vmatpush.msra.mxu0 0.0
    %3905 = vmatpush.msra.mxu0 0.0
    %3906 = vmatpush.msra.mxu0 0.0
    %3907 = vmatpush.msra.mxu0 %v3882
    %3908 = vmatpush.msra.mxu0 %v3881
    %3909 = vmatpush.msra.mxu0 %v3880
    %3910 = vmatpush.msra.mxu0 %v3879
    %3911 = vmatmul.f32.gmra.mxu0 %v3884
    %v3912 = vpop.f32.mrf.mxu0
    %v3913 = vadd.f32 0.0, %v3912
    %3914 = vmatmul.f32.gmra.mxu0 %v3887
    %v3915 = vpop.f32.mrf.mxu0
    %v3916 = vadd.f32 0.0, %v3915
    %3917 = vmatmul.f32.gmra.mxu0 %v3890
    %v3918 = vpop.f32.mrf.mxu0
    %v3919 = vadd.f32 0.0, %v3918
    %3920 = vmatmul.f32.gmra.mxu0 %v3893
    %v3921 = vpop.f32.mrf.mxu0
    %v3922 = vadd.f32 0.0, %v3921
    %3923 = vdwg.mxu0
    %v3924 = vadd.f32 %v3830, %v3913
    %v3925 = vadd.f32 %v3831, %v3916
    %v3926 = vadd.f32 %v3832, %v3919
    %v3927 = vadd.f32 %v3833, %v3922
    %v3928 = vld [vmem:[#allocation2 + $0x668] sm:$0xff]
    %v3929 = vld [vmem:[#allocation2 + $0x670] sm:$0xff]
    %v3930 = vld [vmem:[#allocation2 + $0x678] sm:$0xff]
    %v3931 = vld [vmem:[#allocation2 + $0x680] sm:$0xff]
    %v3933 = vsel %vm50, %v3928, 0
    %v3936 = vsel %vm50, %v3929, 0
    %v3939 = vsel %vm50, %v3930, 0
    %v3942 = vsel %vm50, %v3931, 0
    %3944 = vmatpush.msra.mxu0 0.0
    %3945 = vmatpush.msra.mxu0 0.0
    %3946 = vmatpush.msra.mxu0 0.0
    %3947 = vmatpush.msra.mxu0 0.0
    %3948 = vmatpush.msra.mxu0 0.0
    %3949 = vmatpush.msra.mxu0 0.0
    %3950 = vmatpush.msra.mxu0 0.0
    %3951 = vmatpush.msra.mxu0 0.0
    %3952 = vmatpush.msra.mxu0 0.0
    %3953 = vmatpush.msra.mxu0 0.0
    %3954 = vmatpush.msra.mxu0 0.0
    %3955 = vmatpush.msra.mxu0 0.0
    %3956 = vmatpush.msra.mxu0 %v3735
    %3957 = vmatpush.msra.mxu0 %v3734
    %3958 = vmatpush.msra.mxu0 %v3733
    %3959 = vmatpush.msra.mxu0 %v3732
    %3960 = vmatmul.f32.gmra.mxu0 %v3933
    %v3961 = vpop.f32.mrf.mxu0
    %v3962 = vadd.f32 0.0, %v3961
    %3963 = vmatmul.f32.gmra.mxu0 %v3936
    %v3964 = vpop.f32.mrf.mxu0
    %v3965 = vadd.f32 0.0, %v3964
    %3966 = vmatmul.f32.gmra.mxu0 %v3939
    %v3967 = vpop.f32.mrf.mxu0
    %v3968 = vadd.f32 0.0, %v3967
    %3969 = vmatmul.f32.gmra.mxu0 %v3942
    %v3970 = vpop.f32.mrf.mxu0
    %v3971 = vadd.f32 0.0, %v3970
    %3972 = vdwg.mxu0
    %v3973 = vld [vmem:[#allocation2 + $0x7d0] sm:$0xff]
    %v3974 = vld [vmem:[#allocation2 + $0x7d8] sm:$0xff]
    %v3975 = vld [vmem:[#allocation2 + $0x7e0] sm:$0xff]
    %v3976 = vld [vmem:[#allocation2 + $0x7e8] sm:$0xff]
    %v3978 = vsel %vm50, %v3962, 0
    %v3981 = vsel %vm50, %v3965, 0
    %v3984 = vsel %vm50, %v3968, 0
    %v3987 = vsel %vm50, %v3971, 0
    %3989 = vmatpush.msra.mxu0 0.0
    %3990 = vmatpush.msra.mxu0 0.0
    %3991 = vmatpush.msra.mxu0 0.0
    %3992 = vmatpush.msra.mxu0 0.0
    %3993 = vmatpush.msra.mxu0 0.0
    %3994 = vmatpush.msra.mxu0 0.0
    %3995 = vmatpush.msra.mxu0 0.0
    %3996 = vmatpush.msra.mxu0 0.0
    %3997 = vmatpush.msra.mxu0 0.0
    %3998 = vmatpush.msra.mxu0 0.0
    %3999 = vmatpush.msra.mxu0 0.0
    %4000 = vmatpush.msra.mxu0 0.0
    %4001 = vmatpush.msra.mxu0 %v3976
    %4002 = vmatpush.msra.mxu0 %v3975
    %4003 = vmatpush.msra.mxu0 %v3974
    %4004 = vmatpush.msra.mxu0 %v3973
    %4005 = vmatmul.f32.gmra.mxu0 %v3978
    %v4006 = vpop.f32.mrf.mxu0
    %v4007 = vadd.f32 0.0, %v4006
    %4008 = vmatmul.f32.gmra.mxu0 %v3981
    %v4009 = vpop.f32.mrf.mxu0
    %v4010 = vadd.f32 0.0, %v4009
    %4011 = vmatmul.f32.gmra.mxu0 %v3984
    %v4012 = vpop.f32.mrf.mxu0
    %v4013 = vadd.f32 0.0, %v4012
    %4014 = vmatmul.f32.gmra.mxu0 %v3987
    %v4015 = vpop.f32.mrf.mxu0
    %v4016 = vadd.f32 0.0, %v4015
    %4017 = vdwg.mxu0
    %v4018 = vadd.f32 %v3924, %v4007
    %v4019 = vadd.f32 %v3925, %v4010
    %v4020 = vadd.f32 %v3926, %v4013
    %v4021 = vadd.f32 %v3927, %v4016
    %v4022 = vld [vmem:[#allocation2 + $0x688] sm:$0xff]
    %v4023 = vld [vmem:[#allocation2 + $0x690] sm:$0xff]
    %v4024 = vld [vmem:[#allocation2 + $0x698] sm:$0xff]
    %v4025 = vld [vmem:[#allocation2 + $0x6a0] sm:$0xff]
    %v4027 = vsel %vm50, %v4022, 0
    %v4030 = vsel %vm50, %v4023, 0
    %v4033 = vsel %vm50, %v4024, 0
    %v4036 = vsel %vm50, %v4025, 0
    %4038 = vmatpush.msra.mxu0 0.0
    %4039 = vmatpush.msra.mxu0 0.0
    %4040 = vmatpush.msra.mxu0 0.0
    %4041 = vmatpush.msra.mxu0 0.0
    %4042 = vmatpush.msra.mxu0 0.0
    %4043 = vmatpush.msra.mxu0 0.0
    %4044 = vmatpush.msra.mxu0 0.0
    %4045 = vmatpush.msra.mxu0 0.0
    %4046 = vmatpush.msra.mxu0 0.0
    %4047 = vmatpush.msra.mxu0 0.0
    %4048 = vmatpush.msra.mxu0 0.0
    %4049 = vmatpush.msra.mxu0 0.0
    %4050 = vmatpush.msra.mxu0 %v3735
    %4051 = vmatpush.msra.mxu0 %v3734
    %4052 = vmatpush.msra.mxu0 %v3733
    %4053 = vmatpush.msra.mxu0 %v3732
    %4054 = vmatmul.f32.gmra.mxu0 %v4027
    %v4055 = vpop.f32.mrf.mxu0
    %v4056 = vadd.f32 0.0, %v4055
    %4057 = vmatmul.f32.gmra.mxu0 %v4030
    %v4058 = vpop.f32.mrf.mxu0
    %v4059 = vadd.f32 0.0, %v4058
    %4060 = vmatmul.f32.gmra.mxu0 %v4033
    %v4061 = vpop.f32.mrf.mxu0
    %v4062 = vadd.f32 0.0, %v4061
    %4063 = vmatmul.f32.gmra.mxu0 %v4036
    %v4064 = vpop.f32.mrf.mxu0
    %v4065 = vadd.f32 0.0, %v4064
    %4066 = vdwg.mxu0
    %v4067 = vld [vmem:[#allocation2 + $0x7f0] sm:$0xff]
    %v4068 = vld [vmem:[#allocation2 + $0x7f8] sm:$0xff]
    %v4069 = vld [vmem:[#allocation2 + $0x800] sm:$0xff]
    %v4070 = vld [vmem:[#allocation2 + $0x808] sm:$0xff]
    %v4072 = vsel %vm50, %v4056, 0
    %v4075 = vsel %vm50, %v4059, 0
    %v4078 = vsel %vm50, %v4062, 0
    %v4081 = vsel %vm50, %v4065, 0
    %4083 = vmatpush.msra.mxu0 0.0
    %4084 = vmatpush.msra.mxu0 0.0
    %4085 = vmatpush.msra.mxu0 0.0
    %4086 = vmatpush.msra.mxu0 0.0
    %4087 = vmatpush.msra.mxu0 0.0
    %4088 = vmatpush.msra.mxu0 0.0
    %4089 = vmatpush.msra.mxu0 0.0
    %4090 = vmatpush.msra.mxu0 0.0
    %4091 = vmatpush.msra.mxu0 0.0
    %4092 = vmatpush.msra.mxu0 0.0
    %4093 = vmatpush.msra.mxu0 0.0
    %4094 = vmatpush.msra.mxu0 0.0
    %4095 = vmatpush.msra.mxu0 %v4070
    %4096 = vmatpush.msra.mxu0 %v4069
    %4097 = vmatpush.msra.mxu0 %v4068
    %4098 = vmatpush.msra.mxu0 %v4067
    %4099 = vmatmul.f32.gmra.mxu0 %v4072
    %v4100 = vpop.f32.mrf.mxu0
    %v4101 = vadd.f32 0.0, %v4100
    %4102 = vmatmul.f32.gmra.mxu0 %v4075
    %v4103 = vpop.f32.mrf.mxu0
    %v4104 = vadd.f32 0.0, %v4103
    %4105 = vmatmul.f32.gmra.mxu0 %v4078
    %v4106 = vpop.f32.mrf.mxu0
    %v4107 = vadd.f32 0.0, %v4106
    %4108 = vmatmul.f32.gmra.mxu0 %v4081
    %v4109 = vpop.f32.mrf.mxu0
    %v4110 = vadd.f32 0.0, %v4109
    %4111 = vdwg.mxu0
    %v4112 = vadd.f32 %v4018, %v4101
    %v4113 = vadd.f32 %v4019, %v4104
    %v4114 = vadd.f32 %v4020, %v4107
    %v4115 = vadd.f32 %v4021, %v4110
    %v4116 = vld [vmem:[#allocation2 + $0x6a8] sm:$0xff]
    %v4117 = vld [vmem:[#allocation2 + $0x6b0] sm:$0xff]
    %v4118 = vld [vmem:[#allocation2 + $0x6b8] sm:$0xff]
    %v4119 = vld [vmem:[#allocation2 + $0x6c0] sm:$0xff]
    %v4121 = vsel %vm50, %v4116, 0
    %v4124 = vsel %vm50, %v4117, 0
    %v4127 = vsel %vm50, %v4118, 0
    %v4130 = vsel %vm50, %v4119, 0
    %4132 = vmatpush.msra.mxu0 0.0
    %4133 = vmatpush.msra.mxu0 0.0
    %4134 = vmatpush.msra.mxu0 0.0
    %4135 = vmatpush.msra.mxu0 0.0
    %4136 = vmatpush.msra.mxu0 0.0
    %4137 = vmatpush.msra.mxu0 0.0
    %4138 = vmatpush.msra.mxu0 0.0
    %4139 = vmatpush.msra.mxu0 0.0
    %4140 = vmatpush.msra.mxu0 0.0
    %4141 = vmatpush.msra.mxu0 0.0
    %4142 = vmatpush.msra.mxu0 0.0
    %4143 = vmatpush.msra.mxu0 0.0
    %4144 = vmatpush.msra.mxu0 %v3735
    %4145 = vmatpush.msra.mxu0 %v3734
    %4146 = vmatpush.msra.mxu0 %v3733
    %4147 = vmatpush.msra.mxu0 %v3732
    %4148 = vmatmul.f32.gmra.mxu0 %v4121
    %v4149 = vpop.f32.mrf.mxu0
    %v4150 = vadd.f32 0.0, %v4149
    %4151 = vmatmul.f32.gmra.mxu0 %v4124
    %v4152 = vpop.f32.mrf.mxu0
    %v4153 = vadd.f32 0.0, %v4152
    %4154 = vmatmul.f32.gmra.mxu0 %v4127
    %v4155 = vpop.f32.mrf.mxu0
    %v4156 = vadd.f32 0.0, %v4155
    %4157 = vmatmul.f32.gmra.mxu0 %v4130
    %v4158 = vpop.f32.mrf.mxu0
    %v4159 = vadd.f32 0.0, %v4158
    %4160 = vdwg.mxu0
    %v4161 = vld [vmem:[#allocation2 + $0x810] sm:$0xff]
    %v4162 = vld [vmem:[#allocation2 + $0x818] sm:$0xff]
    %v4163 = vld [vmem:[#allocation2 + $0x820] sm:$0xff]
    %v4164 = vld [vmem:[#allocation2 + $0x828] sm:$0xff]
    %v4166 = vsel %vm50, %v4150, 0
    %v4169 = vsel %vm50, %v4153, 0
    %v4172 = vsel %vm50, %v4156, 0
    %v4175 = vsel %vm50, %v4159, 0
    %4177 = vmatpush.msra.mxu0 0.0
    %4178 = vmatpush.msra.mxu0 0.0
    %4179 = vmatpush.msra.mxu0 0.0
    %4180 = vmatpush.msra.mxu0 0.0
    %4181 = vmatpush.msra.mxu0 0.0
    %4182 = vmatpush.msra.mxu0 0.0
    %4183 = vmatpush.msra.mxu0 0.0
    %4184 = vmatpush.msra.mxu0 0.0
    %4185 = vmatpush.msra.mxu0 0.0
    %4186 = vmatpush.msra.mxu0 0.0
    %4187 = vmatpush.msra.mxu0 0.0
    %4188 = vmatpush.msra.mxu0 0.0
    %4189 = vmatpush.msra.mxu0 %v4164
    %4190 = vmatpush.msra.mxu0 %v4163
    %4191 = vmatpush.msra.mxu0 %v4162
    %4192 = vmatpush.msra.mxu0 %v4161
    %4193 = vmatmul.f32.gmra.mxu0 %v4166
    %v4194 = vpop.f32.mrf.mxu0
    %v4195 = vadd.f32 0.0, %v4194
    %4196 = vmatmul.f32.gmra.mxu0 %v4169
    %v4197 = vpop.f32.mrf.mxu0
    %v4198 = vadd.f32 0.0, %v4197
    %4199 = vmatmul.f32.gmra.mxu0 %v4172
    %v4200 = vpop.f32.mrf.mxu0
    %v4201 = vadd.f32 0.0, %v4200
    %4202 = vmatmul.f32.gmra.mxu0 %v4175
    %v4203 = vpop.f32.mrf.mxu0
    %v4204 = vadd.f32 0.0, %v4203
    %4205 = vdwg.mxu0
    %v4206 = vadd.f32 %v4112, %v4195
    %v4207 = vadd.f32 %v4113, %v4198
    %v4208 = vadd.f32 %v4114, %v4201
    %v4209 = vadd.f32 %v4115, %v4204
    %v4210 = vld [vmem:[#allocation2 + $0x6c8] sm:$0xff]
    %v4211 = vld [vmem:[#allocation2 + $0x6d0] sm:$0xff]
    %v4212 = vld [vmem:[#allocation2 + $0x6d8] sm:$0xff]
    %v4213 = vld [vmem:[#allocation2 + $0x6e0] sm:$0xff]
    %v4215 = vsel %vm50, %v4210, 0
    %v4218 = vsel %vm50, %v4211, 0
    %v4221 = vsel %vm50, %v4212, 0
    %v4224 = vsel %vm50, %v4213, 0
    %4226 = vmatpush.msra.mxu0 0.0
    %4227 = vmatpush.msra.mxu0 0.0
    %4228 = vmatpush.msra.mxu0 0.0
    %4229 = vmatpush.msra.mxu0 0.0
    %4230 = vmatpush.msra.mxu0 0.0
    %4231 = vmatpush.msra.mxu0 0.0
    %4232 = vmatpush.msra.mxu0 0.0
    %4233 = vmatpush.msra.mxu0 0.0
    %4234 = vmatpush.msra.mxu0 0.0
    %4235 = vmatpush.msra.mxu0 0.0
    %4236 = vmatpush.msra.mxu0 0.0
    %4237 = vmatpush.msra.mxu0 0.0
    %4238 = vmatpush.msra.mxu0 %v3735
    %4239 = vmatpush.msra.mxu0 %v3734
    %4240 = vmatpush.msra.mxu0 %v3733
    %4241 = vmatpush.msra.mxu0 %v3732
    %4242 = vmatmul.f32.gmra.mxu0 %v4215
    %v4243 = vpop.f32.mrf.mxu0
    %v4244 = vadd.f32 0.0, %v4243
    %4245 = vmatmul.f32.gmra.mxu0 %v4218
    %v4246 = vpop.f32.mrf.mxu0
    %v4247 = vadd.f32 0.0, %v4246
    %4248 = vmatmul.f32.gmra.mxu0 %v4221
    %v4249 = vpop.f32.mrf.mxu0
    %v4250 = vadd.f32 0.0, %v4249
    %4251 = vmatmul.f32.gmra.mxu0 %v4224
    %v4252 = vpop.f32.mrf.mxu0
    %v4253 = vadd.f32 0.0, %v4252
    %4254 = vdwg.mxu0
    %v4255 = vld [vmem:[#allocation2 + $0x830] sm:$0xff]
    %v4256 = vld [vmem:[#allocation2 + $0x838] sm:$0xff]
    %v4257 = vld [vmem:[#allocation2 + $0x840] sm:$0xff]
    %v4258 = vld [vmem:[#allocation2 + $0x848] sm:$0xff]
    %v4260 = vsel %vm50, %v4244, 0
    %v4263 = vsel %vm50, %v4247, 0
    %v4266 = vsel %vm50, %v4250, 0
    %v4269 = vsel %vm50, %v4253, 0
    %4271 = vmatpush.msra.mxu0 0.0
    %4272 = vmatpush.msra.mxu0 0.0
    %4273 = vmatpush.msra.mxu0 0.0
    %4274 = vmatpush.msra.mxu0 0.0
    %4275 = vmatpush.msra.mxu0 0.0
    %4276 = vmatpush.msra.mxu0 0.0
    %4277 = vmatpush.msra.mxu0 0.0
    %4278 = vmatpush.msra.mxu0 0.0
    %4279 = vmatpush.msra.mxu0 0.0
    %4280 = vmatpush.msra.mxu0 0.0
    %4281 = vmatpush.msra.mxu0 0.0
    %4282 = vmatpush.msra.mxu0 0.0
    %4283 = vmatpush.msra.mxu0 %v4258
    %4284 = vmatpush.msra.mxu0 %v4257
    %4285 = vmatpush.msra.mxu0 %v4256
    %4286 = vmatpush.msra.mxu0 %v4255
    %4287 = vmatmul.f32.gmra.mxu0 %v4260
    %v4288 = vpop.f32.mrf.mxu0
    %v4289 = vadd.f32 0.0, %v4288
    %4290 = vmatmul.f32.gmra.mxu0 %v4263
    %v4291 = vpop.f32.mrf.mxu0
    %v4292 = vadd.f32 0.0, %v4291
    %4293 = vmatmul.f32.gmra.mxu0 %v4266
    %v4294 = vpop.f32.mrf.mxu0
    %v4295 = vadd.f32 0.0, %v4294
    %4296 = vmatmul.f32.gmra.mxu0 %v4269
    %v4297 = vpop.f32.mrf.mxu0
    %v4298 = vadd.f32 0.0, %v4297
    %4299 = vdwg.mxu0
    %v4300 = vadd.f32 %v4206, %v4289
    %v4301 = vadd.f32 %v4207, %v4292
    %v4302 = vadd.f32 %v4208, %v4295
    %v4303 = vadd.f32 %v4209, %v4298
    %v4304 = vld [vmem:[#allocation2 + $0x6e8] sm:$0xff]
    %v4305 = vld [vmem:[#allocation2 + $0x6f0] sm:$0xff]
    %v4306 = vld [vmem:[#allocation2 + $0x6f8] sm:$0xff]
    %v4307 = vld [vmem:[#allocation2 + $0x700] sm:$0xff]
    %v4309 = vsel %vm50, %v4304, 0
    %v4312 = vsel %vm50, %v4305, 0
    %v4315 = vsel %vm50, %v4306, 0
    %v4318 = vsel %vm50, %v4307, 0
    %4320 = vmatpush.msra.mxu0 0.0
    %4321 = vmatpush.msra.mxu0 0.0
    %4322 = vmatpush.msra.mxu0 0.0
    %4323 = vmatpush.msra.mxu0 0.0
    %4324 = vmatpush.msra.mxu0 0.0
    %4325 = vmatpush.msra.mxu0 0.0
    %4326 = vmatpush.msra.mxu0 0.0
    %4327 = vmatpush.msra.mxu0 0.0
    %4328 = vmatpush.msra.mxu0 0.0
    %4329 = vmatpush.msra.mxu0 0.0
    %4330 = vmatpush.msra.mxu0 0.0
    %4331 = vmatpush.msra.mxu0 0.0
    %4332 = vmatpush.msra.mxu0 %v3735
    %4333 = vmatpush.msra.mxu0 %v3734
    %4334 = vmatpush.msra.mxu0 %v3733
    %4335 = vmatpush.msra.mxu0 %v3732
    %4336 = vmatmul.f32.gmra.mxu0 %v4309
    %v4337 = vpop.f32.mrf.mxu0
    %v4338 = vadd.f32 0.0, %v4337
    %4339 = vmatmul.f32.gmra.mxu0 %v4312
    %v4340 = vpop.f32.mrf.mxu0
    %v4341 = vadd.f32 0.0, %v4340
    %4342 = vmatmul.f32.gmra.mxu0 %v4315
    %v4343 = vpop.f32.mrf.mxu0
    %v4344 = vadd.f32 0.0, %v4343
    %4345 = vmatmul.f32.gmra.mxu0 %v4318
    %v4346 = vpop.f32.mrf.mxu0
    %v4347 = vadd.f32 0.0, %v4346
    %4348 = vdwg.mxu0
    %v4349 = vld [vmem:[#allocation2 + $0x850] sm:$0xff]
    %v4350 = vld [vmem:[#allocation2 + $0x858] sm:$0xff]
    %v4351 = vld [vmem:[#allocation2 + $0x860] sm:$0xff]
    %v4352 = vld [vmem:[#allocation2 + $0x868] sm:$0xff]
    %v4354 = vsel %vm50, %v4338, 0
    %v4357 = vsel %vm50, %v4341, 0
    %v4360 = vsel %vm50, %v4344, 0
    %v4363 = vsel %vm50, %v4347, 0
    %4365 = vmatpush.msra.mxu0 0.0
    %4366 = vmatpush.msra.mxu0 0.0
    %4367 = vmatpush.msra.mxu0 0.0
    %4368 = vmatpush.msra.mxu0 0.0
    %4369 = vmatpush.msra.mxu0 0.0
    %4370 = vmatpush.msra.mxu0 0.0
    %4371 = vmatpush.msra.mxu0 0.0
    %4372 = vmatpush.msra.mxu0 0.0
    %4373 = vmatpush.msra.mxu0 0.0
    %4374 = vmatpush.msra.mxu0 0.0
    %4375 = vmatpush.msra.mxu0 0.0
    %4376 = vmatpush.msra.mxu0 0.0
    %4377 = vmatpush.msra.mxu0 %v4352
    %4378 = vmatpush.msra.mxu0 %v4351
    %4379 = vmatpush.msra.mxu0 %v4350
    %4380 = vmatpush.msra.mxu0 %v4349
    %4381 = vmatmul.f32.gmra.mxu0 %v4354
    %v4382 = vpop.f32.mrf.mxu0
    %v4383 = vadd.f32 0.0, %v4382
    %4384 = vmatmul.f32.gmra.mxu0 %v4357
    %v4385 = vpop.f32.mrf.mxu0
    %v4386 = vadd.f32 0.0, %v4385
    %4387 = vmatmul.f32.gmra.mxu0 %v4360
    %v4388 = vpop.f32.mrf.mxu0
    %v4389 = vadd.f32 0.0, %v4388
    %4390 = vmatmul.f32.gmra.mxu0 %v4363
    %v4391 = vpop.f32.mrf.mxu0
    %v4392 = vadd.f32 0.0, %v4391
    %4393 = vdwg.mxu0
    %v4394 = vadd.f32 %v4300, %v4383
    %v4395 = vadd.f32 %v4301, %v4386
    %v4396 = vadd.f32 %v4302, %v4389
    %v4397 = vadd.f32 %v4303, %v4392
    %v4398 = vld [vmem:[#allocation2 + $0x708] sm:$0xff]
    %v4399 = vld [vmem:[#allocation2 + $0x710] sm:$0xff]
    %v4400 = vld [vmem:[#allocation2 + $0x718] sm:$0xff]
    %v4401 = vld [vmem:[#allocation2 + $0x720] sm:$0xff]
    %v4403 = vsel %vm50, %v4398, 0
    %v4406 = vsel %vm50, %v4399, 0
    %v4409 = vsel %vm50, %v4400, 0
    %v4412 = vsel %vm50, %v4401, 0
    %4414 = vmatpush.msra.mxu0 0.0
    %4415 = vmatpush.msra.mxu0 0.0
    %4416 = vmatpush.msra.mxu0 0.0
    %4417 = vmatpush.msra.mxu0 0.0
    %4418 = vmatpush.msra.mxu0 0.0
    %4419 = vmatpush.msra.mxu0 0.0
    %4420 = vmatpush.msra.mxu0 0.0
    %4421 = vmatpush.msra.mxu0 0.0
    %4422 = vmatpush.msra.mxu0 0.0
    %4423 = vmatpush.msra.mxu0 0.0
    %4424 = vmatpush.msra.mxu0 0.0
    %4425 = vmatpush.msra.mxu0 0.0
    %4426 = vmatpush.msra.mxu0 %v3735
    %4427 = vmatpush.msra.mxu0 %v3734
    %4428 = vmatpush.msra.mxu0 %v3733
    %4429 = vmatpush.msra.mxu0 %v3732
    %4430 = vmatmul.f32.gmra.mxu0 %v4403
    %v4431 = vpop.f32.mrf.mxu0
    %v4432 = vadd.f32 0.0, %v4431
    %4433 = vmatmul.f32.gmra.mxu0 %v4406
    %v4434 = vpop.f32.mrf.mxu0
    %v4435 = vadd.f32 0.0, %v4434
    %4436 = vmatmul.f32.gmra.mxu0 %v4409
    %v4437 = vpop.f32.mrf.mxu0
    %v4438 = vadd.f32 0.0, %v4437
    %4439 = vmatmul.f32.gmra.mxu0 %v4412
    %v4440 = vpop.f32.mrf.mxu0
    %v4441 = vadd.f32 0.0, %v4440
    %4442 = vdwg.mxu0
    %v4443 = vld [vmem:[#allocation2 + $0x870] sm:$0xff]
    %v4444 = vld [vmem:[#allocation2 + $0x878] sm:$0xff]
    %v4445 = vld [vmem:[#allocation2 + $0x880] sm:$0xff]
    %v4446 = vld [vmem:[#allocation2 + $0x888] sm:$0xff]
    %v4448 = vsel %vm50, %v4432, 0
    %v4451 = vsel %vm50, %v4435, 0
    %v4454 = vsel %vm50, %v4438, 0
    %v4457 = vsel %vm50, %v4441, 0
    %4459 = vmatpush.msra.mxu0 0.0
    %4460 = vmatpush.msra.mxu0 0.0
    %4461 = vmatpush.msra.mxu0 0.0
    %4462 = vmatpush.msra.mxu0 0.0
    %4463 = vmatpush.msra.mxu0 0.0
    %4464 = vmatpush.msra.mxu0 0.0
    %4465 = vmatpush.msra.mxu0 0.0
    %4466 = vmatpush.msra.mxu0 0.0
    %4467 = vmatpush.msra.mxu0 0.0
    %4468 = vmatpush.msra.mxu0 0.0
    %4469 = vmatpush.msra.mxu0 0.0
    %4470 = vmatpush.msra.mxu0 0.0
    %4471 = vmatpush.msra.mxu0 %v4446
    %4472 = vmatpush.msra.mxu0 %v4445
    %4473 = vmatpush.msra.mxu0 %v4444
    %4474 = vmatpush.msra.mxu0 %v4443
    %4475 = vmatmul.f32.gmra.mxu0 %v4448
    %v4476 = vpop.f32.mrf.mxu0
    %v4477 = vadd.f32 0.0, %v4476
    %4478 = vmatmul.f32.gmra.mxu0 %v4451
    %v4479 = vpop.f32.mrf.mxu0
    %v4480 = vadd.f32 0.0, %v4479
    %4481 = vmatmul.f32.gmra.mxu0 %v4454
    %v4482 = vpop.f32.mrf.mxu0
    %v4483 = vadd.f32 0.0, %v4482
    %4484 = vmatmul.f32.gmra.mxu0 %v4457
    %v4485 = vpop.f32.mrf.mxu0
    %v4486 = vadd.f32 0.0, %v4485
    %4487 = vdwg.mxu0
    %v4488 = vadd.f32 %v4394, %v4477
    %v4489 = vadd.f32 %v4395, %v4480
    %v4490 = vadd.f32 %v4396, %v4483
    %v4491 = vadd.f32 %v4397, %v4486
    %v4492 = vld [vmem:[#allocation2 + $0x728] sm:$0xff]
    %v4493 = vld [vmem:[#allocation2 + $0x730] sm:$0xff]
    %v4494 = vld [vmem:[#allocation2 + $0x738] sm:$0xff]
    %v4495 = vld [vmem:[#allocation2 + $0x740] sm:$0xff]
    %v4497 = vsel %vm50, %v4492, 0
    %v4500 = vsel %vm50, %v4493, 0
    %v4503 = vsel %vm50, %v4494, 0
    %v4506 = vsel %vm50, %v4495, 0
    %4508 = vmatpush.msra.mxu0 0.0
    %4509 = vmatpush.msra.mxu0 0.0
    %4510 = vmatpush.msra.mxu0 0.0
    %4511 = vmatpush.msra.mxu0 0.0
    %4512 = vmatpush.msra.mxu0 0.0
    %4513 = vmatpush.msra.mxu0 0.0
    %4514 = vmatpush.msra.mxu0 0.0
    %4515 = vmatpush.msra.mxu0 0.0
    %4516 = vmatpush.msra.mxu0 0.0
    %4517 = vmatpush.msra.mxu0 0.0
    %4518 = vmatpush.msra.mxu0 0.0
    %4519 = vmatpush.msra.mxu0 0.0
    %4520 = vmatpush.msra.mxu0 %v3735
    %4521 = vmatpush.msra.mxu0 %v3734
    %4522 = vmatpush.msra.mxu0 %v3733
    %4523 = vmatpush.msra.mxu0 %v3732
    %4524 = vmatmul.f32.gmra.mxu0 %v4497
    %v4525 = vpop.f32.mrf.mxu0
    %v4526 = vadd.f32 0.0, %v4525
    %4527 = vmatmul.f32.gmra.mxu0 %v4500
    %v4528 = vpop.f32.mrf.mxu0
    %v4529 = vadd.f32 0.0, %v4528
    %4530 = vmatmul.f32.gmra.mxu0 %v4503
    %v4531 = vpop.f32.mrf.mxu0
    %v4532 = vadd.f32 0.0, %v4531
    %4533 = vmatmul.f32.gmra.mxu0 %v4506
    %v4534 = vpop.f32.mrf.mxu0
    %v4535 = vadd.f32 0.0, %v4534
    %4536 = vdwg.mxu0
    %v4537 = vld [vmem:[#allocation2 + $0x890] sm:$0xff]
    %v4538 = vld [vmem:[#allocation2 + $0x898] sm:$0xff]
    %v4539 = vld [vmem:[#allocation2 + $0x8a0] sm:$0xff]
    %v4540 = vld [vmem:[#allocation2 + $0x8a8] sm:$0xff]
    %v4542 = vsel %vm50, %v4526, 0
    %v4545 = vsel %vm50, %v4529, 0
    %v4548 = vsel %vm50, %v4532, 0
    %v4551 = vsel %vm50, %v4535, 0
    %4553 = vmatpush.msra.mxu0 0.0
    %4554 = vmatpush.msra.mxu0 0.0
    %4555 = vmatpush.msra.mxu0 0.0
    %4556 = vmatpush.msra.mxu0 0.0
    %4557 = vmatpush.msra.mxu0 0.0
    %4558 = vmatpush.msra.mxu0 0.0
    %4559 = vmatpush.msra.mxu0 0.0
    %4560 = vmatpush.msra.mxu0 0.0
    %4561 = vmatpush.msra.mxu0 0.0
    %4562 = vmatpush.msra.mxu0 0.0
    %4563 = vmatpush.msra.mxu0 0.0
    %4564 = vmatpush.msra.mxu0 0.0
    %4565 = vmatpush.msra.mxu0 %v4540
    %4566 = vmatpush.msra.mxu0 %v4539
    %4567 = vmatpush.msra.mxu0 %v4538
    %4568 = vmatpush.msra.mxu0 %v4537
    %4569 = vmatmul.f32.gmra.mxu0 %v4542
    %v4570 = vpop.f32.mrf.mxu0
    %v4571 = vadd.f32 0.0, %v4570
    %4572 = vmatmul.f32.gmra.mxu0 %v4545
    %v4573 = vpop.f32.mrf.mxu0
    %v4574 = vadd.f32 0.0, %v4573
    %4575 = vmatmul.f32.gmra.mxu0 %v4548
    %v4576 = vpop.f32.mrf.mxu0
    %v4577 = vadd.f32 0.0, %v4576
    %4578 = vmatmul.f32.gmra.mxu0 %v4551
    %v4579 = vpop.f32.mrf.mxu0
    %v4580 = vadd.f32 0.0, %v4579
    %4581 = vdwg.mxu0
    %v4582 = vadd.f32 %v4488, %v4571
    %v4583 = vadd.f32 %v4489, %v4574
    %v4584 = vadd.f32 %v4490, %v4577
    %v4585 = vadd.f32 %v4491, %v4580
    %v4586 = vld [vmem:[#allocation2 + $0x9f0] sm:$0xff]
    %v4587 = vld [vmem:[#allocation2 + $0x748] sm:$0xff]
    %v4589 = vsel %vm50, %v4587, 0
    %4591 = vmatpush.msra.mxu0 0.0
    %4592 = vmatpush.msra.mxu0 0.0
    %4593 = vmatpush.msra.mxu0 0.0
    %4594 = vmatpush.msra.mxu0 0.0
    %4595 = vmatpush.msra.mxu0 0.0
    %4596 = vmatpush.msra.mxu0 0.0
    %4597 = vmatpush.msra.mxu0 0.0
    %4598 = vmatpush.msra.mxu0 0.0
    %4599 = vmatpush.msra.mxu0 0.0
    %4600 = vmatpush.msra.mxu0 0.0
    %4601 = vmatpush.msra.mxu0 0.0
    %4602 = vmatpush.msra.mxu0 0.0
    %4603 = vmatpush.msra.mxu0 %v3735
    %4604 = vmatpush.msra.mxu0 %v3734
    %4605 = vmatpush.msra.mxu0 %v3733
    %4606 = vmatpush.msra.mxu0 %v3732
    %4607 = vmatmul.f32.gmra.mxu0 %v4589
    %v4608 = vpop.f32.mrf.mxu0
    %v4609 = vadd.f32 0.0, %v4608
    %4610 = vdwg.mxu0
    %v4611 = vld [vmem:[#allocation2 + $0x8d0] sm:$0xff]
    %v4612 = vld [vmem:[#allocation2 + $0x8d8] sm:$0xff]
    %v4613 = vld [vmem:[#allocation2 + $0x8e0] sm:$0xff]
    %v4614 = vld [vmem:[#allocation2 + $0x8e8] sm:$0xff]
    %v4616 = vsel %vm50, %v4609, 0
    %4618 = vmatpush.msra.mxu0 0.0
    %4619 = vmatpush.msra.mxu0 0.0
    %4620 = vmatpush.msra.mxu0 0.0
    %4621 = vmatpush.msra.mxu0 0.0
    %4622 = vmatpush.msra.mxu0 0.0
    %4623 = vmatpush.msra.mxu0 0.0
    %4624 = vmatpush.msra.mxu0 0.0
    %4625 = vmatpush.msra.mxu0 0.0
    %4626 = vmatpush.msra.mxu0 0.0
    %4627 = vmatpush.msra.mxu0 0.0
    %4628 = vmatpush.msra.mxu0 0.0
    %4629 = vmatpush.msra.mxu0 0.0
    %4630 = vmatpush.msra.mxu0 %v4614
    %4631 = vmatpush.msra.mxu0 %v4613
    %4632 = vmatpush.msra.mxu0 %v4612
    %4633 = vmatpush.msra.mxu0 %v4611
    %4634 = vmatmul.f32.gmra.mxu0 %v4616
    %v4635 = vpop.f32.mrf.mxu0
    %v4636 = vadd.f32 0.0, %v4635
    %4637 = vdwg.mxu0
    %v4638 = vadd.f32 %v4586, %v4636
    %v4639 = vld [vmem:[#allocation2 + $0x750] sm:$0xff]
    %v4641 = vsel %vm50, %v4639, 0
    %4643 = vmatpush.msra.mxu0 0.0
    %4644 = vmatpush.msra.mxu0 0.0
    %4645 = vmatpush.msra.mxu0 0.0
    %4646 = vmatpush.msra.mxu0 0.0
    %4647 = vmatpush.msra.mxu0 0.0
    %4648 = vmatpush.msra.mxu0 0.0
    %4649 = vmatpush.msra.mxu0 0.0
    %4650 = vmatpush.msra.mxu0 0.0
    %4651 = vmatpush.msra.mxu0 0.0
    %4652 = vmatpush.msra.mxu0 0.0
    %4653 = vmatpush.msra.mxu0 0.0
    %4654 = vmatpush.msra.mxu0 0.0
    %4655 = vmatpush.msra.mxu0 %v3735
    %4656 = vmatpush.msra.mxu0 %v3734
    %4657 = vmatpush.msra.mxu0 %v3733
    %4658 = vmatpush.msra.mxu0 %v3732
    %4659 = vmatmul.f32.gmra.mxu0 %v4641
    %v4660 = vpop.f32.mrf.mxu0
    %v4661 = vadd.f32 0.0, %v4660
    %4662 = vdwg.mxu0
    %v4663 = vld [vmem:[#allocation2 + $0x8f0] sm:$0xff]
    %v4664 = vld [vmem:[#allocation2 + $0x8f8] sm:$0xff]
    %v4665 = vld [vmem:[#allocation2 + $0x900] sm:$0xff]
    %v4666 = vld [vmem:[#allocation2 + $0x908] sm:$0xff]
    %v4668 = vsel %vm50, %v4661, 0
    %4670 = vmatpush.msra.mxu0 0.0
    %4671 = vmatpush.msra.mxu0 0.0
    %4672 = vmatpush.msra.mxu0 0.0
    %4673 = vmatpush.msra.mxu0 0.0
    %4674 = vmatpush.msra.mxu0 0.0
    %4675 = vmatpush.msra.mxu0 0.0
    %4676 = vmatpush.msra.mxu0 0.0
    %4677 = vmatpush.msra.mxu0 0.0
    %4678 = vmatpush.msra.mxu0 0.0
    %4679 = vmatpush.msra.mxu0 0.0
    %4680 = vmatpush.msra.mxu0 0.0
    %4681 = vmatpush.msra.mxu0 0.0
    %4682 = vmatpush.msra.mxu0 %v4666
    %4683 = vmatpush.msra.mxu0 %v4665
    %4684 = vmatpush.msra.mxu0 %v4664
    %4685 = vmatpush.msra.mxu0 %v4663
    %4686 = vmatmul.f32.gmra.mxu0 %v4668
    %v4687 = vpop.f32.mrf.mxu0
    %v4688 = vadd.f32 0.0, %v4687
    %4689 = vdwg.mxu0
    %v4690 = vadd.f32 %v4638, %v4688
    %v4691 = vld [vmem:[#allocation2 + $0x758] sm:$0xff]
    %v4693 = vsel %vm50, %v4691, 0
    %4695 = vmatpush.msra.mxu0 0.0
    %4696 = vmatpush.msra.mxu0 0.0
    %4697 = vmatpush.msra.mxu0 0.0
    %4698 = vmatpush.msra.mxu0 0.0
    %4699 = vmatpush.msra.mxu0 0.0
    %4700 = vmatpush.msra.mxu0 0.0
    %4701 = vmatpush.msra.mxu0 0.0
    %4702 = vmatpush.msra.mxu0 0.0
    %4703 = vmatpush.msra.mxu0 0.0
    %4704 = vmatpush.msra.mxu0 0.0
    %4705 = vmatpush.msra.mxu0 0.0
    %4706 = vmatpush.msra.mxu0 0.0
    %4707 = vmatpush.msra.mxu0 %v3735
    %4708 = vmatpush.msra.mxu0 %v3734
    %4709 = vmatpush.msra.mxu0 %v3733
    %4710 = vmatpush.msra.mxu0 %v3732
    %4711 = vmatmul.f32.gmra.mxu0 %v4693
    %v4712 = vpop.f32.mrf.mxu0
    %v4713 = vadd.f32 0.0, %v4712
    %4714 = vdwg.mxu0
    %v4715 = vld [vmem:[#allocation2 + $0x910] sm:$0xff]
    %v4716 = vld [vmem:[#allocation2 + $0x918] sm:$0xff]
    %v4717 = vld [vmem:[#allocation2 + $0x920] sm:$0xff]
    %v4718 = vld [vmem:[#allocation2 + $0x928] sm:$0xff]
    %v4720 = vsel %vm50, %v4713, 0
    %4722 = vmatpush.msra.mxu0 0.0
    %4723 = vmatpush.msra.mxu0 0.0
    %4724 = vmatpush.msra.mxu0 0.0
    %4725 = vmatpush.msra.mxu0 0.0
    %4726 = vmatpush.msra.mxu0 0.0
    %4727 = vmatpush.msra.mxu0 0.0
    %4728 = vmatpush.msra.mxu0 0.0
    %4729 = vmatpush.msra.mxu0 0.0
    %4730 = vmatpush.msra.mxu0 0.0
    %4731 = vmatpush.msra.mxu0 0.0
    %4732 = vmatpush.msra.mxu0 0.0
    %4733 = vmatpush.msra.mxu0 0.0
    %4734 = vmatpush.msra.mxu0 %v4718
    %4735 = vmatpush.msra.mxu0 %v4717
    %4736 = vmatpush.msra.mxu0 %v4716
    %4737 = vmatpush.msra.mxu0 %v4715
    %4738 = vmatmul.f32.gmra.mxu0 %v4720
    %v4739 = vpop.f32.mrf.mxu0
    %v4740 = vadd.f32 0.0, %v4739
    %4741 = vdwg.mxu0
    %v4742 = vadd.f32 %v4690, %v4740
    %v4743 = vld [vmem:[#allocation2 + $0x760] sm:$0xff]
    %v4745 = vsel %vm50, %v4743, 0
    %4747 = vmatpush.msra.mxu0 0.0
    %4748 = vmatpush.msra.mxu0 0.0
    %4749 = vmatpush.msra.mxu0 0.0
    %4750 = vmatpush.msra.mxu0 0.0
    %4751 = vmatpush.msra.mxu0 0.0
    %4752 = vmatpush.msra.mxu0 0.0
    %4753 = vmatpush.msra.mxu0 0.0
    %4754 = vmatpush.msra.mxu0 0.0
    %4755 = vmatpush.msra.mxu0 0.0
    %4756 = vmatpush.msra.mxu0 0.0
    %4757 = vmatpush.msra.mxu0 0.0
    %4758 = vmatpush.msra.mxu0 0.0
    %4759 = vmatpush.msra.mxu0 %v3735
    %4760 = vmatpush.msra.mxu0 %v3734
    %4761 = vmatpush.msra.mxu0 %v3733
    %4762 = vmatpush.msra.mxu0 %v3732
    %4763 = vmatmul.f32.gmra.mxu0 %v4745
    %v4764 = vpop.f32.mrf.mxu0
    %v4765 = vadd.f32 0.0, %v4764
    %4766 = vdwg.mxu0
    %v4767 = vld [vmem:[#allocation2 + $0x930] sm:$0xff]
    %v4768 = vld [vmem:[#allocation2 + $0x938] sm:$0xff]
    %v4769 = vld [vmem:[#allocation2 + $0x940] sm:$0xff]
    %v4770 = vld [vmem:[#allocation2 + $0x948] sm:$0xff]
    %v4772 = vsel %vm50, %v4765, 0
    %4774 = vmatpush.msra.mxu0 0.0
    %4775 = vmatpush.msra.mxu0 0.0
    %4776 = vmatpush.msra.mxu0 0.0
    %4777 = vmatpush.msra.mxu0 0.0
    %4778 = vmatpush.msra.mxu0 0.0
    %4779 = vmatpush.msra.mxu0 0.0
    %4780 = vmatpush.msra.mxu0 0.0
    %4781 = vmatpush.msra.mxu0 0.0
    %4782 = vmatpush.msra.mxu0 0.0
    %4783 = vmatpush.msra.mxu0 0.0
    %4784 = vmatpush.msra.mxu0 0.0
    %4785 = vmatpush.msra.mxu0 0.0
    %4786 = vmatpush.msra.mxu0 %v4770
    %4787 = vmatpush.msra.mxu0 %v4769
    %4788 = vmatpush.msra.mxu0 %v4768
    %4789 = vmatpush.msra.mxu0 %v4767
    %4790 = vmatmul.f32.gmra.mxu0 %v4772
    %v4791 = vpop.f32.mrf.mxu0
    %v4792 = vadd.f32 0.0, %v4791
    %4793 = vdwg.mxu0
    %v4794 = vadd.f32 %v4742, %v4792
    %v4795 = vld [vmem:[#allocation2 + $0x768] sm:$0xff]
    %v4797 = vsel %vm50, %v4795, 0
    %4799 = vmatpush.msra.mxu0 0.0
    %4800 = vmatpush.msra.mxu0 0.0
    %4801 = vmatpush.msra.mxu0 0.0
    %4802 = vmatpush.msra.mxu0 0.0
    %4803 = vmatpush.msra.mxu0 0.0
    %4804 = vmatpush.msra.mxu0 0.0
    %4805 = vmatpush.msra.mxu0 0.0
    %4806 = vmatpush.msra.mxu0 0.0
    %4807 = vmatpush.msra.mxu0 0.0
    %4808 = vmatpush.msra.mxu0 0.0
    %4809 = vmatpush.msra.mxu0 0.0
    %4810 = vmatpush.msra.mxu0 0.0
    %4811 = vmatpush.msra.mxu0 %v3735
    %4812 = vmatpush.msra.mxu0 %v3734
    %4813 = vmatpush.msra.mxu0 %v3733
    %4814 = vmatpush.msra.mxu0 %v3732
    %4815 = vmatmul.f32.gmra.mxu0 %v4797
    %v4816 = vpop.f32.mrf.mxu0
    %v4817 = vadd.f32 0.0, %v4816
    %4818 = vdwg.mxu0
    %v4819 = vld [vmem:[#allocation2 + $0x950] sm:$0xff]
    %v4820 = vld [vmem:[#allocation2 + $0x958] sm:$0xff]
    %v4821 = vld [vmem:[#allocation2 + $0x960] sm:$0xff]
    %v4822 = vld [vmem:[#allocation2 + $0x968] sm:$0xff]
    %v4824 = vsel %vm50, %v4817, 0
    %4826 = vmatpush.msra.mxu0 0.0
    %4827 = vmatpush.msra.mxu0 0.0
    %4828 = vmatpush.msra.mxu0 0.0
    %4829 = vmatpush.msra.mxu0 0.0
    %4830 = vmatpush.msra.mxu0 0.0
    %4831 = vmatpush.msra.mxu0 0.0
    %4832 = vmatpush.msra.mxu0 0.0
    %4833 = vmatpush.msra.mxu0 0.0
    %4834 = vmatpush.msra.mxu0 0.0
    %4835 = vmatpush.msra.mxu0 0.0
    %4836 = vmatpush.msra.mxu0 0.0
    %4837 = vmatpush.msra.mxu0 0.0
    %4838 = vmatpush.msra.mxu0 %v4822
    %4839 = vmatpush.msra.mxu0 %v4821
    %4840 = vmatpush.msra.mxu0 %v4820
    %4841 = vmatpush.msra.mxu0 %v4819
    %4842 = vmatmul.f32.gmra.mxu0 %v4824
    %v4843 = vpop.f32.mrf.mxu0
    %v4844 = vadd.f32 0.0, %v4843
    %4845 = vdwg.mxu0
    %v4846 = vadd.f32 %v4794, %v4844
    %v4847 = vld [vmem:[#allocation2 + $0x770] sm:$0xff]
    %v4849 = vsel %vm50, %v4847, 0
    %4851 = vmatpush.msra.mxu0 0.0
    %4852 = vmatpush.msra.mxu0 0.0
    %4853 = vmatpush.msra.mxu0 0.0
    %4854 = vmatpush.msra.mxu0 0.0
    %4855 = vmatpush.msra.mxu0 0.0
    %4856 = vmatpush.msra.mxu0 0.0
    %4857 = vmatpush.msra.mxu0 0.0
    %4858 = vmatpush.msra.mxu0 0.0
    %4859 = vmatpush.msra.mxu0 0.0
    %4860 = vmatpush.msra.mxu0 0.0
    %4861 = vmatpush.msra.mxu0 0.0
    %4862 = vmatpush.msra.mxu0 0.0
    %4863 = vmatpush.msra.mxu0 %v3735
    %4864 = vmatpush.msra.mxu0 %v3734
    %4865 = vmatpush.msra.mxu0 %v3733
    %4866 = vmatpush.msra.mxu0 %v3732
    %4867 = vmatmul.f32.gmra.mxu0 %v4849
    %v4868 = vpop.f32.mrf.mxu0
    %v4869 = vadd.f32 0.0, %v4868
    %4870 = vdwg.mxu0
    %v4871 = vld [vmem:[#allocation2 + $0x970] sm:$0xff]
    %v4872 = vld [vmem:[#allocation2 + $0x978] sm:$0xff]
    %v4873 = vld [vmem:[#allocation2 + $0x980] sm:$0xff]
    %v4874 = vld [vmem:[#allocation2 + $0x988] sm:$0xff]
    %v4876 = vsel %vm50, %v4869, 0
    %4878 = vmatpush.msra.mxu0 0.0
    %4879 = vmatpush.msra.mxu0 0.0
    %4880 = vmatpush.msra.mxu0 0.0
    %4881 = vmatpush.msra.mxu0 0.0
    %4882 = vmatpush.msra.mxu0 0.0
    %4883 = vmatpush.msra.mxu0 0.0
    %4884 = vmatpush.msra.mxu0 0.0
    %4885 = vmatpush.msra.mxu0 0.0
    %4886 = vmatpush.msra.mxu0 0.0
    %4887 = vmatpush.msra.mxu0 0.0
    %4888 = vmatpush.msra.mxu0 0.0
    %4889 = vmatpush.msra.mxu0 0.0
    %4890 = vmatpush.msra.mxu0 %v4874
    %4891 = vmatpush.msra.mxu0 %v4873
    %4892 = vmatpush.msra.mxu0 %v4872
    %4893 = vmatpush.msra.mxu0 %v4871
    %4894 = vmatmul.f32.gmra.mxu0 %v4876
    %v4895 = vpop.f32.mrf.mxu0
    %v4896 = vadd.f32 0.0, %v4895
    %4897 = vdwg.mxu0
    %v4898 = vadd.f32 %v4846, %v4896
    %v4899 = vld [vmem:[#allocation2 + $0x778] sm:$0xff]
    %v4901 = vsel %vm50, %v4899, 0
    %4903 = vmatpush.msra.mxu0 0.0
    %4904 = vmatpush.msra.mxu0 0.0
    %4905 = vmatpush.msra.mxu0 0.0
    %4906 = vmatpush.msra.mxu0 0.0
    %4907 = vmatpush.msra.mxu0 0.0
    %4908 = vmatpush.msra.mxu0 0.0
    %4909 = vmatpush.msra.mxu0 0.0
    %4910 = vmatpush.msra.mxu0 0.0
    %4911 = vmatpush.msra.mxu0 0.0
    %4912 = vmatpush.msra.mxu0 0.0
    %4913 = vmatpush.msra.mxu0 0.0
    %4914 = vmatpush.msra.mxu0 0.0
    %4915 = vmatpush.msra.mxu0 %v3735
    %4916 = vmatpush.msra.mxu0 %v3734
    %4917 = vmatpush.msra.mxu0 %v3733
    %4918 = vmatpush.msra.mxu0 %v3732
    %4919 = vmatmul.f32.gmra.mxu0 %v4901
    %v4920 = vpop.f32.mrf.mxu0
    %v4921 = vadd.f32 0.0, %v4920
    %4922 = vdwg.mxu0
    %v4923 = vld [vmem:[#allocation2 + $0x990] sm:$0xff]
    %v4924 = vld [vmem:[#allocation2 + $0x998] sm:$0xff]
    %v4925 = vld [vmem:[#allocation2 + $0x9a0] sm:$0xff]
    %v4926 = vld [vmem:[#allocation2 + $0x9a8] sm:$0xff]
    %v4928 = vsel %vm50, %v4921, 0
    %4930 = vmatpush.msra.mxu0 0.0
    %4931 = vmatpush.msra.mxu0 0.0
    %4932 = vmatpush.msra.mxu0 0.0
    %4933 = vmatpush.msra.mxu0 0.0
    %4934 = vmatpush.msra.mxu0 0.0
    %4935 = vmatpush.msra.mxu0 0.0
    %4936 = vmatpush.msra.mxu0 0.0
    %4937 = vmatpush.msra.mxu0 0.0
    %4938 = vmatpush.msra.mxu0 0.0
    %4939 = vmatpush.msra.mxu0 0.0
    %4940 = vmatpush.msra.mxu0 0.0
    %4941 = vmatpush.msra.mxu0 0.0
    %4942 = vmatpush.msra.mxu0 %v4926
    %4943 = vmatpush.msra.mxu0 %v4925
    %4944 = vmatpush.msra.mxu0 %v4924
    %4945 = vmatpush.msra.mxu0 %v4923
    %4946 = vmatmul.f32.gmra.mxu0 %v4928
    %v4947 = vpop.f32.mrf.mxu0
    %v4948 = vadd.f32 0.0, %v4947
    %4949 = vdwg.mxu0
    %v4950 = vadd.f32 %v4898, %v4948
    %v4951 = vld [vmem:[#allocation2 + $0x780] sm:$0xff]
    %v4953 = vsel %vm50, %v4951, 0
    %4955 = vmatpush.msra.mxu0 0.0
    %4956 = vmatpush.msra.mxu0 0.0
    %4957 = vmatpush.msra.mxu0 0.0
    %4958 = vmatpush.msra.mxu0 0.0
    %4959 = vmatpush.msra.mxu0 0.0
    %4960 = vmatpush.msra.mxu0 0.0
    %4961 = vmatpush.msra.mxu0 0.0
    %4962 = vmatpush.msra.mxu0 0.0
    %4963 = vmatpush.msra.mxu0 0.0
    %4964 = vmatpush.msra.mxu0 0.0
    %4965 = vmatpush.msra.mxu0 0.0
    %4966 = vmatpush.msra.mxu0 0.0
    %4967 = vmatpush.msra.mxu0 %v3735
    %4968 = vmatpush.msra.mxu0 %v3734
    %4969 = vmatpush.msra.mxu0 %v3733
    %4970 = vmatpush.msra.mxu0 %v3732
    %4971 = vmatmul.f32.gmra.mxu0 %v4953
    %v4972 = vpop.f32.mrf.mxu0
    %v4973 = vadd.f32 0.0, %v4972
    %4974 = vdwg.mxu0
    %v4975 = vld [vmem:[#allocation2 + $0x9b0] sm:$0xff]
    %v4976 = vld [vmem:[#allocation2 + $0x9b8] sm:$0xff]
    %v4977 = vld [vmem:[#allocation2 + $0x9c0] sm:$0xff]
    %v4978 = vld [vmem:[#allocation2 + $0x9c8] sm:$0xff]
    %v4980 = vsel %vm50, %v4973, 0
    %4982 = vmatpush.msra.mxu0 0.0
    %4983 = vmatpush.msra.mxu0 0.0
    %4984 = vmatpush.msra.mxu0 0.0
    %4985 = vmatpush.msra.mxu0 0.0
    %4986 = vmatpush.msra.mxu0 0.0
    %4987 = vmatpush.msra.mxu0 0.0
    %4988 = vmatpush.msra.mxu0 0.0
    %4989 = vmatpush.msra.mxu0 0.0
    %4990 = vmatpush.msra.mxu0 0.0
    %4991 = vmatpush.msra.mxu0 0.0
    %4992 = vmatpush.msra.mxu0 0.0
    %4993 = vmatpush.msra.mxu0 0.0
    %4994 = vmatpush.msra.mxu0 %v4978
    %4995 = vmatpush.msra.mxu0 %v4977
    %4996 = vmatpush.msra.mxu0 %v4976
    %4997 = vmatpush.msra.mxu0 %v4975
    %4998 = vmatmul.f32.gmra.mxu0 %v4980
    %v4999 = vpop.f32.mrf.mxu0
    %v5000 = vadd.f32 0.0, %v4999
    %5001 = vdwg.mxu0
    %v5002 = vadd.f32 %v4950, %v5000
    %v5003 = vld [vmem:[#allocation2 + $0x788] sm:$0xff]
    %v5005 = vsel %vm50, %v5003, 0
    %5007 = vmatpush.msra.mxu0 0.0
    %5008 = vmatpush.msra.mxu0 0.0
    %5009 = vmatpush.msra.mxu0 0.0
    %5010 = vmatpush.msra.mxu0 0.0
    %5011 = vmatpush.msra.mxu0 0.0
    %5012 = vmatpush.msra.mxu0 0.0
    %5013 = vmatpush.msra.mxu0 0.0
    %5014 = vmatpush.msra.mxu0 0.0
    %5015 = vmatpush.msra.mxu0 0.0
    %5016 = vmatpush.msra.mxu0 0.0
    %5017 = vmatpush.msra.mxu0 0.0
    %5018 = vmatpush.msra.mxu0 0.0
    %5019 = vmatpush.msra.mxu0 %v3735
    %5020 = vmatpush.msra.mxu0 %v3734
    %5021 = vmatpush.msra.mxu0 %v3733
    %5022 = vmatpush.msra.mxu0 %v3732
    %5023 = vmatmul.f32.gmra.mxu0 %v5005
    %v5024 = vpop.f32.mrf.mxu0
    %v5025 = vadd.f32 0.0, %v5024
    %5026 = vdwg.mxu0
    %v5027 = vld [vmem:[#allocation2 + $0x9d0] sm:$0xff]
    %v5028 = vld [vmem:[#allocation2 + $0x9d8] sm:$0xff]
    %v5029 = vld [vmem:[#allocation2 + $0x9e0] sm:$0xff]
    %v5030 = vld [vmem:[#allocation2 + $0x9e8] sm:$0xff]
    %v5032 = vsel %vm50, %v5025, 0
    %5034 = vmatpush.msra.mxu0 0.0
    %5035 = vmatpush.msra.mxu0 0.0
    %5036 = vmatpush.msra.mxu0 0.0
    %5037 = vmatpush.msra.mxu0 0.0
    %5038 = vmatpush.msra.mxu0 0.0
    %5039 = vmatpush.msra.mxu0 0.0
    %5040 = vmatpush.msra.mxu0 0.0
    %5041 = vmatpush.msra.mxu0 0.0
    %5042 = vmatpush.msra.mxu0 0.0
    %5043 = vmatpush.msra.mxu0 0.0
    %5044 = vmatpush.msra.mxu0 0.0
    %5045 = vmatpush.msra.mxu0 0.0
    %5046 = vmatpush.msra.mxu0 %v5030
    %5047 = vmatpush.msra.mxu0 %v5029
    %5048 = vmatpush.msra.mxu0 %v5028
    %5049 = vmatpush.msra.mxu0 %v5027
    %5050 = vmatmul.f32.gmra.mxu0 %v5032
    %v5051 = vpop.f32.mrf.mxu0
    %v5052 = vadd.f32 0.0, %v5051
    %5053 = vdwg.mxu0
    %v5054 = vadd.f32 %v5002, %v5052
    %v5055 = vld [vmem:[#allocation2 + $0xa48] sm:$0xff]
    %v5056 = vld [vmem:[#allocation2 + $0xa50] sm:$0xff]
    %v5057 = vld [vmem:[#allocation2 + $0xa58] sm:$0xff]
    %v5058 = vld [vmem:[#allocation2 + $0xa60] sm:$0xff]
    %v5059 = vld [vmem:[#allocation2 + $0xa68] sm:$0x1]
    %v5060 = vld [vmem:[#allocation2 + $0xa70] sm:$0x1]
    %v5062 = vsel %vm50, %v4582, 0
    %v5065 = vsel %vm50, %v4583, 0
    %v5068 = vsel %vm50, %v4584, 0
    %v5071 = vsel %vm50, %v4585, 0
    %5073 = vmatpush.msra.mxu0 0.0
    %5074 = vmatpush.msra.mxu0 0.0
    %5075 = vmatpush.msra.mxu0 0.0
    %5076 = vmatpush.msra.mxu0 0.0
    %5077 = vmatpush.msra.mxu0 0.0
    %5078 = vmatpush.msra.mxu0 0.0
    %5079 = vmatpush.msra.mxu0 0.0
    %5080 = vmatpush.msra.mxu0 0.0
    %5081 = vmatpush.msra.mxu0 0.0
    %5082 = vmatpush.msra.mxu0 0.0
    %5083 = vmatpush.msra.mxu0 0.0
    %5084 = vmatpush.msra.mxu0 0.0
    %5085 = vmatpush.msra.mxu0 %v5058
    %5086 = vmatpush.msra.mxu0 %v5057
    %5087 = vmatpush.msra.mxu0 %v5056
    %5088 = vmatpush.msra.mxu0 %v5055
    %5089 = vmatmul.f32.gmra.mxu0 %v5062
    %v5090 = vpop.f32.mrf.mxu0
    %v5091 = vadd.f32 0.0, %v5090
    %5092 = vmatmul.f32.gmra.mxu0 %v5065
    %v5093 = vpop.f32.mrf.mxu0
    %v5094 = vadd.f32 0.0, %v5093
    %5095 = vmatmul.f32.gmra.mxu0 %v5068
    %v5096 = vpop.f32.mrf.mxu0
    %v5097 = vadd.f32 0.0, %v5096
    %5098 = vmatmul.f32.gmra.mxu0 %v5071
    %v5099 = vpop.f32.mrf.mxu0
    %v5100 = vadd.f32 0.0, %v5099
    %5101 = vdwg.mxu0
    %v5102 = vmul.f32 %v4582, %v4582
    %v5103 = vmul.f32 %v4583, %v4583
    %v5104 = vmul.f32 %v4584, %v4584
    %v5105 = vmul.f32 %v4585, %v4585
    %v5107 = vsel %vm50, %v5102, 0
    %v5110 = vsel %vm50, %v5103, 0
    %v5113 = vsel %vm50, %v5104, 0
    %v5116 = vsel %vm50, %v5105, 0
    %5118 = vmatpush.msra.mxu0 0.0
    %5119 = vmatpush.msra.mxu0 0.0
    %5120 = vmatpush.msra.mxu0 0.0
    %5121 = vmatpush.msra.mxu0 0.0
    %5122 = vmatpush.msra.mxu0 0.0
    %5123 = vmatpush.msra.mxu0 0.0
    %5124 = vmatpush.msra.mxu0 0.0
    %5125 = vmatpush.msra.mxu0 0.0
    %5126 = vmatpush.msra.mxu0 0.0
    %5127 = vmatpush.msra.mxu0 0.0
    %5128 = vmatpush.msra.mxu0 0.0
    %5129 = vmatpush.msra.mxu0 0.0
    %5130 = vmatpush.msra.mxu0 %v5058
    %5131 = vmatpush.msra.mxu0 %v5057
    %5132 = vmatpush.msra.mxu0 %v5056
    %5133 = vmatpush.msra.mxu0 %v5055
    %5134 = vmatmul.f32.gmra.mxu0 %v5107
    %v5135 = vpop.f32.mrf.mxu0
    %v5136 = vadd.f32 0.0, %v5135
    %5137 = vmatmul.f32.gmra.mxu0 %v5110
    %v5138 = vpop.f32.mrf.mxu0
    %v5139 = vadd.f32 0.0, %v5138
    %5140 = vmatmul.f32.gmra.mxu0 %v5113
    %v5141 = vpop.f32.mrf.mxu0
    %v5142 = vadd.f32 0.0, %v5141
    %5143 = vmatmul.f32.gmra.mxu0 %v5116
    %v5144 = vpop.f32.mrf.mxu0
    %v5145 = vadd.f32 0.0, %v5144
    %5146 = vdwg.mxu0
    %v5147 = vmul.f32 %v5091, %v5091
    %v5148 = vmul.f32 %v5094, %v5094
    %v5149 = vmul.f32 %v5097, %v5097
    %v5150 = vmul.f32 %v5100, %v5100
    %v5151 = vsub.f32 %v5136, %v5147
    %v5152 = vsub.f32 %v5139, %v5148
    %v5153 = vsub.f32 %v5142, %v5149
    %v5154 = vsub.f32 %v5145, %v5150
    %v5155 = vmax.f32 %v5151, 0.0
    %v5156 = vmax.f32 %v5152, 0.0
    %v5157 = vmax.f32 %v5153, 0.0
    %v5158 = vmax.f32 %v5154, 0.0
    %v5159 = vsub.f32 %v4582, %v5091
    %v5160 = vsub.f32 %v4583, %v5094
    %v5161 = vsub.f32 %v4584, %v5097
    %v5162 = vsub.f32 %v4585, %v5100
    %v5163 = vadd.f32 %v5155, 1e-05
    %v5164 = vadd.f32 %v5156, 1e-05
    %v5165 = vadd.f32 %v5157, 1e-05
    %v5166 = vadd.f32 %v5158, 1e-05
    %v5167 = vrsqrt.pop %v5163
    %v5168 = vmul.f32 %v5167, %v5163
    %v5169 = vmul.f32 %v5168, %v5167
    %v5170 = vmul.f32 0.5, %v5169
    %v5171 = vsub.f32 1.5, %v5170
    %v5172 = vmul.f32 %v5167, %v5171
    %vm5173 = vweird.f32 %v5163
    %vm5174 = vweird.f32 %v5167
    %vm5175 = vmor %vm5173, %vm5174
    %v5176 = vsel %vm5175, %v5167, %v5172
    %v5177 = vrsqrt.pop %v5164
    %v5178 = vmul.f32 %v5177, %v5164
    %v5179 = vmul.f32 %v5178, %v5177
    %v5180 = vmul.f32 0.5, %v5179
    %v5181 = vsub.f32 1.5, %v5180
    %v5182 = vmul.f32 %v5177, %v5181
    %vm5183 = vweird.f32 %v5164
    %vm5184 = vweird.f32 %v5177
    %vm5185 = vmor %vm5183, %vm5184
    %v5186 = vsel %vm5185, %v5177, %v5182
    %v5187 = vrsqrt.pop %v5165
    %v5188 = vmul.f32 %v5187, %v5165
    %v5189 = vmul.f32 %v5188, %v5187
    %v5190 = vmul.f32 0.5, %v5189
    %v5191 = vsub.f32 1.5, %v5190
    %v5192 = vmul.f32 %v5187, %v5191
    %vm5193 = vweird.f32 %v5165
    %vm5194 = vweird.f32 %v5187
    %vm5195 = vmor %vm5193, %vm5194
    %v5196 = vsel %vm5195, %v5187, %v5192
    %v5197 = vrsqrt.pop %v5166
    %v5198 = vmul.f32 %v5197, %v5166
    %v5199 = vmul.f32 %v5198, %v5197
    %v5200 = vmul.f32 0.5, %v5199
    %v5201 = vsub.f32 1.5, %v5200
    %v5202 = vmul.f32 %v5197, %v5201
    %vm5203 = vweird.f32 %v5166
    %vm5204 = vweird.f32 %v5197
    %vm5205 = vmor %vm5203, %vm5204
    %v5206 = vsel %vm5205, %v5197, %v5202
    %v5207 = vmul.f32 %v5159, %v5176
    %v5208 = vmul.f32 %v5160, %v5186
    %v5209 = vmul.f32 %v5161, %v5196
    %v5210 = vmul.f32 %v5162, %v5206
    %v5211 = vperm.slane %v5059, 0
    %v5212 = vmul.f32 %v5207, %v5211
    %v5213 = vmul.f32 %v5208, %v5211
    %v5214 = vmul.f32 %v5209, %v5211
    %v5215 = vmul.f32 %v5210, %v5211
    %v5216 = vperm.slane %v5060, 0
    %v5217 = vadd.f32 %v5212, %v5216
    %v5218 = vadd.f32 %v5213, %v5216
    %v5219 = vadd.f32 %v5214, %v5216
    %v5220 = vadd.f32 %v5215, %v5216
    %v5221 = vld [vmem:[#allocation2 + $0xa78] sm:$0x1]
    %v5222 = vld [vmem:[#allocation2 + $0xa80] sm:$0x1]
    %v5224 = vsel %vm50, %v5054, 0
    %5226 = vmatpush.msra.mxu0 0.0
    %5227 = vmatpush.msra.mxu0 0.0
    %5228 = vmatpush.msra.mxu0 0.0
    %5229 = vmatpush.msra.mxu0 0.0
    %5230 = vmatpush.msra.mxu0 0.0
    %5231 = vmatpush.msra.mxu0 0.0
    %5232 = vmatpush.msra.mxu0 0.0
    %5233 = vmatpush.msra.mxu0 0.0
    %5234 = vmatpush.msra.mxu0 0.0
    %5235 = vmatpush.msra.mxu0 0.0
    %5236 = vmatpush.msra.mxu0 0.0
    %5237 = vmatpush.msra.mxu0 0.0
    %5238 = vmatpush.msra.mxu0 %v5058
    %5239 = vmatpush.msra.mxu0 %v5057
    %5240 = vmatpush.msra.mxu0 %v5056
    %5241 = vmatpush.msra.mxu0 %v5055
    %5242 = vmatmul.f32.gmra.mxu0 %v5224
    %v5243 = vpop.f32.mrf.mxu0
    %v5244 = vadd.f32 0.0, %v5243
    %5245 = vdwg.mxu0
    %v5246 = vmul.f32 %v5054, %v5054
    %v5248 = vsel %vm50, %v5246, 0
    %5250 = vmatpush.msra.mxu0 0.0
    %5251 = vmatpush.msra.mxu0 0.0
    %5252 = vmatpush.msra.mxu0 0.0
    %5253 = vmatpush.msra.mxu0 0.0
    %5254 = vmatpush.msra.mxu0 0.0
    %5255 = vmatpush.msra.mxu0 0.0
    %5256 = vmatpush.msra.mxu0 0.0
    %5257 = vmatpush.msra.mxu0 0.0
    %5258 = vmatpush.msra.mxu0 0.0
    %5259 = vmatpush.msra.mxu0 0.0
    %5260 = vmatpush.msra.mxu0 0.0
    %5261 = vmatpush.msra.mxu0 0.0
    %5262 = vmatpush.msra.mxu0 %v5058
    %5263 = vmatpush.msra.mxu0 %v5057
    %5264 = vmatpush.msra.mxu0 %v5056
    %5265 = vmatpush.msra.mxu0 %v5055
    %5266 = vmatmul.f32.gmra.mxu0 %v5248
    %v5267 = vpop.f32.mrf.mxu0
    %v5268 = vadd.f32 0.0, %v5267
    %5269 = vdwg.mxu0
    %v5270 = vmul.f32 %v5244, %v5244
    %v5271 = vsub.f32 %v5268, %v5270
    %v5272 = vmax.f32 %v5271, 0.0
    %v5273 = vsub.f32 %v5054, %v5244
    %v5274 = vadd.f32 %v5272, 1e-05
    %v5275 = vrsqrt.pop %v5274
    %v5276 = vmul.f32 %v5275, %v5274
    %v5277 = vmul.f32 %v5276, %v5275
    %v5278 = vmul.f32 0.5, %v5277
    %v5279 = vsub.f32 1.5, %v5278
    %v5280 = vmul.f32 %v5275, %v5279
    %vm5281 = vweird.f32 %v5274
    %vm5282 = vweird.f32 %v5275
    %vm5283 = vmor %vm5281, %vm5282
    %v5284 = vsel %vm5283, %v5275, %v5280
    %v5285 = vmul.f32 %v5273, %v5284
    %v5286 = vperm.slane %v5221, 0
    %v5287 = vmul.f32 %v5285, %v5286
    %v5288 = vperm.slane %v5222, 0
    %v5289 = vadd.f32 %v5287, %v5288
    %v5290 = vld [vmem:[#allocation2 + $0xa88] sm:$0x1]
    %v5291 = vld [vmem:[#allocation2 + $0xa90] sm:$0x1]
    %5292 = vrot.lane.b32.xlu0 %v5054, 96
    %v5293 = vpop.permute.xlu0 %5292
    %v5294 = vsel %vm50, %v5293, 0
    %5296 = vmatpush.msra.mxu0 0.0
    %5297 = vmatpush.msra.mxu0 0.0
    %5298 = vmatpush.msra.mxu0 0.0
    %5299 = vmatpush.msra.mxu0 0.0
    %5300 = vmatpush.msra.mxu0 0.0
    %5301 = vmatpush.msra.mxu0 0.0
    %5302 = vmatpush.msra.mxu0 0.0
    %5303 = vmatpush.msra.mxu0 0.0
    %5304 = vmatpush.msra.mxu0 0.0
    %5305 = vmatpush.msra.mxu0 0.0
    %5306 = vmatpush.msra.mxu0 0.0
    %5307 = vmatpush.msra.mxu0 0.0
    %5308 = vmatpush.msra.mxu0 %v5058
    %5309 = vmatpush.msra.mxu0 %v5057
    %5310 = vmatpush.msra.mxu0 %v5056
    %5311 = vmatpush.msra.mxu0 %v5055
    %5312 = vmatmul.f32.gmra.mxu0 %v5294
    %v5313 = vpop.f32.mrf.mxu0
    %v5314 = vadd.f32 0.0, %v5313
    %5315 = vdwg.mxu0
    %5316 = vrot.lane.b32.xlu0 %v5246, 96
    %v5317 = vpop.permute.xlu0 %5316
    %v5318 = vsel %vm50, %v5317, 0
    %5320 = vmatpush.msra.mxu0 0.0
    %5321 = vmatpush.msra.mxu0 0.0
    %5322 = vmatpush.msra.mxu0 0.0
    %5323 = vmatpush.msra.mxu0 0.0
    %5324 = vmatpush.msra.mxu0 0.0
    %5325 = vmatpush.msra.mxu0 0.0
    %5326 = vmatpush.msra.mxu0 0.0
    %5327 = vmatpush.msra.mxu0 0.0
    %5328 = vmatpush.msra.mxu0 0.0
    %5329 = vmatpush.msra.mxu0 0.0
    %5330 = vmatpush.msra.mxu0 0.0
    %5331 = vmatpush.msra.mxu0 0.0
    %5332 = vmatpush.msra.mxu0 %v5058
    %5333 = vmatpush.msra.mxu0 %v5057
    %5334 = vmatpush.msra.mxu0 %v5056
    %5335 = vmatpush.msra.mxu0 %v5055
    %5336 = vmatmul.f32.gmra.mxu0 %v5318
    %v5337 = vpop.f32.mrf.mxu0
    %v5338 = vadd.f32 0.0, %v5337
    %5339 = vdwg.mxu0
    %v5340 = vmul.f32 %v5314, %v5314
    %v5341 = vsub.f32 %v5338, %v5340
    %v5342 = vmax.f32 %v5341, 0.0
    %5344 = vrot.lane.b32.xlu0 %v5314, 32
    %v5345 = vpop.permute.xlu0 %5344
    %v5347 = vsub.f32 %v5054, %v5345
    %v5348 = vadd.f32 %v5342, 1e-05
    %v5349 = vrsqrt.pop %v5348
    %v5350 = vmul.f32 %v5349, %v5348
    %v5351 = vmul.f32 %v5350, %v5349
    %v5352 = vmul.f32 0.5, %v5351
    %v5353 = vsub.f32 1.5, %v5352
    %v5354 = vmul.f32 %v5349, %v5353
    %vm5355 = vweird.f32 %v5348
    %vm5356 = vweird.f32 %v5349
    %vm5357 = vmor %vm5355, %vm5356
    %v5358 = vsel %vm5357, %v5349, %v5354
    %5360 = vrot.lane.b32.xlu0 %v5358, 32
    %v5361 = vpop.permute.xlu0 %5360
    %v5363 = vmul.f32 %v5347, %v5361
    %v5364 = vperm.slane %v5290, 0
    %5366 = vrot.lane.b32.xlu0 %v5364, 32
    %v5367 = vpop.permute.xlu0 %5366
    %v5369 = vmul.f32 %v5363, %v5367
    %v5370 = vperm.slane %v5291, 0
    %5372 = vrot.lane.b32.xlu0 %v5370, 32
    %v5373 = vpop.permute.xlu0 %5372
    %v5375 = vadd.f32 %v5369, %v5373
    %v5376 = vld [vmem:[#allocation2 + $0xa98] sm:$0xff]
    %v5377 = vld [vmem:[#allocation2 + $0xaa0] sm:$0xff]
    %v5378 = vld [vmem:[#allocation2 + $0xaa8] sm:$0xff]
    %v5379 = vld [vmem:[#allocation2 + $0xab0] sm:$0xff]
    %v5380 = vld [vmem:[#allocation2 + $0xab8] sm:$0xff]
    %v5381 = vld [vmem:[#allocation2 + $0xac0] sm:$0xff]
    %v5382 = vld [vmem:[#allocation2 + $0xac8] sm:$0xff]
    %v5383 = vld [vmem:[#allocation2 + $0xad0] sm:$0xff]
    %v5384 = vld [vmem:[#allocation2 + $0xad8] sm:$0xff]
    %v5385 = vld [vmem:[#allocation2 + $0xae0] sm:$0xff]
    %v5386 = vld [vmem:[#allocation2 + $0xae8] sm:$0xff]
    %v5387 = vld [vmem:[#allocation2 + $0xaf0] sm:$0xff]
    %v5388 = vld [vmem:[#allocation2 + $0xaf8] sm:$0xff]
    %v5389 = vld [vmem:[#allocation2 + $0xb00] sm:$0xff]
    %v5390 = vld [vmem:[#allocation2 + $0xb08] sm:$0xff]
    %v5391 = vld [vmem:[#allocation2 + $0xb10] sm:$0xff]
    %v5392 = vld [vmem:[#allocation2 + $0xb18] sm:$0xff]
    %v5393 = vld [vmem:[#allocation2 + $0xb20] sm:$0xff]
    %v5394 = vld [vmem:[#allocation2 + $0xb28] sm:$0xff]
    %v5395 = vld [vmem:[#allocation2 + $0xb30] sm:$0xff]
    %v5396 = vld [vmem:[#allocation2 + $0xb38] sm:$0xff]
    %v5397 = vld [vmem:[#allocation2 + $0xb40] sm:$0xff]
    %v5398 = vld [vmem:[#allocation2 + $0xb48] sm:$0xff]
    %v5399 = vld [vmem:[#allocation2 + $0xb50] sm:$0xff]
    %v5400 = vld [vmem:[#allocation2 + $0xb78] sm:$0x1]
    %v5402 = vsel %vm1936, %v5217, 0
    %v5405 = vsel %vm1936, %v5218, 0
    %v5408 = vsel %vm1936, %v5219, 0
    %v5411 = vsel %vm1936, %v5220, 0
    %5413 = vmatpush.msra.mxu0 0.0
    %5414 = vmatpush.msra.mxu0 0.0
    %5415 = vmatpush.msra.mxu0 0.0
    %5416 = vmatpush.msra.mxu0 0.0
    %5417 = vmatpush.msra.mxu0 0.0
    %5418 = vmatpush.msra.mxu0 0.0
    %5419 = vmatpush.msra.mxu0 0.0
    %5420 = vmatpush.msra.mxu0 0.0
    %5421 = vmatpush.msra.mxu0 0.0
    %5422 = vmatpush.msra.mxu0 0.0
    %5423 = vmatpush.msra.mxu0 0.0
    %5424 = vmatpush.msra.mxu0 0.0
    %5425 = vmatpush.msra.mxu0 0.0
    %5426 = vmatpush.msra.mxu0 0.0
    %5427 = vmatpush.msra.mxu0 %v5377
    %5428 = vmatpush.msra.mxu0 %v5376
    %5429 = vmatmul.f32.gmra.mxu0 %v5402
    %v5430 = vpop.f32.mrf.mxu0
    %v5431 = vadd.f32 0.0, %v5430
    %5432 = vmatmul.f32.gmra.mxu0 %v5405
    %v5433 = vpop.f32.mrf.mxu0
    %v5434 = vadd.f32 0.0, %v5433
    %5435 = vmatmul.f32.gmra.mxu0 %v5408
    %v5436 = vpop.f32.mrf.mxu0
    %v5437 = vadd.f32 0.0, %v5436
    %5438 = vmatmul.f32.gmra.mxu0 %v5411
    %v5439 = vpop.f32.mrf.mxu0
    %v5440 = vadd.f32 0.0, %v5439
    %5441 = vdwg.mxu0
    %v5442 = vmul.f32 %v5431, %v5378
    %v5443 = vmul.f32 %v5434, %v5379
    %v5444 = vmul.f32 %v5437, %v5380
    %v5445 = vmul.f32 %v5440, %v5381
    %5446 = vmatpush.msra.mxu0 0.0
    %5447 = vmatpush.msra.mxu0 0.0
    %5448 = vmatpush.msra.mxu0 0.0
    %5449 = vmatpush.msra.mxu0 0.0
    %5450 = vmatpush.msra.mxu0 0.0
    %5451 = vmatpush.msra.mxu0 0.0
    %5452 = vmatpush.msra.mxu0 0.0
    %5453 = vmatpush.msra.mxu0 0.0
    %5454 = vmatpush.msra.mxu0 0.0
    %5455 = vmatpush.msra.mxu0 0.0
    %5456 = vmatpush.msra.mxu0 0.0
    %5457 = vmatpush.msra.mxu0 0.0
    %5458 = vmatpush.msra.mxu0 0.0
    %5459 = vmatpush.msra.mxu0 0.0
    %5460 = vmatpush.msra.mxu0 %v5387
    %5461 = vmatpush.msra.mxu0 %v5386
    %5462 = vmatmul.f32.gmra.mxu0 %v5402
    %v5463 = vpop.f32.mrf.mxu0
    %v5464 = vadd.f32 0.0, %v5463
    %5465 = vmatmul.f32.gmra.mxu0 %v5405
    %v5466 = vpop.f32.mrf.mxu0
    %v5467 = vadd.f32 0.0, %v5466
    %5468 = vmatmul.f32.gmra.mxu0 %v5408
    %v5469 = vpop.f32.mrf.mxu0
    %v5470 = vadd.f32 0.0, %v5469
    %5471 = vmatmul.f32.gmra.mxu0 %v5411
    %v5472 = vpop.f32.mrf.mxu0
    %v5473 = vadd.f32 0.0, %v5472
    %5474 = vdwg.mxu0
    %v5475 = vmul.f32 %v5464, %v5388
    %v5476 = vmul.f32 %v5467, %v5389
    %v5477 = vmul.f32 %v5470, %v5390
    %v5478 = vmul.f32 %v5473, %v5391
    %v5480 = vsel %vm50, %v5475, 0
    %v5483 = vsel %vm50, %v5476, 0
    %v5486 = vsel %vm50, %v5477, 0
    %v5489 = vsel %vm50, %v5478, 0
    %5491 = vmatpush.msra.mxu0 0.0
    %5492 = vmatpush.msra.mxu0 0.0
    %5493 = vmatpush.msra.mxu0 0.0
    %5494 = vmatpush.msra.mxu0 0.0
    %5495 = vmatpush.msra.mxu0 0.0
    %5496 = vmatpush.msra.mxu0 0.0
    %5497 = vmatpush.msra.mxu0 0.0
    %5498 = vmatpush.msra.mxu0 0.0
    %5499 = vmatpush.msra.mxu0 0.0
    %5500 = vmatpush.msra.mxu0 0.0
    %5501 = vmatpush.msra.mxu0 0.0
    %5502 = vmatpush.msra.mxu0 0.0
    %5503 = vmatpush.msra.mxu0 %v5395
    %5504 = vmatpush.msra.mxu0 %v5394
    %5505 = vmatpush.msra.mxu0 %v5393
    %5506 = vmatpush.msra.mxu0 %v5392
    %5507 = vmatmul.f32.gmra.mxu0 %v5480
    %v5508 = vpop.f32.mrf.mxu0
    %v5509 = vadd.f32 0.0, %v5508
    %5510 = vmatmul.f32.gmra.mxu0 %v5483
    %v5511 = vpop.f32.mrf.mxu0
    %v5512 = vadd.f32 0.0, %v5511
    %5513 = vmatmul.f32.gmra.mxu0 %v5486
    %v5514 = vpop.f32.mrf.mxu0
    %v5515 = vadd.f32 0.0, %v5514
    %5516 = vmatmul.f32.gmra.mxu0 %v5489
    %v5517 = vpop.f32.mrf.mxu0
    %v5518 = vadd.f32 0.0, %v5517
    %5519 = vdwg.mxu0
    %v5521 = vsel %vm50, %v5442, 0
    %v5524 = vsel %vm50, %v5443, 0
    %v5527 = vsel %vm50, %v5444, 0
    %v5530 = vsel %vm50, %v5445, 0
    %5532 = vmatpush.msra.mxu0 0.0
    %5533 = vmatpush.msra.mxu0 0.0
    %5534 = vmatpush.msra.mxu0 0.0
    %5535 = vmatpush.msra.mxu0 0.0
    %5536 = vmatpush.msra.mxu0 0.0
    %5537 = vmatpush.msra.mxu0 0.0
    %5538 = vmatpush.msra.mxu0 0.0
    %5539 = vmatpush.msra.mxu0 0.0
    %5540 = vmatpush.msra.mxu0 0.0
    %5541 = vmatpush.msra.mxu0 0.0
    %5542 = vmatpush.msra.mxu0 0.0
    %5543 = vmatpush.msra.mxu0 0.0
    %5544 = vmatpush.msra.mxu0 %v5385
    %5545 = vmatpush.msra.mxu0 %v5384
    %5546 = vmatpush.msra.mxu0 %v5383
    %5547 = vmatpush.msra.mxu0 %v5382
    %5548 = vmatmul.f32.gmra.mxu0 %v5521
    %v5549 = vpop.f32.mrf.mxu0
    %v5550 = vadd.f32 %v5509, %v5549
    %5551 = vmatmul.f32.gmra.mxu0 %v5524
    %v5552 = vpop.f32.mrf.mxu0
    %v5553 = vadd.f32 %v5512, %v5552
    %5554 = vmatmul.f32.gmra.mxu0 %v5527
    %v5555 = vpop.f32.mrf.mxu0
    %v5556 = vadd.f32 %v5515, %v5555
    %5557 = vmatmul.f32.gmra.mxu0 %v5530
    %v5558 = vpop.f32.mrf.mxu0
    %v5559 = vadd.f32 %v5518, %v5558
    %5560 = vdwg.mxu0
    %v5562 = vsel %vm1936, %v5289, 0
    %5564 = vmatpush.xpose.msra.mxu0 0.0
    %5565 = vmatpush.xpose.msra.mxu0 0.0
    %5566 = vmatpush.xpose.msra.mxu0 0.0
    %5567 = vmatpush.xpose.msra.mxu0 0.0
    %5568 = vmatpush.xpose.msra.mxu0 0.0
    %5569 = vmatpush.xpose.msra.mxu0 0.0
    %5570 = vmatpush.xpose.msra.mxu0 0.0
    %5571 = vmatpush.xpose.msra.mxu0 0.0
    %5572 = vmatpush.xpose.msra.mxu0 0.0
    %5573 = vmatpush.xpose.msra.mxu0 0.0
    %5574 = vmatpush.xpose.msra.mxu0 0.0
    %5575 = vmatpush.xpose.msra.mxu0 0.0
    %5576 = vmatpush.xpose.msra.mxu0 0.0
    %5577 = vmatpush.xpose.msra.mxu0 0.0
    %5578 = vmatpush.xpose.msra.mxu0 0.0
    %5579 = vmatpush.xpose.msra.mxu0 %v5562
    %5580 = vmatmul.f32.gmra.mxu0 %v5402
    %v5581 = vpop.f32.mrf.mxu0
    %v5582 = vadd.f32 %v5550, %v5581
    %5583 = vmatmul.f32.gmra.mxu0 %v5405
    %v5584 = vpop.f32.mrf.mxu0
    %v5585 = vadd.f32 %v5553, %v5584
    %5586 = vmatmul.f32.gmra.mxu0 %v5408
    %v5587 = vpop.f32.mrf.mxu0
    %v5588 = vadd.f32 %v5556, %v5587
    %5589 = vmatmul.f32.gmra.mxu0 %v5411
    %v5590 = vpop.f32.mrf.mxu0
    %v5591 = vadd.f32 %v5559, %v5590
    %5592 = vdwg.mxu0
    %v5593 = vadd.f32 %v5582, %v5396
    %v5594 = vadd.f32 %v5585, %v5397
    %v5595 = vadd.f32 %v5588, %v5398
    %v5596 = vadd.f32 %v5591, %v5399
    %vm5597 = vcmask 64512
    %v5598 = vsel %vm5597, %v5593, -inf
    %5599 = vmax.xlane.f32.xlu0 %v5598
    %v5600 = vpop.xlane.xlu0 %5599
    %v5601 = vsel %vm5597, %v5594, -inf
    %5602 = vmax.xlane.f32.xlu0 %v5601
    %v5603 = vpop.xlane.xlu0 %5602
    %v5604 = vsel %vm5597, %v5595, -inf
    %5605 = vmax.xlane.f32.xlu0 %v5604
    %v5606 = vpop.xlane.xlu0 %5605
    %v5607 = vsel %vm5597, %v5596, -inf
    %5608 = vmax.xlane.f32.xlu0 %v5607
    %v5609 = vpop.xlane.xlu0 %5608
    %v5610 = vsub.f32 %v5593, %v5600
    %v5611 = vsub.f32 %v5594, %v5603
    %v5612 = vsub.f32 %v5595, %v5606
    %v5613 = vsub.f32 %v5596, %v5609
    %v5614 = vmul.f32 %v5610, 1.442695
    %v5615 = vpow.pop %v5614
    %v5616 = vmul.f32 %v5611, 1.442695
    %v5617 = vpow.pop %v5616
    %v5618 = vmul.f32 %v5612, 1.442695
    %v5619 = vpow.pop %v5618
    %v5620 = vmul.f32 %v5613, 1.442695
    %v5621 = vpow.pop %v5620
    %v5622 = vsel %vm5597, %v5615, 0.0
    %5623 = vadd.xlane.f32.xlu0 %v5622
    %v5624 = vpop.xlane.xlu0 %5623
    %v5625 = vsel %vm5597, %v5617, 0.0
    %5626 = vadd.xlane.f32.xlu0 %v5625
    %v5627 = vpop.xlane.xlu0 %5626
    %v5628 = vsel %vm5597, %v5619, 0.0
    %5629 = vadd.xlane.f32.xlu0 %v5628
    %v5630 = vpop.xlane.xlu0 %5629
    %v5631 = vsel %vm5597, %v5621, 0.0
    %5632 = vadd.xlane.f32.xlu0 %v5631
    %v5633 = vpop.xlane.xlu0 %5632
    %v5634 = vrcp.pop %v5624
    %v5635 = vrcp.pop %v5627
    %v5636 = vrcp.pop %v5630
    %v5637 = vrcp.pop %v5633
    %v5638 = vmul.f32 %v5615, %v5634
    %v5639 = vmul.f32 %v5617, %v5635
    %v5640 = vmul.f32 %v5619, %v5636
    %v5641 = vmul.f32 %v5621, %v5637
    %5643 = vrot.lane.b32.xlu0 %v5375, 96
    %v5644 = vpop.permute.xlu0 %5643
    %v5647 = vsel %vm5597, %v5638, 0
    %v5650 = vsel %vm5597, %v5639, 0
    %v5653 = vsel %vm5597, %v5640, 0
    %v5656 = vsel %vm5597, %v5641, 0
    %5658 = vmatpush.msra.mxu0 0.0
    %5659 = vmatpush.msra.mxu0 0.0
    %5660 = vmatpush.msra.mxu0 0.0
    %5661 = vmatpush.msra.mxu0 0.0
    %5662 = vmatpush.msra.mxu0 0.0
    %5663 = vmatpush.msra.mxu0 0.0
    %5664 = vmatpush.msra.mxu0 0.0
    %5665 = vmatpush.msra.mxu0 0.0
    %5666 = vmatpush.msra.mxu0 0.0
    %5667 = vmatpush.msra.mxu0 0.0
    %5668 = vmatpush.msra.mxu0 0.0
    %5669 = vmatpush.msra.mxu0 0.0
    %5670 = vmatpush.msra.mxu0 0.0
    %5671 = vmatpush.msra.mxu0 0.0
    %5672 = vmatpush.msra.mxu0 0.0
    %5673 = vmatpush.msra.mxu0 %v5644
    %5674 = vmatmul.f32.gmra.mxu0 %v5647
    %v5675 = vpop.f32.mrf.mxu0
    %v5676 = vadd.f32 %v5217, %v5675
    %5677 = vmatmul.f32.gmra.mxu0 %v5650
    %v5678 = vpop.f32.mrf.mxu0
    %v5679 = vadd.f32 %v5218, %v5678
    %5680 = vmatmul.f32.gmra.mxu0 %v5653
    %v5681 = vpop.f32.mrf.mxu0
    %v5682 = vadd.f32 %v5219, %v5681
    %5683 = vmatmul.f32.gmra.mxu0 %v5656
    %v5684 = vpop.f32.mrf.mxu0
    %v5685 = vadd.f32 %v5220, %v5684
    %5686 = vdwg.mxu0
    %v5687 = vld [vmem:[#allocation2 + $0xb58] sm:$0xff]
    %v5688 = vld [vmem:[#allocation2 + $0xb60] sm:$0xff]
    %v5690 = vsel %vm1936, %v5676, 0
    %v5693 = vsel %vm1936, %v5679, 0
    %v5696 = vsel %vm1936, %v5682, 0
    %v5699 = vsel %vm1936, %v5685, 0
    %5701 = vmatpush.msra.mxu0 0.0
    %5702 = vmatpush.msra.mxu0 0.0
    %5703 = vmatpush.msra.mxu0 0.0
    %5704 = vmatpush.msra.mxu0 0.0
    %5705 = vmatpush.msra.mxu0 0.0
    %5706 = vmatpush.msra.mxu0 0.0
    %5707 = vmatpush.msra.mxu0 0.0
    %5708 = vmatpush.msra.mxu0 0.0
    %5709 = vmatpush.msra.mxu0 0.0
    %5710 = vmatpush.msra.mxu0 0.0
    %5711 = vmatpush.msra.mxu0 0.0
    %5712 = vmatpush.msra.mxu0 0.0
    %5713 = vmatpush.msra.mxu0 0.0
    %5714 = vmatpush.msra.mxu0 0.0
    %5715 = vmatpush.msra.mxu0 %v5688
    %5716 = vmatpush.msra.mxu0 %v5687
    %5717 = vmatmul.f32.gmra.mxu0 %v5690
    %v5718 = vpop.f32.mrf.mxu0
    %v5719 = vadd.f32 0.0, %v5718
    %5720 = vmatmul.f32.gmra.mxu0 %v5693
    %v5721 = vpop.f32.mrf.mxu0
    %v5722 = vadd.f32 0.0, %v5721
    %5723 = vmatmul.f32.gmra.mxu0 %v5696
    %v5724 = vpop.f32.mrf.mxu0
    %v5725 = vadd.f32 0.0, %v5724
    %5726 = vmatmul.f32.gmra.mxu0 %v5699
    %v5727 = vpop.f32.mrf.mxu0
    %v5728 = vadd.f32 0.0, %v5727
    %5729 = vdwg.mxu0
    %v5730 = vperm.slane %v5400, 0
    %v5731 = vadd.f32 %v5730, %v5719
    %v5732 = vadd.f32 %v5730, %v5722
    %v5733 = vadd.f32 %v5730, %v5725
    %v5734 = vadd.f32 %v5730, %v5728
    %5735 = vrot.lane.b32.xlu0 %v5217, 112
    %v5736 = vpop.permute.xlu0 %5735
    %5737 = vrot.lane.b32.xlu0 %v5218, 112
    %v5738 = vpop.permute.xlu0 %5737
    %5739 = vrot.lane.b32.xlu0 %v5219, 112
    %v5740 = vpop.permute.xlu0 %5739
    %5741 = vrot.lane.b32.xlu0 %v5220, 112
    %v5742 = vpop.permute.xlu0 %5741
    %v5743 = vsel %vm1936, %v5736, 0
    %v5745 = vsel %vm1936, %v5738, 0
    %v5747 = vsel %vm1936, %v5740, 0
    %v5749 = vsel %vm1936, %v5742, 0
    %5751 = vmatpush.msra.mxu0 0.0
    %5752 = vmatpush.msra.mxu0 0.0
    %5753 = vmatpush.msra.mxu0 0.0
    %5754 = vmatpush.msra.mxu0 0.0
    %5755 = vmatpush.msra.mxu0 0.0
    %5756 = vmatpush.msra.mxu0 0.0
    %5757 = vmatpush.msra.mxu0 0.0
    %5758 = vmatpush.msra.mxu0 0.0
    %5759 = vmatpush.msra.mxu0 0.0
    %5760 = vmatpush.msra.mxu0 0.0
    %5761 = vmatpush.msra.mxu0 0.0
    %5762 = vmatpush.msra.mxu0 0.0
    %5763 = vmatpush.msra.mxu0 0.0
    %5764 = vmatpush.msra.mxu0 0.0
    %5765 = vmatpush.msra.mxu0 %v5377
    %5766 = vmatpush.msra.mxu0 %v5376
    %5767 = vmatmul.f32.gmra.mxu0 %v5743
    %v5768 = vpop.f32.mrf.mxu0
    %v5769 = vadd.f32 0.0, %v5768
    %5770 = vmatmul.f32.gmra.mxu0 %v5745
    %v5771 = vpop.f32.mrf.mxu0
    %v5772 = vadd.f32 0.0, %v5771
    %5773 = vmatmul.f32.gmra.mxu0 %v5747
    %v5774 = vpop.f32.mrf.mxu0
    %v5775 = vadd.f32 0.0, %v5774
    %5776 = vmatmul.f32.gmra.mxu0 %v5749
    %v5777 = vpop.f32.mrf.mxu0
    %v5778 = vadd.f32 0.0, %v5777
    %5779 = vdwg.mxu0
    %v5780 = vmul.f32 %v5769, %v5378
    %v5781 = vmul.f32 %v5772, %v5379
    %v5782 = vmul.f32 %v5775, %v5380
    %v5783 = vmul.f32 %v5778, %v5381
    %5784 = vmatpush.msra.mxu0 0.0
    %5785 = vmatpush.msra.mxu0 0.0
    %5786 = vmatpush.msra.mxu0 0.0
    %5787 = vmatpush.msra.mxu0 0.0
    %5788 = vmatpush.msra.mxu0 0.0
    %5789 = vmatpush.msra.mxu0 0.0
    %5790 = vmatpush.msra.mxu0 0.0
    %5791 = vmatpush.msra.mxu0 0.0
    %5792 = vmatpush.msra.mxu0 0.0
    %5793 = vmatpush.msra.mxu0 0.0
    %5794 = vmatpush.msra.mxu0 0.0
    %5795 = vmatpush.msra.mxu0 0.0
    %5796 = vmatpush.msra.mxu0 0.0
    %5797 = vmatpush.msra.mxu0 0.0
    %5798 = vmatpush.msra.mxu0 %v5387
    %5799 = vmatpush.msra.mxu0 %v5386
    %5800 = vmatmul.f32.gmra.mxu0 %v5743
    %v5801 = vpop.f32.mrf.mxu0
    %v5802 = vadd.f32 0.0, %v5801
    %5803 = vmatmul.f32.gmra.mxu0 %v5745
    %v5804 = vpop.f32.mrf.mxu0
    %v5805 = vadd.f32 0.0, %v5804
    %5806 = vmatmul.f32.gmra.mxu0 %v5747
    %v5807 = vpop.f32.mrf.mxu0
    %v5808 = vadd.f32 0.0, %v5807
    %5809 = vmatmul.f32.gmra.mxu0 %v5749
    %v5810 = vpop.f32.mrf.mxu0
    %v5811 = vadd.f32 0.0, %v5810
    %5812 = vdwg.mxu0
    %v5813 = vmul.f32 %v5802, %v5388
    %v5814 = vmul.f32 %v5805, %v5389
    %v5815 = vmul.f32 %v5808, %v5390
    %v5816 = vmul.f32 %v5811, %v5391
    %v5818 = vsel %vm50, %v5813, 0
    %v5821 = vsel %vm50, %v5814, 0
    %v5824 = vsel %vm50, %v5815, 0
    %v5827 = vsel %vm50, %v5816, 0
    %5829 = vmatpush.msra.mxu0 0.0
    %5830 = vmatpush.msra.mxu0 0.0
    %5831 = vmatpush.msra.mxu0 0.0
    %5832 = vmatpush.msra.mxu0 0.0
    %5833 = vmatpush.msra.mxu0 0.0
    %5834 = vmatpush.msra.mxu0 0.0
    %5835 = vmatpush.msra.mxu0 0.0
    %5836 = vmatpush.msra.mxu0 0.0
    %5837 = vmatpush.msra.mxu0 0.0
    %5838 = vmatpush.msra.mxu0 0.0
    %5839 = vmatpush.msra.mxu0 0.0
    %5840 = vmatpush.msra.mxu0 0.0
    %5841 = vmatpush.msra.mxu0 %v5395
    %5842 = vmatpush.msra.mxu0 %v5394
    %5843 = vmatpush.msra.mxu0 %v5393
    %5844 = vmatpush.msra.mxu0 %v5392
    %5845 = vmatmul.f32.gmra.mxu0 %v5818
    %v5846 = vpop.f32.mrf.mxu0
    %v5847 = vadd.f32 0.0, %v5846
    %5848 = vmatmul.f32.gmra.mxu0 %v5821
    %v5849 = vpop.f32.mrf.mxu0
    %v5850 = vadd.f32 0.0, %v5849
    %5851 = vmatmul.f32.gmra.mxu0 %v5824
    %v5852 = vpop.f32.mrf.mxu0
    %v5853 = vadd.f32 0.0, %v5852
    %5854 = vmatmul.f32.gmra.mxu0 %v5827
    %v5855 = vpop.f32.mrf.mxu0
    %v5856 = vadd.f32 0.0, %v5855
    %5857 = vdwg.mxu0
    %v5859 = vsel %vm50, %v5780, 0
    %v5862 = vsel %vm50, %v5781, 0
    %v5865 = vsel %vm50, %v5782, 0
    %v5868 = vsel %vm50, %v5783, 0
    %5870 = vmatpush.msra.mxu0 0.0
    %5871 = vmatpush.msra.mxu0 0.0
    %5872 = vmatpush.msra.mxu0 0.0
    %5873 = vmatpush.msra.mxu0 0.0
    %5874 = vmatpush.msra.mxu0 0.0
    %5875 = vmatpush.msra.mxu0 0.0
    %5876 = vmatpush.msra.mxu0 0.0
    %5877 = vmatpush.msra.mxu0 0.0
    %5878 = vmatpush.msra.mxu0 0.0
    %5879 = vmatpush.msra.mxu0 0.0
    %5880 = vmatpush.msra.mxu0 0.0
    %5881 = vmatpush.msra.mxu0 0.0
    %5882 = vmatpush.msra.mxu0 %v5385
    %5883 = vmatpush.msra.mxu0 %v5384
    %5884 = vmatpush.msra.mxu0 %v5383
    %5885 = vmatpush.msra.mxu0 %v5382
    %5886 = vmatmul.f32.gmra.mxu0 %v5859
    %v5887 = vpop.f32.mrf.mxu0
    %v5888 = vadd.f32 %v5847, %v5887
    %5889 = vmatmul.f32.gmra.mxu0 %v5862
    %v5890 = vpop.f32.mrf.mxu0
    %v5891 = vadd.f32 %v5850, %v5890
    %5892 = vmatmul.f32.gmra.mxu0 %v5865
    %v5893 = vpop.f32.mrf.mxu0
    %v5894 = vadd.f32 %v5853, %v5893
    %5895 = vmatmul.f32.gmra.mxu0 %v5868
    %v5896 = vpop.f32.mrf.mxu0
    %v5897 = vadd.f32 %v5856, %v5896
    %5898 = vdwg.mxu0
    %5899 = vrot.lane.b32.xlu0 %v5289, 112
    %v5900 = vpop.permute.xlu0 %5899
    %v5901 = vsel %vm1936, %v5900, 0
    %5903 = vmatpush.xpose.msra.mxu0 0.0
    %5904 = vmatpush.xpose.msra.mxu0 0.0
    %5905 = vmatpush.xpose.msra.mxu0 0.0
    %5906 = vmatpush.xpose.msra.mxu0 0.0
    %5907 = vmatpush.xpose.msra.mxu0 0.0
    %5908 = vmatpush.xpose.msra.mxu0 0.0
    %5909 = vmatpush.xpose.msra.mxu0 0.0
    %5910 = vmatpush.xpose.msra.mxu0 0.0
    %5911 = vmatpush.xpose.msra.mxu0 0.0
    %5912 = vmatpush.xpose.msra.mxu0 0.0
    %5913 = vmatpush.xpose.msra.mxu0 0.0
    %5914 = vmatpush.xpose.msra.mxu0 0.0
    %5915 = vmatpush.xpose.msra.mxu0 0.0
    %5916 = vmatpush.xpose.msra.mxu0 0.0
    %5917 = vmatpush.xpose.msra.mxu0 0.0
    %5918 = vmatpush.xpose.msra.mxu0 %v5901
    %5919 = vmatmul.f32.gmra.mxu0 %v5743
    %v5920 = vpop.f32.mrf.mxu0
    %v5921 = vadd.f32 %v5888, %v5920
    %5922 = vmatmul.f32.gmra.mxu0 %v5745
    %v5923 = vpop.f32.mrf.mxu0
    %v5924 = vadd.f32 %v5891, %v5923
    %5925 = vmatmul.f32.gmra.mxu0 %v5747
    %v5926 = vpop.f32.mrf.mxu0
    %v5927 = vadd.f32 %v5894, %v5926
    %5928 = vmatmul.f32.gmra.mxu0 %v5749
    %v5929 = vpop.f32.mrf.mxu0
    %v5930 = vadd.f32 %v5897, %v5929
    %5931 = vdwg.mxu0
    %v5932 = vadd.f32 %v5921, %v5396
    %v5933 = vadd.f32 %v5924, %v5397
    %v5934 = vadd.f32 %v5927, %v5398
    %v5935 = vadd.f32 %v5930, %v5399
    %v5936 = vsel %vm5597, %v5932, -inf
    %5937 = vmax.xlane.f32.xlu0 %v5936
    %v5938 = vpop.xlane.xlu0 %5937
    %v5939 = vsel %vm5597, %v5933, -inf
    %5940 = vmax.xlane.f32.xlu0 %v5939
    %v5941 = vpop.xlane.xlu0 %5940
    %v5942 = vsel %vm5597, %v5934, -inf
    %5943 = vmax.xlane.f32.xlu0 %v5942
    %v5944 = vpop.xlane.xlu0 %5943
    %v5945 = vsel %vm5597, %v5935, -inf
    %5946 = vmax.xlane.f32.xlu0 %v5945
    %v5947 = vpop.xlane.xlu0 %5946
    %v5948 = vsub.f32 %v5932, %v5938
    %v5949 = vsub.f32 %v5933, %v5941
    %v5950 = vsub.f32 %v5934, %v5944
    %v5951 = vsub.f32 %v5935, %v5947
    %v5952 = vmul.f32 %v5948, 1.442695
    %v5953 = vpow.pop %v5952
    %v5954 = vmul.f32 %v5949, 1.442695
    %v5955 = vpow.pop %v5954
    %v5956 = vmul.f32 %v5950, 1.442695
    %v5957 = vpow.pop %v5956
    %v5958 = vmul.f32 %v5951, 1.442695
    %v5959 = vpow.pop %v5958
    %v5960 = vsel %vm5597, %v5953, 0.0
    %5961 = vadd.xlane.f32.xlu0 %v5960
    %v5962 = vpop.xlane.xlu0 %5961
    %v5963 = vsel %vm5597, %v5955, 0.0
    %5964 = vadd.xlane.f32.xlu0 %v5963
    %v5965 = vpop.xlane.xlu0 %5964
    %v5966 = vsel %vm5597, %v5957, 0.0
    %5967 = vadd.xlane.f32.xlu0 %v5966
    %v5968 = vpop.xlane.xlu0 %5967
    %v5969 = vsel %vm5597, %v5959, 0.0
    %5970 = vadd.xlane.f32.xlu0 %v5969
    %v5971 = vpop.xlane.xlu0 %5970
    %v5972 = vrcp.pop %v5962
    %v5973 = vrcp.pop %v5965
    %v5974 = vrcp.pop %v5968
    %v5975 = vrcp.pop %v5971
    %v5976 = vmul.f32 %v5953, %v5972
    %v5977 = vmul.f32 %v5955, %v5973
    %v5978 = vmul.f32 %v5957, %v5974
    %v5979 = vmul.f32 %v5959, %v5975
    %5980 = vrot.lane.b32.xlu0 %v5375, 80
    %v5981 = vpop.permute.xlu0 %5980
    %v5988 = vsel %vm5597, %v5976, 0
    %v5991 = vsel %vm5597, %v5977, 0
    %v5994 = vsel %vm5597, %v5978, 0
    %v5997 = vsel %vm5597, %v5979, 0
    %5999 = vmatpush.msra.mxu0 0.0
    %6000 = vmatpush.msra.mxu0 0.0
    %6001 = vmatpush.msra.mxu0 0.0
    %6002 = vmatpush.msra.mxu0 0.0
    %6003 = vmatpush.msra.mxu0 0.0
    %6004 = vmatpush.msra.mxu0 0.0
    %6005 = vmatpush.msra.mxu0 0.0
    %6006 = vmatpush.msra.mxu0 0.0
    %6007 = vmatpush.msra.mxu0 0.0
    %6008 = vmatpush.msra.mxu0 0.0
    %6009 = vmatpush.msra.mxu0 0.0
    %6010 = vmatpush.msra.mxu0 0.0
    %6011 = vmatpush.msra.mxu0 0.0
    %6012 = vmatpush.msra.mxu0 0.0
    %6013 = vmatpush.msra.mxu0 0.0
    %6014 = vmatpush.msra.mxu0 %v5981
    %6015 = vmatmul.f32.gmra.mxu0 %v5988
    %v6016 = vpop.f32.mrf.mxu0
    %v6017 = vadd.f32 %v5736, %v6016
    %6018 = vmatmul.f32.gmra.mxu0 %v5991
    %v6019 = vpop.f32.mrf.mxu0
    %v6020 = vadd.f32 %v5738, %v6019
    %6021 = vmatmul.f32.gmra.mxu0 %v5994
    %v6022 = vpop.f32.mrf.mxu0
    %v6023 = vadd.f32 %v5740, %v6022
    %6024 = vmatmul.f32.gmra.mxu0 %v5997
    %v6025 = vpop.f32.mrf.mxu0
    %v6026 = vadd.f32 %v5742, %v6025
    %6027 = vdwg.mxu0
    %v6028 = vld [vmem:[#allocation2 + $0xb68] sm:$0xff]
    %v6029 = vld [vmem:[#allocation2 + $0xb70] sm:$0xff]
    %v6031 = vsel %vm1936, %v6017, 0
    %v6034 = vsel %vm1936, %v6020, 0
    %v6037 = vsel %vm1936, %v6023, 0
    %v6040 = vsel %vm1936, %v6026, 0
    %6042 = vmatpush.msra.mxu0 0.0
    %6043 = vmatpush.msra.mxu0 0.0
    %6044 = vmatpush.msra.mxu0 0.0
    %6045 = vmatpush.msra.mxu0 0.0
    %6046 = vmatpush.msra.mxu0 0.0
    %6047 = vmatpush.msra.mxu0 0.0
    %6048 = vmatpush.msra.mxu0 0.0
    %6049 = vmatpush.msra.mxu0 0.0
    %6050 = vmatpush.msra.mxu0 0.0
    %6051 = vmatpush.msra.mxu0 0.0
    %6052 = vmatpush.msra.mxu0 0.0
    %6053 = vmatpush.msra.mxu0 0.0
    %6054 = vmatpush.msra.mxu0 0.0
    %6055 = vmatpush.msra.mxu0 0.0
    %6056 = vmatpush.msra.mxu0 %v6029
    %6057 = vmatpush.msra.mxu0 %v6028
    %6058 = vmatmul.f32.gmra.mxu0 %v6031
    %v6059 = vpop.f32.mrf.mxu0
    %v6060 = vadd.f32 0.0, %v6059
    %6061 = vmatmul.f32.gmra.mxu0 %v6034
    %v6062 = vpop.f32.mrf.mxu0
    %v6063 = vadd.f32 0.0, %v6062
    %6064 = vmatmul.f32.gmra.mxu0 %v6037
    %v6065 = vpop.f32.mrf.mxu0
    %v6066 = vadd.f32 0.0, %v6065
    %6067 = vmatmul.f32.gmra.mxu0 %v6040
    %v6068 = vpop.f32.mrf.mxu0
    %v6069 = vadd.f32 0.0, %v6068
    %6070 = vdwg.mxu0
    %v6071 = vadd.f32 %v5731, %v6060
    %v6072 = vadd.f32 %v5732, %v6063
    %v6073 = vadd.f32 %v5733, %v6066
    %v6074 = vadd.f32 %v5734, %v6069
    %v6075 = vadd.f32 %v3566, %v6071
    %v6076 = vadd.f32 %v3567, %v6072
    %v6077 = vadd.f32 %v3568, %v6073
    %v6078 = vadd.f32 %v3569, %v6074
    %v6079 = vld [vmem:[#allocation2 + $0xb80] sm:$0x1]
    %v6080 = vld [vmem:[#allocation2 + $0xb88] sm:$0x1]
    %v6081 = vld [vmem:[#allocation2 + $0xa28] sm:$0xff]
    %v6082 = vld [vmem:[#allocation2 + $0xa30] sm:$0xff]
    %v6083 = vld [vmem:[#allocation2 + $0xa38] sm:$0xff]
    %v6084 = vld [vmem:[#allocation2 + $0xa40] sm:$0xff]
    %v6086 = vsel %vm50, %v6075, 0
    %v6089 = vsel %vm50, %v6076, 0
    %v6092 = vsel %vm50, %v6077, 0
    %v6095 = vsel %vm50, %v6078, 0
    %6097 = vmatpush.msra.mxu0 0.0
    %6098 = vmatpush.msra.mxu0 0.0
    %6099 = vmatpush.msra.mxu0 0.0
    %6100 = vmatpush.msra.mxu0 0.0
    %6101 = vmatpush.msra.mxu0 0.0
    %6102 = vmatpush.msra.mxu0 0.0
    %6103 = vmatpush.msra.mxu0 0.0
    %6104 = vmatpush.msra.mxu0 0.0
    %6105 = vmatpush.msra.mxu0 0.0
    %6106 = vmatpush.msra.mxu0 0.0
    %6107 = vmatpush.msra.mxu0 0.0
    %6108 = vmatpush.msra.mxu0 0.0
    %6109 = vmatpush.msra.mxu0 %v6084
    %6110 = vmatpush.msra.mxu0 %v6083
    %6111 = vmatpush.msra.mxu0 %v6082
    %6112 = vmatpush.msra.mxu0 %v6081
    %6113 = vmatmul.f32.gmra.mxu0 %v6086
    %v6114 = vpop.f32.mrf.mxu0
    %v6115 = vadd.f32 0.0, %v6114
    %6116 = vmatmul.f32.gmra.mxu0 %v6089
    %v6117 = vpop.f32.mrf.mxu0
    %v6118 = vadd.f32 0.0, %v6117
    %6119 = vmatmul.f32.gmra.mxu0 %v6092
    %v6120 = vpop.f32.mrf.mxu0
    %v6121 = vadd.f32 0.0, %v6120
    %6122 = vmatmul.f32.gmra.mxu0 %v6095
    %v6123 = vpop.f32.mrf.mxu0
    %v6124 = vadd.f32 0.0, %v6123
    %6125 = vdwg.mxu0
    %v6126 = vmul.f32 %v6075, %v6075
    %v6127 = vmul.f32 %v6076, %v6076
    %v6128 = vmul.f32 %v6077, %v6077
    %v6129 = vmul.f32 %v6078, %v6078
    %v6131 = vsel %vm50, %v6126, 0
    %v6134 = vsel %vm50, %v6127, 0
    %v6137 = vsel %vm50, %v6128, 0
    %v6140 = vsel %vm50, %v6129, 0
    %6142 = vmatpush.msra.mxu0 0.0
    %6143 = vmatpush.msra.mxu0 0.0
    %6144 = vmatpush.msra.mxu0 0.0
    %6145 = vmatpush.msra.mxu0 0.0
    %6146 = vmatpush.msra.mxu0 0.0
    %6147 = vmatpush.msra.mxu0 0.0
    %6148 = vmatpush.msra.mxu0 0.0
    %6149 = vmatpush.msra.mxu0 0.0
    %6150 = vmatpush.msra.mxu0 0.0
    %6151 = vmatpush.msra.mxu0 0.0
    %6152 = vmatpush.msra.mxu0 0.0
    %6153 = vmatpush.msra.mxu0 0.0
    %6154 = vmatpush.msra.mxu0 %v6084
    %6155 = vmatpush.msra.mxu0 %v6083
    %6156 = vmatpush.msra.mxu0 %v6082
    %6157 = vmatpush.msra.mxu0 %v6081
    %6158 = vmatmul.f32.gmra.mxu0 %v6131
    %v6159 = vpop.f32.mrf.mxu0
    %v6160 = vadd.f32 0.0, %v6159
    %6161 = vmatmul.f32.gmra.mxu0 %v6134
    %v6162 = vpop.f32.mrf.mxu0
    %v6163 = vadd.f32 0.0, %v6162
    %6164 = vmatmul.f32.gmra.mxu0 %v6137
    %v6165 = vpop.f32.mrf.mxu0
    %v6166 = vadd.f32 0.0, %v6165
    %6167 = vmatmul.f32.gmra.mxu0 %v6140
    %v6168 = vpop.f32.mrf.mxu0
    %v6169 = vadd.f32 0.0, %v6168
    %6170 = vdwg.mxu0
    %v6171 = vmul.f32 %v6115, %v6115
    %v6172 = vmul.f32 %v6118, %v6118
    %v6173 = vmul.f32 %v6121, %v6121
    %v6174 = vmul.f32 %v6124, %v6124
    %v6175 = vsub.f32 %v6160, %v6171
    %v6176 = vsub.f32 %v6163, %v6172
    %v6177 = vsub.f32 %v6166, %v6173
    %v6178 = vsub.f32 %v6169, %v6174
    %v6179 = vmax.f32 %v6175, 0.0
    %v6180 = vmax.f32 %v6176, 0.0
    %v6181 = vmax.f32 %v6177, 0.0
    %v6182 = vmax.f32 %v6178, 0.0
    %v6183 = vsub.f32 %v6075, %v6115
    %v6184 = vsub.f32 %v6076, %v6118
    %v6185 = vsub.f32 %v6077, %v6121
    %v6186 = vsub.f32 %v6078, %v6124
    %v6187 = vadd.f32 %v6179, 1e-05
    %v6188 = vadd.f32 %v6180, 1e-05
    %v6189 = vadd.f32 %v6181, 1e-05
    %v6190 = vadd.f32 %v6182, 1e-05
    %v6191 = vrsqrt.pop %v6187
    %v6192 = vmul.f32 %v6191, %v6187
    %v6193 = vmul.f32 %v6192, %v6191
    %v6194 = vmul.f32 0.5, %v6193
    %v6195 = vsub.f32 1.5, %v6194
    %v6196 = vmul.f32 %v6191, %v6195
    %vm6197 = vweird.f32 %v6187
    %vm6198 = vweird.f32 %v6191
    %vm6199 = vmor %vm6197, %vm6198
    %v6200 = vsel %vm6199, %v6191, %v6196
    %v6201 = vrsqrt.pop %v6188
    %v6202 = vmul.f32 %v6201, %v6188
    %v6203 = vmul.f32 %v6202, %v6201
    %v6204 = vmul.f32 0.5, %v6203
    %v6205 = vsub.f32 1.5, %v6204
    %v6206 = vmul.f32 %v6201, %v6205
    %vm6207 = vweird.f32 %v6188
    %vm6208 = vweird.f32 %v6201
    %vm6209 = vmor %vm6207, %vm6208
    %v6210 = vsel %vm6209, %v6201, %v6206
    %v6211 = vrsqrt.pop %v6189
    %v6212 = vmul.f32 %v6211, %v6189
    %v6213 = vmul.f32 %v6212, %v6211
    %v6214 = vmul.f32 0.5, %v6213
    %v6215 = vsub.f32 1.5, %v6214
    %v6216 = vmul.f32 %v6211, %v6215
    %vm6217 = vweird.f32 %v6189
    %vm6218 = vweird.f32 %v6211
    %vm6219 = vmor %vm6217, %vm6218
    %v6220 = vsel %vm6219, %v6211, %v6216
    %v6221 = vrsqrt.pop %v6190
    %v6222 = vmul.f32 %v6221, %v6190
    %v6223 = vmul.f32 %v6222, %v6221
    %v6224 = vmul.f32 0.5, %v6223
    %v6225 = vsub.f32 1.5, %v6224
    %v6226 = vmul.f32 %v6221, %v6225
    %vm6227 = vweird.f32 %v6190
    %vm6228 = vweird.f32 %v6221
    %vm6229 = vmor %vm6227, %vm6228
    %v6230 = vsel %vm6229, %v6221, %v6226
    %v6231 = vmul.f32 %v6183, %v6200
    %v6232 = vmul.f32 %v6184, %v6210
    %v6233 = vmul.f32 %v6185, %v6220
    %v6234 = vmul.f32 %v6186, %v6230
    %v6235 = vperm.slane %v6079, 0
    %v6236 = vmul.f32 %v6231, %v6235
    %v6237 = vmul.f32 %v6232, %v6235
    %v6238 = vmul.f32 %v6233, %v6235
    %v6239 = vmul.f32 %v6234, %v6235
    %v6240 = vperm.slane %v6080, 0
    %v6241 = vadd.f32 %v6236, %v6240
    %v6242 = vadd.f32 %v6237, %v6240
    %v6243 = vadd.f32 %v6238, %v6240
    %v6244 = vadd.f32 %v6239, %v6240
    %v6245 = vld [vmem:[#allocation2 + $0xb90] sm:$0xff]
    %v6246 = vld [vmem:[#allocation2 + $0xb98] sm:$0xff]
    %v6247 = vld [vmem:[#allocation2 + $0xba0] sm:$0xff]
    %v6248 = vld [vmem:[#allocation2 + $0xba8] sm:$0xff]
    %v6249 = vld [vmem:[#allocation2 + $0xbb0] sm:$0x1]
    %v6250 = vperm.slane %v6249, 0
    %v6252 = vsel %vm50, %v6241, 0
    %v6255 = vsel %vm50, %v6242, 0
    %v6258 = vsel %vm50, %v6243, 0
    %v6261 = vsel %vm50, %v6244, 0
    %6263 = vmatpush.msra.mxu0 0.0
    %6264 = vmatpush.msra.mxu0 0.0
    %6265 = vmatpush.msra.mxu0 0.0
    %6266 = vmatpush.msra.mxu0 0.0
    %6267 = vmatpush.msra.mxu0 0.0
    %6268 = vmatpush.msra.mxu0 0.0
    %6269 = vmatpush.msra.mxu0 0.0
    %6270 = vmatpush.msra.mxu0 0.0
    %6271 = vmatpush.msra.mxu0 0.0
    %6272 = vmatpush.msra.mxu0 0.0
    %6273 = vmatpush.msra.mxu0 0.0
    %6274 = vmatpush.msra.mxu0 0.0
    %6275 = vmatpush.msra.mxu0 %v6248
    %6276 = vmatpush.msra.mxu0 %v6247
    %6277 = vmatpush.msra.mxu0 %v6246
    %6278 = vmatpush.msra.mxu0 %v6245
    %6279 = vmatmul.f32.gmra.mxu0 %v6252
    %v6280 = vpop.f32.mrf.mxu0
    %v6281 = vadd.f32 %v6250, %v6280
    %6282 = vmatmul.f32.gmra.mxu0 %v6255
    %v6283 = vpop.f32.mrf.mxu0
    %v6284 = vadd.f32 %v6250, %v6283
    %6285 = vmatmul.f32.gmra.mxu0 %v6258
    %v6286 = vpop.f32.mrf.mxu0
    %v6287 = vadd.f32 %v6250, %v6286
    %6288 = vmatmul.f32.gmra.mxu0 %v6261
    %v6289 = vpop.f32.mrf.mxu0
    %v6290 = vadd.f32 %v6250, %v6289
    %6291 = vdwg.mxu0
    %v6292 = vmul.f32 %v6281, 0.70710677
    %v6293 = vmul.f32 %v6284, 0.70710677
    %v6294 = vmul.f32 %v6287, 0.70710677
    %v6295 = vmul.f32 %v6290, 0.70710677
    %v6296 = vand.u32 2147483647, %v6292
    %v6297 = vand.u32 2147483647, %v6293
    %v6298 = vand.u32 2147483647, %v6294
    %v6299 = vand.u32 2147483647, %v6295
    %v6300 = vmul.f32 %v6296, 0.3275911
    %v6301 = vmul.f32 %v6297, 0.3275911
    %v6302 = vmul.f32 %v6298, 0.3275911
    %v6303 = vmul.f32 %v6299, 0.3275911
    %v6304 = vadd.f32 %v6300, 1.0
    %v6305 = vadd.f32 %v6301, 1.0
    %v6306 = vadd.f32 %v6302, 1.0
    %v6307 = vadd.f32 %v6303, 1.0
    %v6308 = vrcp.pop %v6304
    %v6309 = vmul.f32 %v6304, %v6308
    %v6310 = vsub.f32 1.0, %v6309
    %v6311 = vmul.f32 %v6308, %v6310
    %v6312 = vadd.f32 %v6308, %v6311
    %vm6313 = vweird.f32 %v6304
    %vm6314 = vweird.f32 %v6308
    %vm6315 = vmor %vm6313, %vm6314
    %v6316 = vsel %vm6315, %v6308, %v6312
    %v6317 = vand.u32 2147483647, %v6304
    %vm6318 = vcmp.eq.f32.partialorder %v6317, 8.507059e+37
    %v6319 = vand.u32 %v6304, 2147483648
    %v6320 = vor.u32 1.1754944e-38, %v6319
    %v6321 = vsel %vm6318, %v6320, %v6316
    %v6322 = vmul.f32 1.0, %v6321
    %v6323 = vrcp.pop %v6305
    %v6324 = vmul.f32 %v6305, %v6323
    %v6325 = vsub.f32 1.0, %v6324
    %v6326 = vmul.f32 %v6323, %v6325
    %v6327 = vadd.f32 %v6323, %v6326
    %vm6328 = vweird.f32 %v6305
    %vm6329 = vweird.f32 %v6323
    %vm6330 = vmor %vm6328, %vm6329
    %v6331 = vsel %vm6330, %v6323, %v6327
    %v6332 = vand.u32 2147483647, %v6305
    %vm6333 = vcmp.eq.f32.partialorder %v6332, 8.507059e+37
    %v6334 = vand.u32 %v6305, 2147483648
    %v6335 = vor.u32 1.1754944e-38, %v6334
    %v6336 = vsel %vm6333, %v6335, %v6331
    %v6337 = vmul.f32 1.0, %v6336
    %v6338 = vrcp.pop %v6306
    %v6339 = vmul.f32 %v6306, %v6338
    %v6340 = vsub.f32 1.0, %v6339
    %v6341 = vmul.f32 %v6338, %v6340
    %v6342 = vadd.f32 %v6338, %v6341
    %vm6343 = vweird.f32 %v6306
    %vm6344 = vweird.f32 %v6338
    %vm6345 = vmor %vm6343, %vm6344
    %v6346 = vsel %vm6345, %v6338, %v6342
    %v6347 = vand.u32 2147483647, %v6306
    %vm6348 = vcmp.eq.f32.partialorder %v6347, 8.507059e+37
    %v6349 = vand.u32 %v6306, 2147483648
    %v6350 = vor.u32 1.1754944e-38, %v6349
    %v6351 = vsel %vm6348, %v6350, %v6346
    %v6352 = vmul.f32 1.0, %v6351
    %v6353 = vrcp.pop %v6307
    %v6354 = vmul.f32 %v6307, %v6353
    %v6355 = vsub.f32 1.0, %v6354
    %v6356 = vmul.f32 %v6353, %v6355
    %v6357 = vadd.f32 %v6353, %v6356
    %vm6358 = vweird.f32 %v6307
    %vm6359 = vweird.f32 %v6353
    %vm6360 = vmor %vm6358, %vm6359
    %v6361 = vsel %vm6360, %v6353, %v6357
    %v6362 = vand.u32 2147483647, %v6307
    %vm6363 = vcmp.eq.f32.partialorder %v6362, 8.507059e+37
    %v6364 = vand.u32 %v6307, 2147483648
    %v6365 = vor.u32 1.1754944e-38, %v6364
    %v6366 = vsel %vm6363, %v6365, %v6361
    %v6367 = vmul.f32 1.0, %v6366
    %v6368 = vmul.f32 %v6322, 1.0614054
    %v6369 = vmul.f32 %v6337, 1.0614054
    %v6370 = vmul.f32 %v6352, 1.0614054
    %v6371 = vmul.f32 %v6367, 1.0614054
    %v6372 = vsub.f32 %v6368, 1.4531521
    %v6373 = vsub.f32 %v6369, 1.4531521
    %v6374 = vsub.f32 %v6370, 1.4531521
    %v6375 = vsub.f32 %v6371, 1.4531521
    %v6376 = vmul.f32 %v6372, %v6322
    %v6377 = vmul.f32 %v6373, %v6337
    %v6378 = vmul.f32 %v6374, %v6352
    %v6379 = vmul.f32 %v6375, %v6367
    %v6380 = vadd.f32 %v6376, 1.4214138
    %v6381 = vadd.f32 %v6377, 1.4214138
    %v6382 = vadd.f32 %v6378, 1.4214138
    %v6383 = vadd.f32 %v6379, 1.4214138
    %v6384 = vmul.f32 %v6380, %v6322
    %v6385 = vmul.f32 %v6381, %v6337
    %v6386 = vmul.f32 %v6382, %v6352
    %v6387 = vmul.f32 %v6383, %v6367
    %v6388 = vsub.f32 %v6384, 0.28449672
    %v6389 = vsub.f32 %v6385, 0.28449672
    %v6390 = vsub.f32 %v6386, 0.28449672
    %v6391 = vsub.f32 %v6387, 0.28449672
    %v6392 = vmul.f32 %v6388, %v6322
    %v6393 = vmul.f32 %v6389, %v6337
    %v6394 = vmul.f32 %v6390, %v6352
    %v6395 = vmul.f32 %v6391, %v6367
    %v6396 = vadd.f32 %v6392, 0.2548296
    %v6397 = vadd.f32 %v6393, 0.2548296
    %v6398 = vadd.f32 %v6394, 0.2548296
    %v6399 = vadd.f32 %v6395, 0.2548296
    %v6400 = vmul.f32 %v6396, %v6322
    %v6401 = vmul.f32 %v6397, %v6337
    %v6402 = vmul.f32 %v6398, %v6352
    %v6403 = vmul.f32 %v6399, %v6367
    %v6404 = vsub.f32 0.0, %v6296
    %v6405 = vsub.f32 0.0, %v6297
    %v6406 = vsub.f32 0.0, %v6298
    %v6407 = vsub.f32 0.0, %v6299
    %v6408 = vmul.f32 %v6404, %v6296
    %v6409 = vmul.f32 %v6405, %v6297
    %v6410 = vmul.f32 %v6406, %v6298
    %v6411 = vmul.f32 %v6407, %v6299
    %v6412 = vmul.f32 %v6408, 1.442695
    %v6413 = vpow.pop %v6412
    %v6414 = vmul.f32 %v6409, 1.442695
    %v6415 = vpow.pop %v6414
    %v6416 = vmul.f32 %v6410, 1.442695
    %v6417 = vpow.pop %v6416
    %v6418 = vmul.f32 %v6411, 1.442695
    %v6419 = vpow.pop %v6418
    %v6420 = vmul.f32 %v6400, %v6413
    %v6421 = vmul.f32 %v6401, %v6415
    %v6422 = vmul.f32 %v6402, %v6417
    %v6423 = vmul.f32 %v6403, %v6419
    %v6424 = vsub.f32 1.0, %v6420
    %v6425 = vsub.f32 1.0, %v6421
    %v6426 = vsub.f32 1.0, %v6422
    %v6427 = vsub.f32 1.0, %v6423
    %vm6428 = vcmp.lt.f32.partialorder %v6292, 0.0
    %vm6429 = vcmp.lt.f32.partialorder %v6293, 0.0
    %vm6430 = vcmp.lt.f32.partialorder %v6294, 0.0
    %vm6431 = vcmp.lt.f32.partialorder %v6295, 0.0
    %v6432 = vsub.f32 0.0, %v6424
    %v6433 = vsub.f32 0.0, %v6425
    %v6434 = vsub.f32 0.0, %v6426
    %v6435 = vsub.f32 0.0, %v6427
    %v6436 = vsel %vm6428, %v6432, %v6424
    %v6437 = vsel %vm6429, %v6433, %v6425
    %v6438 = vsel %vm6430, %v6434, %v6426
    %v6439 = vsel %vm6431, %v6435, %v6427
    %v6440 = vmul.f32 %v6281, 0.5
    %v6441 = vmul.f32 %v6284, 0.5
    %v6442 = vmul.f32 %v6287, 0.5
    %v6443 = vmul.f32 %v6290, 0.5
    %v6444 = vadd.f32 %v6436, 1.0
    %v6445 = vadd.f32 %v6437, 1.0
    %v6446 = vadd.f32 %v6438, 1.0
    %v6447 = vadd.f32 %v6439, 1.0
    %v6448 = vmul.f32 %v6440, %v6444
    %v6449 = vmul.f32 %v6441, %v6445
    %v6450 = vmul.f32 %v6442, %v6446
    %v6451 = vmul.f32 %v6443, %v6447
    %v6452 = vld [vmem:[#allocation2 + $0xbb8] sm:$0xff]
    %v6453 = vld [vmem:[#allocation2 + $0xbc0] sm:$0xff]
    %v6454 = vld [vmem:[#allocation2 + $0xbc8] sm:$0xff]
    %v6455 = vld [vmem:[#allocation2 + $0xbd0] sm:$0xff]
    %v6456 = vld [vmem:[#allocation2 + $0xbd8] sm:$0xff]
    %v6457 = vld [vmem:[#allocation2 + $0xbe0] sm:$0xff]
    %v6458 = vld [vmem:[#allocation2 + $0xbe8] sm:$0xff]
    %v6459 = vld [vmem:[#allocation2 + $0xbf0] sm:$0xff]
    %v6460 = vld [vmem:[#allocation2 + $0xbf8] sm:$0xff]
    %v6461 = vld [vmem:[#allocation2 + $0xc00] sm:$0xff]
    %v6462 = vld [vmem:[#allocation2 + $0xc08] sm:$0xff]
    %v6463 = vld [vmem:[#allocation2 + $0xc10] sm:$0xff]
    %v6464 = vld [vmem:[#allocation2 + $0xc18] sm:$0xff]
    %v6465 = vld [vmem:[#allocation2 + $0xc20] sm:$0xff]
    %v6466 = vld [vmem:[#allocation2 + $0xc28] sm:$0xff]
    %v6467 = vld [vmem:[#allocation2 + $0xc30] sm:$0xff]
    %v6468 = vld [vmem:[#allocation2 + $0xc38] sm:$0x1]
    %v6469 = vperm.slane %v6468, 0
    %6470 = vmatpush.msra.mxu0 %v6467
    %6471 = vmatpush.msra.mxu0 %v6466
    %6472 = vmatpush.msra.mxu0 %v6465
    %6473 = vmatpush.msra.mxu0 %v6464
    %6474 = vmatpush.msra.mxu0 %v6463
    %6475 = vmatpush.msra.mxu0 %v6462
    %6476 = vmatpush.msra.mxu0 %v6461
    %6477 = vmatpush.msra.mxu0 %v6460
    %6478 = vmatpush.msra.mxu0 %v6459
    %6479 = vmatpush.msra.mxu0 %v6458
    %6480 = vmatpush.msra.mxu0 %v6457
    %6481 = vmatpush.msra.mxu0 %v6456
    %6482 = vmatpush.msra.mxu0 %v6455
    %6483 = vmatpush.msra.mxu0 %v6454
    %6484 = vmatpush.msra.mxu0 %v6453
    %6485 = vmatpush.msra.mxu0 %v6452
    %6486 = vmatmul.f32.gmra.mxu0 %v6448
    %v6487 = vpop.f32.mrf.mxu0
    %v6488 = vadd.f32 %v6469, %v6487
    %6489 = vmatmul.f32.gmra.mxu0 %v6449
    %v6490 = vpop.f32.mrf.mxu0
    %v6491 = vadd.f32 %v6469, %v6490
    %6492 = vmatmul.f32.gmra.mxu0 %v6450
    %v6493 = vpop.f32.mrf.mxu0
    %v6494 = vadd.f32 %v6469, %v6493
    %6495 = vmatmul.f32.gmra.mxu0 %v6451
    %v6496 = vpop.f32.mrf.mxu0
    %v6497 = vadd.f32 %v6469, %v6496
    %6498 = vdwg.mxu0
    %v6499 = vld [vmem:[#allocation2 + $0xc40] sm:$0xff]
    %v6500 = vld [vmem:[#allocation2 + $0xc48] sm:$0xff]
    %v6501 = vld [vmem:[#allocation2 + $0xc50] sm:$0xff]
    %v6502 = vld [vmem:[#allocation2 + $0xc58] sm:$0xff]
    %v6503 = vld [vmem:[#allocation2 + $0xc60] sm:$0x1]
    %v6504 = vperm.slane %v6503, 0
    %6505 = vmatpush.msra.mxu0 0.0
    %6506 = vmatpush.msra.mxu0 0.0
    %6507 = vmatpush.msra.mxu0 0.0
    %6508 = vmatpush.msra.mxu0 0.0
    %6509 = vmatpush.msra.mxu0 0.0
    %6510 = vmatpush.msra.mxu0 0.0
    %6511 = vmatpush.msra.mxu0 0.0
    %6512 = vmatpush.msra.mxu0 0.0
    %6513 = vmatpush.msra.mxu0 0.0
    %6514 = vmatpush.msra.mxu0 0.0
    %6515 = vmatpush.msra.mxu0 0.0
    %6516 = vmatpush.msra.mxu0 0.0
    %6517 = vmatpush.msra.mxu0 %v6502
    %6518 = vmatpush.msra.mxu0 %v6501
    %6519 = vmatpush.msra.mxu0 %v6500
    %6520 = vmatpush.msra.mxu0 %v6499
    %6521 = vmatmul.f32.gmra.mxu0 %v6252
    %v6522 = vpop.f32.mrf.mxu0
    %v6523 = vadd.f32 %v6504, %v6522
    %6524 = vmatmul.f32.gmra.mxu0 %v6255
    %v6525 = vpop.f32.mrf.mxu0
    %v6526 = vadd.f32 %v6504, %v6525
    %6527 = vmatmul.f32.gmra.mxu0 %v6258
    %v6528 = vpop.f32.mrf.mxu0
    %v6529 = vadd.f32 %v6504, %v6528
    %6530 = vmatmul.f32.gmra.mxu0 %v6261
    %v6531 = vpop.f32.mrf.mxu0
    %v6532 = vadd.f32 %v6504, %v6531
    %6533 = vdwg.mxu0
    %v6534 = vadd.f32 %v6523, %v6488
    %v6535 = vadd.f32 %v6526, %v6491
    %v6536 = vadd.f32 %v6529, %v6494
    %v6537 = vadd.f32 %v6532, %v6497
    %6538 = vst.msk [vmem:[#allocation5] sm:$0xff] %vm2015, %v6534
    %6539 = vst.msk [vmem:[#allocation5 + $0x8] sm:$0xff] %vm2015, %v6535
    %6540 = vst.msk [vmem:[#allocation5 + $0x10] sm:$0xff] %vm2015, %v6536
    %6541 = vst.msk [vmem:[#allocation5 + $0x18] sm:$0xff] %vm2015, %v6537
    // Predicated region
    $region14: #{tpu_custom_call.1} parent=1 // pred_check
      _
    $region15: #{tpu_custom_call.1} parent=1 // pred_check_branch
      %6543 = sbr.rel (0) target = $region17
    $region16: #{tpu_custom_call.1} parent=1 // pred_region
      %6545 = vsyncadd [#allocation4], 0
      %s6546 = sshll.u32 [#allocation5], 4
      %s6547 = int_to_ptr.vmem [resolvable:$true] %s6546
      %s6548 = sshll.u32 %s2, 4
      %s6549 = int_to_ptr.hbm [resolvable:$true] %s6548
      %6554 = dma.vmem_to_hbm [thread:$0]  %s6547, 512, %s6549, [#allocation4], 128, 128, 8
    $region17: #{tpu_custom_call.1} parent=1 // pred_fallthru
      _
    // Predicated region
    $region18: #{tpu_custom_call.1} parent=1 // pred_check
      _
    $region19: #{tpu_custom_call.1} parent=1 // pred_check_branch
      %6556 = sbr.rel (0) target = $region21
    $region20: #{tpu_custom_call.1} parent=1 // pred_region
      %6558 = dma.done [#allocation4], 512
    $region21: #{tpu_custom_call.1} parent=1 // pred_fallthru
      _
    %6559 = vsyncpa [#allocation3], 1
    %6560 = vsyncpa [#allocation4], 1

</llo_original>
